<compile_context>
chip_gen: v7x
topology: tpu7x:2x2x1
jax: 0.10.0
libtpu: 0.0.40
codegen_flags: <defaults>
</compile_context>

<pallas_src>
import math
import jax
import jax.numpy as jnp
from jax.experimental import pallas as pl
from jax.experimental.pallas import tpu as pltpu

# ----------------------------- configuration ---------------------------------
PAD = 0             # Constants.PAD
B, L, S = 2, 8, 10  # batch, target seq len, encoder seq len
H, NH = 32, 4       # hidden size, attention heads
DH = H // NH
I = 64              # intermediate (FFN) size
V = 50              # vocab size
MAXPOS = 16
NUM_LAYERS = 2
EPS = 1e-12         # BERT LayerNorm eps
NEG = -1e9          # additive mask value (stands in for masked_fill(-inf))

DECODING_TYPE = "NARFormer"
WATCH = 0

# 128-lane-aligned packed fan-in-H weight slab (per layer):
#   rows 0..H-1 = weights, row H = bias of the corresponding output columns.
SEG = 128
OFF_QKV = 0 * SEG    # width 3H  (q|k|v)
OFF_WO = 1 * SEG     # width H   (self-attn output)
OFF_WQ2 = 2 * SEG    # width H   (cross-attn query)
OFF_WKV2 = 3 * SEG   # width 2H  (cross-attn key|value)
OFF_WO2 = 4 * SEG    # width H   (cross-attn output)
OFF_W1 = 5 * SEG     # width I   (FFN in)
WIN_TOTAL = 6 * SEG

TOK_W = L + 2        # per-token slab columns: [L-wide additive self-mask | non-pad | token id]
EMBC_ROWS = L + 2    # embedding-constants slab rows: [pos+token-type (L) | LN gamma | LN beta]


# ------------------------------ in-kernel math --------------------------------
def _layer_norm(x, g, b):
    mean = jnp.mean(x, axis=-1, keepdims=True)
    xc = x - mean
    var = jnp.mean(xc * xc, axis=-1, keepdims=True)
    return xc * jax.lax.rsqrt(var + EPS) * g + b


def _softmax(x):
    m = jnp.max(x, axis=-1, keepdims=True)
    e = jnp.exp(x - m)
    return e * pl.reciprocal(jnp.sum(e, axis=-1, keepdims=True), approx=True)


def _split_heads(x, rows):
    # (B*rows, H) -> (B*NH, rows, DH)   one reshape + one transpose (no per-head slices)
    return x.reshape(B, rows, NH, DH).transpose(0, 2, 1, 3).reshape(B * NH, rows, DH)


def _merge_heads(x, rows):
    # (B*NH, rows, DH) -> (B*rows, H)
    return x.reshape(B, NH, rows, DH).transpose(0, 2, 1, 3).reshape(B * rows, H)


def _mha(q, k, v, q_rows, kv_rows, add_mask=None):
    """Batched multi-head attention; q/k/v are (B*rows, H) row-major activations."""
    scale = 1.0 / math.sqrt(DH)
    qh = _split_heads(q, q_rows)
    kh = _split_heads(k, kv_rows)
    vh = _split_heads(v, kv_rows)
    scores = jax.lax.dot_general(
        qh, kh, (((2,), (2,)), ((0,), (0,))),
        preferred_element_type=jnp.float32) * scale          # (B*NH, q_rows, kv_rows)
    if add_mask is not None:
        scores = scores + add_mask
    p = _softmax(scores)
    ctx = jax.lax.dot_general(
        p, vh, (((2,), (1,)), ((0,), (0,))),
        preferred_element_type=jnp.float32)                  # (B*NH, q_rows, DH)
    return _merge_heads(ctx, q_rows)                         # (B*q_rows, H)


# ------------------------------ fused Pallas kernel ----------------------------
def bert_decoder_kernel(
    wemb_ref,   # (V, H)                      word-embedding table
    embc_ref,   # (L+2, H)                    [pos+token-type rows | emb-LN gamma | emb-LN beta]
    enc_ref,    # (B*S, H)                    encoder hidden states, batch-flattened
    tok_ref,    # (B, L, L+2)                 [additive self-mask | non-pad gate | token id]
    win_ref,    # (NUM_LAYERS, H+1, 6*128)    packed fan-in-H weights, biases in row H
    w2_ref,     # (NUM_LAYERS, I, H)          FFN output weight
    ln_ref,     # (NUM_LAYERS, 7, H)          [3 gammas | 3 betas | FFN output bias]
    out_ref,    # (NUM_LAYERS, B*L, H)        per-layer hidden states
):
    # ---- per-token slab (hoisted once: reused by both layers) ----
    tok = tok_ref[...]                                                     # (B, L, L+2)
    smask_bh = jnp.broadcast_to(tok[:, None, :, :L],
                                (B, NH, L, L)).reshape(B * NH, L, L)       # (B*NH, L, L)
    npad = tok[:, :, L:L + 1].reshape(B * L, 1)                            # (B*L, 1)
    ids = tok[:, :, L + 1:L + 2].reshape(B * L, 1).astype(jnp.int32)       # (B*L, 1)

    # ---- BertEmbeddings: one-hot word gather on the MXU + pos + token-type -> LayerNorm ----
    onehot = (jax.lax.broadcasted_iota(jnp.int32, (B * L, V), 1) == ids).astype(jnp.float32)
    we = jnp.dot(onehot, wemb_ref[...], preferred_element_type=jnp.float32)  # (B*L, H)
    posl = embc_ref[0:L, :]                               # (L, H) position + token-type-0
    pos = jnp.concatenate([posl] * B, axis=0)             # (B*L, H)
    x = _layer_norm(we + pos, embc_ref[L:L + 1, :], embc_ref[L + 1:L + 2, :])

    enc = enc_ref[...]                                    # (B*S, H)

    for li in range(NUM_LAYERS):
        # ---- masked self-attention + Add&Norm, gated by non-pad mask ----
        qkv = (jnp.dot(x, win_ref[li, :H, OFF_QKV:OFF_QKV + 3 * H],
                       preferred_element_type=jnp.float32)
               + win_ref[li, H:H + 1, OFF_QKV:OFF_QKV + 3 * H])
        ctx = _mha(qkv[:, :H], qkv[:, H:2 * H], qkv[:, 2 * H:3 * H], L, L, smask_bh)
        attn = (jnp.dot(ctx, win_ref[li, :H, OFF_WO:OFF_WO + H],
                        preferred_element_type=jnp.float32)
                + win_ref[li, H:H + 1, OFF_WO:OFF_WO + H])
        h1 = _layer_norm(attn + x, ln_ref[li, 0:1, :], ln_ref[li, 3:4, :]) * npad

        # ---- cross-attention to encoder_hidden_states + Add&Norm, gated ----
        # (src_seq is all-ones in the reference module -> cross key-pad mask is all-False)
        q2 = (jnp.dot(h1, win_ref[li, :H, OFF_WQ2:OFF_WQ2 + H],
                      preferred_element_type=jnp.float32)
              + win_ref[li, H:H + 1, OFF_WQ2:OFF_WQ2 + H])
        kv2 = (jnp.dot(enc, win_ref[li, :H, OFF_WKV2:OFF_WKV2 + 2 * H],
                       preferred_element_type=jnp.float32)
               + win_ref[li, H:H + 1, OFF_WKV2:OFF_WKV2 + 2 * H])
        ctx2 = _mha(q2, kv2[:, :H], kv2[:, H:2 * H], L, S, None)
        attn2 = (jnp.dot(ctx2, win_ref[li, :H, OFF_WO2:OFF_WO2 + H],
                         preferred_element_type=jnp.float32)
                 + win_ref[li, H:H + 1, OFF_WO2:OFF_WO2 + H])
        h2 = _layer_norm(attn2 + h1, ln_ref[li, 1:2, :], ln_ref[li, 4:5, :]) * npad

        # ---- feed-forward (GELU) + Add&Norm, gated ----
        # TODO(synk): PyTorch BERT uses exact erf-GELU; tanh approximation used here
        # (erf has no guaranteed Mosaic lowering); max abs deviation ~1e-3.
        inter = jax.nn.gelu(jnp.dot(h2, win_ref[li, :H, OFF_W1:OFF_W1 + I],
                                    preferred_element_type=jnp.float32)
                            + win_ref[li, H:H + 1, OFF_W1:OFF_W1 + I])
        ffn = (jnp.dot(inter, w2_ref[li], preferred_element_type=jnp.float32)
               + ln_ref[li, 6:7, :])
        h3 = _layer_norm(ffn + h2, ln_ref[li, 2:3, :], ln_ref[li, 5:6, :]) * npad

        out_ref[li] = h3
        x = h3


# ------------------------------ pallas_call wrapper ----------------------------
def bert_decoder_pallas(word_emb, emb_consts, enc_flat, tok_slab, win, w2, ln):
    vmem = pl.BlockSpec(memory_space=pltpu.MemorySpace.VMEM)
    # Single gridless invocation: total VMEM residency << 1 MiB, so everything is
    # fully resident and there is no per-grid-step pipeline prologue.
    # (v7x alternative: grid=(B,) + dimension_semantics=("parallel",) -- trace first.)
    return pl.pallas_call(
        bert_decoder_kernel,
        out_shape=jax.ShapeDtypeStruct((NUM_LAYERS, B * L, H), jnp.float32),
        in_specs=[vmem] * 7,
        out_specs=vmem,
    )(word_emb, emb_consts, enc_flat, tok_slab, win, w2, ln)


# ------------------------------ plain-JAX glue ---------------------------------
def build_self_attn_mask(input_ids, decoding_type=DECODING_TYPE, watch=WATCH):
    """Boolean mask (True = masked), converted to an additive float mask."""
    bsz, slen = input_ids.shape
    keypad = (input_ids == PAD)                                       # (B, L)
    keypad = jnp.broadcast_to(keypad[:, None, :], (bsz, slen, slen))  # (B, Lq, Lk)
    if decoding_type == "NARFormer":
        mask = keypad
    elif decoding_type == "SelfMask":
        diag = jnp.eye(slen, dtype=bool)[None]
        mask = keypad | diag
    else:  # autoregressive default: keypad + subsequent (+ optional watch window)
        subseq = jnp.triu(jnp.ones((slen, slen), dtype=bool), k=1)
        if watch != 0 and slen >= watch:
            subseq = subseq | jnp.tril(jnp.ones((slen, slen), dtype=bool), k=-watch)
        mask = keypad | subseq[None]
    return jnp.where(mask, NEG, 0.0).astype(jnp.float32)


def init_params(key):
    """'Natural' (PyTorch-like) parameters: separate weights, nonzero biases."""
    def dense(k, fi, fo):
        kw, kb = jax.random.split(k)
        return (jax.random.normal(kw, (fi, fo), jnp.float32) * 0.02,
                jax.random.normal(kb, (fo,), jnp.float32) * 0.02)

    keys = jax.random.split(key, 3 + NUM_LAYERS)
    p = {
        "word_emb": jax.random.normal(keys[0], (V, H), jnp.float32) * 0.02,
        "pos_emb": jax.random.normal(keys[1], (MAXPOS, H), jnp.float32) * 0.02,
        "tt_emb": jax.random.normal(keys[2], (1, H), jnp.float32) * 0.02,
        "emb_ln_gamma": jnp.ones((1, H), jnp.float32),
        "emb_ln_beta": jnp.zeros((1, H), jnp.float32),
        "layers": [],
    }
    for l in range(NUM_LAYERS):
        lk = jax.random.split(keys[3 + l], 10)
        wq, bq = dense(lk[0], H, H); wk, bk = dense(lk[1], H, H); wv, bv = dense(lk[2], H, H)
        wo, bo = dense(lk[3], H, H)
        wq2, bq2 = dense(lk[4], H, H); wk2, bk2 = dense(lk[5], H, H); wv2, bv2 = dense(lk[6], H, H)
        wo2, bo2 = dense(lk[7], H, H)
        w1, b1 = dense(lk[8], H, I); w2, b2 = dense(lk[9], I, H)
        p["layers"].append(dict(
            wq=wq, bq=bq, wk=wk, bk=bk, wv=wv, bv=bv, wo=wo, bo=bo,
            wq2=wq2, bq2=bq2, wk2=wk2, bk2=bk2, wv2=wv2, bv2=bv2, wo2=wo2, bo2=bo2,
            w1=w1, b1=b1, w2=w2, b2=b2,
            ln1_g=jnp.ones((H,), jnp.float32), ln1_b=jnp.zeros((H,), jnp.float32),
            ln2_g=jnp.ones((H,), jnp.float32), ln2_b=jnp.zeros((H,), jnp.float32),
            ln3_g=jnp.ones((H,), jnp.float32), ln3_b=jnp.zeros((H,), jnp.float32),
        ))
    return p


def pack_params(p):
    """Pack natural params into the kernel's lane-aligned slabs (done once, offline)."""
    packed = {"word_emb": p["word_emb"]}
    packed["emb_consts"] = jnp.concatenate(
        [p["pos_emb"][:L] + p["tt_emb"], p["emb_ln_gamma"], p["emb_ln_beta"]], axis=0)  # (L+2, H)

    win, w2s, lns = [], [], []
    for lp in p["layers"]:
        slab = jnp.zeros((H + 1, WIN_TOTAL), jnp.float32)
        segs = [
            (OFF_QKV, jnp.concatenate([lp["wq"], lp["wk"], lp["wv"]], axis=1),
                      jnp.concatenate([lp["bq"], lp["bk"], lp["bv"]], axis=0)),
            (OFF_WO, lp["wo"], lp["bo"]),
            (OFF_WQ2, lp["wq2"], lp["bq2"]),
            (OFF_WKV2, jnp.concatenate([lp["wk2"], lp["wv2"]], axis=1),
                       jnp.concatenate([lp["bk2"], lp["bv2"]], axis=0)),
            (OFF_WO2, lp["wo2"], lp["bo2"]),
            (OFF_W1, lp["w1"], lp["b1"]),
        ]
        for off, w, b in segs:
            slab = slab.at[:H, off:off + w.shape[1]].set(w)
            slab = slab.at[H, off:off + b.shape[0]].set(b)
        win.append(slab)
        w2s.append(lp["w2"])
        lns.append(jnp.stack([lp["ln1_g"], lp["ln2_g"], lp["ln3_g"],
                              lp["ln1_b"], lp["ln2_b"], lp["ln3_b"], lp["b2"]], axis=0))
    packed["win"] = jnp.stack(win)   # (NUM_LAYERS, H+1, 6*128)
    packed["w2"] = jnp.stack(w2s)    # (NUM_LAYERS, I, H)
    packed["ln"] = jnp.stack(lns)    # (NUM_LAYERS, 7, H)
    return packed


def bert_decoder_forward(packed, input_ids, encoder_hidden_states):
    # glue: additive self-attn mask + non-pad gate + token ids in ONE per-token slab
    smask = build_self_attn_mask(input_ids)                              # (B, L, L)
    npad = (input_ids != PAD).astype(jnp.float32)[..., None]             # (B, L, 1)
    ids_f = input_ids.astype(jnp.float32)[..., None]                     # (B, L, 1)
    tok_slab = jnp.concatenate([smask, npad, ids_f], axis=-1)            # (B, L, L+2)
    # src_seq is torch.ones(...) in the reference module -> cross-attn key-pad mask is
    # always all-False -> omitted exactly.
    # TODO(synk): enhance_input==1/2 resampling and the pos_attention position-embedding
    # return path are disabled by this config and not implemented in the kernel.
    enc_flat = encoder_hidden_states.reshape(B * S, H)

    out = bert_decoder_pallas(packed["word_emb"], packed["emb_consts"], enc_flat,
                              tok_slab, packed["win"], packed["w2"], packed["ln"])
    out = out.reshape(NUM_LAYERS, B, L, H)
    res = [out[li] for li in range(NUM_LAYERS)]
    # final Dropout is identity in inference mode
    return {"hidden_states": res[-1], "all_hidden_states": res, "all_attentions": ()}


# ------------------------------------ main -------------------------------------
if __name__ == "__main__":
    key = jax.random.PRNGKey(0)
    k_ids, k_enc, k_par = jax.random.split(key, 3)

    input_ids = jax.random.randint(k_ids, (B, L), 1, V, dtype=jnp.int32)
    # introduce PAD tokens so the masks / non_pad gating actually do something
    input_ids = input_ids.at[0, -2:].set(PAD)
    input_ids = input_ids.at[1, -1:].set(PAD)

    encoder_hidden_states = jax.random.normal(k_enc, (B, S, H), jnp.float32)
    packed = pack_params(init_params(k_par))

    fwd = jax.jit(bert_decoder_forward)
    out = fwd(packed, input_ids, encoder_hidden_states)
    jax.block_until_ready(out["hidden_states"])
    assert out["hidden_states"].shape == (B, L, H)
    assert len(out["all_hidden_states"]) == NUM_LAYERS
    print("KERNEL_OK")
</pallas_src>

<mosaic_0001>
module attributes {stable_mosaic.version = 11 : i64} {
  func.func @bert_decoder_kernel(%arg0: memref<50x32xf32, #tpu.memory_space<vmem>>, %arg1: memref<10x32xf32, #tpu.memory_space<vmem>>, %arg2: memref<20x32xf32, #tpu.memory_space<vmem>>, %arg3: memref<2x8x10xf32, #tpu.memory_space<vmem>>, %arg4: memref<2x33x768xf32, #tpu.memory_space<vmem>>, %arg5: memref<2x64x32xf32, #tpu.memory_space<vmem>>, %arg6: memref<2x7x32xf32, #tpu.memory_space<vmem>>, %arg7: memref<2x16x32xf32, #tpu.memory_space<vmem>>) attributes {dimension_semantics = [], scalar_prefetch = 0 : i64, scratch_operands = 0 : i64, tpu.core_type = #tpu.core_type<tc>} {
    %c0 = arith.constant 0 : index
    %c0_0 = arith.constant 0 : index
    %c0_1 = arith.constant 0 : index
    %0 = vector.load %arg3[%c0, %c0_0, %c0_1] : memref<2x8x10xf32, #tpu.memory_space<vmem>>, vector<2x8x10xf32>
    %1 = vector.extract_strided_slice %0 {offsets = [0, 0, 0], sizes = [2, 8, 8], strides = [1, 1, 1]} : vector<2x8x10xf32> to vector<2x8x8xf32>
    %2 = vector.shape_cast %1 : vector<2x8x8xf32> to vector<2x1x8x8xf32>
    %3 = vector.shape_cast %2 : vector<2x1x8x8xf32> to vector<2x1x8x8xf32>
    %4 = vector.broadcast %3 : vector<2x1x8x8xf32> to vector<2x4x8x8xf32>
    %5 = vector.shape_cast %4 : vector<2x4x8x8xf32> to vector<8x8x8xf32>
    %6 = vector.extract_strided_slice %0 {offsets = [0, 0, 8], sizes = [2, 8, 1], strides = [1, 1, 1]} : vector<2x8x10xf32> to vector<2x8x1xf32>
    %7 = vector.shape_cast %6 : vector<2x8x1xf32> to vector<16x1xf32>
    %8 = vector.extract_strided_slice %0 {offsets = [0, 0, 9], sizes = [2, 8, 1], strides = [1, 1, 1]} : vector<2x8x10xf32> to vector<2x8x1xf32>
    %9 = vector.shape_cast %8 : vector<2x8x1xf32> to vector<16x1xf32>
    %10 = arith.fptosi %9 : vector<16x1xf32> to vector<16x1xi32>
    %11 = tpu.iota {dimensions = array<i32: 1>} : vector<16x50xi32>
    %12 = vector.broadcast %10 : vector<16x1xi32> to vector<16x50xi32>
    %13 = arith.cmpi eq, %11, %12 : vector<16x50xi32>
    %14 = arith.extui %13 : vector<16x50xi1> to vector<16x50xi32>
    %15 = arith.sitofp %14 : vector<16x50xi32> to vector<16x50xf32>
    %c0_2 = arith.constant 0 : index
    %c0_3 = arith.constant 0 : index
    %16 = vector.load %arg0[%c0_2, %c0_3] : memref<50x32xf32, #tpu.memory_space<vmem>>, vector<50x32xf32>
    %cst = arith.constant dense<0.000000e+00> : vector<16x32xf32>
    %17 = tpu.matmul %15, %16, %cst {dimension_numbers = #tpu.dot_dimension_numbers<[1], [0], [0], [1], [0, 0, 1, 1], [], []>} : vector<16x50xf32>, vector<50x32xf32>, vector<16x32xf32> -> vector<16x32xf32>
    %c0_4 = arith.constant 0 : index
    %c0_5 = arith.constant 0 : index
    %18 = vector.load %arg1[%c0_4, %c0_5] : memref<10x32xf32, #tpu.memory_space<vmem>>, vector<8x32xf32>
    %19 = tpu.concatenate %18, %18 in 0 : vector<8x32xf32>, vector<8x32xf32> -> vector<16x32xf32>
    %20 = arith.addf %17, %19 : vector<16x32xf32>
    %c8 = arith.constant 8 : index
    %c0_6 = arith.constant 0 : index
    %21 = vector.load %arg1[%c8, %c0_6] : memref<10x32xf32, #tpu.memory_space<vmem>>, vector<1x32xf32>
    %c9 = arith.constant 9 : index
    %c0_7 = arith.constant 0 : index
    %22 = vector.load %arg1[%c9, %c0_7] : memref<10x32xf32, #tpu.memory_space<vmem>>, vector<1x32xf32>
    %cst_8 = arith.constant dense<0.000000e+00> : vector<16xf32>
    %23 = vector.multi_reduction <add>, %20, %cst_8 [1] : vector<16x32xf32> to vector<16xf32>
    %24 = vector.shape_cast %23 : vector<16xf32> to vector<16x1xf32>
    %cst_9 = arith.constant 3.200000e+01 : f32
    %25 = vector.broadcast %cst_9 : f32 to vector<16x1xf32>
    %26 = arith.divf %24, %25 : vector<16x1xf32>
    %27 = vector.broadcast %26 : vector<16x1xf32> to vector<16x32xf32>
    %28 = arith.subf %20, %27 : vector<16x32xf32>
    %29 = arith.mulf %28, %28 : vector<16x32xf32>
    %cst_10 = arith.constant dense<0.000000e+00> : vector<16xf32>
    %30 = vector.multi_reduction <add>, %29, %cst_10 [1] : vector<16x32xf32> to vector<16xf32>
    %31 = vector.shape_cast %30 : vector<16xf32> to vector<16x1xf32>
    %cst_11 = arith.constant 3.200000e+01 : f32
    %32 = vector.broadcast %cst_11 : f32 to vector<16x1xf32>
    %33 = arith.divf %31, %32 : vector<16x1xf32>
    %cst_12 = arith.constant 9.99999996E-13 : f32
    %34 = vector.broadcast %cst_12 : f32 to vector<16x1xf32>
    %35 = arith.addf %33, %34 : vector<16x1xf32>
    %36 = math.rsqrt %35 : vector<16x1xf32>
    %37 = vector.broadcast %36 : vector<16x1xf32> to vector<16x32xf32>
    %38 = arith.mulf %28, %37 : vector<16x32xf32>
    %39 = vector.broadcast %21 : vector<1x32xf32> to vector<16x32xf32>
    %40 = arith.mulf %38, %39 : vector<16x32xf32>
    %41 = vector.broadcast %22 : vector<1x32xf32> to vector<16x32xf32>
    %42 = arith.addf %40, %41 : vector<16x32xf32>
    %c0_13 = arith.constant 0 : index
    %c0_14 = arith.constant 0 : index
    %43 = vector.load %arg2[%c0_13, %c0_14] : memref<20x32xf32, #tpu.memory_space<vmem>>, vector<20x32xf32>
    %c0_15 = arith.constant 0 : index
    %c0_16 = arith.constant 0 : index
    %c0_17 = arith.constant 0 : index
    %44 = vector.load %arg4[%c0_15, %c0_16, %c0_17] : memref<2x33x768xf32, #tpu.memory_space<vmem>>, vector<1x32x96xf32>
    %45 = vector.shape_cast %44 : vector<1x32x96xf32> to vector<32x96xf32>
    %cst_18 = arith.constant dense<0.000000e+00> : vector<16x96xf32>
    %46 = tpu.matmul %42, %45, %cst_18 {dimension_numbers = #tpu.dot_dimension_numbers<[1], [0], [0], [1], [0, 0, 1, 1], [], []>} : vector<16x32xf32>, vector<32x96xf32>, vector<16x96xf32> -> vector<16x96xf32>
    %c0_19 = arith.constant 0 : index
    %c32 = arith.constant 32 : index
    %c0_20 = arith.constant 0 : index
    %47 = vector.load %arg4[%c0_19, %c32, %c0_20] : memref<2x33x768xf32, #tpu.memory_space<vmem>>, vector<1x1x96xf32>
    %48 = vector.shape_cast %47 : vector<1x1x96xf32> to vector<1x96xf32>
    %49 = vector.broadcast %48 : vector<1x96xf32> to vector<16x96xf32>
    %50 = arith.addf %46, %49 : vector<16x96xf32>
    %51 = vector.extract_strided_slice %50 {offsets = [0, 0], sizes = [16, 32], strides = [1, 1]} : vector<16x96xf32> to vector<16x32xf32>
    %52 = vector.extract_strided_slice %50 {offsets = [0, 32], sizes = [16, 32], strides = [1, 1]} : vector<16x96xf32> to vector<16x32xf32>
    %53 = vector.extract_strided_slice %50 {offsets = [0, 64], sizes = [16, 32], strides = [1, 1]} : vector<16x96xf32> to vector<16x32xf32>
    %54 = vector.shape_cast %51 : vector<16x32xf32> to vector<2x8x4x8xf32>
    %55 = tpu.transpose %54, [0, 2, 1, 3] : vector<2x8x4x8xf32> -> vector<2x4x8x8xf32>
    %56 = vector.shape_cast %55 : vector<2x4x8x8xf32> to vector<8x8x8xf32>
    %57 = vector.shape_cast %52 : vector<16x32xf32> to vector<2x8x4x8xf32>
    %58 = tpu.transpose %57, [0, 2, 1, 3] : vector<2x8x4x8xf32> -> vector<2x4x8x8xf32>
    %59 = vector.shape_cast %58 : vector<2x4x8x8xf32> to vector<8x8x8xf32>
    %60 = vector.shape_cast %53 : vector<16x32xf32> to vector<2x8x4x8xf32>
    %61 = tpu.transpose %60, [0, 2, 1, 3] : vector<2x8x4x8xf32> -> vector<2x4x8x8xf32>
    %62 = vector.shape_cast %61 : vector<2x4x8x8xf32> to vector<8x8x8xf32>
    %cst_21 = arith.constant dense<0.000000e+00> : vector<8x8x8xf32>
    %63 = tpu.matmul %56, %59, %cst_21 {dimension_numbers = #tpu.dot_dimension_numbers<[2], [2], [1], [1], [0, 0, 0, 1, 1, 1], [0], [0]>} : vector<8x8x8xf32>, vector<8x8x8xf32>, vector<8x8x8xf32> -> vector<8x8x8xf32>
    %cst_22 = arith.constant 0.353553385 : f32
    %64 = vector.broadcast %cst_22 : f32 to vector<8x8x8xf32>
    %65 = arith.mulf %63, %64 : vector<8x8x8xf32>
    %66 = arith.addf %65, %5 : vector<8x8x8xf32>
    %cst_23 = arith.constant dense<0xFF800000> : vector<8x8xf32>
    %67 = vector.multi_reduction <maximumf>, %66, %cst_23 [2] : vector<8x8x8xf32> to vector<8x8xf32>
    %68 = vector.shape_cast %67 : vector<8x8xf32> to vector<8x8x1xf32>
    %69 = vector.broadcast %68 : vector<8x8x1xf32> to vector<8x8x8xf32>
    %70 = arith.subf %66, %69 : vector<8x8x8xf32>
    %71 = math.exp %70 : vector<8x8x8xf32>
    %cst_24 = arith.constant dense<0.000000e+00> : vector<8x8xf32>
    %72 = vector.multi_reduction <add>, %71, %cst_24 [2] : vector<8x8x8xf32> to vector<8x8xf32>
    %73 = vector.shape_cast %72 : vector<8x8xf32> to vector<8x8x1xf32>
    %74 = tpu.reciprocal %73 {approx = true} : vector<8x8x1xf32> -> vector<8x8x1xf32>
    %75 = vector.broadcast %74 : vector<8x8x1xf32> to vector<8x8x8xf32>
    %76 = arith.mulf %71, %75 : vector<8x8x8xf32>
    %cst_25 = arith.constant dense<0.000000e+00> : vector<8x8x8xf32>
    %77 = tpu.matmul %76, %62, %cst_25 {dimension_numbers = #tpu.dot_dimension_numbers<[2], [1], [1], [2], [0, 0, 0, 1, 1, 2], [0], [0]>} : vector<8x8x8xf32>, vector<8x8x8xf32>, vector<8x8x8xf32> -> vector<8x8x8xf32>
    %78 = vector.shape_cast %77 : vector<8x8x8xf32> to vector<2x4x8x8xf32>
    %79 = tpu.transpose %78, [0, 2, 1, 3] : vector<2x4x8x8xf32> -> vector<2x8x4x8xf32>
    %80 = vector.shape_cast %79 : vector<2x8x4x8xf32> to vector<16x32xf32>
    %c0_26 = arith.constant 0 : index
    %c0_27 = arith.constant 0 : index
    %c128 = arith.constant 128 : index
    %81 = vector.load %arg4[%c0_26, %c0_27, %c128] : memref<2x33x768xf32, #tpu.memory_space<vmem>>, vector<1x32x32xf32>
    %82 = vector.shape_cast %81 : vector<1x32x32xf32> to vector<32x32xf32>
    %cst_28 = arith.constant dense<0.000000e+00> : vector<16x32xf32>
    %83 = tpu.matmul %80, %82, %cst_28 {dimension_numbers = #tpu.dot_dimension_numbers<[1], [0], [0], [1], [0, 0, 1, 1], [], []>} : vector<16x32xf32>, vector<32x32xf32>, vector<16x32xf32> -> vector<16x32xf32>
    %c0_29 = arith.constant 0 : index
    %c32_30 = arith.constant 32 : index
    %c128_31 = arith.constant 128 : index
    %84 = vector.load %arg4[%c0_29, %c32_30, %c128_31] : memref<2x33x768xf32, #tpu.memory_space<vmem>>, vector<1x1x32xf32>
    %85 = vector.shape_cast %84 : vector<1x1x32xf32> to vector<1x32xf32>
    %86 = vector.broadcast %85 : vector<1x32xf32> to vector<16x32xf32>
    %87 = arith.addf %83, %86 : vector<16x32xf32>
    %88 = arith.addf %87, %42 : vector<16x32xf32>
    %c0_32 = arith.constant 0 : index
    %c0_33 = arith.constant 0 : index
    %c0_34 = arith.constant 0 : index
    %89 = vector.load %arg6[%c0_32, %c0_33, %c0_34] : memref<2x7x32xf32, #tpu.memory_space<vmem>>, vector<1x1x32xf32>
    %90 = vector.shape_cast %89 : vector<1x1x32xf32> to vector<1x32xf32>
    %c0_35 = arith.constant 0 : index
    %c3 = arith.constant 3 : index
    %c0_36 = arith.constant 0 : index
    %91 = vector.load %arg6[%c0_35, %c3, %c0_36] : memref<2x7x32xf32, #tpu.memory_space<vmem>>, vector<1x1x32xf32>
    %92 = vector.shape_cast %91 : vector<1x1x32xf32> to vector<1x32xf32>
    %cst_37 = arith.constant dense<0.000000e+00> : vector<16xf32>
    %93 = vector.multi_reduction <add>, %88, %cst_37 [1] : vector<16x32xf32> to vector<16xf32>
    %94 = vector.shape_cast %93 : vector<16xf32> to vector<16x1xf32>
    %cst_38 = arith.constant 3.200000e+01 : f32
    %95 = vector.broadcast %cst_38 : f32 to vector<16x1xf32>
    %96 = arith.divf %94, %95 : vector<16x1xf32>
    %97 = vector.broadcast %96 : vector<16x1xf32> to vector<16x32xf32>
    %98 = arith.subf %88, %97 : vector<16x32xf32>
    %99 = arith.mulf %98, %98 : vector<16x32xf32>
    %cst_39 = arith.constant dense<0.000000e+00> : vector<16xf32>
    %100 = vector.multi_reduction <add>, %99, %cst_39 [1] : vector<16x32xf32> to vector<16xf32>
    %101 = vector.shape_cast %100 : vector<16xf32> to vector<16x1xf32>
    %cst_40 = arith.constant 3.200000e+01 : f32
    %102 = vector.broadcast %cst_40 : f32 to vector<16x1xf32>
    %103 = arith.divf %101, %102 : vector<16x1xf32>
    %cst_41 = arith.constant 9.99999996E-13 : f32
    %104 = vector.broadcast %cst_41 : f32 to vector<16x1xf32>
    %105 = arith.addf %103, %104 : vector<16x1xf32>
    %106 = math.rsqrt %105 : vector<16x1xf32>
    %107 = vector.broadcast %106 : vector<16x1xf32> to vector<16x32xf32>
    %108 = arith.mulf %98, %107 : vector<16x32xf32>
    %109 = vector.broadcast %90 : vector<1x32xf32> to vector<16x32xf32>
    %110 = arith.mulf %108, %109 : vector<16x32xf32>
    %111 = vector.broadcast %92 : vector<1x32xf32> to vector<16x32xf32>
    %112 = arith.addf %110, %111 : vector<16x32xf32>
    %113 = vector.broadcast %7 : vector<16x1xf32> to vector<16x32xf32>
    %114 = arith.mulf %112, %113 : vector<16x32xf32>
    %c0_42 = arith.constant 0 : index
    %c0_43 = arith.constant 0 : index
    %c256 = arith.constant 256 : index
    %115 = vector.load %arg4[%c0_42, %c0_43, %c256] : memref<2x33x768xf32, #tpu.memory_space<vmem>>, vector<1x32x32xf32>
    %116 = vector.shape_cast %115 : vector<1x32x32xf32> to vector<32x32xf32>
    %cst_44 = arith.constant dense<0.000000e+00> : vector<16x32xf32>
    %117 = tpu.matmul %114, %116, %cst_44 {dimension_numbers = #tpu.dot_dimension_numbers<[1], [0], [0], [1], [0, 0, 1, 1], [], []>} : vector<16x32xf32>, vector<32x32xf32>, vector<16x32xf32> -> vector<16x32xf32>
    %c0_45 = arith.constant 0 : index
    %c32_46 = arith.constant 32 : index
    %c256_47 = arith.constant 256 : index
    %118 = vector.load %arg4[%c0_45, %c32_46, %c256_47] : memref<2x33x768xf32, #tpu.memory_space<vmem>>, vector<1x1x32xf32>
    %119 = vector.shape_cast %118 : vector<1x1x32xf32> to vector<1x32xf32>
    %120 = vector.broadcast %119 : vector<1x32xf32> to vector<16x32xf32>
    %121 = arith.addf %117, %120 : vector<16x32xf32>
    %c0_48 = arith.constant 0 : index
    %c0_49 = arith.constant 0 : index
    %c384 = arith.constant 384 : index
    %122 = vector.load %arg4[%c0_48, %c0_49, %c384] : memref<2x33x768xf32, #tpu.memory_space<vmem>>, vector<1x32x64xf32>
    %123 = vector.shape_cast %122 : vector<1x32x64xf32> to vector<32x64xf32>
    %cst_50 = arith.constant dense<0.000000e+00> : vector<20x64xf32>
    %124 = tpu.matmul %43, %123, %cst_50 {dimension_numbers = #tpu.dot_dimension_numbers<[1], [0], [0], [1], [0, 0, 1, 1], [], []>} : vector<20x32xf32>, vector<32x64xf32>, vector<20x64xf32> -> vector<20x64xf32>
    %c0_51 = arith.constant 0 : index
    %c32_52 = arith.constant 32 : index
    %c384_53 = arith.constant 384 : index
    %125 = vector.load %arg4[%c0_51, %c32_52, %c384_53] : memref<2x33x768xf32, #tpu.memory_space<vmem>>, vector<1x1x64xf32>
    %126 = vector.shape_cast %125 : vector<1x1x64xf32> to vector<1x64xf32>
    %127 = vector.broadcast %126 : vector<1x64xf32> to vector<20x64xf32>
    %128 = arith.addf %124, %127 : vector<20x64xf32>
    %129 = vector.extract_strided_slice %128 {offsets = [0, 0], sizes = [20, 32], strides = [1, 1]} : vector<20x64xf32> to vector<20x32xf32>
    %130 = vector.extract_strided_slice %128 {offsets = [0, 32], sizes = [20, 32], strides = [1, 1]} : vector<20x64xf32> to vector<20x32xf32>
    %131 = vector.shape_cast %121 : vector<16x32xf32> to vector<2x8x4x8xf32>
    %132 = tpu.transpose %131, [0, 2, 1, 3] : vector<2x8x4x8xf32> -> vector<2x4x8x8xf32>
    %133 = vector.shape_cast %132 : vector<2x4x8x8xf32> to vector<8x8x8xf32>
    %134 = vector.shape_cast %129 : vector<20x32xf32> to vector<2x10x4x8xf32>
    %135 = tpu.transpose %134, [0, 2, 1, 3] : vector<2x10x4x8xf32> -> vector<2x4x10x8xf32>
    %136 = vector.shape_cast %135 : vector<2x4x10x8xf32> to vector<8x10x8xf32>
    %137 = vector.shape_cast %130 : vector<20x32xf32> to vector<2x10x4x8xf32>
    %138 = tpu.transpose %137, [0, 2, 1, 3] : vector<2x10x4x8xf32> -> vector<2x4x10x8xf32>
    %139 = vector.shape_cast %138 : vector<2x4x10x8xf32> to vector<8x10x8xf32>
    %cst_54 = arith.constant dense<0.000000e+00> : vector<8x8x10xf32>
    %140 = tpu.matmul %133, %136, %cst_54 {dimension_numbers = #tpu.dot_dimension_numbers<[2], [2], [1], [1], [0, 0, 0, 1, 1, 1], [0], [0]>} : vector<8x8x8xf32>, vector<8x10x8xf32>, vector<8x8x10xf32> -> vector<8x8x10xf32>
    %cst_55 = arith.constant 0.353553385 : f32
    %141 = vector.broadcast %cst_55 : f32 to vector<8x8x10xf32>
    %142 = arith.mulf %140, %141 : vector<8x8x10xf32>
    %cst_56 = arith.constant dense<0xFF800000> : vector<8x8xf32>
    %143 = vector.multi_reduction <maximumf>, %142, %cst_56 [2] : vector<8x8x10xf32> to vector<8x8xf32>
    %144 = vector.shape_cast %143 : vector<8x8xf32> to vector<8x8x1xf32>
    %145 = vector.broadcast %144 : vector<8x8x1xf32> to vector<8x8x10xf32>
    %146 = arith.subf %142, %145 : vector<8x8x10xf32>
    %147 = math.exp %146 : vector<8x8x10xf32>
    %cst_57 = arith.constant dense<0.000000e+00> : vector<8x8xf32>
    %148 = vector.multi_reduction <add>, %147, %cst_57 [2] : vector<8x8x10xf32> to vector<8x8xf32>
    %149 = vector.shape_cast %148 : vector<8x8xf32> to vector<8x8x1xf32>
    %150 = tpu.reciprocal %149 {approx = true} : vector<8x8x1xf32> -> vector<8x8x1xf32>
    %151 = vector.broadcast %150 : vector<8x8x1xf32> to vector<8x8x10xf32>
    %152 = arith.mulf %147, %151 : vector<8x8x10xf32>
    %cst_58 = arith.constant dense<0.000000e+00> : vector<8x8x8xf32>
    %153 = tpu.matmul %152, %139, %cst_58 {dimension_numbers = #tpu.dot_dimension_numbers<[2], [1], [1], [2], [0, 0, 0, 1, 1, 2], [0], [0]>} : vector<8x8x10xf32>, vector<8x10x8xf32>, vector<8x8x8xf32> -> vector<8x8x8xf32>
    %154 = vector.shape_cast %153 : vector<8x8x8xf32> to vector<2x4x8x8xf32>
    %155 = tpu.transpose %154, [0, 2, 1, 3] : vector<2x4x8x8xf32> -> vector<2x8x4x8xf32>
    %156 = vector.shape_cast %155 : vector<2x8x4x8xf32> to vector<16x32xf32>
    %c0_59 = arith.constant 0 : index
    %c0_60 = arith.constant 0 : index
    %c512 = arith.constant 512 : index
    %157 = vector.load %arg4[%c0_59, %c0_60, %c512] : memref<2x33x768xf32, #tpu.memory_space<vmem>>, vector<1x32x32xf32>
    %158 = vector.shape_cast %157 : vector<1x32x32xf32> to vector<32x32xf32>
    %cst_61 = arith.constant dense<0.000000e+00> : vector<16x32xf32>
    %159 = tpu.matmul %156, %158, %cst_61 {dimension_numbers = #tpu.dot_dimension_numbers<[1], [0], [0], [1], [0, 0, 1, 1], [], []>} : vector<16x32xf32>, vector<32x32xf32>, vector<16x32xf32> -> vector<16x32xf32>
    %c0_62 = arith.constant 0 : index
    %c32_63 = arith.constant 32 : index
    %c512_64 = arith.constant 512 : index
    %160 = vector.load %arg4[%c0_62, %c32_63, %c512_64] : memref<2x33x768xf32, #tpu.memory_space<vmem>>, vector<1x1x32xf32>
    %161 = vector.shape_cast %160 : vector<1x1x32xf32> to vector<1x32xf32>
    %162 = vector.broadcast %161 : vector<1x32xf32> to vector<16x32xf32>
    %163 = arith.addf %159, %162 : vector<16x32xf32>
    %164 = arith.addf %163, %114 : vector<16x32xf32>
    %c0_65 = arith.constant 0 : index
    %c1 = arith.constant 1 : index
    %c0_66 = arith.constant 0 : index
    %165 = vector.load %arg6[%c0_65, %c1, %c0_66] : memref<2x7x32xf32, #tpu.memory_space<vmem>>, vector<1x1x32xf32>
    %166 = vector.shape_cast %165 : vector<1x1x32xf32> to vector<1x32xf32>
    %c0_67 = arith.constant 0 : index
    %c4 = arith.constant 4 : index
    %c0_68 = arith.constant 0 : index
    %167 = vector.load %arg6[%c0_67, %c4, %c0_68] : memref<2x7x32xf32, #tpu.memory_space<vmem>>, vector<1x1x32xf32>
    %168 = vector.shape_cast %167 : vector<1x1x32xf32> to vector<1x32xf32>
    %cst_69 = arith.constant dense<0.000000e+00> : vector<16xf32>
    %169 = vector.multi_reduction <add>, %164, %cst_69 [1] : vector<16x32xf32> to vector<16xf32>
    %170 = vector.shape_cast %169 : vector<16xf32> to vector<16x1xf32>
    %cst_70 = arith.constant 3.200000e+01 : f32
    %171 = vector.broadcast %cst_70 : f32 to vector<16x1xf32>
    %172 = arith.divf %170, %171 : vector<16x1xf32>
    %173 = vector.broadcast %172 : vector<16x1xf32> to vector<16x32xf32>
    %174 = arith.subf %164, %173 : vector<16x32xf32>
    %175 = arith.mulf %174, %174 : vector<16x32xf32>
    %cst_71 = arith.constant dense<0.000000e+00> : vector<16xf32>
    %176 = vector.multi_reduction <add>, %175, %cst_71 [1] : vector<16x32xf32> to vector<16xf32>
    %177 = vector.shape_cast %176 : vector<16xf32> to vector<16x1xf32>
    %cst_72 = arith.constant 3.200000e+01 : f32
    %178 = vector.broadcast %cst_72 : f32 to vector<16x1xf32>
    %179 = arith.divf %177, %178 : vector<16x1xf32>
    %cst_73 = arith.constant 9.99999996E-13 : f32
    %180 = vector.broadcast %cst_73 : f32 to vector<16x1xf32>
    %181 = arith.addf %179, %180 : vector<16x1xf32>
    %182 = math.rsqrt %181 : vector<16x1xf32>
    %183 = vector.broadcast %182 : vector<16x1xf32> to vector<16x32xf32>
    %184 = arith.mulf %174, %183 : vector<16x32xf32>
    %185 = vector.broadcast %166 : vector<1x32xf32> to vector<16x32xf32>
    %186 = arith.mulf %184, %185 : vector<16x32xf32>
    %187 = vector.broadcast %168 : vector<1x32xf32> to vector<16x32xf32>
    %188 = arith.addf %186, %187 : vector<16x32xf32>
    %189 = vector.broadcast %7 : vector<16x1xf32> to vector<16x32xf32>
    %190 = arith.mulf %188, %189 : vector<16x32xf32>
    %c0_74 = arith.constant 0 : index
    %c0_75 = arith.constant 0 : index
    %c640 = arith.constant 640 : index
    %191 = vector.load %arg4[%c0_74, %c0_75, %c640] : memref<2x33x768xf32, #tpu.memory_space<vmem>>, vector<1x32x64xf32>
    %192 = vector.shape_cast %191 : vector<1x32x64xf32> to vector<32x64xf32>
    %cst_76 = arith.constant dense<0.000000e+00> : vector<16x64xf32>
    %193 = tpu.matmul %190, %192, %cst_76 {dimension_numbers = #tpu.dot_dimension_numbers<[1], [0], [0], [1], [0, 0, 1, 1], [], []>} : vector<16x32xf32>, vector<32x64xf32>, vector<16x64xf32> -> vector<16x64xf32>
    %c0_77 = arith.constant 0 : index
    %c32_78 = arith.constant 32 : index
    %c640_79 = arith.constant 640 : index
    %194 = vector.load %arg4[%c0_77, %c32_78, %c640_79] : memref<2x33x768xf32, #tpu.memory_space<vmem>>, vector<1x1x64xf32>
    %195 = vector.shape_cast %194 : vector<1x1x64xf32> to vector<1x64xf32>
    %196 = vector.broadcast %195 : vector<1x64xf32> to vector<16x64xf32>
    %197 = arith.addf %193, %196 : vector<16x64xf32>
    %198 = arith.mulf %197, %197 : vector<16x64xf32>
    %199 = arith.mulf %197, %198 : vector<16x64xf32>
    %cst_80 = arith.constant 4.471500e-02 : f32
    %200 = vector.broadcast %cst_80 : f32 to vector<16x64xf32>
    %201 = arith.mulf %200, %199 : vector<16x64xf32>
    %202 = arith.addf %197, %201 : vector<16x64xf32>
    %cst_81 = arith.constant 0.797884583 : f32
    %203 = vector.broadcast %cst_81 : f32 to vector<16x64xf32>
    %204 = arith.mulf %203, %202 : vector<16x64xf32>
    %205 = math.tanh %204 : vector<16x64xf32>
    %cst_82 = arith.constant 1.000000e+00 : f32
    %206 = vector.broadcast %cst_82 : f32 to vector<16x64xf32>
    %207 = arith.addf %206, %205 : vector<16x64xf32>
    %cst_83 = arith.constant 5.000000e-01 : f32
    %208 = vector.broadcast %cst_83 : f32 to vector<16x64xf32>
    %209 = arith.mulf %208, %207 : vector<16x64xf32>
    %210 = arith.mulf %197, %209 : vector<16x64xf32>
    %c0_84 = arith.constant 0 : index
    %c0_85 = arith.constant 0 : index
    %c0_86 = arith.constant 0 : index
    %211 = vector.load %arg5[%c0_84, %c0_85, %c0_86] : memref<2x64x32xf32, #tpu.memory_space<vmem>>, vector<1x64x32xf32>
    %212 = vector.shape_cast %211 : vector<1x64x32xf32> to vector<64x32xf32>
    %cst_87 = arith.constant dense<0.000000e+00> : vector<16x32xf32>
    %213 = tpu.matmul %210, %212, %cst_87 {dimension_numbers = #tpu.dot_dimension_numbers<[1], [0], [0], [1], [0, 0, 1, 1], [], []>} : vector<16x64xf32>, vector<64x32xf32>, vector<16x32xf32> -> vector<16x32xf32>
    %c0_88 = arith.constant 0 : index
    %c6 = arith.constant 6 : index
    %c0_89 = arith.constant 0 : index
    %214 = vector.load %arg6[%c0_88, %c6, %c0_89] : memref<2x7x32xf32, #tpu.memory_space<vmem>>, vector<1x1x32xf32>
    %215 = vector.shape_cast %214 : vector<1x1x32xf32> to vector<1x32xf32>
    %216 = vector.broadcast %215 : vector<1x32xf32> to vector<16x32xf32>
    %217 = arith.addf %213, %216 : vector<16x32xf32>
    %218 = arith.addf %217, %190 : vector<16x32xf32>
    %c0_90 = arith.constant 0 : index
    %c2 = arith.constant 2 : index
    %c0_91 = arith.constant 0 : index
    %219 = vector.load %arg6[%c0_90, %c2, %c0_91] : memref<2x7x32xf32, #tpu.memory_space<vmem>>, vector<1x1x32xf32>
    %220 = vector.shape_cast %219 : vector<1x1x32xf32> to vector<1x32xf32>
    %c0_92 = arith.constant 0 : index
    %c5 = arith.constant 5 : index
    %c0_93 = arith.constant 0 : index
    %221 = vector.load %arg6[%c0_92, %c5, %c0_93] : memref<2x7x32xf32, #tpu.memory_space<vmem>>, vector<1x1x32xf32>
    %222 = vector.shape_cast %221 : vector<1x1x32xf32> to vector<1x32xf32>
    %cst_94 = arith.constant dense<0.000000e+00> : vector<16xf32>
    %223 = vector.multi_reduction <add>, %218, %cst_94 [1] : vector<16x32xf32> to vector<16xf32>
    %224 = vector.shape_cast %223 : vector<16xf32> to vector<16x1xf32>
    %cst_95 = arith.constant 3.200000e+01 : f32
    %225 = vector.broadcast %cst_95 : f32 to vector<16x1xf32>
    %226 = arith.divf %224, %225 : vector<16x1xf32>
    %227 = vector.broadcast %226 : vector<16x1xf32> to vector<16x32xf32>
    %228 = arith.subf %218, %227 : vector<16x32xf32>
    %229 = arith.mulf %228, %228 : vector<16x32xf32>
    %cst_96 = arith.constant dense<0.000000e+00> : vector<16xf32>
    %230 = vector.multi_reduction <add>, %229, %cst_96 [1] : vector<16x32xf32> to vector<16xf32>
    %231 = vector.shape_cast %230 : vector<16xf32> to vector<16x1xf32>
    %cst_97 = arith.constant 3.200000e+01 : f32
    %232 = vector.broadcast %cst_97 : f32 to vector<16x1xf32>
    %233 = arith.divf %231, %232 : vector<16x1xf32>
    %cst_98 = arith.constant 9.99999996E-13 : f32
    %234 = vector.broadcast %cst_98 : f32 to vector<16x1xf32>
    %235 = arith.addf %233, %234 : vector<16x1xf32>
    %236 = math.rsqrt %235 : vector<16x1xf32>
    %237 = vector.broadcast %236 : vector<16x1xf32> to vector<16x32xf32>
    %238 = arith.mulf %228, %237 : vector<16x32xf32>
    %239 = vector.broadcast %220 : vector<1x32xf32> to vector<16x32xf32>
    %240 = arith.mulf %238, %239 : vector<16x32xf32>
    %241 = vector.broadcast %222 : vector<1x32xf32> to vector<16x32xf32>
    %242 = arith.addf %240, %241 : vector<16x32xf32>
    %243 = vector.broadcast %7 : vector<16x1xf32> to vector<16x32xf32>
    %244 = arith.mulf %242, %243 : vector<16x32xf32>
    %c0_99 = arith.constant 0 : index
    %c0_100 = arith.constant 0 : index
    %c0_101 = arith.constant 0 : index
    %245 = vector.load %arg7[%c0_99, %c0_100, %c0_101] : memref<2x16x32xf32, #tpu.memory_space<vmem>>, vector<1x16x32xf32>
    %246 = vector.shape_cast %245 : vector<1x16x32xf32> to vector<16x32xf32>
    %247 = vector.shape_cast %244 : vector<16x32xf32> to vector<1x16x32xf32>
    tpu.vector_store %arg7[%c0_99, %c0_100, %c0_101], %247 {strides = array<i32>} : memref<2x16x32xf32, #tpu.memory_space<vmem>>, vector<1x16x32xf32>,
    %c1_102 = arith.constant 1 : index
    %c0_103 = arith.constant 0 : index
    %c0_104 = arith.constant 0 : index
    %248 = vector.load %arg4[%c1_102, %c0_103, %c0_104] : memref<2x33x768xf32, #tpu.memory_space<vmem>>, vector<1x32x96xf32>
    %249 = vector.shape_cast %248 : vector<1x32x96xf32> to vector<32x96xf32>
    %cst_105 = arith.constant dense<0.000000e+00> : vector<16x96xf32>
    %250 = tpu.matmul %244, %249, %cst_105 {dimension_numbers = #tpu.dot_dimension_numbers<[1], [0], [0], [1], [0, 0, 1, 1], [], []>} : vector<16x32xf32>, vector<32x96xf32>, vector<16x96xf32> -> vector<16x96xf32>
    %c1_106 = arith.constant 1 : index
    %c32_107 = arith.constant 32 : index
    %c0_108 = arith.constant 0 : index
    %251 = vector.load %arg4[%c1_106, %c32_107, %c0_108] : memref<2x33x768xf32, #tpu.memory_space<vmem>>, vector<1x1x96xf32>
    %252 = vector.shape_cast %251 : vector<1x1x96xf32> to vector<1x96xf32>
    %253 = vector.broadcast %252 : vector<1x96xf32> to vector<16x96xf32>
    %254 = arith.addf %250, %253 : vector<16x96xf32>
    %255 = vector.extract_strided_slice %254 {offsets = [0, 0], sizes = [16, 32], strides = [1, 1]} : vector<16x96xf32> to vector<16x32xf32>
    %256 = vector.extract_strided_slice %254 {offsets = [0, 32], sizes = [16, 32], strides = [1, 1]} : vector<16x96xf32> to vector<16x32xf32>
    %257 = vector.extract_strided_slice %254 {offsets = [0, 64], sizes = [16, 32], strides = [1, 1]} : vector<16x96xf32> to vector<16x32xf32>
    %258 = vector.shape_cast %255 : vector<16x32xf32> to vector<2x8x4x8xf32>
    %259 = tpu.transpose %258, [0, 2, 1, 3] : vector<2x8x4x8xf32> -> vector<2x4x8x8xf32>
    %260 = vector.shape_cast %259 : vector<2x4x8x8xf32> to vector<8x8x8xf32>
    %261 = vector.shape_cast %256 : vector<16x32xf32> to vector<2x8x4x8xf32>
    %262 = tpu.transpose %261, [0, 2, 1, 3] : vector<2x8x4x8xf32> -> vector<2x4x8x8xf32>
    %263 = vector.shape_cast %262 : vector<2x4x8x8xf32> to vector<8x8x8xf32>
    %264 = vector.shape_cast %257 : vector<16x32xf32> to vector<2x8x4x8xf32>
    %265 = tpu.transpose %264, [0, 2, 1, 3] : vector<2x8x4x8xf32> -> vector<2x4x8x8xf32>
    %266 = vector.shape_cast %265 : vector<2x4x8x8xf32> to vector<8x8x8xf32>
    %cst_109 = arith.constant dense<0.000000e+00> : vector<8x8x8xf32>
    %267 = tpu.matmul %260, %263, %cst_109 {dimension_numbers = #tpu.dot_dimension_numbers<[2], [2], [1], [1], [0, 0, 0, 1, 1, 1], [0], [0]>} : vector<8x8x8xf32>, vector<8x8x8xf32>, vector<8x8x8xf32> -> vector<8x8x8xf32>
    %cst_110 = arith.constant 0.353553385 : f32
    %268 = vector.broadcast %cst_110 : f32 to vector<8x8x8xf32>
    %269 = arith.mulf %267, %268 : vector<8x8x8xf32>
    %270 = arith.addf %269, %5 : vector<8x8x8xf32>
    %cst_111 = arith.constant dense<0xFF800000> : vector<8x8xf32>
    %271 = vector.multi_reduction <maximumf>, %270, %cst_111 [2] : vector<8x8x8xf32> to vector<8x8xf32>
    %272 = vector.shape_cast %271 : vector<8x8xf32> to vector<8x8x1xf32>
    %273 = vector.broadcast %272 : vector<8x8x1xf32> to vector<8x8x8xf32>
    %274 = arith.subf %270, %273 : vector<8x8x8xf32>
    %275 = math.exp %274 : vector<8x8x8xf32>
    %cst_112 = arith.constant dense<0.000000e+00> : vector<8x8xf32>
    %276 = vector.multi_reduction <add>, %275, %cst_112 [2] : vector<8x8x8xf32> to vector<8x8xf32>
    %277 = vector.shape_cast %276 : vector<8x8xf32> to vector<8x8x1xf32>
    %278 = tpu.reciprocal %277 {approx = true} : vector<8x8x1xf32> -> vector<8x8x1xf32>
    %279 = vector.broadcast %278 : vector<8x8x1xf32> to vector<8x8x8xf32>
    %280 = arith.mulf %275, %279 : vector<8x8x8xf32>
    %cst_113 = arith.constant dense<0.000000e+00> : vector<8x8x8xf32>
    %281 = tpu.matmul %280, %266, %cst_113 {dimension_numbers = #tpu.dot_dimension_numbers<[2], [1], [1], [2], [0, 0, 0, 1, 1, 2], [0], [0]>} : vector<8x8x8xf32>, vector<8x8x8xf32>, vector<8x8x8xf32> -> vector<8x8x8xf32>
    %282 = vector.shape_cast %281 : vector<8x8x8xf32> to vector<2x4x8x8xf32>
    %283 = tpu.transpose %282, [0, 2, 1, 3] : vector<2x4x8x8xf32> -> vector<2x8x4x8xf32>
    %284 = vector.shape_cast %283 : vector<2x8x4x8xf32> to vector<16x32xf32>
    %c1_114 = arith.constant 1 : index
    %c0_115 = arith.constant 0 : index
    %c128_116 = arith.constant 128 : index
    %285 = vector.load %arg4[%c1_114, %c0_115, %c128_116] : memref<2x33x768xf32, #tpu.memory_space<vmem>>, vector<1x32x32xf32>
    %286 = vector.shape_cast %285 : vector<1x32x32xf32> to vector<32x32xf32>
    %cst_117 = arith.constant dense<0.000000e+00> : vector<16x32xf32>
    %287 = tpu.matmul %284, %286, %cst_117 {dimension_numbers = #tpu.dot_dimension_numbers<[1], [0], [0], [1], [0, 0, 1, 1], [], []>} : vector<16x32xf32>, vector<32x32xf32>, vector<16x32xf32> -> vector<16x32xf32>
    %c1_118 = arith.constant 1 : index
    %c32_119 = arith.constant 32 : index
    %c128_120 = arith.constant 128 : index
    %288 = vector.load %arg4[%c1_118, %c32_119, %c128_120] : memref<2x33x768xf32, #tpu.memory_space<vmem>>, vector<1x1x32xf32>
    %289 = vector.shape_cast %288 : vector<1x1x32xf32> to vector<1x32xf32>
    %290 = vector.broadcast %289 : vector<1x32xf32> to vector<16x32xf32>
    %291 = arith.addf %287, %290 : vector<16x32xf32>
    %292 = arith.addf %291, %244 : vector<16x32xf32>
    %c1_121 = arith.constant 1 : index
    %c0_122 = arith.constant 0 : index
    %c0_123 = arith.constant 0 : index
    %293 = vector.load %arg6[%c1_121, %c0_122, %c0_123] : memref<2x7x32xf32, #tpu.memory_space<vmem>>, vector<1x1x32xf32>
    %294 = vector.shape_cast %293 : vector<1x1x32xf32> to vector<1x32xf32>
    %c1_124 = arith.constant 1 : index
    %c3_125 = arith.constant 3 : index
    %c0_126 = arith.constant 0 : index
    %295 = vector.load %arg6[%c1_124, %c3_125, %c0_126] : memref<2x7x32xf32, #tpu.memory_space<vmem>>, vector<1x1x32xf32>
    %296 = vector.shape_cast %295 : vector<1x1x32xf32> to vector<1x32xf32>
    %cst_127 = arith.constant dense<0.000000e+00> : vector<16xf32>
    %297 = vector.multi_reduction <add>, %292, %cst_127 [1] : vector<16x32xf32> to vector<16xf32>
    %298 = vector.shape_cast %297 : vector<16xf32> to vector<16x1xf32>
    %cst_128 = arith.constant 3.200000e+01 : f32
    %299 = vector.broadcast %cst_128 : f32 to vector<16x1xf32>
    %300 = arith.divf %298, %299 : vector<16x1xf32>
    %301 = vector.broadcast %300 : vector<16x1xf32> to vector<16x32xf32>
    %302 = arith.subf %292, %301 : vector<16x32xf32>
    %303 = arith.mulf %302, %302 : vector<16x32xf32>
    %cst_129 = arith.constant dense<0.000000e+00> : vector<16xf32>
    %304 = vector.multi_reduction <add>, %303, %cst_129 [1] : vector<16x32xf32> to vector<16xf32>
    %305 = vector.shape_cast %304 : vector<16xf32> to vector<16x1xf32>
    %cst_130 = arith.constant 3.200000e+01 : f32
    %306 = vector.broadcast %cst_130 : f32 to vector<16x1xf32>
    %307 = arith.divf %305, %306 : vector<16x1xf32>
    %cst_131 = arith.constant 9.99999996E-13 : f32
    %308 = vector.broadcast %cst_131 : f32 to vector<16x1xf32>
    %309 = arith.addf %307, %308 : vector<16x1xf32>
    %310 = math.rsqrt %309 : vector<16x1xf32>
    %311 = vector.broadcast %310 : vector<16x1xf32> to vector<16x32xf32>
    %312 = arith.mulf %302, %311 : vector<16x32xf32>
    %313 = vector.broadcast %294 : vector<1x32xf32> to vector<16x32xf32>
    %314 = arith.mulf %312, %313 : vector<16x32xf32>
    %315 = vector.broadcast %296 : vector<1x32xf32> to vector<16x32xf32>
    %316 = arith.addf %314, %315 : vector<16x32xf32>
    %317 = vector.broadcast %7 : vector<16x1xf32> to vector<16x32xf32>
    %318 = arith.mulf %316, %317 : vector<16x32xf32>
    %c1_132 = arith.constant 1 : index
    %c0_133 = arith.constant 0 : index
    %c256_134 = arith.constant 256 : index
    %319 = vector.load %arg4[%c1_132, %c0_133, %c256_134] : memref<2x33x768xf32, #tpu.memory_space<vmem>>, vector<1x32x32xf32>
    %320 = vector.shape_cast %319 : vector<1x32x32xf32> to vector<32x32xf32>
    %cst_135 = arith.constant dense<0.000000e+00> : vector<16x32xf32>
    %321 = tpu.matmul %318, %320, %cst_135 {dimension_numbers = #tpu.dot_dimension_numbers<[1], [0], [0], [1], [0, 0, 1, 1], [], []>} : vector<16x32xf32>, vector<32x32xf32>, vector<16x32xf32> -> vector<16x32xf32>
    %c1_136 = arith.constant 1 : index
    %c32_137 = arith.constant 32 : index
    %c256_138 = arith.constant 256 : index
    %322 = vector.load %arg4[%c1_136, %c32_137, %c256_138] : memref<2x33x768xf32, #tpu.memory_space<vmem>>, vector<1x1x32xf32>
    %323 = vector.shape_cast %322 : vector<1x1x32xf32> to vector<1x32xf32>
    %324 = vector.broadcast %323 : vector<1x32xf32> to vector<16x32xf32>
    %325 = arith.addf %321, %324 : vector<16x32xf32>
    %c1_139 = arith.constant 1 : index
    %c0_140 = arith.constant 0 : index
    %c384_141 = arith.constant 384 : index
    %326 = vector.load %arg4[%c1_139, %c0_140, %c384_141] : memref<2x33x768xf32, #tpu.memory_space<vmem>>, vector<1x32x64xf32>
    %327 = vector.shape_cast %326 : vector<1x32x64xf32> to vector<32x64xf32>
    %cst_142 = arith.constant dense<0.000000e+00> : vector<20x64xf32>
    %328 = tpu.matmul %43, %327, %cst_142 {dimension_numbers = #tpu.dot_dimension_numbers<[1], [0], [0], [1], [0, 0, 1, 1], [], []>} : vector<20x32xf32>, vector<32x64xf32>, vector<20x64xf32> -> vector<20x64xf32>
    %c1_143 = arith.constant 1 : index
    %c32_144 = arith.constant 32 : index
    %c384_145 = arith.constant 384 : index
    %329 = vector.load %arg4[%c1_143, %c32_144, %c384_145] : memref<2x33x768xf32, #tpu.memory_space<vmem>>, vector<1x1x64xf32>
    %330 = vector.shape_cast %329 : vector<1x1x64xf32> to vector<1x64xf32>
    %331 = vector.broadcast %330 : vector<1x64xf32> to vector<20x64xf32>
    %332 = arith.addf %328, %331 : vector<20x64xf32>
    %333 = vector.extract_strided_slice %332 {offsets = [0, 0], sizes = [20, 32], strides = [1, 1]} : vector<20x64xf32> to vector<20x32xf32>
    %334 = vector.extract_strided_slice %332 {offsets = [0, 32], sizes = [20, 32], strides = [1, 1]} : vector<20x64xf32> to vector<20x32xf32>
    %335 = vector.shape_cast %325 : vector<16x32xf32> to vector<2x8x4x8xf32>
    %336 = tpu.transpose %335, [0, 2, 1, 3] : vector<2x8x4x8xf32> -> vector<2x4x8x8xf32>
    %337 = vector.shape_cast %336 : vector<2x4x8x8xf32> to vector<8x8x8xf32>
    %338 = vector.shape_cast %333 : vector<20x32xf32> to vector<2x10x4x8xf32>
    %339 = tpu.transpose %338, [0, 2, 1, 3] : vector<2x10x4x8xf32> -> vector<2x4x10x8xf32>
    %340 = vector.shape_cast %339 : vector<2x4x10x8xf32> to vector<8x10x8xf32>
    %341 = vector.shape_cast %334 : vector<20x32xf32> to vector<2x10x4x8xf32>
    %342 = tpu.transpose %341, [0, 2, 1, 3] : vector<2x10x4x8xf32> -> vector<2x4x10x8xf32>
    %343 = vector.shape_cast %342 : vector<2x4x10x8xf32> to vector<8x10x8xf32>
    %cst_146 = arith.constant dense<0.000000e+00> : vector<8x8x10xf32>
    %344 = tpu.matmul %337, %340, %cst_146 {dimension_numbers = #tpu.dot_dimension_numbers<[2], [2], [1], [1], [0, 0, 0, 1, 1, 1], [0], [0]>} : vector<8x8x8xf32>, vector<8x10x8xf32>, vector<8x8x10xf32> -> vector<8x8x10xf32>
    %cst_147 = arith.constant 0.353553385 : f32
    %345 = vector.broadcast %cst_147 : f32 to vector<8x8x10xf32>
    %346 = arith.mulf %344, %345 : vector<8x8x10xf32>
    %cst_148 = arith.constant dense<0xFF800000> : vector<8x8xf32>
    %347 = vector.multi_reduction <maximumf>, %346, %cst_148 [2] : vector<8x8x10xf32> to vector<8x8xf32>
    %348 = vector.shape_cast %347 : vector<8x8xf32> to vector<8x8x1xf32>
    %349 = vector.broadcast %348 : vector<8x8x1xf32> to vector<8x8x10xf32>
    %350 = arith.subf %346, %349 : vector<8x8x10xf32>
    %351 = math.exp %350 : vector<8x8x10xf32>
    %cst_149 = arith.constant dense<0.000000e+00> : vector<8x8xf32>
    %352 = vector.multi_reduction <add>, %351, %cst_149 [2] : vector<8x8x10xf32> to vector<8x8xf32>
    %353 = vector.shape_cast %352 : vector<8x8xf32> to vector<8x8x1xf32>
    %354 = tpu.reciprocal %353 {approx = true} : vector<8x8x1xf32> -> vector<8x8x1xf32>
    %355 = vector.broadcast %354 : vector<8x8x1xf32> to vector<8x8x10xf32>
    %356 = arith.mulf %351, %355 : vector<8x8x10xf32>
    %cst_150 = arith.constant dense<0.000000e+00> : vector<8x8x8xf32>
    %357 = tpu.matmul %356, %343, %cst_150 {dimension_numbers = #tpu.dot_dimension_numbers<[2], [1], [1], [2], [0, 0, 0, 1, 1, 2], [0], [0]>} : vector<8x8x10xf32>, vector<8x10x8xf32>, vector<8x8x8xf32> -> vector<8x8x8xf32>
    %358 = vector.shape_cast %357 : vector<8x8x8xf32> to vector<2x4x8x8xf32>
    %359 = tpu.transpose %358, [0, 2, 1, 3] : vector<2x4x8x8xf32> -> vector<2x8x4x8xf32>
    %360 = vector.shape_cast %359 : vector<2x8x4x8xf32> to vector<16x32xf32>
    %c1_151 = arith.constant 1 : index
    %c0_152 = arith.constant 0 : index
    %c512_153 = arith.constant 512 : index
    %361 = vector.load %arg4[%c1_151, %c0_152, %c512_153] : memref<2x33x768xf32, #tpu.memory_space<vmem>>, vector<1x32x32xf32>
    %362 = vector.shape_cast %361 : vector<1x32x32xf32> to vector<32x32xf32>
    %cst_154 = arith.constant dense<0.000000e+00> : vector<16x32xf32>
    %363 = tpu.matmul %360, %362, %cst_154 {dimension_numbers = #tpu.dot_dimension_numbers<[1], [0], [0], [1], [0, 0, 1, 1], [], []>} : vector<16x32xf32>, vector<32x32xf32>, vector<16x32xf32> -> vector<16x32xf32>
    %c1_155 = arith.constant 1 : index
    %c32_156 = arith.constant 32 : index
    %c512_157 = arith.constant 512 : index
    %364 = vector.load %arg4[%c1_155, %c32_156, %c512_157] : memref<2x33x768xf32, #tpu.memory_space<vmem>>, vector<1x1x32xf32>
    %365 = vector.shape_cast %364 : vector<1x1x32xf32> to vector<1x32xf32>
    %366 = vector.broadcast %365 : vector<1x32xf32> to vector<16x32xf32>
    %367 = arith.addf %363, %366 : vector<16x32xf32>
    %368 = arith.addf %367, %318 : vector<16x32xf32>
    %c1_158 = arith.constant 1 : index
    %c1_159 = arith.constant 1 : index
    %c0_160 = arith.constant 0 : index
    %369 = vector.load %arg6[%c1_158, %c1_159, %c0_160] : memref<2x7x32xf32, #tpu.memory_space<vmem>>, vector<1x1x32xf32>
    %370 = vector.shape_cast %369 : vector<1x1x32xf32> to vector<1x32xf32>
    %c1_161 = arith.constant 1 : index
    %c4_162 = arith.constant 4 : index
    %c0_163 = arith.constant 0 : index
    %371 = vector.load %arg6[%c1_161, %c4_162, %c0_163] : memref<2x7x32xf32, #tpu.memory_space<vmem>>, vector<1x1x32xf32>
    %372 = vector.shape_cast %371 : vector<1x1x32xf32> to vector<1x32xf32>
    %cst_164 = arith.constant dense<0.000000e+00> : vector<16xf32>
    %373 = vector.multi_reduction <add>, %368, %cst_164 [1] : vector<16x32xf32> to vector<16xf32>
    %374 = vector.shape_cast %373 : vector<16xf32> to vector<16x1xf32>
    %cst_165 = arith.constant 3.200000e+01 : f32
    %375 = vector.broadcast %cst_165 : f32 to vector<16x1xf32>
    %376 = arith.divf %374, %375 : vector<16x1xf32>
    %377 = vector.broadcast %376 : vector<16x1xf32> to vector<16x32xf32>
    %378 = arith.subf %368, %377 : vector<16x32xf32>
    %379 = arith.mulf %378, %378 : vector<16x32xf32>
    %cst_166 = arith.constant dense<0.000000e+00> : vector<16xf32>
    %380 = vector.multi_reduction <add>, %379, %cst_166 [1] : vector<16x32xf32> to vector<16xf32>
    %381 = vector.shape_cast %380 : vector<16xf32> to vector<16x1xf32>
    %cst_167 = arith.constant 3.200000e+01 : f32
    %382 = vector.broadcast %cst_167 : f32 to vector<16x1xf32>
    %383 = arith.divf %381, %382 : vector<16x1xf32>
    %cst_168 = arith.constant 9.99999996E-13 : f32
    %384 = vector.broadcast %cst_168 : f32 to vector<16x1xf32>
    %385 = arith.addf %383, %384 : vector<16x1xf32>
    %386 = math.rsqrt %385 : vector<16x1xf32>
    %387 = vector.broadcast %386 : vector<16x1xf32> to vector<16x32xf32>
    %388 = arith.mulf %378, %387 : vector<16x32xf32>
    %389 = vector.broadcast %370 : vector<1x32xf32> to vector<16x32xf32>
    %390 = arith.mulf %388, %389 : vector<16x32xf32>
    %391 = vector.broadcast %372 : vector<1x32xf32> to vector<16x32xf32>
    %392 = arith.addf %390, %391 : vector<16x32xf32>
    %393 = vector.broadcast %7 : vector<16x1xf32> to vector<16x32xf32>
    %394 = arith.mulf %392, %393 : vector<16x32xf32>
    %c1_169 = arith.constant 1 : index
    %c0_170 = arith.constant 0 : index
    %c640_171 = arith.constant 640 : index
    %395 = vector.load %arg4[%c1_169, %c0_170, %c640_171] : memref<2x33x768xf32, #tpu.memory_space<vmem>>, vector<1x32x64xf32>
    %396 = vector.shape_cast %395 : vector<1x32x64xf32> to vector<32x64xf32>
    %cst_172 = arith.constant dense<0.000000e+00> : vector<16x64xf32>
    %397 = tpu.matmul %394, %396, %cst_172 {dimension_numbers = #tpu.dot_dimension_numbers<[1], [0], [0], [1], [0, 0, 1, 1], [], []>} : vector<16x32xf32>, vector<32x64xf32>, vector<16x64xf32> -> vector<16x64xf32>
    %c1_173 = arith.constant 1 : index
    %c32_174 = arith.constant 32 : index
    %c640_175 = arith.constant 640 : index
    %398 = vector.load %arg4[%c1_173, %c32_174, %c640_175] : memref<2x33x768xf32, #tpu.memory_space<vmem>>, vector<1x1x64xf32>
    %399 = vector.shape_cast %398 : vector<1x1x64xf32> to vector<1x64xf32>
    %400 = vector.broadcast %399 : vector<1x64xf32> to vector<16x64xf32>
    %401 = arith.addf %397, %400 : vector<16x64xf32>
    %402 = arith.mulf %401, %401 : vector<16x64xf32>
    %403 = arith.mulf %401, %402 : vector<16x64xf32>
    %cst_176 = arith.constant 4.471500e-02 : f32
    %404 = vector.broadcast %cst_176 : f32 to vector<16x64xf32>
    %405 = arith.mulf %404, %403 : vector<16x64xf32>
    %406 = arith.addf %401, %405 : vector<16x64xf32>
    %cst_177 = arith.constant 0.797884583 : f32
    %407 = vector.broadcast %cst_177 : f32 to vector<16x64xf32>
    %408 = arith.mulf %407, %406 : vector<16x64xf32>
    %409 = math.tanh %408 : vector<16x64xf32>
    %cst_178 = arith.constant 1.000000e+00 : f32
    %410 = vector.broadcast %cst_178 : f32 to vector<16x64xf32>
    %411 = arith.addf %410, %409 : vector<16x64xf32>
    %cst_179 = arith.constant 5.000000e-01 : f32
    %412 = vector.broadcast %cst_179 : f32 to vector<16x64xf32>
    %413 = arith.mulf %412, %411 : vector<16x64xf32>
    %414 = arith.mulf %401, %413 : vector<16x64xf32>
    %c1_180 = arith.constant 1 : index
    %c0_181 = arith.constant 0 : index
    %c0_182 = arith.constant 0 : index
    %415 = vector.load %arg5[%c1_180, %c0_181, %c0_182] : memref<2x64x32xf32, #tpu.memory_space<vmem>>, vector<1x64x32xf32>
    %416 = vector.shape_cast %415 : vector<1x64x32xf32> to vector<64x32xf32>
    %cst_183 = arith.constant dense<0.000000e+00> : vector<16x32xf32>
    %417 = tpu.matmul %414, %416, %cst_183 {dimension_numbers = #tpu.dot_dimension_numbers<[1], [0], [0], [1], [0, 0, 1, 1], [], []>} : vector<16x64xf32>, vector<64x32xf32>, vector<16x32xf32> -> vector<16x32xf32>
    %c1_184 = arith.constant 1 : index
    %c6_185 = arith.constant 6 : index
    %c0_186 = arith.constant 0 : index
    %418 = vector.load %arg6[%c1_184, %c6_185, %c0_186] : memref<2x7x32xf32, #tpu.memory_space<vmem>>, vector<1x1x32xf32>
    %419 = vector.shape_cast %418 : vector<1x1x32xf32> to vector<1x32xf32>
    %420 = vector.broadcast %419 : vector<1x32xf32> to vector<16x32xf32>
    %421 = arith.addf %417, %420 : vector<16x32xf32>
    %422 = arith.addf %421, %394 : vector<16x32xf32>
    %c1_187 = arith.constant 1 : index
    %c2_188 = arith.constant 2 : index
    %c0_189 = arith.constant 0 : index
    %423 = vector.load %arg6[%c1_187, %c2_188, %c0_189] : memref<2x7x32xf32, #tpu.memory_space<vmem>>, vector<1x1x32xf32>
    %424 = vector.shape_cast %423 : vector<1x1x32xf32> to vector<1x32xf32>
    %c1_190 = arith.constant 1 : index
    %c5_191 = arith.constant 5 : index
    %c0_192 = arith.constant 0 : index
    %425 = vector.load %arg6[%c1_190, %c5_191, %c0_192] : memref<2x7x32xf32, #tpu.memory_space<vmem>>, vector<1x1x32xf32>
    %426 = vector.shape_cast %425 : vector<1x1x32xf32> to vector<1x32xf32>
    %cst_193 = arith.constant dense<0.000000e+00> : vector<16xf32>
    %427 = vector.multi_reduction <add>, %422, %cst_193 [1] : vector<16x32xf32> to vector<16xf32>
    %428 = vector.shape_cast %427 : vector<16xf32> to vector<16x1xf32>
    %cst_194 = arith.constant 3.200000e+01 : f32
    %429 = vector.broadcast %cst_194 : f32 to vector<16x1xf32>
    %430 = arith.divf %428, %429 : vector<16x1xf32>
    %431 = vector.broadcast %430 : vector<16x1xf32> to vector<16x32xf32>
    %432 = arith.subf %422, %431 : vector<16x32xf32>
    %433 = arith.mulf %432, %432 : vector<16x32xf32>
    %cst_195 = arith.constant dense<0.000000e+00> : vector<16xf32>
    %434 = vector.multi_reduction <add>, %433, %cst_195 [1] : vector<16x32xf32> to vector<16xf32>
    %435 = vector.shape_cast %434 : vector<16xf32> to vector<16x1xf32>
    %cst_196 = arith.constant 3.200000e+01 : f32
    %436 = vector.broadcast %cst_196 : f32 to vector<16x1xf32>
    %437 = arith.divf %435, %436 : vector<16x1xf32>
    %cst_197 = arith.constant 9.99999996E-13 : f32
    %438 = vector.broadcast %cst_197 : f32 to vector<16x1xf32>
    %439 = arith.addf %437, %438 : vector<16x1xf32>
    %440 = math.rsqrt %439 : vector<16x1xf32>
    %441 = vector.broadcast %440 : vector<16x1xf32> to vector<16x32xf32>
    %442 = arith.mulf %432, %441 : vector<16x32xf32>
    %443 = vector.broadcast %424 : vector<1x32xf32> to vector<16x32xf32>
    %444 = arith.mulf %442, %443 : vector<16x32xf32>
    %445 = vector.broadcast %426 : vector<1x32xf32> to vector<16x32xf32>
    %446 = arith.addf %444, %445 : vector<16x32xf32>
    %447 = vector.broadcast %7 : vector<16x1xf32> to vector<16x32xf32>
    %448 = arith.mulf %446, %447 : vector<16x32xf32>
    %c1_198 = arith.constant 1 : index
    %c0_199 = arith.constant 0 : index
    %c0_200 = arith.constant 0 : index
    %449 = vector.load %arg7[%c1_198, %c0_199, %c0_200] : memref<2x16x32xf32, #tpu.memory_space<vmem>>, vector<1x16x32xf32>
    %450 = vector.shape_cast %449 : vector<1x16x32xf32> to vector<16x32xf32>
    %451 = vector.shape_cast %448 : vector<16x32xf32> to vector<1x16x32xf32>
    tpu.vector_store %arg7[%c1_198, %c0_199, %c0_200], %451 {strides = array<i32>} : memref<2x16x32xf32, #tpu.memory_space<vmem>>, vector<1x16x32xf32>,
    return
  }
}

</mosaic_0001>

<llo_original>
// kernel: bert_decoder_forward.1
$region0: #{bert_decoder_forward.1}
  #allocation0 [shape = 'u32[]', space=smem, size = 0x4, offset = 0x4, fixed_abs, tag = 'smem constant byte address 0x4 - core index']
  #allocation1 [shape = 'u32[144,128]{1,0:T(1,128)}', space=vmem, size = 0x12000, scoped, tag = 'internal scratch']
  %s0 = inlined_call_operand.vmem [shape: f32[50,32], index: 0, kind: input, shape index: {}]
  %s1 = inlined_call_operand.vmem [shape: f32[10,32], index: 1, kind: input, shape index: {}]
  %s2 = inlined_call_operand.vmem [shape: f32[20,32], index: 2, kind: input, shape index: {}]
  %s3 = inlined_call_operand.vmem [shape: f32[2,8,10], index: 3, kind: input, shape index: {}]
  %s4 = inlined_call_operand.vmem [shape: f32[2,33,768], index: 4, kind: input, shape index: {}]
  %s5 = inlined_call_operand.vmem [shape: f32[2,64,32], index: 5, kind: input, shape index: {}]
  %s6 = inlined_call_operand.vmem [shape: f32[2,7,32], index: 6, kind: input, shape index: {}]
  %s7 = inlined_call_operand.vmem [shape: f32[2,16,32], index: 7, kind: output, shape index: {}]
  %s8 = sld [smem:[#allocation0]]
  $region38: #{bert_decoder_forward.1} parent=0
    _
  %s10 = ssub.s32 1, %s8
  %s11 = scalar_select 0, %s10, %s8
  // Predicated region
  $region2: #{bert_decoder_forward.1} parent=0 // pred_check
    _
  $region3: #{bert_decoder_forward.1} parent=0 // pred_check_branch
    %13 = sbr.rel (0) target = $region5
  $region4: #{bert_decoder_forward.1} parent=0 // pred_region
    _
  $region5: #{bert_decoder_forward.1} parent=0 // pred_fallthru
    _
  // Predicated region
  $region6: #{bert_decoder_forward.1} parent=0 // pred_check
    _
  $region7: #{bert_decoder_forward.1} parent=0 // pred_check_branch
    %15 = sbr.rel (0) target = $region9
  $region8: #{bert_decoder_forward.1} parent=0 // pred_region
    _
  $region9: #{bert_decoder_forward.1} parent=0 // pred_fallthru
    _
  // Predicated region
  $region10: #{bert_decoder_forward.1} parent=0 // pred_check
    _
  $region11: #{bert_decoder_forward.1} parent=0 // pred_check_branch
    %17 = sbr.rel (0) target = $region13
  $region12: #{bert_decoder_forward.1} parent=0 // pred_region
    _
  $region13: #{bert_decoder_forward.1} parent=0 // pred_fallthru
    _
  // Predicated region
  $region14: #{bert_decoder_forward.1} parent=0 // pred_check
    _
  $region15: #{bert_decoder_forward.1} parent=0 // pred_check_branch
    %19 = sbr.rel (0) target = $region17
  $region16: #{bert_decoder_forward.1} parent=0 // pred_region
    _
  $region17: #{bert_decoder_forward.1} parent=0 // pred_fallthru
    _
  // Predicated region
  $region18: #{bert_decoder_forward.1} parent=0 // pred_check
    _
  $region19: #{bert_decoder_forward.1} parent=0 // pred_check_branch
    %21 = sbr.rel (0) target = $region21
  $region20: #{bert_decoder_forward.1} parent=0 // pred_region
    _
  $region21: #{bert_decoder_forward.1} parent=0 // pred_fallthru
    _
  // Predicated region
  $region22: #{bert_decoder_forward.1} parent=0 // pred_check
    _
  $region23: #{bert_decoder_forward.1} parent=0 // pred_check_branch
    %23 = sbr.rel (0) target = $region25
  $region24: #{bert_decoder_forward.1} parent=0 // pred_region
    _
  $region25: #{bert_decoder_forward.1} parent=0 // pred_fallthru
    _
  // Predicated region
  $region26: #{bert_decoder_forward.1} parent=0 // pred_check
    _
  $region27: #{bert_decoder_forward.1} parent=0 // pred_check_branch
    %25 = sbr.rel (0) target = $region29
  $region28: #{bert_decoder_forward.1} parent=0 // pred_region
    _
  $region29: #{bert_decoder_forward.1} parent=0 // pred_fallthru
    _
  %v26 = vld [vmem:[%s3] sm:$0xff]
  %v27 = vld [vmem:[%s3 + $0x8] sm:$0xff]
  %v28 = vcvt.f32.s32.to.zero.pseudo %v26
  %v29 = vcvt.f32.s32.to.zero.pseudo %v27
  %v30 = vlaneseq
  %v31 = vand.u32 %v30, 127
  %32 = vset.pattern.permute.xlu0 9
  %33 = vperm.xlu0 %32, %v28
  %v34 = vpop.permute.xlu0 %33
  %35 = vset.pattern.permute.xlu0 9
  %36 = vperm.xlu0 %35, %v29
  %v37 = vpop.permute.xlu0 %36
  %vm38 = vcmp.eq.s32.totalorder %v31, %v34
  %vm39 = vcmp.eq.s32.totalorder %v31, %v37
  %v40 = vsel %vm38, 1, 0
  %v41 = vsel %vm39, 1, 0
  %v42 = vcvt.s32.f32 %v40
  %v43 = vcvt.s32.f32 %v41
  %v44 = vld [vmem:[%s0] sm:$0xff]
  %v45 = vld [vmem:[%s0 + $0x8] sm:$0xff]
  %v46 = vld [vmem:[%s0 + $0x10] sm:$0xff]
  %v47 = vld [vmem:[%s0 + $0x18] sm:$0xff]
  %v48 = vld [vmem:[%s0 + $0x20] sm:$0xff]
  %v49 = vld [vmem:[%s0 + $0x28] sm:$0xff]
  %v50 = vld [vmem:[%s0 + $0x30] sm:$0x3]
  %v51 = vld [vmem:[%s1] sm:$0xff]
  %vm52 = vcmask 408576
  %v54 = vsel %vm52, %v42, 0
  %v57 = vsel %vm52, %v43, 0
  %vm59 = vcmask 1041408
  %v61 = vsel %vm59, %v50, 0
  %63 = vmatprep.subr.mxu0 0.0
  %64 = vmatpush1.msra.mxu0 %v44
  %65 = vmatprep.subr.mxu0 0.0
  %66 = vmatpush1.msra.mxu0 %v45
  %67 = vmatprep.subr.mxu0 0.0
  %68 = vmatpush1.msra.mxu0 %v46
  %69 = vmatprep.subr.mxu0 0.0
  %70 = vmatpush1.msra.mxu0 %v47
  %71 = vmatprep.subr.mxu0 0.0
  %72 = vmatpush1.msra.mxu0 %v48
  %73 = vmatprep.subr.mxu0 0.0
  %74 = vmatpush1.msra.mxu0 %v49
  %75 = vmatprep.subr.mxu0 0.0
  %76 = vmatpush1.msra.mxu0 %v61
  %77 = vmatprep.subr.mxu0 0.0
  %78 = vmatpush1.msra.mxu0 0.0
  %79 = vmatprep.subr.mxu0 0.0
  %80 = vmatpush1.msra.mxu0 0.0
  %81 = vmatprep.subr.mxu0 0.0
  %82 = vmatpush1.msra.mxu0 0.0
  %83 = vmatprep.subr.mxu0 0.0
  %84 = vmatpush1.msra.mxu0 0.0
  %85 = vmatprep.subr.mxu0 0.0
  %86 = vmatpush1.msra.mxu0 0.0
  %87 = vmatprep.subr.mxu0 0.0
  %88 = vmatpush1.msra.mxu0 0.0
  %89 = vmatprep.subr.mxu0 0.0
  %90 = vmatpush1.msra.mxu0 0.0
  %91 = vmatprep.subr.mxu0 0.0
  %92 = vmatpush1.msra.mxu0 0.0
  %93 = vmatprep.subr.mxu0 0.0
  %94 = vmatpush1.msra.mxu0 0.0
  %95 = vmatprep.subr.mxu0 0.0
  %96 = vmatpush1.msra.mxu0 0.0
  %97 = vmatprep.subr.mxu0 0.0
  %98 = vmatpush1.msra.mxu0 0.0
  %99 = vmatprep.subr.mxu0 0.0
  %100 = vmatpush1.msra.mxu0 0.0
  %101 = vmatprep.subr.mxu0 0.0
  %102 = vmatpush1.msra.mxu0 0.0
  %103 = vmatprep.subr.mxu0 0.0
  %104 = vmatpush1.msra.mxu0 0.0
  %105 = vmatprep.subr.mxu0 0.0
  %106 = vmatpush1.msra.mxu0 0.0
  %107 = vmatprep.subr.mxu0 0.0
  %108 = vmatpush1.msra.mxu0 0.0
  %109 = vmatprep.subr.mxu0 0.0
  %110 = vmatpush1.msra.mxu0 0.0
  %111 = vmatprep.subr.mxu0 0.0
  %112 = vmatpush1.msra.mxu0 0.0
  %113 = vmatprep.subr.mxu0 0.0
  %114 = vmatpush1.msra.mxu0 0.0
  %115 = vmatprep.subr.mxu0 0.0
  %116 = vmatpush1.msra.mxu0 0.0
  %117 = vmatprep.subr.mxu0 0.0
  %118 = vmatpush1.msra.mxu0 0.0
  %119 = vmatprep.subr.mxu0 0.0
  %120 = vmatpush1.msra.mxu0 0.0
  %121 = vmatprep.subr.mxu0 0.0
  %122 = vmatpush1.msra.mxu0 0.0
  %123 = vmatprep.subr.mxu0 0.0
  %124 = vmatpush1.msra.mxu0 0.0
  %125 = vmatprep.subr.mxu0 0.0
  %126 = vmatpush1.msra.mxu0 0.0
  %127 = vmatprep.mubr.f32.mxu0 0.0
  %128 = vmatmul.mubr.f32.gmra.mrb[0].mxu0 %v54
  %v129 = vpop.f32.mrb[0].mxu0
  %v130 = vadd.f32 %v51, %v129
  %v131 = vpop.f32.mrb[0].mxu0
  %132 = vmatprep.mubr.f32.mxu0 0.0
  %133 = vmatmul.mubr.f32.gmra.mrb[0].mxu0 %v57
  %v134 = vpop.f32.mrb[0].mxu0
  %v135 = vadd.f32 %v51, %v134
  %v136 = vpop.f32.mrb[0].mxu0
  %137 = vdwg.mxu0
  %v138 = vld [vmem:[%s1 + $0x8] sm:$0x1]
  %v139 = vld [vmem:[%s1 + $0x9] sm:$0x1]
  %vm140 = vcmask 261120
  %v141 = vsel %vm140, %v130, 0.0
  %142 = vadd.xlane.f32.xlu0 %v141
  %v143 = vpop.xlane.xlu0 %142
  %v144 = vsel %vm140, %v135, 0.0
  %145 = vadd.xlane.f32.xlu0 %v144
  %v146 = vpop.xlane.xlu0 %145
  %v147 = vrcp.pop 32.0
  %v148 = vmul.f32 %v143, %v147
  %v149 = vmul.f32 %v146, %v147
  %v150 = vsub.f32 %v130, %v148
  %v151 = vsub.f32 %v135, %v149
  %v152 = vmul.f32 %v150, %v150
  %v153 = vmul.f32 %v151, %v151
  %v154 = vsel %vm140, %v152, 0.0
  %155 = vadd.xlane.f32.xlu0 %v154
  %v156 = vpop.xlane.xlu0 %155
  %v157 = vsel %vm140, %v153, 0.0
  %158 = vadd.xlane.f32.xlu0 %v157
  %v159 = vpop.xlane.xlu0 %158
  %v160 = vmul.f32 %v156, %v147
  %v161 = vmul.f32 %v159, %v147
  %v162 = vadd.f32 %v160, 1e-12
  %v163 = vadd.f32 %v161, 1e-12
  %v164 = vrsqrt.pop %v162
  %v165 = vrsqrt.pop %v163
  %v166 = vmul.f32 %v150, %v164
  %v167 = vmul.f32 %v151, %v165
  %v168 = vlaneseq
  %v169 = vshrl.u32 %v168, 7
  %v170 = vsub.s32 0, %v169
  %v171 = vrot.slane %v138, %v170
  %v172 = vmul.f32 %v166, %v171
  %v173 = vmul.f32 %v167, %v171
  %v174 = vlaneseq
  %v175 = vshrl.u32 %v174, 7
  %v176 = vsub.s32 0, %v175
  %v177 = vrot.slane %v139, %v176
  %v178 = vadd.f32 %v172, %v177
  %v179 = vadd.f32 %v173, %v177
  %v180 = vld [vmem:[%s2] sm:$0xff]
  %v181 = vld [vmem:[%s2 + $0x8] sm:$0xff]
  %v182 = vld [vmem:[%s2 + $0x10] sm:$0xf]
  %v183 = vld [vmem:[%s4] sm:$0xff]
  %v184 = vld [vmem:[%s4 + $0x30] sm:$0xff]
  %v185 = vld [vmem:[%s4 + $0x60] sm:$0xff]
  %v186 = vld [vmem:[%s4 + $0x90] sm:$0xff]
  %v187 = vld [vmem:[%s4 + $0xc0] ss:$0 sm:$0xff]
  %v189 = vsel %vm140, %v178, 0
  %v192 = vsel %vm140, %v179, 0
  %194 = vmatprep.subr.mxu0 0.0
  %195 = vmatpush1.msra.mxu0 %v183
  %196 = vmatprep.subr.mxu0 0.0
  %197 = vmatpush1.msra.mxu0 %v184
  %198 = vmatprep.subr.mxu0 0.0
  %199 = vmatpush1.msra.mxu0 %v185
  %200 = vmatprep.subr.mxu0 0.0
  %201 = vmatpush1.msra.mxu0 %v186
  %202 = vmatprep.subr.mxu0 0.0
  %203 = vmatpush1.msra.mxu0 0.0
  %204 = vmatprep.subr.mxu0 0.0
  %205 = vmatpush1.msra.mxu0 0.0
  %206 = vmatprep.subr.mxu0 0.0
  %207 = vmatpush1.msra.mxu0 0.0
  %208 = vmatprep.subr.mxu0 0.0
  %209 = vmatpush1.msra.mxu0 0.0
  %210 = vmatprep.subr.mxu0 0.0
  %211 = vmatpush1.msra.mxu0 0.0
  %212 = vmatprep.subr.mxu0 0.0
  %213 = vmatpush1.msra.mxu0 0.0
  %214 = vmatprep.subr.mxu0 0.0
  %215 = vmatpush1.msra.mxu0 0.0
  %216 = vmatprep.subr.mxu0 0.0
  %217 = vmatpush1.msra.mxu0 0.0
  %218 = vmatprep.subr.mxu0 0.0
  %219 = vmatpush1.msra.mxu0 0.0
  %220 = vmatprep.subr.mxu0 0.0
  %221 = vmatpush1.msra.mxu0 0.0
  %222 = vmatprep.subr.mxu0 0.0
  %223 = vmatpush1.msra.mxu0 0.0
  %224 = vmatprep.subr.mxu0 0.0
  %225 = vmatpush1.msra.mxu0 0.0
  %226 = vmatprep.subr.mxu0 0.0
  %227 = vmatpush1.msra.mxu0 0.0
  %228 = vmatprep.subr.mxu0 0.0
  %229 = vmatpush1.msra.mxu0 0.0
  %230 = vmatprep.subr.mxu0 0.0
  %231 = vmatpush1.msra.mxu0 0.0
  %232 = vmatprep.subr.mxu0 0.0
  %233 = vmatpush1.msra.mxu0 0.0
  %234 = vmatprep.subr.mxu0 0.0
  %235 = vmatpush1.msra.mxu0 0.0
  %236 = vmatprep.subr.mxu0 0.0
  %237 = vmatpush1.msra.mxu0 0.0
  %238 = vmatprep.subr.mxu0 0.0
  %239 = vmatpush1.msra.mxu0 0.0
  %240 = vmatprep.subr.mxu0 0.0
  %241 = vmatpush1.msra.mxu0 0.0
  %242 = vmatprep.subr.mxu0 0.0
  %243 = vmatpush1.msra.mxu0 0.0
  %244 = vmatprep.subr.mxu0 0.0
  %245 = vmatpush1.msra.mxu0 0.0
  %246 = vmatprep.subr.mxu0 0.0
  %247 = vmatpush1.msra.mxu0 0.0
  %248 = vmatprep.subr.mxu0 0.0
  %249 = vmatpush1.msra.mxu0 0.0
  %250 = vmatprep.subr.mxu0 0.0
  %251 = vmatpush1.msra.mxu0 0.0
  %252 = vmatprep.subr.mxu0 0.0
  %253 = vmatpush1.msra.mxu0 0.0
  %254 = vmatprep.subr.mxu0 0.0
  %255 = vmatpush1.msra.mxu0 0.0
  %256 = vmatprep.subr.mxu0 0.0
  %257 = vmatpush1.msra.mxu0 0.0
  %258 = vmatprep.mubr.f32.mxu0 0.0
  %259 = vmatmul.mubr.f32.gmra.mrb[0].mxu0 %v189
  %v260 = vpop.f32.mrb[0].mxu0
  %v261 = vadd.f32 %v187, %v260
  %v262 = vpop.f32.mrb[0].mxu0
  %263 = vmatprep.mubr.f32.mxu0 0.0
  %264 = vmatmul.mubr.f32.gmra.mrb[0].mxu0 %v192
  %v265 = vpop.f32.mrb[0].mxu0
  %v266 = vadd.f32 %v187, %v265
  %v267 = vpop.f32.mrb[0].mxu0
  %268 = vdwg.mxu0
  %271 = vrot.lane.b32.xlu0 %v261, 120
  %v272 = vpop.permute.xlu0 %271
  %273 = vrot.lane.b32.xlu0 %v266, 120
  %v274 = vpop.permute.xlu0 %273
  %277 = vrot.lane.b32.xlu0 %v261, 112
  %v278 = vpop.permute.xlu0 %277
  %279 = vrot.lane.b32.xlu0 %v266, 112
  %v280 = vpop.permute.xlu0 %279
  %283 = vrot.lane.b32.xlu0 %v261, 104
  %v284 = vpop.permute.xlu0 %283
  %285 = vrot.lane.b32.xlu0 %v266, 104
  %v286 = vpop.permute.xlu0 %285
  %v289 = vcombine.low %v261, %v278
  %v290 = vcombine.high %v261, %v278
  %v292 = vunpack.c.l.s4 1983009808
  %v293 = vunpack.c.0.s8 %v292
  %v294 = vlaneseq
  %v295 = vshrl.u32 %v294, 7
  %v296 = vsub.s32 %v293, %v295
  %v297 = vrot.slane %v289, %v296
  %v299 = vunpack.c.l.s4 1983009808
  %v300 = vunpack.c.0.s8 %v299
  %v301 = vlaneseq
  %v302 = vshrl.u32 %v301, 7
  %v303 = vsub.s32 %v300, %v302
  %v304 = vrot.slane %v290, %v303
  %v305 = vcombine.low %v272, %v284
  %v306 = vcombine.high %v272, %v284
  %v308 = vunpack.c.l.s4 1983009808
  %v309 = vunpack.c.0.s8 %v308
  %v310 = vlaneseq
  %v311 = vshrl.u32 %v310, 7
  %v312 = vsub.s32 %v309, %v311
  %v313 = vrot.slane %v305, %v312
  %v315 = vunpack.c.l.s4 1983009808
  %v316 = vunpack.c.0.s8 %v315
  %v317 = vlaneseq
  %v318 = vshrl.u32 %v317, 7
  %v319 = vsub.s32 %v316, %v318
  %v320 = vrot.slane %v306, %v319
  %v321 = vcombine.low %v297, %v313
  %v322 = vcombine.high %v297, %v313
  %v324 = vunpack.c.l.s4 1934713408
  %v325 = vunpack.c.0.s8 %v324
  %v326 = vlaneseq
  %v327 = vshrl.u32 %v326, 7
  %v328 = vsub.s32 %v325, %v327
  %v329 = vrot.slane %v321, %v328
  %v331 = vunpack.c.l.s4 1934713408
  %v332 = vunpack.c.0.s8 %v331
  %v333 = vlaneseq
  %v334 = vshrl.u32 %v333, 7
  %v335 = vsub.s32 %v332, %v334
  %v336 = vrot.slane %v322, %v335
  %v337 = vcombine.low %v304, %v320
  %v338 = vcombine.high %v304, %v320
  %v340 = vunpack.c.l.s4 1934713408
  %v341 = vunpack.c.0.s8 %v340
  %v342 = vlaneseq
  %v343 = vshrl.u32 %v342, 7
  %v344 = vsub.s32 %v341, %v343
  %v345 = vrot.slane %v337, %v344
  %v347 = vunpack.c.l.s4 1934713408
  %v348 = vunpack.c.0.s8 %v347
  %v349 = vlaneseq
  %v350 = vshrl.u32 %v349, 7
  %v351 = vsub.s32 %v348, %v350
  %v352 = vrot.slane %v338, %v351
  %v353 = vcombine.high %v329, 0.0
  %v354 = vcombine.high %v336, 0.0
  %v355 = vcombine.high %v345, 0.0
  %v356 = vcombine.high %v352, 0.0
  %v357 = vcombine.low %v266, %v280
  %v358 = vcombine.high %v266, %v280
  %v360 = vunpack.c.l.s4 1983009808
  %v361 = vunpack.c.0.s8 %v360
  %v362 = vlaneseq
  %v363 = vshrl.u32 %v362, 7
  %v364 = vsub.s32 %v361, %v363
  %v365 = vrot.slane %v357, %v364
  %v367 = vunpack.c.l.s4 1983009808
  %v368 = vunpack.c.0.s8 %v367
  %v369 = vlaneseq
  %v370 = vshrl.u32 %v369, 7
  %v371 = vsub.s32 %v368, %v370
  %v372 = vrot.slane %v358, %v371
  %v373 = vcombine.low %v274, %v286
  %v374 = vcombine.high %v274, %v286
  %v376 = vunpack.c.l.s4 1983009808
  %v377 = vunpack.c.0.s8 %v376
  %v378 = vlaneseq
  %v379 = vshrl.u32 %v378, 7
  %v380 = vsub.s32 %v377, %v379
  %v381 = vrot.slane %v373, %v380
  %v383 = vunpack.c.l.s4 1983009808
  %v384 = vunpack.c.0.s8 %v383
  %v385 = vlaneseq
  %v386 = vshrl.u32 %v385, 7
  %v387 = vsub.s32 %v384, %v386
  %v388 = vrot.slane %v374, %v387
  %v389 = vcombine.low %v365, %v381
  %v390 = vcombine.high %v365, %v381
  %v392 = vunpack.c.l.s4 1934713408
  %v393 = vunpack.c.0.s8 %v392
  %v394 = vlaneseq
  %v395 = vshrl.u32 %v394, 7
  %v396 = vsub.s32 %v393, %v395
  %v397 = vrot.slane %v389, %v396
  %v399 = vunpack.c.l.s4 1934713408
  %v400 = vunpack.c.0.s8 %v399
  %v401 = vlaneseq
  %v402 = vshrl.u32 %v401, 7
  %v403 = vsub.s32 %v400, %v402
  %v404 = vrot.slane %v390, %v403
  %v405 = vcombine.low %v372, %v388
  %v406 = vcombine.high %v372, %v388
  %v408 = vunpack.c.l.s4 1934713408
  %v409 = vunpack.c.0.s8 %v408
  %v410 = vlaneseq
  %v411 = vshrl.u32 %v410, 7
  %v412 = vsub.s32 %v409, %v411
  %v413 = vrot.slane %v405, %v412
  %v415 = vunpack.c.l.s4 1934713408
  %v416 = vunpack.c.0.s8 %v415
  %v417 = vlaneseq
  %v418 = vshrl.u32 %v417, 7
  %v419 = vsub.s32 %v416, %v418
  %v420 = vrot.slane %v406, %v419
  %v421 = vcombine.high %v397, 0.0
  %v422 = vcombine.high %v404, 0.0
  %v423 = vcombine.high %v413, 0.0
  %v424 = vcombine.high %v420, 0.0
  %v425 = vcombine.low %v329, %v336
  %v427 = vunpack.c.l.s4 1983009808
  %v428 = vunpack.c.0.s8 %v427
  %v429 = vlaneseq
  %v430 = vshrl.u32 %v429, 7
  %v431 = vsub.s32 %v428, %v430
  %v432 = vrot.slane %v425, %v431
  %v433 = vcombine.low %v353, %v354
  %v435 = vunpack.c.l.s4 1983009808
  %v436 = vunpack.c.0.s8 %v435
  %v437 = vlaneseq
  %v438 = vshrl.u32 %v437, 7
  %v439 = vsub.s32 %v436, %v438
  %v440 = vrot.slane %v433, %v439
  %v441 = vcombine.low %v345, %v352
  %v443 = vunpack.c.l.s4 1983009808
  %v444 = vunpack.c.0.s8 %v443
  %v445 = vlaneseq
  %v446 = vshrl.u32 %v445, 7
  %v447 = vsub.s32 %v444, %v446
  %v448 = vrot.slane %v441, %v447
  %v449 = vcombine.low %v355, %v356
  %v451 = vunpack.c.l.s4 1983009808
  %v452 = vunpack.c.0.s8 %v451
  %v453 = vlaneseq
  %v454 = vshrl.u32 %v453, 7
  %v455 = vsub.s32 %v452, %v454
  %v456 = vrot.slane %v449, %v455
  %v457 = vcombine.low %v432, %v440
  %v458 = vcombine.high %v432, %v440
  %v460 = vunpack.c.l.s4 1934713408
  %v461 = vunpack.c.0.s8 %v460
  %v462 = vlaneseq
  %v463 = vshrl.u32 %v462, 7
  %v464 = vsub.s32 %v461, %v463
  %v465 = vrot.slane %v457, %v464
  %v467 = vunpack.c.l.s4 1934713408
  %v468 = vunpack.c.0.s8 %v467
  %v469 = vlaneseq
  %v470 = vshrl.u32 %v469, 7
  %v471 = vsub.s32 %v468, %v470
  %v472 = vrot.slane %v458, %v471
  %v473 = vcombine.low %v448, %v456
  %v474 = vcombine.high %v448, %v456
  %v476 = vunpack.c.l.s4 1934713408
  %v477 = vunpack.c.0.s8 %v476
  %v478 = vlaneseq
  %v479 = vshrl.u32 %v478, 7
  %v480 = vsub.s32 %v477, %v479
  %v481 = vrot.slane %v473, %v480
  %v483 = vunpack.c.l.s4 1934713408
  %v484 = vunpack.c.0.s8 %v483
  %v485 = vlaneseq
  %v486 = vshrl.u32 %v485, 7
  %v487 = vsub.s32 %v484, %v486
  %v488 = vrot.slane %v474, %v487
  %v489 = vcombine.low %v465, %v481
  %v490 = vcombine.high %v465, %v481
  %v491 = vcombine.low %v472, %v488
  %v492 = vcombine.high %v472, %v488
  %v493 = vcombine.low %v397, %v404
  %v495 = vunpack.c.l.s4 1983009808
  %v496 = vunpack.c.0.s8 %v495
  %v497 = vlaneseq
  %v498 = vshrl.u32 %v497, 7
  %v499 = vsub.s32 %v496, %v498
  %v500 = vrot.slane %v493, %v499
  %v501 = vcombine.low %v421, %v422
  %v503 = vunpack.c.l.s4 1983009808
  %v504 = vunpack.c.0.s8 %v503
  %v505 = vlaneseq
  %v506 = vshrl.u32 %v505, 7
  %v507 = vsub.s32 %v504, %v506
  %v508 = vrot.slane %v501, %v507
  %v509 = vcombine.low %v413, %v420
  %v511 = vunpack.c.l.s4 1983009808
  %v512 = vunpack.c.0.s8 %v511
  %v513 = vlaneseq
  %v514 = vshrl.u32 %v513, 7
  %v515 = vsub.s32 %v512, %v514
  %v516 = vrot.slane %v509, %v515
  %v517 = vcombine.low %v423, %v424
  %v519 = vunpack.c.l.s4 1983009808
  %v520 = vunpack.c.0.s8 %v519
  %v521 = vlaneseq
  %v522 = vshrl.u32 %v521, 7
  %v523 = vsub.s32 %v520, %v522
  %v524 = vrot.slane %v517, %v523
  %v525 = vcombine.low %v500, %v508
  %v526 = vcombine.high %v500, %v508
  %v528 = vunpack.c.l.s4 1934713408
  %v529 = vunpack.c.0.s8 %v528
  %v530 = vlaneseq
  %v531 = vshrl.u32 %v530, 7
  %v532 = vsub.s32 %v529, %v531
  %v533 = vrot.slane %v525, %v532
  %v535 = vunpack.c.l.s4 1934713408
  %v536 = vunpack.c.0.s8 %v535
  %v537 = vlaneseq
  %v538 = vshrl.u32 %v537, 7
  %v539 = vsub.s32 %v536, %v538
  %v540 = vrot.slane %v526, %v539
  %v541 = vcombine.low %v516, %v524
  %v542 = vcombine.high %v516, %v524
  %v544 = vunpack.c.l.s4 1934713408
  %v545 = vunpack.c.0.s8 %v544
  %v546 = vlaneseq
  %v547 = vshrl.u32 %v546, 7
  %v548 = vsub.s32 %v545, %v547
  %v549 = vrot.slane %v541, %v548
  %v551 = vunpack.c.l.s4 1934713408
  %v552 = vunpack.c.0.s8 %v551
  %v553 = vlaneseq
  %v554 = vshrl.u32 %v553, 7
  %v555 = vsub.s32 %v552, %v554
  %v556 = vrot.slane %v542, %v555
  %v557 = vcombine.low %v533, %v549
  %v558 = vcombine.high %v533, %v549
  %v559 = vcombine.low %v540, %v556
  %v560 = vcombine.high %v540, %v556
  %561 = vrot.lane.b32.xlu0 %v261, 96
  %v562 = vpop.permute.xlu0 %561
  %563 = vrot.lane.b32.xlu0 %v266, 96
  %v564 = vpop.permute.xlu0 %563
  %565 = vrot.lane.b32.xlu0 %v272, 96
  %v566 = vpop.permute.xlu0 %565
  %567 = vrot.lane.b32.xlu0 %v274, 96
  %v568 = vpop.permute.xlu0 %567
  %569 = vrot.lane.b32.xlu0 %v278, 96
  %v570 = vpop.permute.xlu0 %569
  %571 = vrot.lane.b32.xlu0 %v280, 96
  %v572 = vpop.permute.xlu0 %571
  %573 = vrot.lane.b32.xlu0 %v284, 96
  %v574 = vpop.permute.xlu0 %573
  %575 = vrot.lane.b32.xlu0 %v286, 96
  %v576 = vpop.permute.xlu0 %575
  %v585 = vcombine.low %v562, %v570
  %v586 = vcombine.high %v562, %v570
  %v588 = vunpack.c.l.s4 1983009808
  %v589 = vunpack.c.0.s8 %v588
  %v590 = vlaneseq
  %v591 = vshrl.u32 %v590, 7
  %v592 = vsub.s32 %v589, %v591
  %v593 = vrot.slane %v585, %v592
  %v595 = vunpack.c.l.s4 1983009808
  %v596 = vunpack.c.0.s8 %v595
  %v597 = vlaneseq
  %v598 = vshrl.u32 %v597, 7
  %v599 = vsub.s32 %v596, %v598
  %v600 = vrot.slane %v586, %v599
  %v601 = vcombine.low %v566, %v574
  %v602 = vcombine.high %v566, %v574
  %v604 = vunpack.c.l.s4 1983009808
  %v605 = vunpack.c.0.s8 %v604
  %v606 = vlaneseq
  %v607 = vshrl.u32 %v606, 7
  %v608 = vsub.s32 %v605, %v607
  %v609 = vrot.slane %v601, %v608
  %v611 = vunpack.c.l.s4 1983009808
  %v612 = vunpack.c.0.s8 %v611
  %v613 = vlaneseq
  %v614 = vshrl.u32 %v613, 7
  %v615 = vsub.s32 %v612, %v614
  %v616 = vrot.slane %v602, %v615
  %v617 = vcombine.low %v593, %v609
  %v618 = vcombine.high %v593, %v609
  %v620 = vunpack.c.l.s4 1934713408
  %v621 = vunpack.c.0.s8 %v620
  %v622 = vlaneseq
  %v623 = vshrl.u32 %v622, 7
  %v624 = vsub.s32 %v621, %v623
  %v625 = vrot.slane %v617, %v624
  %v627 = vunpack.c.l.s4 1934713408
  %v628 = vunpack.c.0.s8 %v627
  %v629 = vlaneseq
  %v630 = vshrl.u32 %v629, 7
  %v631 = vsub.s32 %v628, %v630
  %v632 = vrot.slane %v618, %v631
  %v633 = vcombine.low %v600, %v616
  %v634 = vcombine.high %v600, %v616
  %v636 = vunpack.c.l.s4 1934713408
  %v637 = vunpack.c.0.s8 %v636
  %v638 = vlaneseq
  %v639 = vshrl.u32 %v638, 7
  %v640 = vsub.s32 %v637, %v639
  %v641 = vrot.slane %v633, %v640
  %v643 = vunpack.c.l.s4 1934713408
  %v644 = vunpack.c.0.s8 %v643
  %v645 = vlaneseq
  %v646 = vshrl.u32 %v645, 7
  %v647 = vsub.s32 %v644, %v646
  %v648 = vrot.slane %v634, %v647
  %v649 = vcombine.high %v625, 0.0
  %v650 = vcombine.high %v632, 0.0
  %v651 = vcombine.high %v641, 0.0
  %v652 = vcombine.high %v648, 0.0
  %v653 = vcombine.low %v564, %v572
  %v654 = vcombine.high %v564, %v572
  %v656 = vunpack.c.l.s4 1983009808
  %v657 = vunpack.c.0.s8 %v656
  %v658 = vlaneseq
  %v659 = vshrl.u32 %v658, 7
  %v660 = vsub.s32 %v657, %v659
  %v661 = vrot.slane %v653, %v660
  %v663 = vunpack.c.l.s4 1983009808
  %v664 = vunpack.c.0.s8 %v663
  %v665 = vlaneseq
  %v666 = vshrl.u32 %v665, 7
  %v667 = vsub.s32 %v664, %v666
  %v668 = vrot.slane %v654, %v667
  %v669 = vcombine.low %v568, %v576
  %v670 = vcombine.high %v568, %v576
  %v672 = vunpack.c.l.s4 1983009808
  %v673 = vunpack.c.0.s8 %v672
  %v674 = vlaneseq
  %v675 = vshrl.u32 %v674, 7
  %v676 = vsub.s32 %v673, %v675
  %v677 = vrot.slane %v669, %v676
  %v679 = vunpack.c.l.s4 1983009808
  %v680 = vunpack.c.0.s8 %v679
  %v681 = vlaneseq
  %v682 = vshrl.u32 %v681, 7
  %v683 = vsub.s32 %v680, %v682
  %v684 = vrot.slane %v670, %v683
  %v685 = vcombine.low %v661, %v677
  %v686 = vcombine.high %v661, %v677
  %v688 = vunpack.c.l.s4 1934713408
  %v689 = vunpack.c.0.s8 %v688
  %v690 = vlaneseq
  %v691 = vshrl.u32 %v690, 7
  %v692 = vsub.s32 %v689, %v691
  %v693 = vrot.slane %v685, %v692
  %v695 = vunpack.c.l.s4 1934713408
  %v696 = vunpack.c.0.s8 %v695
  %v697 = vlaneseq
  %v698 = vshrl.u32 %v697, 7
  %v699 = vsub.s32 %v696, %v698
  %v700 = vrot.slane %v686, %v699
  %v701 = vcombine.low %v668, %v684
  %v702 = vcombine.high %v668, %v684
  %v704 = vunpack.c.l.s4 1934713408
  %v705 = vunpack.c.0.s8 %v704
  %v706 = vlaneseq
  %v707 = vshrl.u32 %v706, 7
  %v708 = vsub.s32 %v705, %v707
  %v709 = vrot.slane %v701, %v708
  %v711 = vunpack.c.l.s4 1934713408
  %v712 = vunpack.c.0.s8 %v711
  %v713 = vlaneseq
  %v714 = vshrl.u32 %v713, 7
  %v715 = vsub.s32 %v712, %v714
  %v716 = vrot.slane %v702, %v715
  %v717 = vcombine.high %v693, 0.0
  %v718 = vcombine.high %v700, 0.0
  %v719 = vcombine.high %v709, 0.0
  %v720 = vcombine.high %v716, 0.0
  %v721 = vcombine.low %v625, %v632
  %v723 = vunpack.c.l.s4 1983009808
  %v724 = vunpack.c.0.s8 %v723
  %v725 = vlaneseq
  %v726 = vshrl.u32 %v725, 7
  %v727 = vsub.s32 %v724, %v726
  %v728 = vrot.slane %v721, %v727
  %v729 = vcombine.low %v649, %v650
  %v731 = vunpack.c.l.s4 1983009808
  %v732 = vunpack.c.0.s8 %v731
  %v733 = vlaneseq
  %v734 = vshrl.u32 %v733, 7
  %v735 = vsub.s32 %v732, %v734
  %v736 = vrot.slane %v729, %v735
  %v737 = vcombine.low %v641, %v648
  %v739 = vunpack.c.l.s4 1983009808
  %v740 = vunpack.c.0.s8 %v739
  %v741 = vlaneseq
  %v742 = vshrl.u32 %v741, 7
  %v743 = vsub.s32 %v740, %v742
  %v744 = vrot.slane %v737, %v743
  %v745 = vcombine.low %v651, %v652
  %v747 = vunpack.c.l.s4 1983009808
  %v748 = vunpack.c.0.s8 %v747
  %v749 = vlaneseq
  %v750 = vshrl.u32 %v749, 7
  %v751 = vsub.s32 %v748, %v750
  %v752 = vrot.slane %v745, %v751
  %v753 = vcombine.low %v728, %v736
  %v754 = vcombine.high %v728, %v736
  %v756 = vunpack.c.l.s4 1934713408
  %v757 = vunpack.c.0.s8 %v756
  %v758 = vlaneseq
  %v759 = vshrl.u32 %v758, 7
  %v760 = vsub.s32 %v757, %v759
  %v761 = vrot.slane %v753, %v760
  %v763 = vunpack.c.l.s4 1934713408
  %v764 = vunpack.c.0.s8 %v763
  %v765 = vlaneseq
  %v766 = vshrl.u32 %v765, 7
  %v767 = vsub.s32 %v764, %v766
  %v768 = vrot.slane %v754, %v767
  %v769 = vcombine.low %v744, %v752
  %v770 = vcombine.high %v744, %v752
  %v772 = vunpack.c.l.s4 1934713408
  %v773 = vunpack.c.0.s8 %v772
  %v774 = vlaneseq
  %v775 = vshrl.u32 %v774, 7
  %v776 = vsub.s32 %v773, %v775
  %v777 = vrot.slane %v769, %v776
  %v779 = vunpack.c.l.s4 1934713408
  %v780 = vunpack.c.0.s8 %v779
  %v781 = vlaneseq
  %v782 = vshrl.u32 %v781, 7
  %v783 = vsub.s32 %v780, %v782
  %v784 = vrot.slane %v770, %v783
  %v785 = vcombine.low %v761, %v777
  %v786 = vcombine.high %v761, %v777
  %v787 = vcombine.low %v768, %v784
  %v788 = vcombine.high %v768, %v784
  %v789 = vcombine.low %v693, %v700
  %v791 = vunpack.c.l.s4 1983009808
  %v792 = vunpack.c.0.s8 %v791
  %v793 = vlaneseq
  %v794 = vshrl.u32 %v793, 7
  %v795 = vsub.s32 %v792, %v794
  %v796 = vrot.slane %v789, %v795
  %v797 = vcombine.low %v717, %v718
  %v799 = vunpack.c.l.s4 1983009808
  %v800 = vunpack.c.0.s8 %v799
  %v801 = vlaneseq
  %v802 = vshrl.u32 %v801, 7
  %v803 = vsub.s32 %v800, %v802
  %v804 = vrot.slane %v797, %v803
  %v805 = vcombine.low %v709, %v716
  %v807 = vunpack.c.l.s4 1983009808
  %v808 = vunpack.c.0.s8 %v807
  %v809 = vlaneseq
  %v810 = vshrl.u32 %v809, 7
  %v811 = vsub.s32 %v808, %v810
  %v812 = vrot.slane %v805, %v811
  %v813 = vcombine.low %v719, %v720
  %v815 = vunpack.c.l.s4 1983009808
  %v816 = vunpack.c.0.s8 %v815
  %v817 = vlaneseq
  %v818 = vshrl.u32 %v817, 7
  %v819 = vsub.s32 %v816, %v818
  %v820 = vrot.slane %v813, %v819
  %v821 = vcombine.low %v796, %v804
  %v822 = vcombine.high %v796, %v804
  %v824 = vunpack.c.l.s4 1934713408
  %v825 = vunpack.c.0.s8 %v824
  %v826 = vlaneseq
  %v827 = vshrl.u32 %v826, 7
  %v828 = vsub.s32 %v825, %v827
  %v829 = vrot.slane %v821, %v828
  %v831 = vunpack.c.l.s4 1934713408
  %v832 = vunpack.c.0.s8 %v831
  %v833 = vlaneseq
  %v834 = vshrl.u32 %v833, 7
  %v835 = vsub.s32 %v832, %v834
  %v836 = vrot.slane %v822, %v835
  %v837 = vcombine.low %v812, %v820
  %v838 = vcombine.high %v812, %v820
  %v840 = vunpack.c.l.s4 1934713408
  %v841 = vunpack.c.0.s8 %v840
  %v842 = vlaneseq
  %v843 = vshrl.u32 %v842, 7
  %v844 = vsub.s32 %v841, %v843
  %v845 = vrot.slane %v837, %v844
  %v847 = vunpack.c.l.s4 1934713408
  %v848 = vunpack.c.0.s8 %v847
  %v849 = vlaneseq
  %v850 = vshrl.u32 %v849, 7
  %v851 = vsub.s32 %v848, %v850
  %v852 = vrot.slane %v838, %v851
  %v853 = vcombine.low %v829, %v845
  %v854 = vcombine.high %v829, %v845
  %v855 = vcombine.low %v836, %v852
  %v856 = vcombine.high %v836, %v852
  %857 = vrot.lane.b32.xlu0 %v261, 64
  %v858 = vpop.permute.xlu0 %857
  %859 = vrot.lane.b32.xlu0 %v266, 64
  %v860 = vpop.permute.xlu0 %859
  %861 = vrot.lane.b32.xlu0 %v272, 64
  %v862 = vpop.permute.xlu0 %861
  %863 = vrot.lane.b32.xlu0 %v274, 64
  %v864 = vpop.permute.xlu0 %863
  %865 = vrot.lane.b32.xlu0 %v278, 64
  %v866 = vpop.permute.xlu0 %865
  %867 = vrot.lane.b32.xlu0 %v280, 64
  %v868 = vpop.permute.xlu0 %867
  %869 = vrot.lane.b32.xlu0 %v284, 64
  %v870 = vpop.permute.xlu0 %869
  %871 = vrot.lane.b32.xlu0 %v286, 64
  %v872 = vpop.permute.xlu0 %871
  %v881 = vcombine.low %v858, %v866
  %v882 = vcombine.high %v858, %v866
  %v884 = vunpack.c.l.s4 1983009808
  %v885 = vunpack.c.0.s8 %v884
  %v886 = vlaneseq
  %v887 = vshrl.u32 %v886, 7
  %v888 = vsub.s32 %v885, %v887
  %v889 = vrot.slane %v881, %v888
  %v891 = vunpack.c.l.s4 1983009808
  %v892 = vunpack.c.0.s8 %v891
  %v893 = vlaneseq
  %v894 = vshrl.u32 %v893, 7
  %v895 = vsub.s32 %v892, %v894
  %v896 = vrot.slane %v882, %v895
  %v897 = vcombine.low %v862, %v870
  %v898 = vcombine.high %v862, %v870
  %v900 = vunpack.c.l.s4 1983009808
  %v901 = vunpack.c.0.s8 %v900
  %v902 = vlaneseq
  %v903 = vshrl.u32 %v902, 7
  %v904 = vsub.s32 %v901, %v903
  %v905 = vrot.slane %v897, %v904
  %v907 = vunpack.c.l.s4 1983009808
  %v908 = vunpack.c.0.s8 %v907
  %v909 = vlaneseq
  %v910 = vshrl.u32 %v909, 7
  %v911 = vsub.s32 %v908, %v910
  %v912 = vrot.slane %v898, %v911
  %v913 = vcombine.low %v889, %v905
  %v914 = vcombine.high %v889, %v905
  %v916 = vunpack.c.l.s4 1934713408
  %v917 = vunpack.c.0.s8 %v916
  %v918 = vlaneseq
  %v919 = vshrl.u32 %v918, 7
  %v920 = vsub.s32 %v917, %v919
  %v921 = vrot.slane %v913, %v920
  %v923 = vunpack.c.l.s4 1934713408
  %v924 = vunpack.c.0.s8 %v923
  %v925 = vlaneseq
  %v926 = vshrl.u32 %v925, 7
  %v927 = vsub.s32 %v924, %v926
  %v928 = vrot.slane %v914, %v927
  %v929 = vcombine.low %v896, %v912
  %v930 = vcombine.high %v896, %v912
  %v932 = vunpack.c.l.s4 1934713408
  %v933 = vunpack.c.0.s8 %v932
  %v934 = vlaneseq
  %v935 = vshrl.u32 %v934, 7
  %v936 = vsub.s32 %v933, %v935
  %v937 = vrot.slane %v929, %v936
  %v939 = vunpack.c.l.s4 1934713408
  %v940 = vunpack.c.0.s8 %v939
  %v941 = vlaneseq
  %v942 = vshrl.u32 %v941, 7
  %v943 = vsub.s32 %v940, %v942
  %v944 = vrot.slane %v930, %v943
  %v945 = vcombine.high %v921, 0.0
  %v946 = vcombine.high %v928, 0.0
  %v947 = vcombine.high %v937, 0.0
  %v948 = vcombine.high %v944, 0.0
  %v949 = vcombine.low %v860, %v868
  %v950 = vcombine.high %v860, %v868
  %v952 = vunpack.c.l.s4 1983009808
  %v953 = vunpack.c.0.s8 %v952
  %v954 = vlaneseq
  %v955 = vshrl.u32 %v954, 7
  %v956 = vsub.s32 %v953, %v955
  %v957 = vrot.slane %v949, %v956
  %v959 = vunpack.c.l.s4 1983009808
  %v960 = vunpack.c.0.s8 %v959
  %v961 = vlaneseq
  %v962 = vshrl.u32 %v961, 7
  %v963 = vsub.s32 %v960, %v962
  %v964 = vrot.slane %v950, %v963
  %v965 = vcombine.low %v864, %v872
  %v966 = vcombine.high %v864, %v872
  %v968 = vunpack.c.l.s4 1983009808
  %v969 = vunpack.c.0.s8 %v968
  %v970 = vlaneseq
  %v971 = vshrl.u32 %v970, 7
  %v972 = vsub.s32 %v969, %v971
  %v973 = vrot.slane %v965, %v972
  %v975 = vunpack.c.l.s4 1983009808
  %v976 = vunpack.c.0.s8 %v975
  %v977 = vlaneseq
  %v978 = vshrl.u32 %v977, 7
  %v979 = vsub.s32 %v976, %v978
  %v980 = vrot.slane %v966, %v979
  %v981 = vcombine.low %v957, %v973
  %v982 = vcombine.high %v957, %v973
  %v984 = vunpack.c.l.s4 1934713408
  %v985 = vunpack.c.0.s8 %v984
  %v986 = vlaneseq
  %v987 = vshrl.u32 %v986, 7
  %v988 = vsub.s32 %v985, %v987
  %v989 = vrot.slane %v981, %v988
  %v991 = vunpack.c.l.s4 1934713408
  %v992 = vunpack.c.0.s8 %v991
  %v993 = vlaneseq
  %v994 = vshrl.u32 %v993, 7
  %v995 = vsub.s32 %v992, %v994
  %v996 = vrot.slane %v982, %v995
  %v997 = vcombine.low %v964, %v980
  %v998 = vcombine.high %v964, %v980
  %v1000 = vunpack.c.l.s4 1934713408
  %v1001 = vunpack.c.0.s8 %v1000
  %v1002 = vlaneseq
  %v1003 = vshrl.u32 %v1002, 7
  %v1004 = vsub.s32 %v1001, %v1003
  %v1005 = vrot.slane %v997, %v1004
  %v1007 = vunpack.c.l.s4 1934713408
  %v1008 = vunpack.c.0.s8 %v1007
  %v1009 = vlaneseq
  %v1010 = vshrl.u32 %v1009, 7
  %v1011 = vsub.s32 %v1008, %v1010
  %v1012 = vrot.slane %v998, %v1011
  %v1013 = vcombine.high %v989, 0.0
  %v1014 = vcombine.high %v996, 0.0
  %v1015 = vcombine.high %v1005, 0.0
  %v1016 = vcombine.high %v1012, 0.0
  %v1017 = vcombine.low %v921, %v928
  %v1019 = vunpack.c.l.s4 1983009808
  %v1020 = vunpack.c.0.s8 %v1019
  %v1021 = vlaneseq
  %v1022 = vshrl.u32 %v1021, 7
  %v1023 = vsub.s32 %v1020, %v1022
  %v1024 = vrot.slane %v1017, %v1023
  %v1025 = vcombine.low %v945, %v946
  %v1027 = vunpack.c.l.s4 1983009808
  %v1028 = vunpack.c.0.s8 %v1027
  %v1029 = vlaneseq
  %v1030 = vshrl.u32 %v1029, 7
  %v1031 = vsub.s32 %v1028, %v1030
  %v1032 = vrot.slane %v1025, %v1031
  %v1033 = vcombine.low %v937, %v944
  %v1035 = vunpack.c.l.s4 1983009808
  %v1036 = vunpack.c.0.s8 %v1035
  %v1037 = vlaneseq
  %v1038 = vshrl.u32 %v1037, 7
  %v1039 = vsub.s32 %v1036, %v1038
  %v1040 = vrot.slane %v1033, %v1039
  %v1041 = vcombine.low %v947, %v948
  %v1043 = vunpack.c.l.s4 1983009808
  %v1044 = vunpack.c.0.s8 %v1043
  %v1045 = vlaneseq
  %v1046 = vshrl.u32 %v1045, 7
  %v1047 = vsub.s32 %v1044, %v1046
  %v1048 = vrot.slane %v1041, %v1047
  %v1049 = vcombine.low %v1024, %v1032
  %v1050 = vcombine.high %v1024, %v1032
  %v1052 = vunpack.c.l.s4 1934713408
  %v1053 = vunpack.c.0.s8 %v1052
  %v1054 = vlaneseq
  %v1055 = vshrl.u32 %v1054, 7
  %v1056 = vsub.s32 %v1053, %v1055
  %v1057 = vrot.slane %v1049, %v1056
  %v1059 = vunpack.c.l.s4 1934713408
  %v1060 = vunpack.c.0.s8 %v1059
  %v1061 = vlaneseq
  %v1062 = vshrl.u32 %v1061, 7
  %v1063 = vsub.s32 %v1060, %v1062
  %v1064 = vrot.slane %v1050, %v1063
  %v1065 = vcombine.low %v1040, %v1048
  %v1066 = vcombine.high %v1040, %v1048
  %v1068 = vunpack.c.l.s4 1934713408
  %v1069 = vunpack.c.0.s8 %v1068
  %v1070 = vlaneseq
  %v1071 = vshrl.u32 %v1070, 7
  %v1072 = vsub.s32 %v1069, %v1071
  %v1073 = vrot.slane %v1065, %v1072
  %v1075 = vunpack.c.l.s4 1934713408
  %v1076 = vunpack.c.0.s8 %v1075
  %v1077 = vlaneseq
  %v1078 = vshrl.u32 %v1077, 7
  %v1079 = vsub.s32 %v1076, %v1078
  %v1080 = vrot.slane %v1066, %v1079
  %v1081 = vcombine.low %v1057, %v1073
  %v1082 = vcombine.high %v1057, %v1073
  %v1083 = vcombine.low %v1064, %v1080
  %v1084 = vcombine.high %v1064, %v1080
  %v1085 = vcombine.low %v989, %v996
  %v1087 = vunpack.c.l.s4 1983009808
  %v1088 = vunpack.c.0.s8 %v1087
  %v1089 = vlaneseq
  %v1090 = vshrl.u32 %v1089, 7
  %v1091 = vsub.s32 %v1088, %v1090
  %v1092 = vrot.slane %v1085, %v1091
  %v1093 = vcombine.low %v1013, %v1014
  %v1095 = vunpack.c.l.s4 1983009808
  %v1096 = vunpack.c.0.s8 %v1095
  %v1097 = vlaneseq
  %v1098 = vshrl.u32 %v1097, 7
  %v1099 = vsub.s32 %v1096, %v1098
  %v1100 = vrot.slane %v1093, %v1099
  %v1101 = vcombine.low %v1005, %v1012
  %v1103 = vunpack.c.l.s4 1983009808
  %v1104 = vunpack.c.0.s8 %v1103
  %v1105 = vlaneseq
  %v1106 = vshrl.u32 %v1105, 7
  %v1107 = vsub.s32 %v1104, %v1106
  %v1108 = vrot.slane %v1101, %v1107
  %v1109 = vcombine.low %v1015, %v1016
  %v1111 = vunpack.c.l.s4 1983009808
  %v1112 = vunpack.c.0.s8 %v1111
  %v1113 = vlaneseq
  %v1114 = vshrl.u32 %v1113, 7
  %v1115 = vsub.s32 %v1112, %v1114
  %v1116 = vrot.slane %v1109, %v1115
  %v1117 = vcombine.low %v1092, %v1100
  %v1118 = vcombine.high %v1092, %v1100
  %v1120 = vunpack.c.l.s4 1934713408
  %v1121 = vunpack.c.0.s8 %v1120
  %v1122 = vlaneseq
  %v1123 = vshrl.u32 %v1122, 7
  %v1124 = vsub.s32 %v1121, %v1123
  %v1125 = vrot.slane %v1117, %v1124
  %v1127 = vunpack.c.l.s4 1934713408
  %v1128 = vunpack.c.0.s8 %v1127
  %v1129 = vlaneseq
  %v1130 = vshrl.u32 %v1129, 7
  %v1131 = vsub.s32 %v1128, %v1130
  %v1132 = vrot.slane %v1118, %v1131
  %v1133 = vcombine.low %v1108, %v1116
  %v1134 = vcombine.high %v1108, %v1116
  %v1136 = vunpack.c.l.s4 1934713408
  %v1137 = vunpack.c.0.s8 %v1136
  %v1138 = vlaneseq
  %v1139 = vshrl.u32 %v1138, 7
  %v1140 = vsub.s32 %v1137, %v1139
  %v1141 = vrot.slane %v1133, %v1140
  %v1143 = vunpack.c.l.s4 1934713408
  %v1144 = vunpack.c.0.s8 %v1143
  %v1145 = vlaneseq
  %v1146 = vshrl.u32 %v1145, 7
  %v1147 = vsub.s32 %v1144, %v1146
  %v1148 = vrot.slane %v1134, %v1147
  %v1149 = vcombine.low %v1125, %v1141
  %v1150 = vcombine.high %v1125, %v1141
  %v1151 = vcombine.low %v1132, %v1148
  %v1152 = vcombine.high %v1132, %v1148
  %vm1153 = vcmask 64512
  %v1155 = vsel %vm1153, %v489, 0
  %v1158 = vsel %vm1153, %v785, 0
  %1160 = vmatprep.subr.mxu0 0.0
  %1161 = vmatpush1.xpose.msra.mxu0 %v1158
  %1162 = vmatprep.subr.mxu0 0.0
  %1163 = vmatpush1.xpose.msra.mxu0 0.0
  %1164 = vmatprep.subr.mxu0 0.0
  %1165 = vmatpush1.xpose.msra.mxu0 0.0
  %1166 = vmatprep.subr.mxu0 0.0
  %1167 = vmatpush1.xpose.msra.mxu0 0.0
  %1168 = vmatprep.subr.mxu0 0.0
  %1169 = vmatpush1.xpose.msra.mxu0 0.0
  %1170 = vmatprep.subr.mxu0 0.0
  %1171 = vmatpush1.xpose.msra.mxu0 0.0
  %1172 = vmatprep.subr.mxu0 0.0
  %1173 = vmatpush1.xpose.msra.mxu0 0.0
  %1174 = vmatprep.subr.mxu0 0.0
  %1175 = vmatpush1.xpose.msra.mxu0 0.0
  %1176 = vmatprep.subr.mxu0 0.0
  %1177 = vmatpush1.xpose.msra.mxu0 0.0
  %1178 = vmatprep.subr.mxu0 0.0
  %1179 = vmatpush1.xpose.msra.mxu0 0.0
  %1180 = vmatprep.subr.mxu0 0.0
  %1181 = vmatpush1.xpose.msra.mxu0 0.0
  %1182 = vmatprep.subr.mxu0 0.0
  %1183 = vmatpush1.xpose.msra.mxu0 0.0
  %1184 = vmatprep.subr.mxu0 0.0
  %1185 = vmatpush1.xpose.msra.mxu0 0.0
  %1186 = vmatprep.subr.mxu0 0.0
  %1187 = vmatpush1.xpose.msra.mxu0 0.0
  %1188 = vmatprep.subr.mxu0 0.0
  %1189 = vmatpush1.xpose.msra.mxu0 0.0
  %1190 = vmatprep.subr.mxu0 0.0
  %1191 = vmatpush1.xpose.msra.mxu0 0.0
  %1192 = vmatprep.subr.mxu0 0.0
  %1193 = vmatpush1.xpose.msra.mxu0 0.0
  %1194 = vmatprep.subr.mxu0 0.0
  %1195 = vmatpush1.xpose.msra.mxu0 0.0
  %1196 = vmatprep.subr.mxu0 0.0
  %1197 = vmatpush1.xpose.msra.mxu0 0.0
  %1198 = vmatprep.subr.mxu0 0.0
  %1199 = vmatpush1.xpose.msra.mxu0 0.0
  %1200 = vmatprep.subr.mxu0 0.0
  %1201 = vmatpush1.xpose.msra.mxu0 0.0
  %1202 = vmatprep.subr.mxu0 0.0
  %1203 = vmatpush1.xpose.msra.mxu0 0.0
  %1204 = vmatprep.subr.mxu0 0.0
  %1205 = vmatpush1.xpose.msra.mxu0 0.0
  %1206 = vmatprep.subr.mxu0 0.0
  %1207 = vmatpush1.xpose.msra.mxu0 0.0
  %1208 = vmatprep.subr.mxu0 0.0
  %1209 = vmatpush1.xpose.msra.mxu0 0.0
  %1210 = vmatprep.subr.mxu0 0.0
  %1211 = vmatpush1.xpose.msra.mxu0 0.0
  %1212 = vmatprep.subr.mxu0 0.0
  %1213 = vmatpush1.xpose.msra.mxu0 0.0
  %1214 = vmatprep.subr.mxu0 0.0
  %1215 = vmatpush1.xpose.msra.mxu0 0.0
  %1216 = vmatprep.subr.mxu0 0.0
  %1217 = vmatpush1.xpose.msra.mxu0 0.0
  %1218 = vmatprep.subr.mxu0 0.0
  %1219 = vmatpush1.xpose.msra.mxu0 0.0
  %1220 = vmatprep.subr.mxu0 0.0
  %1221 = vmatpush1.xpose.msra.mxu0 0.0
  %1222 = vmatprep.subr.mxu0 0.0
  %1223 = vmatpush1.xpose.msra.mxu0 0.0
  %1224 = vmatprep.mubr.f32.mxu0 0.0
  %1225 = vmatmul.mubr.f32.gmra.mrb[0].mxu0 %v1155
  %v1226 = vpop.f32.mrb[0].mxu0
  %v1227 = vadd.f32 0.0, %v1226
  %v1228 = vpop.f32.mrb[0].mxu0
  %1229 = vdwg.mxu0
  %v1231 = vsel %vm1153, %v490, 0
  %v1234 = vsel %vm1153, %v786, 0
  %1236 = vmatprep.subr.mxu0 0.0
  %1237 = vmatpush1.xpose.msra.mxu0 %v1234
  %1238 = vmatprep.subr.mxu0 0.0
  %1239 = vmatpush1.xpose.msra.mxu0 0.0
  %1240 = vmatprep.subr.mxu0 0.0
  %1241 = vmatpush1.xpose.msra.mxu0 0.0
  %1242 = vmatprep.subr.mxu0 0.0
  %1243 = vmatpush1.xpose.msra.mxu0 0.0
  %1244 = vmatprep.subr.mxu0 0.0
  %1245 = vmatpush1.xpose.msra.mxu0 0.0
  %1246 = vmatprep.subr.mxu0 0.0
  %1247 = vmatpush1.xpose.msra.mxu0 0.0
  %1248 = vmatprep.subr.mxu0 0.0
  %1249 = vmatpush1.xpose.msra.mxu0 0.0
  %1250 = vmatprep.subr.mxu0 0.0
  %1251 = vmatpush1.xpose.msra.mxu0 0.0
  %1252 = vmatprep.subr.mxu0 0.0
  %1253 = vmatpush1.xpose.msra.mxu0 0.0
  %1254 = vmatprep.subr.mxu0 0.0
  %1255 = vmatpush1.xpose.msra.mxu0 0.0
  %1256 = vmatprep.subr.mxu0 0.0
  %1257 = vmatpush1.xpose.msra.mxu0 0.0
  %1258 = vmatprep.subr.mxu0 0.0
  %1259 = vmatpush1.xpose.msra.mxu0 0.0
  %1260 = vmatprep.subr.mxu0 0.0
  %1261 = vmatpush1.xpose.msra.mxu0 0.0
  %1262 = vmatprep.subr.mxu0 0.0
  %1263 = vmatpush1.xpose.msra.mxu0 0.0
  %1264 = vmatprep.subr.mxu0 0.0
  %1265 = vmatpush1.xpose.msra.mxu0 0.0
  %1266 = vmatprep.subr.mxu0 0.0
  %1267 = vmatpush1.xpose.msra.mxu0 0.0
  %1268 = vmatprep.subr.mxu0 0.0
  %1269 = vmatpush1.xpose.msra.mxu0 0.0
  %1270 = vmatprep.subr.mxu0 0.0
  %1271 = vmatpush1.xpose.msra.mxu0 0.0
  %1272 = vmatprep.subr.mxu0 0.0
  %1273 = vmatpush1.xpose.msra.mxu0 0.0
  %1274 = vmatprep.subr.mxu0 0.0
  %1275 = vmatpush1.xpose.msra.mxu0 0.0
  %1276 = vmatprep.subr.mxu0 0.0
  %1277 = vmatpush1.xpose.msra.mxu0 0.0
  %1278 = vmatprep.subr.mxu0 0.0
  %1279 = vmatpush1.xpose.msra.mxu0 0.0
  %1280 = vmatprep.subr.mxu0 0.0
  %1281 = vmatpush1.xpose.msra.mxu0 0.0
  %1282 = vmatprep.subr.mxu0 0.0
  %1283 = vmatpush1.xpose.msra.mxu0 0.0
  %1284 = vmatprep.subr.mxu0 0.0
  %1285 = vmatpush1.xpose.msra.mxu0 0.0
  %1286 = vmatprep.subr.mxu0 0.0
  %1287 = vmatpush1.xpose.msra.mxu0 0.0
  %1288 = vmatprep.subr.mxu0 0.0
  %1289 = vmatpush1.xpose.msra.mxu0 0.0
  %1290 = vmatprep.subr.mxu0 0.0
  %1291 = vmatpush1.xpose.msra.mxu0 0.0
  %1292 = vmatprep.subr.mxu0 0.0
  %1293 = vmatpush1.xpose.msra.mxu0 0.0
  %1294 = vmatprep.subr.mxu0 0.0
  %1295 = vmatpush1.xpose.msra.mxu0 0.0
  %1296 = vmatprep.subr.mxu0 0.0
  %1297 = vmatpush1.xpose.msra.mxu0 0.0
  %1298 = vmatprep.subr.mxu0 0.0
  %1299 = vmatpush1.xpose.msra.mxu0 0.0
  %1300 = vmatprep.mubr.f32.mxu0 0.0
  %1301 = vmatmul.mubr.f32.gmra.mrb[0].mxu0 %v1231
  %v1302 = vpop.f32.mrb[0].mxu0
  %v1303 = vadd.f32 0.0, %v1302
  %v1304 = vpop.f32.mrb[0].mxu0
  %1305 = vdwg.mxu0
  %v1307 = vsel %vm1153, %v491, 0
  %v1310 = vsel %vm1153, %v787, 0
  %1312 = vmatprep.subr.mxu0 0.0
  %1313 = vmatpush1.xpose.msra.mxu0 %v1310
  %1314 = vmatprep.subr.mxu0 0.0
  %1315 = vmatpush1.xpose.msra.mxu0 0.0
  %1316 = vmatprep.subr.mxu0 0.0
  %1317 = vmatpush1.xpose.msra.mxu0 0.0
  %1318 = vmatprep.subr.mxu0 0.0
  %1319 = vmatpush1.xpose.msra.mxu0 0.0
  %1320 = vmatprep.subr.mxu0 0.0
  %1321 = vmatpush1.xpose.msra.mxu0 0.0
  %1322 = vmatprep.subr.mxu0 0.0
  %1323 = vmatpush1.xpose.msra.mxu0 0.0
  %1324 = vmatprep.subr.mxu0 0.0
  %1325 = vmatpush1.xpose.msra.mxu0 0.0
  %1326 = vmatprep.subr.mxu0 0.0
  %1327 = vmatpush1.xpose.msra.mxu0 0.0
  %1328 = vmatprep.subr.mxu0 0.0
  %1329 = vmatpush1.xpose.msra.mxu0 0.0
  %1330 = vmatprep.subr.mxu0 0.0
  %1331 = vmatpush1.xpose.msra.mxu0 0.0
  %1332 = vmatprep.subr.mxu0 0.0
  %1333 = vmatpush1.xpose.msra.mxu0 0.0
  %1334 = vmatprep.subr.mxu0 0.0
  %1335 = vmatpush1.xpose.msra.mxu0 0.0
  %1336 = vmatprep.subr.mxu0 0.0
  %1337 = vmatpush1.xpose.msra.mxu0 0.0
  %1338 = vmatprep.subr.mxu0 0.0
  %1339 = vmatpush1.xpose.msra.mxu0 0.0
  %1340 = vmatprep.subr.mxu0 0.0
  %1341 = vmatpush1.xpose.msra.mxu0 0.0
  %1342 = vmatprep.subr.mxu0 0.0
  %1343 = vmatpush1.xpose.msra.mxu0 0.0
  %1344 = vmatprep.subr.mxu0 0.0
  %1345 = vmatpush1.xpose.msra.mxu0 0.0
  %1346 = vmatprep.subr.mxu0 0.0
  %1347 = vmatpush1.xpose.msra.mxu0 0.0
  %1348 = vmatprep.subr.mxu0 0.0
  %1349 = vmatpush1.xpose.msra.mxu0 0.0
  %1350 = vmatprep.subr.mxu0 0.0
  %1351 = vmatpush1.xpose.msra.mxu0 0.0
  %1352 = vmatprep.subr.mxu0 0.0
  %1353 = vmatpush1.xpose.msra.mxu0 0.0
  %1354 = vmatprep.subr.mxu0 0.0
  %1355 = vmatpush1.xpose.msra.mxu0 0.0
  %1356 = vmatprep.subr.mxu0 0.0
  %1357 = vmatpush1.xpose.msra.mxu0 0.0
  %1358 = vmatprep.subr.mxu0 0.0
  %1359 = vmatpush1.xpose.msra.mxu0 0.0
  %1360 = vmatprep.subr.mxu0 0.0
  %1361 = vmatpush1.xpose.msra.mxu0 0.0
  %1362 = vmatprep.subr.mxu0 0.0
  %1363 = vmatpush1.xpose.msra.mxu0 0.0
  %1364 = vmatprep.subr.mxu0 0.0
  %1365 = vmatpush1.xpose.msra.mxu0 0.0
  %1366 = vmatprep.subr.mxu0 0.0
  %1367 = vmatpush1.xpose.msra.mxu0 0.0
  %1368 = vmatprep.subr.mxu0 0.0
  %1369 = vmatpush1.xpose.msra.mxu0 0.0
  %1370 = vmatprep.subr.mxu0 0.0
  %1371 = vmatpush1.xpose.msra.mxu0 0.0
  %1372 = vmatprep.subr.mxu0 0.0
  %1373 = vmatpush1.xpose.msra.mxu0 0.0
  %1374 = vmatprep.subr.mxu0 0.0
  %1375 = vmatpush1.xpose.msra.mxu0 0.0
  %1376 = vmatprep.mubr.f32.mxu0 0.0
  %1377 = vmatmul.mubr.f32.gmra.mrb[0].mxu0 %v1307
  %v1378 = vpop.f32.mrb[0].mxu0
  %v1379 = vadd.f32 0.0, %v1378
  %v1380 = vpop.f32.mrb[0].mxu0
  %1381 = vdwg.mxu0
  %v1383 = vsel %vm1153, %v492, 0
  %v1386 = vsel %vm1153, %v788, 0
  %1388 = vmatprep.subr.mxu0 0.0
  %1389 = vmatpush1.xpose.msra.mxu0 %v1386
  %1390 = vmatprep.subr.mxu0 0.0
  %1391 = vmatpush1.xpose.msra.mxu0 0.0
  %1392 = vmatprep.subr.mxu0 0.0
  %1393 = vmatpush1.xpose.msra.mxu0 0.0
  %1394 = vmatprep.subr.mxu0 0.0
  %1395 = vmatpush1.xpose.msra.mxu0 0.0
  %1396 = vmatprep.subr.mxu0 0.0
  %1397 = vmatpush1.xpose.msra.mxu0 0.0
  %1398 = vmatprep.subr.mxu0 0.0
  %1399 = vmatpush1.xpose.msra.mxu0 0.0
  %1400 = vmatprep.subr.mxu0 0.0
  %1401 = vmatpush1.xpose.msra.mxu0 0.0
  %1402 = vmatprep.subr.mxu0 0.0
  %1403 = vmatpush1.xpose.msra.mxu0 0.0
  %1404 = vmatprep.subr.mxu0 0.0
  %1405 = vmatpush1.xpose.msra.mxu0 0.0
  %1406 = vmatprep.subr.mxu0 0.0
  %1407 = vmatpush1.xpose.msra.mxu0 0.0
  %1408 = vmatprep.subr.mxu0 0.0
  %1409 = vmatpush1.xpose.msra.mxu0 0.0
  %1410 = vmatprep.subr.mxu0 0.0
  %1411 = vmatpush1.xpose.msra.mxu0 0.0
  %1412 = vmatprep.subr.mxu0 0.0
  %1413 = vmatpush1.xpose.msra.mxu0 0.0
  %1414 = vmatprep.subr.mxu0 0.0
  %1415 = vmatpush1.xpose.msra.mxu0 0.0
  %1416 = vmatprep.subr.mxu0 0.0
  %1417 = vmatpush1.xpose.msra.mxu0 0.0
  %1418 = vmatprep.subr.mxu0 0.0
  %1419 = vmatpush1.xpose.msra.mxu0 0.0
  %1420 = vmatprep.subr.mxu0 0.0
  %1421 = vmatpush1.xpose.msra.mxu0 0.0
  %1422 = vmatprep.subr.mxu0 0.0
  %1423 = vmatpush1.xpose.msra.mxu0 0.0
  %1424 = vmatprep.subr.mxu0 0.0
  %1425 = vmatpush1.xpose.msra.mxu0 0.0
  %1426 = vmatprep.subr.mxu0 0.0
  %1427 = vmatpush1.xpose.msra.mxu0 0.0
  %1428 = vmatprep.subr.mxu0 0.0
  %1429 = vmatpush1.xpose.msra.mxu0 0.0
  %1430 = vmatprep.subr.mxu0 0.0
  %1431 = vmatpush1.xpose.msra.mxu0 0.0
  %1432 = vmatprep.subr.mxu0 0.0
  %1433 = vmatpush1.xpose.msra.mxu0 0.0
  %1434 = vmatprep.subr.mxu0 0.0
  %1435 = vmatpush1.xpose.msra.mxu0 0.0
  %1436 = vmatprep.subr.mxu0 0.0
  %1437 = vmatpush1.xpose.msra.mxu0 0.0
  %1438 = vmatprep.subr.mxu0 0.0
  %1439 = vmatpush1.xpose.msra.mxu0 0.0
  %1440 = vmatprep.subr.mxu0 0.0
  %1441 = vmatpush1.xpose.msra.mxu0 0.0
  %1442 = vmatprep.subr.mxu0 0.0
  %1443 = vmatpush1.xpose.msra.mxu0 0.0
  %1444 = vmatprep.subr.mxu0 0.0
  %1445 = vmatpush1.xpose.msra.mxu0 0.0
  %1446 = vmatprep.subr.mxu0 0.0
  %1447 = vmatpush1.xpose.msra.mxu0 0.0
  %1448 = vmatprep.subr.mxu0 0.0
  %1449 = vmatpush1.xpose.msra.mxu0 0.0
  %1450 = vmatprep.subr.mxu0 0.0
  %1451 = vmatpush1.xpose.msra.mxu0 0.0
  %1452 = vmatprep.mubr.f32.mxu0 0.0
  %1453 = vmatmul.mubr.f32.gmra.mrb[0].mxu0 %v1383
  %v1454 = vpop.f32.mrb[0].mxu0
  %v1455 = vadd.f32 0.0, %v1454
  %v1456 = vpop.f32.mrb[0].mxu0
  %1457 = vdwg.mxu0
  %v1459 = vsel %vm1153, %v557, 0
  %v1462 = vsel %vm1153, %v853, 0
  %1464 = vmatprep.subr.mxu0 0.0
  %1465 = vmatpush1.xpose.msra.mxu0 %v1462
  %1466 = vmatprep.subr.mxu0 0.0
  %1467 = vmatpush1.xpose.msra.mxu0 0.0
  %1468 = vmatprep.subr.mxu0 0.0
  %1469 = vmatpush1.xpose.msra.mxu0 0.0
  %1470 = vmatprep.subr.mxu0 0.0
  %1471 = vmatpush1.xpose.msra.mxu0 0.0
  %1472 = vmatprep.subr.mxu0 0.0
  %1473 = vmatpush1.xpose.msra.mxu0 0.0
  %1474 = vmatprep.subr.mxu0 0.0
  %1475 = vmatpush1.xpose.msra.mxu0 0.0
  %1476 = vmatprep.subr.mxu0 0.0
  %1477 = vmatpush1.xpose.msra.mxu0 0.0
  %1478 = vmatprep.subr.mxu0 0.0
  %1479 = vmatpush1.xpose.msra.mxu0 0.0
  %1480 = vmatprep.subr.mxu0 0.0
  %1481 = vmatpush1.xpose.msra.mxu0 0.0
  %1482 = vmatprep.subr.mxu0 0.0
  %1483 = vmatpush1.xpose.msra.mxu0 0.0
  %1484 = vmatprep.subr.mxu0 0.0
  %1485 = vmatpush1.xpose.msra.mxu0 0.0
  %1486 = vmatprep.subr.mxu0 0.0
  %1487 = vmatpush1.xpose.msra.mxu0 0.0
  %1488 = vmatprep.subr.mxu0 0.0
  %1489 = vmatpush1.xpose.msra.mxu0 0.0
  %1490 = vmatprep.subr.mxu0 0.0
  %1491 = vmatpush1.xpose.msra.mxu0 0.0
  %1492 = vmatprep.subr.mxu0 0.0
  %1493 = vmatpush1.xpose.msra.mxu0 0.0
  %1494 = vmatprep.subr.mxu0 0.0
  %1495 = vmatpush1.xpose.msra.mxu0 0.0
  %1496 = vmatprep.subr.mxu0 0.0
  %1497 = vmatpush1.xpose.msra.mxu0 0.0
  %1498 = vmatprep.subr.mxu0 0.0
  %1499 = vmatpush1.xpose.msra.mxu0 0.0
  %1500 = vmatprep.subr.mxu0 0.0
  %1501 = vmatpush1.xpose.msra.mxu0 0.0
  %1502 = vmatprep.subr.mxu0 0.0
  %1503 = vmatpush1.xpose.msra.mxu0 0.0
  %1504 = vmatprep.subr.mxu0 0.0
  %1505 = vmatpush1.xpose.msra.mxu0 0.0
  %1506 = vmatprep.subr.mxu0 0.0
  %1507 = vmatpush1.xpose.msra.mxu0 0.0
  %1508 = vmatprep.subr.mxu0 0.0
  %1509 = vmatpush1.xpose.msra.mxu0 0.0
  %1510 = vmatprep.subr.mxu0 0.0
  %1511 = vmatpush1.xpose.msra.mxu0 0.0
  %1512 = vmatprep.subr.mxu0 0.0
  %1513 = vmatpush1.xpose.msra.mxu0 0.0
  %1514 = vmatprep.subr.mxu0 0.0
  %1515 = vmatpush1.xpose.msra.mxu0 0.0
  %1516 = vmatprep.subr.mxu0 0.0
  %1517 = vmatpush1.xpose.msra.mxu0 0.0
  %1518 = vmatprep.subr.mxu0 0.0
  %1519 = vmatpush1.xpose.msra.mxu0 0.0
  %1520 = vmatprep.subr.mxu0 0.0
  %1521 = vmatpush1.xpose.msra.mxu0 0.0
  %1522 = vmatprep.subr.mxu0 0.0
  %1523 = vmatpush1.xpose.msra.mxu0 0.0
  %1524 = vmatprep.subr.mxu0 0.0
  %1525 = vmatpush1.xpose.msra.mxu0 0.0
  %1526 = vmatprep.subr.mxu0 0.0
  %1527 = vmatpush1.xpose.msra.mxu0 0.0
  %1528 = vmatprep.mubr.f32.mxu0 0.0
  %1529 = vmatmul.mubr.f32.gmra.mrb[0].mxu0 %v1459
  %v1530 = vpop.f32.mrb[0].mxu0
  %v1531 = vadd.f32 0.0, %v1530
  %v1532 = vpop.f32.mrb[0].mxu0
  %1533 = vdwg.mxu0
  %v1535 = vsel %vm1153, %v558, 0
  %v1538 = vsel %vm1153, %v854, 0
  %1540 = vmatprep.subr.mxu0 0.0
  %1541 = vmatpush1.xpose.msra.mxu0 %v1538
  %1542 = vmatprep.subr.mxu0 0.0
  %1543 = vmatpush1.xpose.msra.mxu0 0.0
  %1544 = vmatprep.subr.mxu0 0.0
  %1545 = vmatpush1.xpose.msra.mxu0 0.0
  %1546 = vmatprep.subr.mxu0 0.0
  %1547 = vmatpush1.xpose.msra.mxu0 0.0
  %1548 = vmatprep.subr.mxu0 0.0
  %1549 = vmatpush1.xpose.msra.mxu0 0.0
  %1550 = vmatprep.subr.mxu0 0.0
  %1551 = vmatpush1.xpose.msra.mxu0 0.0
  %1552 = vmatprep.subr.mxu0 0.0
  %1553 = vmatpush1.xpose.msra.mxu0 0.0
  %1554 = vmatprep.subr.mxu0 0.0
  %1555 = vmatpush1.xpose.msra.mxu0 0.0
  %1556 = vmatprep.subr.mxu0 0.0
  %1557 = vmatpush1.xpose.msra.mxu0 0.0
  %1558 = vmatprep.subr.mxu0 0.0
  %1559 = vmatpush1.xpose.msra.mxu0 0.0
  %1560 = vmatprep.subr.mxu0 0.0
  %1561 = vmatpush1.xpose.msra.mxu0 0.0
  %1562 = vmatprep.subr.mxu0 0.0
  %1563 = vmatpush1.xpose.msra.mxu0 0.0
  %1564 = vmatprep.subr.mxu0 0.0
  %1565 = vmatpush1.xpose.msra.mxu0 0.0
  %1566 = vmatprep.subr.mxu0 0.0
  %1567 = vmatpush1.xpose.msra.mxu0 0.0
  %1568 = vmatprep.subr.mxu0 0.0
  %1569 = vmatpush1.xpose.msra.mxu0 0.0
  %1570 = vmatprep.subr.mxu0 0.0
  %1571 = vmatpush1.xpose.msra.mxu0 0.0
  %1572 = vmatprep.subr.mxu0 0.0
  %1573 = vmatpush1.xpose.msra.mxu0 0.0
  %1574 = vmatprep.subr.mxu0 0.0
  %1575 = vmatpush1.xpose.msra.mxu0 0.0
  %1576 = vmatprep.subr.mxu0 0.0
  %1577 = vmatpush1.xpose.msra.mxu0 0.0
  %1578 = vmatprep.subr.mxu0 0.0
  %1579 = vmatpush1.xpose.msra.mxu0 0.0
  %1580 = vmatprep.subr.mxu0 0.0
  %1581 = vmatpush1.xpose.msra.mxu0 0.0
  %1582 = vmatprep.subr.mxu0 0.0
  %1583 = vmatpush1.xpose.msra.mxu0 0.0
  %1584 = vmatprep.subr.mxu0 0.0
  %1585 = vmatpush1.xpose.msra.mxu0 0.0
  %1586 = vmatprep.subr.mxu0 0.0
  %1587 = vmatpush1.xpose.msra.mxu0 0.0
  %1588 = vmatprep.subr.mxu0 0.0
  %1589 = vmatpush1.xpose.msra.mxu0 0.0
  %1590 = vmatprep.subr.mxu0 0.0
  %1591 = vmatpush1.xpose.msra.mxu0 0.0
  %1592 = vmatprep.subr.mxu0 0.0
  %1593 = vmatpush1.xpose.msra.mxu0 0.0
  %1594 = vmatprep.subr.mxu0 0.0
  %1595 = vmatpush1.xpose.msra.mxu0 0.0
  %1596 = vmatprep.subr.mxu0 0.0
  %1597 = vmatpush1.xpose.msra.mxu0 0.0
  %1598 = vmatprep.subr.mxu0 0.0
  %1599 = vmatpush1.xpose.msra.mxu0 0.0
  %1600 = vmatprep.subr.mxu0 0.0
  %1601 = vmatpush1.xpose.msra.mxu0 0.0
  %1602 = vmatprep.subr.mxu0 0.0
  %1603 = vmatpush1.xpose.msra.mxu0 0.0
  %1604 = vmatprep.mubr.f32.mxu0 0.0
  %1605 = vmatmul.mubr.f32.gmra.mrb[0].mxu0 %v1535
  %v1606 = vpop.f32.mrb[0].mxu0
  %v1607 = vadd.f32 0.0, %v1606
  %v1608 = vpop.f32.mrb[0].mxu0
  %1609 = vdwg.mxu0
  %v1611 = vsel %vm1153, %v559, 0
  %v1614 = vsel %vm1153, %v855, 0
  %1616 = vmatprep.subr.mxu0 0.0
  %1617 = vmatpush1.xpose.msra.mxu0 %v1614
  %1618 = vmatprep.subr.mxu0 0.0
  %1619 = vmatpush1.xpose.msra.mxu0 0.0
  %1620 = vmatprep.subr.mxu0 0.0
  %1621 = vmatpush1.xpose.msra.mxu0 0.0
  %1622 = vmatprep.subr.mxu0 0.0
  %1623 = vmatpush1.xpose.msra.mxu0 0.0
  %1624 = vmatprep.subr.mxu0 0.0
  %1625 = vmatpush1.xpose.msra.mxu0 0.0
  %1626 = vmatprep.subr.mxu0 0.0
  %1627 = vmatpush1.xpose.msra.mxu0 0.0
  %1628 = vmatprep.subr.mxu0 0.0
  %1629 = vmatpush1.xpose.msra.mxu0 0.0
  %1630 = vmatprep.subr.mxu0 0.0
  %1631 = vmatpush1.xpose.msra.mxu0 0.0
  %1632 = vmatprep.subr.mxu0 0.0
  %1633 = vmatpush1.xpose.msra.mxu0 0.0
  %1634 = vmatprep.subr.mxu0 0.0
  %1635 = vmatpush1.xpose.msra.mxu0 0.0
  %1636 = vmatprep.subr.mxu0 0.0
  %1637 = vmatpush1.xpose.msra.mxu0 0.0
  %1638 = vmatprep.subr.mxu0 0.0
  %1639 = vmatpush1.xpose.msra.mxu0 0.0
  %1640 = vmatprep.subr.mxu0 0.0
  %1641 = vmatpush1.xpose.msra.mxu0 0.0
  %1642 = vmatprep.subr.mxu0 0.0
  %1643 = vmatpush1.xpose.msra.mxu0 0.0
  %1644 = vmatprep.subr.mxu0 0.0
  %1645 = vmatpush1.xpose.msra.mxu0 0.0
  %1646 = vmatprep.subr.mxu0 0.0
  %1647 = vmatpush1.xpose.msra.mxu0 0.0
  %1648 = vmatprep.subr.mxu0 0.0
  %1649 = vmatpush1.xpose.msra.mxu0 0.0
  %1650 = vmatprep.subr.mxu0 0.0
  %1651 = vmatpush1.xpose.msra.mxu0 0.0
  %1652 = vmatprep.subr.mxu0 0.0
  %1653 = vmatpush1.xpose.msra.mxu0 0.0
  %1654 = vmatprep.subr.mxu0 0.0
  %1655 = vmatpush1.xpose.msra.mxu0 0.0
  %1656 = vmatprep.subr.mxu0 0.0
  %1657 = vmatpush1.xpose.msra.mxu0 0.0
  %1658 = vmatprep.subr.mxu0 0.0
  %1659 = vmatpush1.xpose.msra.mxu0 0.0
  %1660 = vmatprep.subr.mxu0 0.0
  %1661 = vmatpush1.xpose.msra.mxu0 0.0
  %1662 = vmatprep.subr.mxu0 0.0
  %1663 = vmatpush1.xpose.msra.mxu0 0.0
  %1664 = vmatprep.subr.mxu0 0.0
  %1665 = vmatpush1.xpose.msra.mxu0 0.0
  %1666 = vmatprep.subr.mxu0 0.0
  %1667 = vmatpush1.xpose.msra.mxu0 0.0
  %1668 = vmatprep.subr.mxu0 0.0
  %1669 = vmatpush1.xpose.msra.mxu0 0.0
  %1670 = vmatprep.subr.mxu0 0.0
  %1671 = vmatpush1.xpose.msra.mxu0 0.0
  %1672 = vmatprep.subr.mxu0 0.0
  %1673 = vmatpush1.xpose.msra.mxu0 0.0
  %1674 = vmatprep.subr.mxu0 0.0
  %1675 = vmatpush1.xpose.msra.mxu0 0.0
  %1676 = vmatprep.subr.mxu0 0.0
  %1677 = vmatpush1.xpose.msra.mxu0 0.0
  %1678 = vmatprep.subr.mxu0 0.0
  %1679 = vmatpush1.xpose.msra.mxu0 0.0
  %1680 = vmatprep.mubr.f32.mxu0 0.0
  %1681 = vmatmul.mubr.f32.gmra.mrb[0].mxu0 %v1611
  %v1682 = vpop.f32.mrb[0].mxu0
  %v1683 = vadd.f32 0.0, %v1682
  %v1684 = vpop.f32.mrb[0].mxu0
  %1685 = vdwg.mxu0
  %v1687 = vsel %vm1153, %v560, 0
  %v1690 = vsel %vm1153, %v856, 0
  %1692 = vmatprep.subr.mxu0 0.0
  %1693 = vmatpush1.xpose.msra.mxu0 %v1690
  %1694 = vmatprep.subr.mxu0 0.0
  %1695 = vmatpush1.xpose.msra.mxu0 0.0
  %1696 = vmatprep.subr.mxu0 0.0
  %1697 = vmatpush1.xpose.msra.mxu0 0.0
  %1698 = vmatprep.subr.mxu0 0.0
  %1699 = vmatpush1.xpose.msra.mxu0 0.0
  %1700 = vmatprep.subr.mxu0 0.0
  %1701 = vmatpush1.xpose.msra.mxu0 0.0
  %1702 = vmatprep.subr.mxu0 0.0
  %1703 = vmatpush1.xpose.msra.mxu0 0.0
  %1704 = vmatprep.subr.mxu0 0.0
  %1705 = vmatpush1.xpose.msra.mxu0 0.0
  %1706 = vmatprep.subr.mxu0 0.0
  %1707 = vmatpush1.xpose.msra.mxu0 0.0
  %1708 = vmatprep.subr.mxu0 0.0
  %1709 = vmatpush1.xpose.msra.mxu0 0.0
  %1710 = vmatprep.subr.mxu0 0.0
  %1711 = vmatpush1.xpose.msra.mxu0 0.0
  %1712 = vmatprep.subr.mxu0 0.0
  %1713 = vmatpush1.xpose.msra.mxu0 0.0
  %1714 = vmatprep.subr.mxu0 0.0
  %1715 = vmatpush1.xpose.msra.mxu0 0.0
  %1716 = vmatprep.subr.mxu0 0.0
  %1717 = vmatpush1.xpose.msra.mxu0 0.0
  %1718 = vmatprep.subr.mxu0 0.0
  %1719 = vmatpush1.xpose.msra.mxu0 0.0
  %1720 = vmatprep.subr.mxu0 0.0
  %1721 = vmatpush1.xpose.msra.mxu0 0.0
  %1722 = vmatprep.subr.mxu0 0.0
  %1723 = vmatpush1.xpose.msra.mxu0 0.0
  %1724 = vmatprep.subr.mxu0 0.0
  %1725 = vmatpush1.xpose.msra.mxu0 0.0
  %1726 = vmatprep.subr.mxu0 0.0
  %1727 = vmatpush1.xpose.msra.mxu0 0.0
  %1728 = vmatprep.subr.mxu0 0.0
  %1729 = vmatpush1.xpose.msra.mxu0 0.0
  %1730 = vmatprep.subr.mxu0 0.0
  %1731 = vmatpush1.xpose.msra.mxu0 0.0
  %1732 = vmatprep.subr.mxu0 0.0
  %1733 = vmatpush1.xpose.msra.mxu0 0.0
  %1734 = vmatprep.subr.mxu0 0.0
  %1735 = vmatpush1.xpose.msra.mxu0 0.0
  %1736 = vmatprep.subr.mxu0 0.0
  %1737 = vmatpush1.xpose.msra.mxu0 0.0
  %1738 = vmatprep.subr.mxu0 0.0
  %1739 = vmatpush1.xpose.msra.mxu0 0.0
  %1740 = vmatprep.subr.mxu0 0.0
  %1741 = vmatpush1.xpose.msra.mxu0 0.0
  %1742 = vmatprep.subr.mxu0 0.0
  %1743 = vmatpush1.xpose.msra.mxu0 0.0
  %1744 = vmatprep.subr.mxu0 0.0
  %1745 = vmatpush1.xpose.msra.mxu0 0.0
  %1746 = vmatprep.subr.mxu0 0.0
  %1747 = vmatpush1.xpose.msra.mxu0 0.0
  %1748 = vmatprep.subr.mxu0 0.0
  %1749 = vmatpush1.xpose.msra.mxu0 0.0
  %1750 = vmatprep.subr.mxu0 0.0
  %1751 = vmatpush1.xpose.msra.mxu0 0.0
  %1752 = vmatprep.subr.mxu0 0.0
  %1753 = vmatpush1.xpose.msra.mxu0 0.0
  %1754 = vmatprep.subr.mxu0 0.0
  %1755 = vmatpush1.xpose.msra.mxu0 0.0
  %1756 = vmatprep.mubr.f32.mxu0 0.0
  %1757 = vmatmul.mubr.f32.gmra.mrb[0].mxu0 %v1687
  %v1758 = vpop.f32.mrb[0].mxu0
  %v1759 = vadd.f32 0.0, %v1758
  %v1760 = vpop.f32.mrb[0].mxu0
  %1761 = vdwg.mxu0
  %v1762 = vmul.f32 %v1227, 0.35355338
  %v1763 = vmul.f32 %v1303, 0.35355338
  %v1764 = vmul.f32 %v1379, 0.35355338
  %v1765 = vmul.f32 %v1455, 0.35355338
  %v1766 = vmul.f32 %v1531, 0.35355338
  %v1767 = vmul.f32 %v1607, 0.35355338
  %v1768 = vmul.f32 %v1683, 0.35355338
  %v1769 = vmul.f32 %v1759, 0.35355338
  %v1770 = vadd.f32 %v1762, %v26
  %v1771 = vadd.f32 %v1763, %v26
  %v1772 = vadd.f32 %v1764, %v26
  %v1773 = vadd.f32 %v1765, %v26
  %v1774 = vadd.f32 %v1766, %v27
  %v1775 = vadd.f32 %v1767, %v27
  %v1776 = vadd.f32 %v1768, %v27
  %v1777 = vadd.f32 %v1769, %v27
  %v1778 = vsel %vm1153, %v1770, -inf
  %1779 = vmax.xlane.f32.xlu0 %v1778
  %v1780 = vpop.xlane.xlu0 %1779
  %v1781 = vsel %vm1153, %v1771, -inf
  %1782 = vmax.xlane.f32.xlu0 %v1781
  %v1783 = vpop.xlane.xlu0 %1782
  %v1784 = vsel %vm1153, %v1772, -inf
  %1785 = vmax.xlane.f32.xlu0 %v1784
  %v1786 = vpop.xlane.xlu0 %1785
  %v1787 = vsel %vm1153, %v1773, -inf
  %1788 = vmax.xlane.f32.xlu0 %v1787
  %v1789 = vpop.xlane.xlu0 %1788
  %v1790 = vsel %vm1153, %v1774, -inf
  %1791 = vmax.xlane.f32.xlu0 %v1790
  %v1792 = vpop.xlane.xlu0 %1791
  %v1793 = vsel %vm1153, %v1775, -inf
  %1794 = vmax.xlane.f32.xlu0 %v1793
  %v1795 = vpop.xlane.xlu0 %1794
  %v1796 = vsel %vm1153, %v1776, -inf
  %1797 = vmax.xlane.f32.xlu0 %v1796
  %v1798 = vpop.xlane.xlu0 %1797
  %v1799 = vsel %vm1153, %v1777, -inf
  %1800 = vmax.xlane.f32.xlu0 %v1799
  %v1801 = vpop.xlane.xlu0 %1800
  %v1802 = vsub.f32 %v1770, %v1780
  %v1803 = vsub.f32 %v1771, %v1783
  %v1804 = vsub.f32 %v1772, %v1786
  %v1805 = vsub.f32 %v1773, %v1789
  %v1806 = vsub.f32 %v1774, %v1792
  %v1807 = vsub.f32 %v1775, %v1795
  %v1808 = vsub.f32 %v1776, %v1798
  %v1809 = vsub.f32 %v1777, %v1801
  %v1810 = vmul.f32 %v1802, 1.442695
  %v1811 = vpow.pop %v1810
  %v1812 = vmul.f32 %v1803, 1.442695
  %v1813 = vpow.pop %v1812
  %v1814 = vmul.f32 %v1804, 1.442695
  %v1815 = vpow.pop %v1814
  %v1816 = vmul.f32 %v1805, 1.442695
  %v1817 = vpow.pop %v1816
  %v1818 = vmul.f32 %v1806, 1.442695
  %v1819 = vpow.pop %v1818
  %v1820 = vmul.f32 %v1807, 1.442695
  %v1821 = vpow.pop %v1820
  %v1822 = vmul.f32 %v1808, 1.442695
  %v1823 = vpow.pop %v1822
  %v1824 = vmul.f32 %v1809, 1.442695
  %v1825 = vpow.pop %v1824
  %v1826 = vsel %vm1153, %v1811, 0.0
  %1827 = vadd.xlane.f32.xlu0 %v1826
  %v1828 = vpop.xlane.xlu0 %1827
  %v1829 = vsel %vm1153, %v1813, 0.0
  %1830 = vadd.xlane.f32.xlu0 %v1829
  %v1831 = vpop.xlane.xlu0 %1830
  %v1832 = vsel %vm1153, %v1815, 0.0
  %1833 = vadd.xlane.f32.xlu0 %v1832
  %v1834 = vpop.xlane.xlu0 %1833
  %v1835 = vsel %vm1153, %v1817, 0.0
  %1836 = vadd.xlane.f32.xlu0 %v1835
  %v1837 = vpop.xlane.xlu0 %1836
  %v1838 = vsel %vm1153, %v1819, 0.0
  %1839 = vadd.xlane.f32.xlu0 %v1838
  %v1840 = vpop.xlane.xlu0 %1839
  %v1841 = vsel %vm1153, %v1821, 0.0
  %1842 = vadd.xlane.f32.xlu0 %v1841
  %v1843 = vpop.xlane.xlu0 %1842
  %v1844 = vsel %vm1153, %v1823, 0.0
  %1845 = vadd.xlane.f32.xlu0 %v1844
  %v1846 = vpop.xlane.xlu0 %1845
  %v1847 = vsel %vm1153, %v1825, 0.0
  %1848 = vadd.xlane.f32.xlu0 %v1847
  %v1849 = vpop.xlane.xlu0 %1848
  %v1850 = vrcp.pop %v1828
  %v1851 = vrcp.pop %v1831
  %v1852 = vrcp.pop %v1834
  %v1853 = vrcp.pop %v1837
  %v1854 = vrcp.pop %v1840
  %v1855 = vrcp.pop %v1843
  %v1856 = vrcp.pop %v1846
  %v1857 = vrcp.pop %v1849
  %v1858 = vmul.f32 %v1811, %v1850
  %v1859 = vmul.f32 %v1813, %v1851
  %v1860 = vmul.f32 %v1815, %v1852
  %v1861 = vmul.f32 %v1817, %v1853
  %v1862 = vmul.f32 %v1819, %v1854
  %v1863 = vmul.f32 %v1821, %v1855
  %v1864 = vmul.f32 %v1823, %v1856
  %v1865 = vmul.f32 %v1825, %v1857
  %v1867 = vsel %vm1153, %v1858, 0
  %1869 = vmatprep.subr.mxu0 0.0
  %1870 = vmatpush1.msra.mxu0 %v1081
  %1871 = vmatprep.subr.mxu0 0.0
  %1872 = vmatpush1.msra.mxu0 0.0
  %1873 = vmatprep.subr.mxu0 0.0
  %1874 = vmatpush1.msra.mxu0 0.0
  %1875 = vmatprep.subr.mxu0 0.0
  %1876 = vmatpush1.msra.mxu0 0.0
  %1877 = vmatprep.subr.mxu0 0.0
  %1878 = vmatpush1.msra.mxu0 0.0
  %1879 = vmatprep.subr.mxu0 0.0
  %1880 = vmatpush1.msra.mxu0 0.0
  %1881 = vmatprep.subr.mxu0 0.0
  %1882 = vmatpush1.msra.mxu0 0.0
  %1883 = vmatprep.subr.mxu0 0.0
  %1884 = vmatpush1.msra.mxu0 0.0
  %1885 = vmatprep.subr.mxu0 0.0
  %1886 = vmatpush1.msra.mxu0 0.0
  %1887 = vmatprep.subr.mxu0 0.0
  %1888 = vmatpush1.msra.mxu0 0.0
  %1889 = vmatprep.subr.mxu0 0.0
  %1890 = vmatpush1.msra.mxu0 0.0
  %1891 = vmatprep.subr.mxu0 0.0
  %1892 = vmatpush1.msra.mxu0 0.0
  %1893 = vmatprep.subr.mxu0 0.0
  %1894 = vmatpush1.msra.mxu0 0.0
  %1895 = vmatprep.subr.mxu0 0.0
  %1896 = vmatpush1.msra.mxu0 0.0
  %1897 = vmatprep.subr.mxu0 0.0
  %1898 = vmatpush1.msra.mxu0 0.0
  %1899 = vmatprep.subr.mxu0 0.0
  %1900 = vmatpush1.msra.mxu0 0.0
  %1901 = vmatprep.subr.mxu0 0.0
  %1902 = vmatpush1.msra.mxu0 0.0
  %1903 = vmatprep.subr.mxu0 0.0
  %1904 = vmatpush1.msra.mxu0 0.0
  %1905 = vmatprep.subr.mxu0 0.0
  %1906 = vmatpush1.msra.mxu0 0.0
  %1907 = vmatprep.subr.mxu0 0.0
  %1908 = vmatpush1.msra.mxu0 0.0
  %1909 = vmatprep.subr.mxu0 0.0
  %1910 = vmatpush1.msra.mxu0 0.0
  %1911 = vmatprep.subr.mxu0 0.0
  %1912 = vmatpush1.msra.mxu0 0.0
  %1913 = vmatprep.subr.mxu0 0.0
  %1914 = vmatpush1.msra.mxu0 0.0
  %1915 = vmatprep.subr.mxu0 0.0
  %1916 = vmatpush1.msra.mxu0 0.0
  %1917 = vmatprep.subr.mxu0 0.0
  %1918 = vmatpush1.msra.mxu0 0.0
  %1919 = vmatprep.subr.mxu0 0.0
  %1920 = vmatpush1.msra.mxu0 0.0
  %1921 = vmatprep.subr.mxu0 0.0
  %1922 = vmatpush1.msra.mxu0 0.0
  %1923 = vmatprep.subr.mxu0 0.0
  %1924 = vmatpush1.msra.mxu0 0.0
  %1925 = vmatprep.subr.mxu0 0.0
  %1926 = vmatpush1.msra.mxu0 0.0
  %1927 = vmatprep.subr.mxu0 0.0
  %1928 = vmatpush1.msra.mxu0 0.0
  %1929 = vmatprep.subr.mxu0 0.0
  %1930 = vmatpush1.msra.mxu0 0.0
  %1931 = vmatprep.subr.mxu0 0.0
  %1932 = vmatpush1.msra.mxu0 0.0
  %1933 = vmatprep.mubr.f32.mxu0 0.0
  %1934 = vmatmul.mubr.f32.gmra.mrb[0].mxu0 %v1867
  %v1935 = vpop.f32.mrb[0].mxu0
  %v1936 = vadd.f32 0.0, %v1935
  %v1937 = vpop.f32.mrb[0].mxu0
  %1938 = vdwg.mxu0
  %v1940 = vsel %vm1153, %v1859, 0
  %1942 = vmatprep.subr.mxu0 0.0
  %1943 = vmatpush1.msra.mxu0 %v1082
  %1944 = vmatprep.subr.mxu0 0.0
  %1945 = vmatpush1.msra.mxu0 0.0
  %1946 = vmatprep.subr.mxu0 0.0
  %1947 = vmatpush1.msra.mxu0 0.0
  %1948 = vmatprep.subr.mxu0 0.0
  %1949 = vmatpush1.msra.mxu0 0.0
  %1950 = vmatprep.subr.mxu0 0.0
  %1951 = vmatpush1.msra.mxu0 0.0
  %1952 = vmatprep.subr.mxu0 0.0
  %1953 = vmatpush1.msra.mxu0 0.0
  %1954 = vmatprep.subr.mxu0 0.0
  %1955 = vmatpush1.msra.mxu0 0.0
  %1956 = vmatprep.subr.mxu0 0.0
  %1957 = vmatpush1.msra.mxu0 0.0
  %1958 = vmatprep.subr.mxu0 0.0
  %1959 = vmatpush1.msra.mxu0 0.0
  %1960 = vmatprep.subr.mxu0 0.0
  %1961 = vmatpush1.msra.mxu0 0.0
  %1962 = vmatprep.subr.mxu0 0.0
  %1963 = vmatpush1.msra.mxu0 0.0
  %1964 = vmatprep.subr.mxu0 0.0
  %1965 = vmatpush1.msra.mxu0 0.0
  %1966 = vmatprep.subr.mxu0 0.0
  %1967 = vmatpush1.msra.mxu0 0.0
  %1968 = vmatprep.subr.mxu0 0.0
  %1969 = vmatpush1.msra.mxu0 0.0
  %1970 = vmatprep.subr.mxu0 0.0
  %1971 = vmatpush1.msra.mxu0 0.0
  %1972 = vmatprep.subr.mxu0 0.0
  %1973 = vmatpush1.msra.mxu0 0.0
  %1974 = vmatprep.subr.mxu0 0.0
  %1975 = vmatpush1.msra.mxu0 0.0
  %1976 = vmatprep.subr.mxu0 0.0
  %1977 = vmatpush1.msra.mxu0 0.0
  %1978 = vmatprep.subr.mxu0 0.0
  %1979 = vmatpush1.msra.mxu0 0.0
  %1980 = vmatprep.subr.mxu0 0.0
  %1981 = vmatpush1.msra.mxu0 0.0
  %1982 = vmatprep.subr.mxu0 0.0
  %1983 = vmatpush1.msra.mxu0 0.0
  %1984 = vmatprep.subr.mxu0 0.0
  %1985 = vmatpush1.msra.mxu0 0.0
  %1986 = vmatprep.subr.mxu0 0.0
  %1987 = vmatpush1.msra.mxu0 0.0
  %1988 = vmatprep.subr.mxu0 0.0
  %1989 = vmatpush1.msra.mxu0 0.0
  %1990 = vmatprep.subr.mxu0 0.0
  %1991 = vmatpush1.msra.mxu0 0.0
  %1992 = vmatprep.subr.mxu0 0.0
  %1993 = vmatpush1.msra.mxu0 0.0
  %1994 = vmatprep.subr.mxu0 0.0
  %1995 = vmatpush1.msra.mxu0 0.0
  %1996 = vmatprep.subr.mxu0 0.0
  %1997 = vmatpush1.msra.mxu0 0.0
  %1998 = vmatprep.subr.mxu0 0.0
  %1999 = vmatpush1.msra.mxu0 0.0
  %2000 = vmatprep.subr.mxu0 0.0
  %2001 = vmatpush1.msra.mxu0 0.0
  %2002 = vmatprep.subr.mxu0 0.0
  %2003 = vmatpush1.msra.mxu0 0.0
  %2004 = vmatprep.subr.mxu0 0.0
  %2005 = vmatpush1.msra.mxu0 0.0
  %2006 = vmatprep.mubr.f32.mxu0 0.0
  %2007 = vmatmul.mubr.f32.gmra.mrb[0].mxu0 %v1940
  %v2008 = vpop.f32.mrb[0].mxu0
  %v2009 = vadd.f32 0.0, %v2008
  %v2010 = vpop.f32.mrb[0].mxu0
  %2011 = vdwg.mxu0
  %v2013 = vsel %vm1153, %v1860, 0
  %2015 = vmatprep.subr.mxu0 0.0
  %2016 = vmatpush1.msra.mxu0 %v1083
  %2017 = vmatprep.subr.mxu0 0.0
  %2018 = vmatpush1.msra.mxu0 0.0
  %2019 = vmatprep.subr.mxu0 0.0
  %2020 = vmatpush1.msra.mxu0 0.0
  %2021 = vmatprep.subr.mxu0 0.0
  %2022 = vmatpush1.msra.mxu0 0.0
  %2023 = vmatprep.subr.mxu0 0.0
  %2024 = vmatpush1.msra.mxu0 0.0
  %2025 = vmatprep.subr.mxu0 0.0
  %2026 = vmatpush1.msra.mxu0 0.0
  %2027 = vmatprep.subr.mxu0 0.0
  %2028 = vmatpush1.msra.mxu0 0.0
  %2029 = vmatprep.subr.mxu0 0.0
  %2030 = vmatpush1.msra.mxu0 0.0
  %2031 = vmatprep.subr.mxu0 0.0
  %2032 = vmatpush1.msra.mxu0 0.0
  %2033 = vmatprep.subr.mxu0 0.0
  %2034 = vmatpush1.msra.mxu0 0.0
  %2035 = vmatprep.subr.mxu0 0.0
  %2036 = vmatpush1.msra.mxu0 0.0
  %2037 = vmatprep.subr.mxu0 0.0
  %2038 = vmatpush1.msra.mxu0 0.0
  %2039 = vmatprep.subr.mxu0 0.0
  %2040 = vmatpush1.msra.mxu0 0.0
  %2041 = vmatprep.subr.mxu0 0.0
  %2042 = vmatpush1.msra.mxu0 0.0
  %2043 = vmatprep.subr.mxu0 0.0
  %2044 = vmatpush1.msra.mxu0 0.0
  %2045 = vmatprep.subr.mxu0 0.0
  %2046 = vmatpush1.msra.mxu0 0.0
  %2047 = vmatprep.subr.mxu0 0.0
  %2048 = vmatpush1.msra.mxu0 0.0
  %2049 = vmatprep.subr.mxu0 0.0
  %2050 = vmatpush1.msra.mxu0 0.0
  %2051 = vmatprep.subr.mxu0 0.0
  %2052 = vmatpush1.msra.mxu0 0.0
  %2053 = vmatprep.subr.mxu0 0.0
  %2054 = vmatpush1.msra.mxu0 0.0
  %2055 = vmatprep.subr.mxu0 0.0
  %2056 = vmatpush1.msra.mxu0 0.0
  %2057 = vmatprep.subr.mxu0 0.0
  %2058 = vmatpush1.msra.mxu0 0.0
  %2059 = vmatprep.subr.mxu0 0.0
  %2060 = vmatpush1.msra.mxu0 0.0
  %2061 = vmatprep.subr.mxu0 0.0
  %2062 = vmatpush1.msra.mxu0 0.0
  %2063 = vmatprep.subr.mxu0 0.0
  %2064 = vmatpush1.msra.mxu0 0.0
  %2065 = vmatprep.subr.mxu0 0.0
  %2066 = vmatpush1.msra.mxu0 0.0
  %2067 = vmatprep.subr.mxu0 0.0
  %2068 = vmatpush1.msra.mxu0 0.0
  %2069 = vmatprep.subr.mxu0 0.0
  %2070 = vmatpush1.msra.mxu0 0.0
  %2071 = vmatprep.subr.mxu0 0.0
  %2072 = vmatpush1.msra.mxu0 0.0
  %2073 = vmatprep.subr.mxu0 0.0
  %2074 = vmatpush1.msra.mxu0 0.0
  %2075 = vmatprep.subr.mxu0 0.0
  %2076 = vmatpush1.msra.mxu0 0.0
  %2077 = vmatprep.subr.mxu0 0.0
  %2078 = vmatpush1.msra.mxu0 0.0
  %2079 = vmatprep.mubr.f32.mxu0 0.0
  %2080 = vmatmul.mubr.f32.gmra.mrb[0].mxu0 %v2013
  %v2081 = vpop.f32.mrb[0].mxu0
  %v2082 = vadd.f32 0.0, %v2081
  %v2083 = vpop.f32.mrb[0].mxu0
  %2084 = vdwg.mxu0
  %v2086 = vsel %vm1153, %v1861, 0
  %2088 = vmatprep.subr.mxu0 0.0
  %2089 = vmatpush1.msra.mxu0 %v1084
  %2090 = vmatprep.subr.mxu0 0.0
  %2091 = vmatpush1.msra.mxu0 0.0
  %2092 = vmatprep.subr.mxu0 0.0
  %2093 = vmatpush1.msra.mxu0 0.0
  %2094 = vmatprep.subr.mxu0 0.0
  %2095 = vmatpush1.msra.mxu0 0.0
  %2096 = vmatprep.subr.mxu0 0.0
  %2097 = vmatpush1.msra.mxu0 0.0
  %2098 = vmatprep.subr.mxu0 0.0
  %2099 = vmatpush1.msra.mxu0 0.0
  %2100 = vmatprep.subr.mxu0 0.0
  %2101 = vmatpush1.msra.mxu0 0.0
  %2102 = vmatprep.subr.mxu0 0.0
  %2103 = vmatpush1.msra.mxu0 0.0
  %2104 = vmatprep.subr.mxu0 0.0
  %2105 = vmatpush1.msra.mxu0 0.0
  %2106 = vmatprep.subr.mxu0 0.0
  %2107 = vmatpush1.msra.mxu0 0.0
  %2108 = vmatprep.subr.mxu0 0.0
  %2109 = vmatpush1.msra.mxu0 0.0
  %2110 = vmatprep.subr.mxu0 0.0
  %2111 = vmatpush1.msra.mxu0 0.0
  %2112 = vmatprep.subr.mxu0 0.0
  %2113 = vmatpush1.msra.mxu0 0.0
  %2114 = vmatprep.subr.mxu0 0.0
  %2115 = vmatpush1.msra.mxu0 0.0
  %2116 = vmatprep.subr.mxu0 0.0
  %2117 = vmatpush1.msra.mxu0 0.0
  %2118 = vmatprep.subr.mxu0 0.0
  %2119 = vmatpush1.msra.mxu0 0.0
  %2120 = vmatprep.subr.mxu0 0.0
  %2121 = vmatpush1.msra.mxu0 0.0
  %2122 = vmatprep.subr.mxu0 0.0
  %2123 = vmatpush1.msra.mxu0 0.0
  %2124 = vmatprep.subr.mxu0 0.0
  %2125 = vmatpush1.msra.mxu0 0.0
  %2126 = vmatprep.subr.mxu0 0.0
  %2127 = vmatpush1.msra.mxu0 0.0
  %2128 = vmatprep.subr.mxu0 0.0
  %2129 = vmatpush1.msra.mxu0 0.0
  %2130 = vmatprep.subr.mxu0 0.0
  %2131 = vmatpush1.msra.mxu0 0.0
  %2132 = vmatprep.subr.mxu0 0.0
  %2133 = vmatpush1.msra.mxu0 0.0
  %2134 = vmatprep.subr.mxu0 0.0
  %2135 = vmatpush1.msra.mxu0 0.0
  %2136 = vmatprep.subr.mxu0 0.0
  %2137 = vmatpush1.msra.mxu0 0.0
  %2138 = vmatprep.subr.mxu0 0.0
  %2139 = vmatpush1.msra.mxu0 0.0
  %2140 = vmatprep.subr.mxu0 0.0
  %2141 = vmatpush1.msra.mxu0 0.0
  %2142 = vmatprep.subr.mxu0 0.0
  %2143 = vmatpush1.msra.mxu0 0.0
  %2144 = vmatprep.subr.mxu0 0.0
  %2145 = vmatpush1.msra.mxu0 0.0
  %2146 = vmatprep.subr.mxu0 0.0
  %2147 = vmatpush1.msra.mxu0 0.0
  %2148 = vmatprep.subr.mxu0 0.0
  %2149 = vmatpush1.msra.mxu0 0.0
  %2150 = vmatprep.subr.mxu0 0.0
  %2151 = vmatpush1.msra.mxu0 0.0
  %2152 = vmatprep.mubr.f32.mxu0 0.0
  %2153 = vmatmul.mubr.f32.gmra.mrb[0].mxu0 %v2086
  %v2154 = vpop.f32.mrb[0].mxu0
  %v2155 = vadd.f32 0.0, %v2154
  %v2156 = vpop.f32.mrb[0].mxu0
  %2157 = vdwg.mxu0
  %v2159 = vsel %vm1153, %v1862, 0
  %2161 = vmatprep.subr.mxu0 0.0
  %2162 = vmatpush1.msra.mxu0 %v1149
  %2163 = vmatprep.subr.mxu0 0.0
  %2164 = vmatpush1.msra.mxu0 0.0
  %2165 = vmatprep.subr.mxu0 0.0
  %2166 = vmatpush1.msra.mxu0 0.0
  %2167 = vmatprep.subr.mxu0 0.0
  %2168 = vmatpush1.msra.mxu0 0.0
  %2169 = vmatprep.subr.mxu0 0.0
  %2170 = vmatpush1.msra.mxu0 0.0
  %2171 = vmatprep.subr.mxu0 0.0
  %2172 = vmatpush1.msra.mxu0 0.0
  %2173 = vmatprep.subr.mxu0 0.0
  %2174 = vmatpush1.msra.mxu0 0.0
  %2175 = vmatprep.subr.mxu0 0.0
  %2176 = vmatpush1.msra.mxu0 0.0
  %2177 = vmatprep.subr.mxu0 0.0
  %2178 = vmatpush1.msra.mxu0 0.0
  %2179 = vmatprep.subr.mxu0 0.0
  %2180 = vmatpush1.msra.mxu0 0.0
  %2181 = vmatprep.subr.mxu0 0.0
  %2182 = vmatpush1.msra.mxu0 0.0
  %2183 = vmatprep.subr.mxu0 0.0
  %2184 = vmatpush1.msra.mxu0 0.0
  %2185 = vmatprep.subr.mxu0 0.0
  %2186 = vmatpush1.msra.mxu0 0.0
  %2187 = vmatprep.subr.mxu0 0.0
  %2188 = vmatpush1.msra.mxu0 0.0
  %2189 = vmatprep.subr.mxu0 0.0
  %2190 = vmatpush1.msra.mxu0 0.0
  %2191 = vmatprep.subr.mxu0 0.0
  %2192 = vmatpush1.msra.mxu0 0.0
  %2193 = vmatprep.subr.mxu0 0.0
  %2194 = vmatpush1.msra.mxu0 0.0
  %2195 = vmatprep.subr.mxu0 0.0
  %2196 = vmatpush1.msra.mxu0 0.0
  %2197 = vmatprep.subr.mxu0 0.0
  %2198 = vmatpush1.msra.mxu0 0.0
  %2199 = vmatprep.subr.mxu0 0.0
  %2200 = vmatpush1.msra.mxu0 0.0
  %2201 = vmatprep.subr.mxu0 0.0
  %2202 = vmatpush1.msra.mxu0 0.0
  %2203 = vmatprep.subr.mxu0 0.0
  %2204 = vmatpush1.msra.mxu0 0.0
  %2205 = vmatprep.subr.mxu0 0.0
  %2206 = vmatpush1.msra.mxu0 0.0
  %2207 = vmatprep.subr.mxu0 0.0
  %2208 = vmatpush1.msra.mxu0 0.0
  %2209 = vmatprep.subr.mxu0 0.0
  %2210 = vmatpush1.msra.mxu0 0.0
  %2211 = vmatprep.subr.mxu0 0.0
  %2212 = vmatpush1.msra.mxu0 0.0
  %2213 = vmatprep.subr.mxu0 0.0
  %2214 = vmatpush1.msra.mxu0 0.0
  %2215 = vmatprep.subr.mxu0 0.0
  %2216 = vmatpush1.msra.mxu0 0.0
  %2217 = vmatprep.subr.mxu0 0.0
  %2218 = vmatpush1.msra.mxu0 0.0
  %2219 = vmatprep.subr.mxu0 0.0
  %2220 = vmatpush1.msra.mxu0 0.0
  %2221 = vmatprep.subr.mxu0 0.0
  %2222 = vmatpush1.msra.mxu0 0.0
  %2223 = vmatprep.subr.mxu0 0.0
  %2224 = vmatpush1.msra.mxu0 0.0
  %2225 = vmatprep.mubr.f32.mxu0 0.0
  %2226 = vmatmul.mubr.f32.gmra.mrb[0].mxu0 %v2159
  %v2227 = vpop.f32.mrb[0].mxu0
  %v2228 = vadd.f32 0.0, %v2227
  %v2229 = vpop.f32.mrb[0].mxu0
  %2230 = vdwg.mxu0
  %v2232 = vsel %vm1153, %v1863, 0
  %2234 = vmatprep.subr.mxu0 0.0
  %2235 = vmatpush1.msra.mxu0 %v1150
  %2236 = vmatprep.subr.mxu0 0.0
  %2237 = vmatpush1.msra.mxu0 0.0
  %2238 = vmatprep.subr.mxu0 0.0
  %2239 = vmatpush1.msra.mxu0 0.0
  %2240 = vmatprep.subr.mxu0 0.0
  %2241 = vmatpush1.msra.mxu0 0.0
  %2242 = vmatprep.subr.mxu0 0.0
  %2243 = vmatpush1.msra.mxu0 0.0
  %2244 = vmatprep.subr.mxu0 0.0
  %2245 = vmatpush1.msra.mxu0 0.0
  %2246 = vmatprep.subr.mxu0 0.0
  %2247 = vmatpush1.msra.mxu0 0.0
  %2248 = vmatprep.subr.mxu0 0.0
  %2249 = vmatpush1.msra.mxu0 0.0
  %2250 = vmatprep.subr.mxu0 0.0
  %2251 = vmatpush1.msra.mxu0 0.0
  %2252 = vmatprep.subr.mxu0 0.0
  %2253 = vmatpush1.msra.mxu0 0.0
  %2254 = vmatprep.subr.mxu0 0.0
  %2255 = vmatpush1.msra.mxu0 0.0
  %2256 = vmatprep.subr.mxu0 0.0
  %2257 = vmatpush1.msra.mxu0 0.0
  %2258 = vmatprep.subr.mxu0 0.0
  %2259 = vmatpush1.msra.mxu0 0.0
  %2260 = vmatprep.subr.mxu0 0.0
  %2261 = vmatpush1.msra.mxu0 0.0
  %2262 = vmatprep.subr.mxu0 0.0
  %2263 = vmatpush1.msra.mxu0 0.0
  %2264 = vmatprep.subr.mxu0 0.0
  %2265 = vmatpush1.msra.mxu0 0.0
  %2266 = vmatprep.subr.mxu0 0.0
  %2267 = vmatpush1.msra.mxu0 0.0
  %2268 = vmatprep.subr.mxu0 0.0
  %2269 = vmatpush1.msra.mxu0 0.0
  %2270 = vmatprep.subr.mxu0 0.0
  %2271 = vmatpush1.msra.mxu0 0.0
  %2272 = vmatprep.subr.mxu0 0.0
  %2273 = vmatpush1.msra.mxu0 0.0
  %2274 = vmatprep.subr.mxu0 0.0
  %2275 = vmatpush1.msra.mxu0 0.0
  %2276 = vmatprep.subr.mxu0 0.0
  %2277 = vmatpush1.msra.mxu0 0.0
  %2278 = vmatprep.subr.mxu0 0.0
  %2279 = vmatpush1.msra.mxu0 0.0
  %2280 = vmatprep.subr.mxu0 0.0
  %2281 = vmatpush1.msra.mxu0 0.0
  %2282 = vmatprep.subr.mxu0 0.0
  %2283 = vmatpush1.msra.mxu0 0.0
  %2284 = vmatprep.subr.mxu0 0.0
  %2285 = vmatpush1.msra.mxu0 0.0
  %2286 = vmatprep.subr.mxu0 0.0
  %2287 = vmatpush1.msra.mxu0 0.0
  %2288 = vmatprep.subr.mxu0 0.0
  %2289 = vmatpush1.msra.mxu0 0.0
  %2290 = vmatprep.subr.mxu0 0.0
  %2291 = vmatpush1.msra.mxu0 0.0
  %2292 = vmatprep.subr.mxu0 0.0
  %2293 = vmatpush1.msra.mxu0 0.0
  %2294 = vmatprep.subr.mxu0 0.0
  %2295 = vmatpush1.msra.mxu0 0.0
  %2296 = vmatprep.subr.mxu0 0.0
  %2297 = vmatpush1.msra.mxu0 0.0
  %2298 = vmatprep.mubr.f32.mxu0 0.0
  %2299 = vmatmul.mubr.f32.gmra.mrb[0].mxu0 %v2232
  %v2300 = vpop.f32.mrb[0].mxu0
  %v2301 = vadd.f32 0.0, %v2300
  %v2302 = vpop.f32.mrb[0].mxu0
  %2303 = vdwg.mxu0
  %v2305 = vsel %vm1153, %v1864, 0
  %2307 = vmatprep.subr.mxu0 0.0
  %2308 = vmatpush1.msra.mxu0 %v1151
  %2309 = vmatprep.subr.mxu0 0.0
  %2310 = vmatpush1.msra.mxu0 0.0
  %2311 = vmatprep.subr.mxu0 0.0
  %2312 = vmatpush1.msra.mxu0 0.0
  %2313 = vmatprep.subr.mxu0 0.0
  %2314 = vmatpush1.msra.mxu0 0.0
  %2315 = vmatprep.subr.mxu0 0.0
  %2316 = vmatpush1.msra.mxu0 0.0
  %2317 = vmatprep.subr.mxu0 0.0
  %2318 = vmatpush1.msra.mxu0 0.0
  %2319 = vmatprep.subr.mxu0 0.0
  %2320 = vmatpush1.msra.mxu0 0.0
  %2321 = vmatprep.subr.mxu0 0.0
  %2322 = vmatpush1.msra.mxu0 0.0
  %2323 = vmatprep.subr.mxu0 0.0
  %2324 = vmatpush1.msra.mxu0 0.0
  %2325 = vmatprep.subr.mxu0 0.0
  %2326 = vmatpush1.msra.mxu0 0.0
  %2327 = vmatprep.subr.mxu0 0.0
  %2328 = vmatpush1.msra.mxu0 0.0
  %2329 = vmatprep.subr.mxu0 0.0
  %2330 = vmatpush1.msra.mxu0 0.0
  %2331 = vmatprep.subr.mxu0 0.0
  %2332 = vmatpush1.msra.mxu0 0.0
  %2333 = vmatprep.subr.mxu0 0.0
  %2334 = vmatpush1.msra.mxu0 0.0
  %2335 = vmatprep.subr.mxu0 0.0
  %2336 = vmatpush1.msra.mxu0 0.0
  %2337 = vmatprep.subr.mxu0 0.0
  %2338 = vmatpush1.msra.mxu0 0.0
  %2339 = vmatprep.subr.mxu0 0.0
  %2340 = vmatpush1.msra.mxu0 0.0
  %2341 = vmatprep.subr.mxu0 0.0
  %2342 = vmatpush1.msra.mxu0 0.0
  %2343 = vmatprep.subr.mxu0 0.0
  %2344 = vmatpush1.msra.mxu0 0.0
  %2345 = vmatprep.subr.mxu0 0.0
  %2346 = vmatpush1.msra.mxu0 0.0
  %2347 = vmatprep.subr.mxu0 0.0
  %2348 = vmatpush1.msra.mxu0 0.0
  %2349 = vmatprep.subr.mxu0 0.0
  %2350 = vmatpush1.msra.mxu0 0.0
  %2351 = vmatprep.subr.mxu0 0.0
  %2352 = vmatpush1.msra.mxu0 0.0
  %2353 = vmatprep.subr.mxu0 0.0
  %2354 = vmatpush1.msra.mxu0 0.0
  %2355 = vmatprep.subr.mxu0 0.0
  %2356 = vmatpush1.msra.mxu0 0.0
  %2357 = vmatprep.subr.mxu0 0.0
  %2358 = vmatpush1.msra.mxu0 0.0
  %2359 = vmatprep.subr.mxu0 0.0
  %2360 = vmatpush1.msra.mxu0 0.0
  %2361 = vmatprep.subr.mxu0 0.0
  %2362 = vmatpush1.msra.mxu0 0.0
  %2363 = vmatprep.subr.mxu0 0.0
  %2364 = vmatpush1.msra.mxu0 0.0
  %2365 = vmatprep.subr.mxu0 0.0
  %2366 = vmatpush1.msra.mxu0 0.0
  %2367 = vmatprep.subr.mxu0 0.0
  %2368 = vmatpush1.msra.mxu0 0.0
  %2369 = vmatprep.subr.mxu0 0.0
  %2370 = vmatpush1.msra.mxu0 0.0
  %2371 = vmatprep.mubr.f32.mxu0 0.0
  %2372 = vmatmul.mubr.f32.gmra.mrb[0].mxu0 %v2305
  %v2373 = vpop.f32.mrb[0].mxu0
  %v2374 = vadd.f32 0.0, %v2373
  %v2375 = vpop.f32.mrb[0].mxu0
  %2376 = vdwg.mxu0
  %v2378 = vsel %vm1153, %v1865, 0
  %2380 = vmatprep.subr.mxu0 0.0
  %2381 = vmatpush1.msra.mxu0 %v1152
  %2382 = vmatprep.subr.mxu0 0.0
  %2383 = vmatpush1.msra.mxu0 0.0
  %2384 = vmatprep.subr.mxu0 0.0
  %2385 = vmatpush1.msra.mxu0 0.0
  %2386 = vmatprep.subr.mxu0 0.0
  %2387 = vmatpush1.msra.mxu0 0.0
  %2388 = vmatprep.subr.mxu0 0.0
  %2389 = vmatpush1.msra.mxu0 0.0
  %2390 = vmatprep.subr.mxu0 0.0
  %2391 = vmatpush1.msra.mxu0 0.0
  %2392 = vmatprep.subr.mxu0 0.0
  %2393 = vmatpush1.msra.mxu0 0.0
  %2394 = vmatprep.subr.mxu0 0.0
  %2395 = vmatpush1.msra.mxu0 0.0
  %2396 = vmatprep.subr.mxu0 0.0
  %2397 = vmatpush1.msra.mxu0 0.0
  %2398 = vmatprep.subr.mxu0 0.0
  %2399 = vmatpush1.msra.mxu0 0.0
  %2400 = vmatprep.subr.mxu0 0.0
  %2401 = vmatpush1.msra.mxu0 0.0
  %2402 = vmatprep.subr.mxu0 0.0
  %2403 = vmatpush1.msra.mxu0 0.0
  %2404 = vmatprep.subr.mxu0 0.0
  %2405 = vmatpush1.msra.mxu0 0.0
  %2406 = vmatprep.subr.mxu0 0.0
  %2407 = vmatpush1.msra.mxu0 0.0
  %2408 = vmatprep.subr.mxu0 0.0
  %2409 = vmatpush1.msra.mxu0 0.0
  %2410 = vmatprep.subr.mxu0 0.0
  %2411 = vmatpush1.msra.mxu0 0.0
  %2412 = vmatprep.subr.mxu0 0.0
  %2413 = vmatpush1.msra.mxu0 0.0
  %2414 = vmatprep.subr.mxu0 0.0
  %2415 = vmatpush1.msra.mxu0 0.0
  %2416 = vmatprep.subr.mxu0 0.0
  %2417 = vmatpush1.msra.mxu0 0.0
  %2418 = vmatprep.subr.mxu0 0.0
  %2419 = vmatpush1.msra.mxu0 0.0
  %2420 = vmatprep.subr.mxu0 0.0
  %2421 = vmatpush1.msra.mxu0 0.0
  %2422 = vmatprep.subr.mxu0 0.0
  %2423 = vmatpush1.msra.mxu0 0.0
  %2424 = vmatprep.subr.mxu0 0.0
  %2425 = vmatpush1.msra.mxu0 0.0
  %2426 = vmatprep.subr.mxu0 0.0
  %2427 = vmatpush1.msra.mxu0 0.0
  %2428 = vmatprep.subr.mxu0 0.0
  %2429 = vmatpush1.msra.mxu0 0.0
  %2430 = vmatprep.subr.mxu0 0.0
  %2431 = vmatpush1.msra.mxu0 0.0
  %2432 = vmatprep.subr.mxu0 0.0
  %2433 = vmatpush1.msra.mxu0 0.0
  %2434 = vmatprep.subr.mxu0 0.0
  %2435 = vmatpush1.msra.mxu0 0.0
  %2436 = vmatprep.subr.mxu0 0.0
  %2437 = vmatpush1.msra.mxu0 0.0
  %2438 = vmatprep.subr.mxu0 0.0
  %2439 = vmatpush1.msra.mxu0 0.0
  %2440 = vmatprep.subr.mxu0 0.0
  %2441 = vmatpush1.msra.mxu0 0.0
  %2442 = vmatprep.subr.mxu0 0.0
  %2443 = vmatpush1.msra.mxu0 0.0
  %2444 = vmatprep.mubr.f32.mxu0 0.0
  %2445 = vmatmul.mubr.f32.gmra.mrb[0].mxu0 %v2378
  %v2446 = vpop.f32.mrb[0].mxu0
  %v2447 = vadd.f32 0.0, %v2446
  %v2448 = vpop.f32.mrb[0].mxu0
  %2449 = vdwg.mxu0
  %v2450 = vcombine.low %v1936, %v2082
  %v2451 = vcombine.high %v1936, %v2082
  %v2453 = vunpack.c.l.s4 1983009808
  %v2454 = vunpack.c.0.s8 %v2453
  %v2455 = vlaneseq
  %v2456 = vshrl.u32 %v2455, 7
  %v2457 = vsub.s32 %v2454, %v2456
  %v2458 = vrot.slane %v2450, %v2457
  %v2460 = vunpack.c.l.s4 1983009808
  %v2461 = vunpack.c.0.s8 %v2460
  %v2462 = vlaneseq
  %v2463 = vshrl.u32 %v2462, 7
  %v2464 = vsub.s32 %v2461, %v2463
  %v2465 = vrot.slane %v2451, %v2464
  %v2466 = vcombine.low %v2009, %v2155
  %v2467 = vcombine.high %v2009, %v2155
  %v2469 = vunpack.c.l.s4 1983009808
  %v2470 = vunpack.c.0.s8 %v2469
  %v2471 = vlaneseq
  %v2472 = vshrl.u32 %v2471, 7
  %v2473 = vsub.s32 %v2470, %v2472
  %v2474 = vrot.slane %v2466, %v2473
  %v2476 = vunpack.c.l.s4 1983009808
  %v2477 = vunpack.c.0.s8 %v2476
  %v2478 = vlaneseq
  %v2479 = vshrl.u32 %v2478, 7
  %v2480 = vsub.s32 %v2477, %v2479
  %v2481 = vrot.slane %v2467, %v2480
  %v2482 = vcombine.low %v2458, %v2474
  %v2483 = vcombine.high %v2458, %v2474
  %v2485 = vunpack.c.l.s4 1934713408
  %v2486 = vunpack.c.0.s8 %v2485
  %v2487 = vlaneseq
  %v2488 = vshrl.u32 %v2487, 7
  %v2489 = vsub.s32 %v2486, %v2488
  %v2490 = vrot.slane %v2482, %v2489
  %v2492 = vunpack.c.l.s4 1934713408
  %v2493 = vunpack.c.0.s8 %v2492
  %v2494 = vlaneseq
  %v2495 = vshrl.u32 %v2494, 7
  %v2496 = vsub.s32 %v2493, %v2495
  %v2497 = vrot.slane %v2483, %v2496
  %v2498 = vcombine.low %v2465, %v2481
  %v2499 = vcombine.high %v2465, %v2481
  %v2501 = vunpack.c.l.s4 1934713408
  %v2502 = vunpack.c.0.s8 %v2501
  %v2503 = vlaneseq
  %v2504 = vshrl.u32 %v2503, 7
  %v2505 = vsub.s32 %v2502, %v2504
  %v2506 = vrot.slane %v2498, %v2505
  %v2508 = vunpack.c.l.s4 1934713408
  %v2509 = vunpack.c.0.s8 %v2508
  %v2510 = vlaneseq
  %v2511 = vshrl.u32 %v2510, 7
  %v2512 = vsub.s32 %v2509, %v2511
  %v2513 = vrot.slane %v2499, %v2512
  %v2514 = vcombine.high %v2490, 0.0
  %v2515 = vcombine.high %v2497, 0.0
  %v2516 = vcombine.high %v2506, 0.0
  %v2517 = vcombine.high %v2513, 0.0
  %v2518 = vcombine.low %v2228, %v2374
  %v2519 = vcombine.high %v2228, %v2374
  %v2521 = vunpack.c.l.s4 1983009808
  %v2522 = vunpack.c.0.s8 %v2521
  %v2523 = vlaneseq
  %v2524 = vshrl.u32 %v2523, 7
  %v2525 = vsub.s32 %v2522, %v2524
  %v2526 = vrot.slane %v2518, %v2525
  %v2528 = vunpack.c.l.s4 1983009808
  %v2529 = vunpack.c.0.s8 %v2528
  %v2530 = vlaneseq
  %v2531 = vshrl.u32 %v2530, 7
  %v2532 = vsub.s32 %v2529, %v2531
  %v2533 = vrot.slane %v2519, %v2532
  %v2534 = vcombine.low %v2301, %v2447
  %v2535 = vcombine.high %v2301, %v2447
  %v2537 = vunpack.c.l.s4 1983009808
  %v2538 = vunpack.c.0.s8 %v2537
  %v2539 = vlaneseq
  %v2540 = vshrl.u32 %v2539, 7
  %v2541 = vsub.s32 %v2538, %v2540
  %v2542 = vrot.slane %v2534, %v2541
  %v2544 = vunpack.c.l.s4 1983009808
  %v2545 = vunpack.c.0.s8 %v2544
  %v2546 = vlaneseq
  %v2547 = vshrl.u32 %v2546, 7
  %v2548 = vsub.s32 %v2545, %v2547
  %v2549 = vrot.slane %v2535, %v2548
  %v2550 = vcombine.low %v2526, %v2542
  %v2551 = vcombine.high %v2526, %v2542
  %v2553 = vunpack.c.l.s4 1934713408
  %v2554 = vunpack.c.0.s8 %v2553
  %v2555 = vlaneseq
  %v2556 = vshrl.u32 %v2555, 7
  %v2557 = vsub.s32 %v2554, %v2556
  %v2558 = vrot.slane %v2550, %v2557
  %v2560 = vunpack.c.l.s4 1934713408
  %v2561 = vunpack.c.0.s8 %v2560
  %v2562 = vlaneseq
  %v2563 = vshrl.u32 %v2562, 7
  %v2564 = vsub.s32 %v2561, %v2563
  %v2565 = vrot.slane %v2551, %v2564
  %v2566 = vcombine.low %v2533, %v2549
  %v2567 = vcombine.high %v2533, %v2549
  %v2569 = vunpack.c.l.s4 1934713408
  %v2570 = vunpack.c.0.s8 %v2569
  %v2571 = vlaneseq
  %v2572 = vshrl.u32 %v2571, 7
  %v2573 = vsub.s32 %v2570, %v2572
  %v2574 = vrot.slane %v2566, %v2573
  %v2576 = vunpack.c.l.s4 1934713408
  %v2577 = vunpack.c.0.s8 %v2576
  %v2578 = vlaneseq
  %v2579 = vshrl.u32 %v2578, 7
  %v2580 = vsub.s32 %v2577, %v2579
  %v2581 = vrot.slane %v2567, %v2580
  %v2582 = vcombine.high %v2558, 0.0
  %v2583 = vcombine.high %v2565, 0.0
  %v2584 = vcombine.high %v2574, 0.0
  %v2585 = vcombine.high %v2581, 0.0
  %v2586 = vcombine.low %v2490, %v2497
  %v2588 = vunpack.c.l.s4 1983009808
  %v2589 = vunpack.c.0.s8 %v2588
  %v2590 = vlaneseq
  %v2591 = vshrl.u32 %v2590, 7
  %v2592 = vsub.s32 %v2589, %v2591
  %v2593 = vrot.slane %v2586, %v2592
  %v2594 = vcombine.low %v2514, %v2515
  %v2596 = vunpack.c.l.s4 1983009808
  %v2597 = vunpack.c.0.s8 %v2596
  %v2598 = vlaneseq
  %v2599 = vshrl.u32 %v2598, 7
  %v2600 = vsub.s32 %v2597, %v2599
  %v2601 = vrot.slane %v2594, %v2600
  %v2602 = vcombine.low %v2506, %v2513
  %v2604 = vunpack.c.l.s4 1983009808
  %v2605 = vunpack.c.0.s8 %v2604
  %v2606 = vlaneseq
  %v2607 = vshrl.u32 %v2606, 7
  %v2608 = vsub.s32 %v2605, %v2607
  %v2609 = vrot.slane %v2602, %v2608
  %v2610 = vcombine.low %v2516, %v2517
  %v2612 = vunpack.c.l.s4 1983009808
  %v2613 = vunpack.c.0.s8 %v2612
  %v2614 = vlaneseq
  %v2615 = vshrl.u32 %v2614, 7
  %v2616 = vsub.s32 %v2613, %v2615
  %v2617 = vrot.slane %v2610, %v2616
  %v2618 = vcombine.low %v2593, %v2601
  %v2619 = vcombine.high %v2593, %v2601
  %v2621 = vunpack.c.l.s4 1934713408
  %v2622 = vunpack.c.0.s8 %v2621
  %v2623 = vlaneseq
  %v2624 = vshrl.u32 %v2623, 7
  %v2625 = vsub.s32 %v2622, %v2624
  %v2626 = vrot.slane %v2618, %v2625
  %v2628 = vunpack.c.l.s4 1934713408
  %v2629 = vunpack.c.0.s8 %v2628
  %v2630 = vlaneseq
  %v2631 = vshrl.u32 %v2630, 7
  %v2632 = vsub.s32 %v2629, %v2631
  %v2633 = vrot.slane %v2619, %v2632
  %v2634 = vcombine.low %v2609, %v2617
  %v2635 = vcombine.high %v2609, %v2617
  %v2637 = vunpack.c.l.s4 1934713408
  %v2638 = vunpack.c.0.s8 %v2637
  %v2639 = vlaneseq
  %v2640 = vshrl.u32 %v2639, 7
  %v2641 = vsub.s32 %v2638, %v2640
  %v2642 = vrot.slane %v2634, %v2641
  %v2644 = vunpack.c.l.s4 1934713408
  %v2645 = vunpack.c.0.s8 %v2644
  %v2646 = vlaneseq
  %v2647 = vshrl.u32 %v2646, 7
  %v2648 = vsub.s32 %v2645, %v2647
  %v2649 = vrot.slane %v2635, %v2648
  %v2650 = vcombine.low %v2626, %v2642
  %v2651 = vcombine.high %v2626, %v2642
  %v2652 = vcombine.low %v2633, %v2649
  %v2653 = vcombine.high %v2633, %v2649
  %v2654 = vcombine.low %v2558, %v2565
  %v2656 = vunpack.c.l.s4 1983009808
  %v2657 = vunpack.c.0.s8 %v2656
  %v2658 = vlaneseq
  %v2659 = vshrl.u32 %v2658, 7
  %v2660 = vsub.s32 %v2657, %v2659
  %v2661 = vrot.slane %v2654, %v2660
  %v2662 = vcombine.low %v2582, %v2583
  %v2664 = vunpack.c.l.s4 1983009808
  %v2665 = vunpack.c.0.s8 %v2664
  %v2666 = vlaneseq
  %v2667 = vshrl.u32 %v2666, 7
  %v2668 = vsub.s32 %v2665, %v2667
  %v2669 = vrot.slane %v2662, %v2668
  %v2670 = vcombine.low %v2574, %v2581
  %v2672 = vunpack.c.l.s4 1983009808
  %v2673 = vunpack.c.0.s8 %v2672
  %v2674 = vlaneseq
  %v2675 = vshrl.u32 %v2674, 7
  %v2676 = vsub.s32 %v2673, %v2675
  %v2677 = vrot.slane %v2670, %v2676
  %v2678 = vcombine.low %v2584, %v2585
  %v2680 = vunpack.c.l.s4 1983009808
  %v2681 = vunpack.c.0.s8 %v2680
  %v2682 = vlaneseq
  %v2683 = vshrl.u32 %v2682, 7
  %v2684 = vsub.s32 %v2681, %v2683
  %v2685 = vrot.slane %v2678, %v2684
  %v2686 = vcombine.low %v2661, %v2669
  %v2687 = vcombine.high %v2661, %v2669
  %v2689 = vunpack.c.l.s4 1934713408
  %v2690 = vunpack.c.0.s8 %v2689
  %v2691 = vlaneseq
  %v2692 = vshrl.u32 %v2691, 7
  %v2693 = vsub.s32 %v2690, %v2692
  %v2694 = vrot.slane %v2686, %v2693
  %v2696 = vunpack.c.l.s4 1934713408
  %v2697 = vunpack.c.0.s8 %v2696
  %v2698 = vlaneseq
  %v2699 = vshrl.u32 %v2698, 7
  %v2700 = vsub.s32 %v2697, %v2699
  %v2701 = vrot.slane %v2687, %v2700
  %v2702 = vcombine.low %v2677, %v2685
  %v2703 = vcombine.high %v2677, %v2685
  %v2705 = vunpack.c.l.s4 1934713408
  %v2706 = vunpack.c.0.s8 %v2705
  %v2707 = vlaneseq
  %v2708 = vshrl.u32 %v2707, 7
  %v2709 = vsub.s32 %v2706, %v2708
  %v2710 = vrot.slane %v2702, %v2709
  %v2712 = vunpack.c.l.s4 1934713408
  %v2713 = vunpack.c.0.s8 %v2712
  %v2714 = vlaneseq
  %v2715 = vshrl.u32 %v2714, 7
  %v2716 = vsub.s32 %v2713, %v2715
  %v2717 = vrot.slane %v2703, %v2716
  %v2718 = vcombine.low %v2694, %v2710
  %v2719 = vcombine.high %v2694, %v2710
  %v2720 = vcombine.low %v2701, %v2717
  %v2721 = vcombine.high %v2701, %v2717
  %2724 = vrot.lane.b32.xlu0 %v2651, 8
  %v2725 = vpop.permute.xlu0 %2724
  %2726 = vrot.lane.b32.xlu0 %v2719, 8
  %v2727 = vpop.permute.xlu0 %2726
  %2732 = vrot.lane.b32.xlu0 %v2652, 16
  %v2733 = vpop.permute.xlu0 %2732
  %2734 = vrot.lane.b32.xlu0 %v2720, 16
  %v2735 = vpop.permute.xlu0 %2734
  %2740 = vrot.lane.b32.xlu0 %v2653, 24
  %v2741 = vpop.permute.xlu0 %2740
  %2742 = vrot.lane.b32.xlu0 %v2721, 24
  %v2743 = vpop.permute.xlu0 %2742
  %v2746 = vsel %vm1153, %v2650, %v2725
  %v2747 = vsel %vm1153, %v2718, %v2727
  %vm2748 = vcmask 130048
  %v2749 = vsel %vm2748, %v2746, %v2733
  %v2750 = vsel %vm2748, %v2747, %v2735
  %vm2751 = vcmask 195584
  %v2752 = vsel %vm2751, %v2749, %v2741
  %v2753 = vsel %vm2751, %v2750, %v2743
  %v2754 = vld [vmem:[%s4 + $0x8] sm:$0xff]
  %v2755 = vld [vmem:[%s4 + $0x38] sm:$0xff]
  %v2756 = vld [vmem:[%s4 + $0x68] sm:$0xff]
  %v2757 = vld [vmem:[%s4 + $0x98] sm:$0xff]
  %v2758 = vld [vmem:[%s4 + $0xc8] ss:$0 sm:$0xff]
  %v2760 = vsel %vm140, %v2752, 0
  %v2763 = vsel %vm140, %v2753, 0
  %2765 = vmatprep.subr.mxu0 0.0
  %2766 = vmatpush1.msra.mxu0 %v2754
  %2767 = vmatprep.subr.mxu0 0.0
  %2768 = vmatpush1.msra.mxu0 %v2755
  %2769 = vmatprep.subr.mxu0 0.0
  %2770 = vmatpush1.msra.mxu0 %v2756
  %2771 = vmatprep.subr.mxu0 0.0
  %2772 = vmatpush1.msra.mxu0 %v2757
  %2773 = vmatprep.subr.mxu0 0.0
  %2774 = vmatpush1.msra.mxu0 0.0
  %2775 = vmatprep.subr.mxu0 0.0
  %2776 = vmatpush1.msra.mxu0 0.0
  %2777 = vmatprep.subr.mxu0 0.0
  %2778 = vmatpush1.msra.mxu0 0.0
  %2779 = vmatprep.subr.mxu0 0.0
  %2780 = vmatpush1.msra.mxu0 0.0
  %2781 = vmatprep.subr.mxu0 0.0
  %2782 = vmatpush1.msra.mxu0 0.0
  %2783 = vmatprep.subr.mxu0 0.0
  %2784 = vmatpush1.msra.mxu0 0.0
  %2785 = vmatprep.subr.mxu0 0.0
  %2786 = vmatpush1.msra.mxu0 0.0
  %2787 = vmatprep.subr.mxu0 0.0
  %2788 = vmatpush1.msra.mxu0 0.0
  %2789 = vmatprep.subr.mxu0 0.0
  %2790 = vmatpush1.msra.mxu0 0.0
  %2791 = vmatprep.subr.mxu0 0.0
  %2792 = vmatpush1.msra.mxu0 0.0
  %2793 = vmatprep.subr.mxu0 0.0
  %2794 = vmatpush1.msra.mxu0 0.0
  %2795 = vmatprep.subr.mxu0 0.0
  %2796 = vmatpush1.msra.mxu0 0.0
  %2797 = vmatprep.subr.mxu0 0.0
  %2798 = vmatpush1.msra.mxu0 0.0
  %2799 = vmatprep.subr.mxu0 0.0
  %2800 = vmatpush1.msra.mxu0 0.0
  %2801 = vmatprep.subr.mxu0 0.0
  %2802 = vmatpush1.msra.mxu0 0.0
  %2803 = vmatprep.subr.mxu0 0.0
  %2804 = vmatpush1.msra.mxu0 0.0
  %2805 = vmatprep.subr.mxu0 0.0
  %2806 = vmatpush1.msra.mxu0 0.0
  %2807 = vmatprep.subr.mxu0 0.0
  %2808 = vmatpush1.msra.mxu0 0.0
  %2809 = vmatprep.subr.mxu0 0.0
  %2810 = vmatpush1.msra.mxu0 0.0
  %2811 = vmatprep.subr.mxu0 0.0
  %2812 = vmatpush1.msra.mxu0 0.0
  %2813 = vmatprep.subr.mxu0 0.0
  %2814 = vmatpush1.msra.mxu0 0.0
  %2815 = vmatprep.subr.mxu0 0.0
  %2816 = vmatpush1.msra.mxu0 0.0
  %2817 = vmatprep.subr.mxu0 0.0
  %2818 = vmatpush1.msra.mxu0 0.0
  %2819 = vmatprep.subr.mxu0 0.0
  %2820 = vmatpush1.msra.mxu0 0.0
  %2821 = vmatprep.subr.mxu0 0.0
  %2822 = vmatpush1.msra.mxu0 0.0
  %2823 = vmatprep.subr.mxu0 0.0
  %2824 = vmatpush1.msra.mxu0 0.0
  %2825 = vmatprep.subr.mxu0 0.0
  %2826 = vmatpush1.msra.mxu0 0.0
  %2827 = vmatprep.subr.mxu0 0.0
  %2828 = vmatpush1.msra.mxu0 0.0
  %2829 = vmatprep.mubr.f32.mxu0 0.0
  %2830 = vmatmul.mubr.f32.gmra.mrb[0].mxu0 %v2760
  %v2831 = vpop.f32.mrb[0].mxu0
  %v2832 = vadd.f32 %v2758, %v2831
  %v2833 = vpop.f32.mrb[0].mxu0
  %2834 = vmatprep.mubr.f32.mxu0 0.0
  %2835 = vmatmul.mubr.f32.gmra.mrb[0].mxu0 %v2763
  %v2836 = vpop.f32.mrb[0].mxu0
  %v2837 = vadd.f32 %v2758, %v2836
  %v2838 = vpop.f32.mrb[0].mxu0
  %2839 = vdwg.mxu0
  %v2840 = vadd.f32 %v2832, %v178
  %v2841 = vadd.f32 %v2837, %v179
  %v2842 = vld [vmem:[%s6] sm:$0x1]
  %v2843 = vld [vmem:[%s6 + $0x3] sm:$0x1]
  %v2844 = vsel %vm140, %v2840, 0.0
  %2845 = vadd.xlane.f32.xlu0 %v2844
  %v2846 = vpop.xlane.xlu0 %2845
  %v2847 = vsel %vm140, %v2841, 0.0
  %2848 = vadd.xlane.f32.xlu0 %v2847
  %v2849 = vpop.xlane.xlu0 %2848
  %v2850 = vmul.f32 %v2846, %v147
  %v2851 = vmul.f32 %v2849, %v147
  %v2852 = vsub.f32 %v2840, %v2850
  %v2853 = vsub.f32 %v2841, %v2851
  %v2854 = vmul.f32 %v2852, %v2852
  %v2855 = vmul.f32 %v2853, %v2853
  %v2856 = vsel %vm140, %v2854, 0.0
  %2857 = vadd.xlane.f32.xlu0 %v2856
  %v2858 = vpop.xlane.xlu0 %2857
  %v2859 = vsel %vm140, %v2855, 0.0
  %2860 = vadd.xlane.f32.xlu0 %v2859
  %v2861 = vpop.xlane.xlu0 %2860
  %v2862 = vmul.f32 %v2858, %v147
  %v2863 = vmul.f32 %v2861, %v147
  %v2864 = vadd.f32 %v2862, 1e-12
  %v2865 = vadd.f32 %v2863, 1e-12
  %v2866 = vrsqrt.pop %v2864
  %v2867 = vrsqrt.pop %v2865
  %v2868 = vmul.f32 %v2852, %v2866
  %v2869 = vmul.f32 %v2853, %v2867
  %v2870 = vlaneseq
  %v2871 = vshrl.u32 %v2870, 7
  %v2872 = vsub.s32 0, %v2871
  %v2873 = vrot.slane %v2842, %v2872
  %v2874 = vmul.f32 %v2868, %v2873
  %v2875 = vmul.f32 %v2869, %v2873
  %v2876 = vlaneseq
  %v2877 = vshrl.u32 %v2876, 7
  %v2878 = vsub.s32 0, %v2877
  %v2879 = vrot.slane %v2843, %v2878
  %v2880 = vadd.f32 %v2874, %v2879
  %v2881 = vadd.f32 %v2875, %v2879
  %2883 = vset.pattern.permute.xlu0 8
  %2884 = vperm.xlu0 %2883, %v26
  %v2885 = vpop.permute.xlu0 %2884
  %2888 = vset.pattern.permute.xlu0 8
  %2889 = vperm.xlu0 %2888, %v27
  %v2890 = vpop.permute.xlu0 %2889
  %v2892 = vmul.f32 %v2880, %v2885
  %v2893 = vmul.f32 %v2881, %v2890
  %v2894 = vld [vmem:[%s4 + $0x10] sm:$0xff]
  %v2895 = vld [vmem:[%s4 + $0x40] sm:$0xff]
  %v2896 = vld [vmem:[%s4 + $0x70] sm:$0xff]
  %v2897 = vld [vmem:[%s4 + $0xa0] sm:$0xff]
  %v2898 = vld [vmem:[%s4 + $0xd0] ss:$0 sm:$0xff]
  %v2900 = vsel %vm140, %v2892, 0
  %v2903 = vsel %vm140, %v2893, 0
  %2905 = vmatprep.subr.mxu0 0.0
  %2906 = vmatpush1.msra.mxu0 %v2894
  %2907 = vmatprep.subr.mxu0 0.0
  %2908 = vmatpush1.msra.mxu0 %v2895
  %2909 = vmatprep.subr.mxu0 0.0
  %2910 = vmatpush1.msra.mxu0 %v2896
  %2911 = vmatprep.subr.mxu0 0.0
  %2912 = vmatpush1.msra.mxu0 %v2897
  %2913 = vmatprep.subr.mxu0 0.0
  %2914 = vmatpush1.msra.mxu0 0.0
  %2915 = vmatprep.subr.mxu0 0.0
  %2916 = vmatpush1.msra.mxu0 0.0
  %2917 = vmatprep.subr.mxu0 0.0
  %2918 = vmatpush1.msra.mxu0 0.0
  %2919 = vmatprep.subr.mxu0 0.0
  %2920 = vmatpush1.msra.mxu0 0.0
  %2921 = vmatprep.subr.mxu0 0.0
  %2922 = vmatpush1.msra.mxu0 0.0
  %2923 = vmatprep.subr.mxu0 0.0
  %2924 = vmatpush1.msra.mxu0 0.0
  %2925 = vmatprep.subr.mxu0 0.0
  %2926 = vmatpush1.msra.mxu0 0.0
  %2927 = vmatprep.subr.mxu0 0.0
  %2928 = vmatpush1.msra.mxu0 0.0
  %2929 = vmatprep.subr.mxu0 0.0
  %2930 = vmatpush1.msra.mxu0 0.0
  %2931 = vmatprep.subr.mxu0 0.0
  %2932 = vmatpush1.msra.mxu0 0.0
  %2933 = vmatprep.subr.mxu0 0.0
  %2934 = vmatpush1.msra.mxu0 0.0
  %2935 = vmatprep.subr.mxu0 0.0
  %2936 = vmatpush1.msra.mxu0 0.0
  %2937 = vmatprep.subr.mxu0 0.0
  %2938 = vmatpush1.msra.mxu0 0.0
  %2939 = vmatprep.subr.mxu0 0.0
  %2940 = vmatpush1.msra.mxu0 0.0
  %2941 = vmatprep.subr.mxu0 0.0
  %2942 = vmatpush1.msra.mxu0 0.0
  %2943 = vmatprep.subr.mxu0 0.0
  %2944 = vmatpush1.msra.mxu0 0.0
  %2945 = vmatprep.subr.mxu0 0.0
  %2946 = vmatpush1.msra.mxu0 0.0
  %2947 = vmatprep.subr.mxu0 0.0
  %2948 = vmatpush1.msra.mxu0 0.0
  %2949 = vmatprep.subr.mxu0 0.0
  %2950 = vmatpush1.msra.mxu0 0.0
  %2951 = vmatprep.subr.mxu0 0.0
  %2952 = vmatpush1.msra.mxu0 0.0
  %2953 = vmatprep.subr.mxu0 0.0
  %2954 = vmatpush1.msra.mxu0 0.0
  %2955 = vmatprep.subr.mxu0 0.0
  %2956 = vmatpush1.msra.mxu0 0.0
  %2957 = vmatprep.subr.mxu0 0.0
  %2958 = vmatpush1.msra.mxu0 0.0
  %2959 = vmatprep.subr.mxu0 0.0
  %2960 = vmatpush1.msra.mxu0 0.0
  %2961 = vmatprep.subr.mxu0 0.0
  %2962 = vmatpush1.msra.mxu0 0.0
  %2963 = vmatprep.subr.mxu0 0.0
  %2964 = vmatpush1.msra.mxu0 0.0
  %2965 = vmatprep.subr.mxu0 0.0
  %2966 = vmatpush1.msra.mxu0 0.0
  %2967 = vmatprep.subr.mxu0 0.0
  %2968 = vmatpush1.msra.mxu0 0.0
  %2969 = vmatprep.mubr.f32.mxu0 0.0
  %2970 = vmatmul.mubr.f32.gmra.mrb[0].mxu0 %v2900
  %v2971 = vpop.f32.mrb[0].mxu0
  %v2972 = vadd.f32 %v2898, %v2971
  %v2973 = vpop.f32.mrb[0].mxu0
  %2974 = vmatprep.mubr.f32.mxu0 0.0
  %2975 = vmatmul.mubr.f32.gmra.mrb[0].mxu0 %v2903
  %v2976 = vpop.f32.mrb[0].mxu0
  %v2977 = vadd.f32 %v2898, %v2976
  %v2978 = vpop.f32.mrb[0].mxu0
  %2979 = vdwg.mxu0
  %v2980 = vld [vmem:[%s4 + $0x18] sm:$0xff]
  %v2981 = vld [vmem:[%s4 + $0x48] sm:$0xff]
  %v2982 = vld [vmem:[%s4 + $0x78] sm:$0xff]
  %v2983 = vld [vmem:[%s4 + $0xa8] sm:$0xff]
  %v2984 = vld [vmem:[%s4 + $0xd8] ss:$0 sm:$0xff]
  %v2986 = vsel %vm140, %v180, 0
  %v2989 = vsel %vm140, %v181, 0
  %v2992 = vsel %vm140, %v182, 0
  %2994 = vmatprep.subr.mxu0 0.0
  %2995 = vmatpush1.msra.mxu0 %v2980
  %2996 = vmatprep.subr.mxu0 0.0
  %2997 = vmatpush1.msra.mxu0 %v2981
  %2998 = vmatprep.subr.mxu0 0.0
  %2999 = vmatpush1.msra.mxu0 %v2982
  %3000 = vmatprep.subr.mxu0 0.0
  %3001 = vmatpush1.msra.mxu0 %v2983
  %3002 = vmatprep.subr.mxu0 0.0
  %3003 = vmatpush1.msra.mxu0 0.0
  %3004 = vmatprep.subr.mxu0 0.0
  %3005 = vmatpush1.msra.mxu0 0.0
  %3006 = vmatprep.subr.mxu0 0.0
  %3007 = vmatpush1.msra.mxu0 0.0
  %3008 = vmatprep.subr.mxu0 0.0
  %3009 = vmatpush1.msra.mxu0 0.0
  %3010 = vmatprep.subr.mxu0 0.0
  %3011 = vmatpush1.msra.mxu0 0.0
  %3012 = vmatprep.subr.mxu0 0.0
  %3013 = vmatpush1.msra.mxu0 0.0
  %3014 = vmatprep.subr.mxu0 0.0
  %3015 = vmatpush1.msra.mxu0 0.0
  %3016 = vmatprep.subr.mxu0 0.0
  %3017 = vmatpush1.msra.mxu0 0.0
  %3018 = vmatprep.subr.mxu0 0.0
  %3019 = vmatpush1.msra.mxu0 0.0
  %3020 = vmatprep.subr.mxu0 0.0
  %3021 = vmatpush1.msra.mxu0 0.0
  %3022 = vmatprep.subr.mxu0 0.0
  %3023 = vmatpush1.msra.mxu0 0.0
  %3024 = vmatprep.subr.mxu0 0.0
  %3025 = vmatpush1.msra.mxu0 0.0
  %3026 = vmatprep.subr.mxu0 0.0
  %3027 = vmatpush1.msra.mxu0 0.0
  %3028 = vmatprep.subr.mxu0 0.0
  %3029 = vmatpush1.msra.mxu0 0.0
  %3030 = vmatprep.subr.mxu0 0.0
  %3031 = vmatpush1.msra.mxu0 0.0
  %3032 = vmatprep.subr.mxu0 0.0
  %3033 = vmatpush1.msra.mxu0 0.0
  %3034 = vmatprep.subr.mxu0 0.0
  %3035 = vmatpush1.msra.mxu0 0.0
  %3036 = vmatprep.subr.mxu0 0.0
  %3037 = vmatpush1.msra.mxu0 0.0
  %3038 = vmatprep.subr.mxu0 0.0
  %3039 = vmatpush1.msra.mxu0 0.0
  %3040 = vmatprep.subr.mxu0 0.0
  %3041 = vmatpush1.msra.mxu0 0.0
  %3042 = vmatprep.subr.mxu0 0.0
  %3043 = vmatpush1.msra.mxu0 0.0
  %3044 = vmatprep.subr.mxu0 0.0
  %3045 = vmatpush1.msra.mxu0 0.0
  %3046 = vmatprep.subr.mxu0 0.0
  %3047 = vmatpush1.msra.mxu0 0.0
  %3048 = vmatprep.subr.mxu0 0.0
  %3049 = vmatpush1.msra.mxu0 0.0
  %3050 = vmatprep.subr.mxu0 0.0
  %3051 = vmatpush1.msra.mxu0 0.0
  %3052 = vmatprep.subr.mxu0 0.0
  %3053 = vmatpush1.msra.mxu0 0.0
  %3054 = vmatprep.subr.mxu0 0.0
  %3055 = vmatpush1.msra.mxu0 0.0
  %3056 = vmatprep.subr.mxu0 0.0
  %3057 = vmatpush1.msra.mxu0 0.0
  %3058 = vmatprep.mubr.f32.mxu0 0.0
  %3059 = vmatmul.mubr.f32.gmra.mrb[0].mxu0 %v2986
  %v3060 = vpop.f32.mrb[0].mxu0
  %v3061 = vadd.f32 %v2984, %v3060
  %v3062 = vpop.f32.mrb[0].mxu0
  %3063 = vmatprep.mubr.f32.mxu0 0.0
  %3064 = vmatmul.mubr.f32.gmra.mrb[0].mxu0 %v2989
  %v3065 = vpop.f32.mrb[0].mxu0
  %v3066 = vadd.f32 %v2984, %v3065
  %v3067 = vpop.f32.mrb[0].mxu0
  %3068 = vmatprep.mubr.f32.mxu0 0.0
  %3069 = vmatmul.mubr.f32.gmra.mrb[0].mxu0 %v2992
  %v3070 = vpop.f32.mrb[0].mxu0
  %v3071 = vadd.f32 %v2984, %v3070
  %v3072 = vpop.f32.mrb[0].mxu0
  %3073 = vdwg.mxu0
  %3076 = vrot.lane.b32.xlu0 %v2972, 120
  %v3077 = vpop.permute.xlu0 %3076
  %3078 = vrot.lane.b32.xlu0 %v2977, 120
  %v3079 = vpop.permute.xlu0 %3078
  %3082 = vrot.lane.b32.xlu0 %v2972, 112
  %v3083 = vpop.permute.xlu0 %3082
  %3084 = vrot.lane.b32.xlu0 %v2977, 112
  %v3085 = vpop.permute.xlu0 %3084
  %3088 = vrot.lane.b32.xlu0 %v2972, 104
  %v3089 = vpop.permute.xlu0 %3088
  %3090 = vrot.lane.b32.xlu0 %v2977, 104
  %v3091 = vpop.permute.xlu0 %3090
  %v3094 = vcombine.low %v2972, %v3083
  %v3095 = vcombine.high %v2972, %v3083
  %v3097 = vunpack.c.l.s4 1983009808
  %v3098 = vunpack.c.0.s8 %v3097
  %v3099 = vlaneseq
  %v3100 = vshrl.u32 %v3099, 7
  %v3101 = vsub.s32 %v3098, %v3100
  %v3102 = vrot.slane %v3094, %v3101
  %v3104 = vunpack.c.l.s4 1983009808
  %v3105 = vunpack.c.0.s8 %v3104
  %v3106 = vlaneseq
  %v3107 = vshrl.u32 %v3106, 7
  %v3108 = vsub.s32 %v3105, %v3107
  %v3109 = vrot.slane %v3095, %v3108
  %v3110 = vcombine.low %v3077, %v3089
  %v3111 = vcombine.high %v3077, %v3089
  %v3113 = vunpack.c.l.s4 1983009808
  %v3114 = vunpack.c.0.s8 %v3113
  %v3115 = vlaneseq
  %v3116 = vshrl.u32 %v3115, 7
  %v3117 = vsub.s32 %v3114, %v3116
  %v3118 = vrot.slane %v3110, %v3117
  %v3120 = vunpack.c.l.s4 1983009808
  %v3121 = vunpack.c.0.s8 %v3120
  %v3122 = vlaneseq
  %v3123 = vshrl.u32 %v3122, 7
  %v3124 = vsub.s32 %v3121, %v3123
  %v3125 = vrot.slane %v3111, %v3124
  %v3126 = vcombine.low %v3102, %v3118
  %v3127 = vcombine.high %v3102, %v3118
  %v3129 = vunpack.c.l.s4 1934713408
  %v3130 = vunpack.c.0.s8 %v3129
  %v3131 = vlaneseq
  %v3132 = vshrl.u32 %v3131, 7
  %v3133 = vsub.s32 %v3130, %v3132
  %v3134 = vrot.slane %v3126, %v3133
  %v3136 = vunpack.c.l.s4 1934713408
  %v3137 = vunpack.c.0.s8 %v3136
  %v3138 = vlaneseq
  %v3139 = vshrl.u32 %v3138, 7
  %v3140 = vsub.s32 %v3137, %v3139
  %v3141 = vrot.slane %v3127, %v3140
  %v3142 = vcombine.low %v3109, %v3125
  %v3143 = vcombine.high %v3109, %v3125
  %v3145 = vunpack.c.l.s4 1934713408
  %v3146 = vunpack.c.0.s8 %v3145
  %v3147 = vlaneseq
  %v3148 = vshrl.u32 %v3147, 7
  %v3149 = vsub.s32 %v3146, %v3148
  %v3150 = vrot.slane %v3142, %v3149
  %v3152 = vunpack.c.l.s4 1934713408
  %v3153 = vunpack.c.0.s8 %v3152
  %v3154 = vlaneseq
  %v3155 = vshrl.u32 %v3154, 7
  %v3156 = vsub.s32 %v3153, %v3155
  %v3157 = vrot.slane %v3143, %v3156
  %v3158 = vcombine.high %v3134, 0.0
  %v3159 = vcombine.high %v3141, 0.0
  %v3160 = vcombine.high %v3150, 0.0
  %v3161 = vcombine.high %v3157, 0.0
  %v3162 = vcombine.low %v2977, %v3085
  %v3163 = vcombine.high %v2977, %v3085
  %v3165 = vunpack.c.l.s4 1983009808
  %v3166 = vunpack.c.0.s8 %v3165
  %v3167 = vlaneseq
  %v3168 = vshrl.u32 %v3167, 7
  %v3169 = vsub.s32 %v3166, %v3168
  %v3170 = vrot.slane %v3162, %v3169
  %v3172 = vunpack.c.l.s4 1983009808
  %v3173 = vunpack.c.0.s8 %v3172
  %v3174 = vlaneseq
  %v3175 = vshrl.u32 %v3174, 7
  %v3176 = vsub.s32 %v3173, %v3175
  %v3177 = vrot.slane %v3163, %v3176
  %v3178 = vcombine.low %v3079, %v3091
  %v3179 = vcombine.high %v3079, %v3091
  %v3181 = vunpack.c.l.s4 1983009808
  %v3182 = vunpack.c.0.s8 %v3181
  %v3183 = vlaneseq
  %v3184 = vshrl.u32 %v3183, 7
  %v3185 = vsub.s32 %v3182, %v3184
  %v3186 = vrot.slane %v3178, %v3185
  %v3188 = vunpack.c.l.s4 1983009808
  %v3189 = vunpack.c.0.s8 %v3188
  %v3190 = vlaneseq
  %v3191 = vshrl.u32 %v3190, 7
  %v3192 = vsub.s32 %v3189, %v3191
  %v3193 = vrot.slane %v3179, %v3192
  %v3194 = vcombine.low %v3170, %v3186
  %v3195 = vcombine.high %v3170, %v3186
  %v3197 = vunpack.c.l.s4 1934713408
  %v3198 = vunpack.c.0.s8 %v3197
  %v3199 = vlaneseq
  %v3200 = vshrl.u32 %v3199, 7
  %v3201 = vsub.s32 %v3198, %v3200
  %v3202 = vrot.slane %v3194, %v3201
  %v3204 = vunpack.c.l.s4 1934713408
  %v3205 = vunpack.c.0.s8 %v3204
  %v3206 = vlaneseq
  %v3207 = vshrl.u32 %v3206, 7
  %v3208 = vsub.s32 %v3205, %v3207
  %v3209 = vrot.slane %v3195, %v3208
  %v3210 = vcombine.low %v3177, %v3193
  %v3211 = vcombine.high %v3177, %v3193
  %v3213 = vunpack.c.l.s4 1934713408
  %v3214 = vunpack.c.0.s8 %v3213
  %v3215 = vlaneseq
  %v3216 = vshrl.u32 %v3215, 7
  %v3217 = vsub.s32 %v3214, %v3216
  %v3218 = vrot.slane %v3210, %v3217
  %v3220 = vunpack.c.l.s4 1934713408
  %v3221 = vunpack.c.0.s8 %v3220
  %v3222 = vlaneseq
  %v3223 = vshrl.u32 %v3222, 7
  %v3224 = vsub.s32 %v3221, %v3223
  %v3225 = vrot.slane %v3211, %v3224
  %v3226 = vcombine.high %v3202, 0.0
  %v3227 = vcombine.high %v3209, 0.0
  %v3228 = vcombine.high %v3218, 0.0
  %v3229 = vcombine.high %v3225, 0.0
  %v3230 = vcombine.low %v3134, %v3141
  %v3232 = vunpack.c.l.s4 1983009808
  %v3233 = vunpack.c.0.s8 %v3232
  %v3234 = vlaneseq
  %v3235 = vshrl.u32 %v3234, 7
  %v3236 = vsub.s32 %v3233, %v3235
  %v3237 = vrot.slane %v3230, %v3236
  %v3238 = vcombine.low %v3158, %v3159
  %v3240 = vunpack.c.l.s4 1983009808
  %v3241 = vunpack.c.0.s8 %v3240
  %v3242 = vlaneseq
  %v3243 = vshrl.u32 %v3242, 7
  %v3244 = vsub.s32 %v3241, %v3243
  %v3245 = vrot.slane %v3238, %v3244
  %v3246 = vcombine.low %v3150, %v3157
  %v3248 = vunpack.c.l.s4 1983009808
  %v3249 = vunpack.c.0.s8 %v3248
  %v3250 = vlaneseq
  %v3251 = vshrl.u32 %v3250, 7
  %v3252 = vsub.s32 %v3249, %v3251
  %v3253 = vrot.slane %v3246, %v3252
  %v3254 = vcombine.low %v3160, %v3161
  %v3256 = vunpack.c.l.s4 1983009808
  %v3257 = vunpack.c.0.s8 %v3256
  %v3258 = vlaneseq
  %v3259 = vshrl.u32 %v3258, 7
  %v3260 = vsub.s32 %v3257, %v3259
  %v3261 = vrot.slane %v3254, %v3260
  %v3262 = vcombine.low %v3237, %v3245
  %v3263 = vcombine.high %v3237, %v3245
  %v3265 = vunpack.c.l.s4 1934713408
  %v3266 = vunpack.c.0.s8 %v3265
  %v3267 = vlaneseq
  %v3268 = vshrl.u32 %v3267, 7
  %v3269 = vsub.s32 %v3266, %v3268
  %v3270 = vrot.slane %v3262, %v3269
  %v3272 = vunpack.c.l.s4 1934713408
  %v3273 = vunpack.c.0.s8 %v3272
  %v3274 = vlaneseq
  %v3275 = vshrl.u32 %v3274, 7
  %v3276 = vsub.s32 %v3273, %v3275
  %v3277 = vrot.slane %v3263, %v3276
  %v3278 = vcombine.low %v3253, %v3261
  %v3279 = vcombine.high %v3253, %v3261
  %v3281 = vunpack.c.l.s4 1934713408
  %v3282 = vunpack.c.0.s8 %v3281
  %v3283 = vlaneseq
  %v3284 = vshrl.u32 %v3283, 7
  %v3285 = vsub.s32 %v3282, %v3284
  %v3286 = vrot.slane %v3278, %v3285
  %v3288 = vunpack.c.l.s4 1934713408
  %v3289 = vunpack.c.0.s8 %v3288
  %v3290 = vlaneseq
  %v3291 = vshrl.u32 %v3290, 7
  %v3292 = vsub.s32 %v3289, %v3291
  %v3293 = vrot.slane %v3279, %v3292
  %v3294 = vcombine.low %v3270, %v3286
  %v3295 = vcombine.high %v3270, %v3286
  %v3296 = vcombine.low %v3277, %v3293
  %v3297 = vcombine.high %v3277, %v3293
  %v3298 = vcombine.low %v3202, %v3209
  %v3300 = vunpack.c.l.s4 1983009808
  %v3301 = vunpack.c.0.s8 %v3300
  %v3302 = vlaneseq
  %v3303 = vshrl.u32 %v3302, 7
  %v3304 = vsub.s32 %v3301, %v3303
  %v3305 = vrot.slane %v3298, %v3304
  %v3306 = vcombine.low %v3226, %v3227
  %v3308 = vunpack.c.l.s4 1983009808
  %v3309 = vunpack.c.0.s8 %v3308
  %v3310 = vlaneseq
  %v3311 = vshrl.u32 %v3310, 7
  %v3312 = vsub.s32 %v3309, %v3311
  %v3313 = vrot.slane %v3306, %v3312
  %v3314 = vcombine.low %v3218, %v3225
  %v3316 = vunpack.c.l.s4 1983009808
  %v3317 = vunpack.c.0.s8 %v3316
  %v3318 = vlaneseq
  %v3319 = vshrl.u32 %v3318, 7
  %v3320 = vsub.s32 %v3317, %v3319
  %v3321 = vrot.slane %v3314, %v3320
  %v3322 = vcombine.low %v3228, %v3229
  %v3324 = vunpack.c.l.s4 1983009808
  %v3325 = vunpack.c.0.s8 %v3324
  %v3326 = vlaneseq
  %v3327 = vshrl.u32 %v3326, 7
  %v3328 = vsub.s32 %v3325, %v3327
  %v3329 = vrot.slane %v3322, %v3328
  %v3330 = vcombine.low %v3305, %v3313
  %v3331 = vcombine.high %v3305, %v3313
  %v3333 = vunpack.c.l.s4 1934713408
  %v3334 = vunpack.c.0.s8 %v3333
  %v3335 = vlaneseq
  %v3336 = vshrl.u32 %v3335, 7
  %v3337 = vsub.s32 %v3334, %v3336
  %v3338 = vrot.slane %v3330, %v3337
  %v3340 = vunpack.c.l.s4 1934713408
  %v3341 = vunpack.c.0.s8 %v3340
  %v3342 = vlaneseq
  %v3343 = vshrl.u32 %v3342, 7
  %v3344 = vsub.s32 %v3341, %v3343
  %v3345 = vrot.slane %v3331, %v3344
  %v3346 = vcombine.low %v3321, %v3329
  %v3347 = vcombine.high %v3321, %v3329
  %v3349 = vunpack.c.l.s4 1934713408
  %v3350 = vunpack.c.0.s8 %v3349
  %v3351 = vlaneseq
  %v3352 = vshrl.u32 %v3351, 7
  %v3353 = vsub.s32 %v3350, %v3352
  %v3354 = vrot.slane %v3346, %v3353
  %v3356 = vunpack.c.l.s4 1934713408
  %v3357 = vunpack.c.0.s8 %v3356
  %v3358 = vlaneseq
  %v3359 = vshrl.u32 %v3358, 7
  %v3360 = vsub.s32 %v3357, %v3359
  %v3361 = vrot.slane %v3347, %v3360
  %v3362 = vcombine.low %v3338, %v3354
  %v3363 = vcombine.high %v3338, %v3354
  %v3364 = vcombine.low %v3345, %v3361
  %v3365 = vcombine.high %v3345, %v3361
  %3369 = vrot.lane.b32.xlu0 %v3061, 120
  %v3370 = vpop.permute.xlu0 %3369
  %3371 = vrot.lane.b32.xlu0 %v3066, 120
  %v3372 = vpop.permute.xlu0 %3371
  %3373 = vrot.lane.b32.xlu0 %v3071, 120
  %v3374 = vpop.permute.xlu0 %3373
  %3378 = vrot.lane.b32.xlu0 %v3061, 112
  %v3379 = vpop.permute.xlu0 %3378
  %3380 = vrot.lane.b32.xlu0 %v3066, 112
  %v3381 = vpop.permute.xlu0 %3380
  %3382 = vrot.lane.b32.xlu0 %v3071, 112
  %v3383 = vpop.permute.xlu0 %3382
  %3387 = vrot.lane.b32.xlu0 %v3061, 104
  %v3388 = vpop.permute.xlu0 %3387
  %3389 = vrot.lane.b32.xlu0 %v3066, 104
  %v3390 = vpop.permute.xlu0 %3389
  %3391 = vrot.lane.b32.xlu0 %v3071, 104
  %v3392 = vpop.permute.xlu0 %3391
  %v3396 = vcombine.low %v3061, %v3379
  %v3397 = vcombine.high %v3061, %v3379
  %v3399 = vunpack.c.l.s4 1983009808
  %v3400 = vunpack.c.0.s8 %v3399
  %v3401 = vlaneseq
  %v3402 = vshrl.u32 %v3401, 7
  %v3403 = vsub.s32 %v3400, %v3402
  %v3404 = vrot.slane %v3396, %v3403
  %v3406 = vunpack.c.l.s4 1983009808
  %v3407 = vunpack.c.0.s8 %v3406
  %v3408 = vlaneseq
  %v3409 = vshrl.u32 %v3408, 7
  %v3410 = vsub.s32 %v3407, %v3409
  %v3411 = vrot.slane %v3397, %v3410
  %v3412 = vcombine.low %v3370, %v3388
  %v3413 = vcombine.high %v3370, %v3388
  %v3415 = vunpack.c.l.s4 1983009808
  %v3416 = vunpack.c.0.s8 %v3415
  %v3417 = vlaneseq
  %v3418 = vshrl.u32 %v3417, 7
  %v3419 = vsub.s32 %v3416, %v3418
  %v3420 = vrot.slane %v3412, %v3419
  %v3422 = vunpack.c.l.s4 1983009808
  %v3423 = vunpack.c.0.s8 %v3422
  %v3424 = vlaneseq
  %v3425 = vshrl.u32 %v3424, 7
  %v3426 = vsub.s32 %v3423, %v3425
  %v3427 = vrot.slane %v3413, %v3426
  %v3428 = vcombine.low %v3404, %v3420
  %v3429 = vcombine.high %v3404, %v3420
  %v3431 = vunpack.c.l.s4 1934713408
  %v3432 = vunpack.c.0.s8 %v3431
  %v3433 = vlaneseq
  %v3434 = vshrl.u32 %v3433, 7
  %v3435 = vsub.s32 %v3432, %v3434
  %v3436 = vrot.slane %v3428, %v3435
  %v3438 = vunpack.c.l.s4 1934713408
  %v3439 = vunpack.c.0.s8 %v3438
  %v3440 = vlaneseq
  %v3441 = vshrl.u32 %v3440, 7
  %v3442 = vsub.s32 %v3439, %v3441
  %v3443 = vrot.slane %v3429, %v3442
  %v3444 = vcombine.low %v3411, %v3427
  %v3445 = vcombine.high %v3411, %v3427
  %v3447 = vunpack.c.l.s4 1934713408
  %v3448 = vunpack.c.0.s8 %v3447
  %v3449 = vlaneseq
  %v3450 = vshrl.u32 %v3449, 7
  %v3451 = vsub.s32 %v3448, %v3450
  %v3452 = vrot.slane %v3444, %v3451
  %v3454 = vunpack.c.l.s4 1934713408
  %v3455 = vunpack.c.0.s8 %v3454
  %v3456 = vlaneseq
  %v3457 = vshrl.u32 %v3456, 7
  %v3458 = vsub.s32 %v3455, %v3457
  %v3459 = vrot.slane %v3445, %v3458
  %v3460 = vcombine.high %v3436, 0.0
  %v3461 = vcombine.high %v3443, 0.0
  %v3462 = vcombine.high %v3452, 0.0
  %v3463 = vcombine.high %v3459, 0.0
  %v3464 = vcombine.low %v3066, %v3381
  %v3465 = vcombine.high %v3066, %v3381
  %v3467 = vunpack.c.l.s4 1983009808
  %v3468 = vunpack.c.0.s8 %v3467
  %v3469 = vlaneseq
  %v3470 = vshrl.u32 %v3469, 7
  %v3471 = vsub.s32 %v3468, %v3470
  %v3472 = vrot.slane %v3464, %v3471
  %v3474 = vunpack.c.l.s4 1983009808
  %v3475 = vunpack.c.0.s8 %v3474
  %v3476 = vlaneseq
  %v3477 = vshrl.u32 %v3476, 7
  %v3478 = vsub.s32 %v3475, %v3477
  %v3479 = vrot.slane %v3465, %v3478
  %v3480 = vcombine.low %v3372, %v3390
  %v3481 = vcombine.high %v3372, %v3390
  %v3483 = vunpack.c.l.s4 1983009808
  %v3484 = vunpack.c.0.s8 %v3483
  %v3485 = vlaneseq
  %v3486 = vshrl.u32 %v3485, 7
  %v3487 = vsub.s32 %v3484, %v3486
  %v3488 = vrot.slane %v3480, %v3487
  %v3490 = vunpack.c.l.s4 1983009808
  %v3491 = vunpack.c.0.s8 %v3490
  %v3492 = vlaneseq
  %v3493 = vshrl.u32 %v3492, 7
  %v3494 = vsub.s32 %v3491, %v3493
  %v3495 = vrot.slane %v3481, %v3494
  %v3496 = vcombine.low %v3472, %v3488
  %v3497 = vcombine.high %v3472, %v3488
  %v3499 = vunpack.c.l.s4 1934713408
  %v3500 = vunpack.c.0.s8 %v3499
  %v3501 = vlaneseq
  %v3502 = vshrl.u32 %v3501, 7
  %v3503 = vsub.s32 %v3500, %v3502
  %v3504 = vrot.slane %v3496, %v3503
  %v3506 = vunpack.c.l.s4 1934713408
  %v3507 = vunpack.c.0.s8 %v3506
  %v3508 = vlaneseq
  %v3509 = vshrl.u32 %v3508, 7
  %v3510 = vsub.s32 %v3507, %v3509
  %v3511 = vrot.slane %v3497, %v3510
  %v3512 = vcombine.low %v3479, %v3495
  %v3513 = vcombine.high %v3479, %v3495
  %v3515 = vunpack.c.l.s4 1934713408
  %v3516 = vunpack.c.0.s8 %v3515
  %v3517 = vlaneseq
  %v3518 = vshrl.u32 %v3517, 7
  %v3519 = vsub.s32 %v3516, %v3518
  %v3520 = vrot.slane %v3512, %v3519
  %v3522 = vunpack.c.l.s4 1934713408
  %v3523 = vunpack.c.0.s8 %v3522
  %v3524 = vlaneseq
  %v3525 = vshrl.u32 %v3524, 7
  %v3526 = vsub.s32 %v3523, %v3525
  %v3527 = vrot.slane %v3513, %v3526
  %v3528 = vcombine.high %v3511, 0.0
  %v3529 = vcombine.high %v3520, 0.0
  %v3530 = vcombine.high %v3527, 0.0
  %v3531 = vcombine.low %v3071, %v3383
  %v3533 = vunpack.c.l.s4 1983009808
  %v3534 = vunpack.c.0.s8 %v3533
  %v3535 = vlaneseq
  %v3536 = vshrl.u32 %v3535, 7
  %v3537 = vsub.s32 %v3534, %v3536
  %v3538 = vrot.slane %v3531, %v3537
  %v3539 = vcombine.low %v3374, %v3392
  %v3541 = vunpack.c.l.s4 1983009808
  %v3542 = vunpack.c.0.s8 %v3541
  %v3543 = vlaneseq
  %v3544 = vshrl.u32 %v3543, 7
  %v3545 = vsub.s32 %v3542, %v3544
  %v3546 = vrot.slane %v3539, %v3545
  %v3547 = vcombine.low %v3538, %v3546
  %v3548 = vcombine.high %v3538, %v3546
  %v3550 = vunpack.c.l.s4 1934713408
  %v3551 = vunpack.c.0.s8 %v3550
  %v3552 = vlaneseq
  %v3553 = vshrl.u32 %v3552, 7
  %v3554 = vsub.s32 %v3551, %v3553
  %v3555 = vrot.slane %v3547, %v3554
  %v3557 = vunpack.c.l.s4 1934713408
  %v3558 = vunpack.c.0.s8 %v3557
  %v3559 = vlaneseq
  %v3560 = vshrl.u32 %v3559, 7
  %v3561 = vsub.s32 %v3558, %v3560
  %v3562 = vrot.slane %v3548, %v3561
  %v3563 = vcombine.high %v3555, 0.0
  %v3564 = vcombine.low %v3436, %v3443
  %v3566 = vunpack.c.l.s4 1983009808
  %v3567 = vunpack.c.0.s8 %v3566
  %v3568 = vlaneseq
  %v3569 = vshrl.u32 %v3568, 7
  %v3570 = vsub.s32 %v3567, %v3569
  %v3571 = vrot.slane %v3564, %v3570
  %v3572 = vcombine.low %v3460, %v3461
  %v3574 = vunpack.c.l.s4 1983009808
  %v3575 = vunpack.c.0.s8 %v3574
  %v3576 = vlaneseq
  %v3577 = vshrl.u32 %v3576, 7
  %v3578 = vsub.s32 %v3575, %v3577
  %v3579 = vrot.slane %v3572, %v3578
  %v3580 = vcombine.low %v3452, %v3459
  %v3582 = vunpack.c.l.s4 1983009808
  %v3583 = vunpack.c.0.s8 %v3582
  %v3584 = vlaneseq
  %v3585 = vshrl.u32 %v3584, 7
  %v3586 = vsub.s32 %v3583, %v3585
  %v3587 = vrot.slane %v3580, %v3586
  %v3588 = vcombine.low %v3462, %v3463
  %v3590 = vunpack.c.l.s4 1983009808
  %v3591 = vunpack.c.0.s8 %v3590
  %v3592 = vlaneseq
  %v3593 = vshrl.u32 %v3592, 7
  %v3594 = vsub.s32 %v3591, %v3593
  %v3595 = vrot.slane %v3588, %v3594
  %v3596 = vcombine.low %v3571, %v3579
  %v3597 = vcombine.high %v3571, %v3579
  %v3599 = vunpack.c.l.s4 1934713408
  %v3600 = vunpack.c.0.s8 %v3599
  %v3601 = vlaneseq
  %v3602 = vshrl.u32 %v3601, 7
  %v3603 = vsub.s32 %v3600, %v3602
  %v3604 = vrot.slane %v3596, %v3603
  %v3606 = vunpack.c.l.s4 1934713408
  %v3607 = vunpack.c.0.s8 %v3606
  %v3608 = vlaneseq
  %v3609 = vshrl.u32 %v3608, 7
  %v3610 = vsub.s32 %v3607, %v3609
  %v3611 = vrot.slane %v3597, %v3610
  %v3612 = vcombine.low %v3587, %v3595
  %v3613 = vcombine.high %v3587, %v3595
  %v3615 = vunpack.c.l.s4 1934713408
  %v3616 = vunpack.c.0.s8 %v3615
  %v3617 = vlaneseq
  %v3618 = vshrl.u32 %v3617, 7
  %v3619 = vsub.s32 %v3616, %v3618
  %v3620 = vrot.slane %v3612, %v3619
  %v3622 = vunpack.c.l.s4 1934713408
  %v3623 = vunpack.c.0.s8 %v3622
  %v3624 = vlaneseq
  %v3625 = vshrl.u32 %v3624, 7
  %v3626 = vsub.s32 %v3623, %v3625
  %v3627 = vrot.slane %v3613, %v3626
  %v3628 = vcombine.low %v3604, %v3620
  %v3629 = vcombine.high %v3604, %v3620
  %v3630 = vcombine.low %v3611, %v3627
  %v3631 = vcombine.high %v3611, %v3627
  %v3633 = vunpack.c.l.s4 1983009808
  %v3634 = vunpack.c.0.s8 %v3633
  %v3635 = vlaneseq
  %v3636 = vshrl.u32 %v3635, 7
  %v3637 = vsub.s32 %v3634, %v3636
  %v3638 = vrot.slane %v3504, %v3637
  %v3639 = vcombine.high %v3504, 0.0
  %v3641 = vunpack.c.l.s4 1983009808
  %v3642 = vunpack.c.0.s8 %v3641
  %v3643 = vlaneseq
  %v3644 = vshrl.u32 %v3643, 7
  %v3645 = vsub.s32 %v3642, %v3644
  %v3646 = vrot.slane %v3639, %v3645
  %v3647 = vcombine.low %v3638, %v3646
  %v3648 = vcombine.high %v3638, %v3646
  %v3650 = vunpack.c.l.s4 1934713408
  %v3651 = vunpack.c.0.s8 %v3650
  %v3652 = vlaneseq
  %v3653 = vshrl.u32 %v3652, 7
  %v3654 = vsub.s32 %v3651, %v3653
  %v3655 = vrot.slane %v3647, %v3654
  %v3657 = vunpack.c.l.s4 1934713408
  %v3658 = vunpack.c.0.s8 %v3657
  %v3659 = vlaneseq
  %v3660 = vshrl.u32 %v3659, 7
  %v3661 = vsub.s32 %v3658, %v3660
  %v3662 = vrot.slane %v3648, %v3661
  %v3663 = vcombine.high %v3655, 0.0
  %v3664 = vcombine.high %v3662, 0.0
  %v3665 = vcombine.low %v3511, %v3520
  %v3667 = vunpack.c.l.s4 1983009808
  %v3668 = vunpack.c.0.s8 %v3667
  %v3669 = vlaneseq
  %v3670 = vshrl.u32 %v3669, 7
  %v3671 = vsub.s32 %v3668, %v3670
  %v3672 = vrot.slane %v3665, %v3671
  %v3673 = vcombine.low %v3528, %v3529
  %v3675 = vunpack.c.l.s4 1983009808
  %v3676 = vunpack.c.0.s8 %v3675
  %v3677 = vlaneseq
  %v3678 = vshrl.u32 %v3677, 7
  %v3679 = vsub.s32 %v3676, %v3678
  %v3680 = vrot.slane %v3673, %v3679
  %v3681 = vcombine.low %v3527, %v3555
  %v3683 = vunpack.c.l.s4 1983009808
  %v3684 = vunpack.c.0.s8 %v3683
  %v3685 = vlaneseq
  %v3686 = vshrl.u32 %v3685, 7
  %v3687 = vsub.s32 %v3684, %v3686
  %v3688 = vrot.slane %v3681, %v3687
  %v3689 = vcombine.low %v3530, %v3563
  %v3691 = vunpack.c.l.s4 1983009808
  %v3692 = vunpack.c.0.s8 %v3691
  %v3693 = vlaneseq
  %v3694 = vshrl.u32 %v3693, 7
  %v3695 = vsub.s32 %v3692, %v3694
  %v3696 = vrot.slane %v3689, %v3695
  %v3697 = vcombine.low %v3672, %v3680
  %v3698 = vcombine.high %v3672, %v3680
  %v3700 = vunpack.c.l.s4 1934713408
  %v3701 = vunpack.c.0.s8 %v3700
  %v3702 = vlaneseq
  %v3703 = vshrl.u32 %v3702, 7
  %v3704 = vsub.s32 %v3701, %v3703
  %v3705 = vrot.slane %v3697, %v3704
  %v3707 = vunpack.c.l.s4 1934713408
  %v3708 = vunpack.c.0.s8 %v3707
  %v3709 = vlaneseq
  %v3710 = vshrl.u32 %v3709, 7
  %v3711 = vsub.s32 %v3708, %v3710
  %v3712 = vrot.slane %v3698, %v3711
  %v3713 = vcombine.low %v3688, %v3696
  %v3714 = vcombine.high %v3688, %v3696
  %v3716 = vunpack.c.l.s4 1934713408
  %v3717 = vunpack.c.0.s8 %v3716
  %v3718 = vlaneseq
  %v3719 = vshrl.u32 %v3718, 7
  %v3720 = vsub.s32 %v3717, %v3719
  %v3721 = vrot.slane %v3713, %v3720
  %v3723 = vunpack.c.l.s4 1934713408
  %v3724 = vunpack.c.0.s8 %v3723
  %v3725 = vlaneseq
  %v3726 = vshrl.u32 %v3725, 7
  %v3727 = vsub.s32 %v3724, %v3726
  %v3728 = vrot.slane %v3714, %v3727
  %v3729 = vcombine.low %v3705, %v3721
  %v3730 = vcombine.high %v3705, %v3721
  %v3731 = vcombine.low %v3712, %v3728
  %v3732 = vcombine.high %v3712, %v3728
  %v3734 = vunpack.c.l.s4 1983009808
  %v3735 = vunpack.c.0.s8 %v3734
  %v3736 = vlaneseq
  %v3737 = vshrl.u32 %v3736, 7
  %v3738 = vsub.s32 %v3735, %v3737
  %v3739 = vrot.slane %v3562, %v3738
  %v3740 = vcombine.high %v3562, 0.0
  %v3742 = vunpack.c.l.s4 1983009808
  %v3743 = vunpack.c.0.s8 %v3742
  %v3744 = vlaneseq
  %v3745 = vshrl.u32 %v3744, 7
  %v3746 = vsub.s32 %v3743, %v3745
  %v3747 = vrot.slane %v3740, %v3746
  %v3748 = vcombine.low %v3739, %v3747
  %v3749 = vcombine.high %v3739, %v3747
  %v3751 = vunpack.c.l.s4 1934713408
  %v3752 = vunpack.c.0.s8 %v3751
  %v3753 = vlaneseq
  %v3754 = vshrl.u32 %v3753, 7
  %v3755 = vsub.s32 %v3752, %v3754
  %v3756 = vrot.slane %v3748, %v3755
  %v3758 = vunpack.c.l.s4 1934713408
  %v3759 = vunpack.c.0.s8 %v3758
  %v3760 = vlaneseq
  %v3761 = vshrl.u32 %v3760, 7
  %v3762 = vsub.s32 %v3759, %v3761
  %v3763 = vrot.slane %v3749, %v3762
  %v3764 = vcombine.high %v3756, 0.0
  %v3765 = vcombine.high %v3763, 0.0
  %3766 = vrot.lane.b32.xlu0 %v3061, 96
  %v3767 = vpop.permute.xlu0 %3766
  %3768 = vrot.lane.b32.xlu0 %v3066, 96
  %v3769 = vpop.permute.xlu0 %3768
  %3770 = vrot.lane.b32.xlu0 %v3071, 96
  %v3771 = vpop.permute.xlu0 %3770
  %3772 = vrot.lane.b32.xlu0 %v3370, 96
  %v3773 = vpop.permute.xlu0 %3772
  %3774 = vrot.lane.b32.xlu0 %v3372, 96
  %v3775 = vpop.permute.xlu0 %3774
  %3776 = vrot.lane.b32.xlu0 %v3374, 96
  %v3777 = vpop.permute.xlu0 %3776
  %3778 = vrot.lane.b32.xlu0 %v3379, 96
  %v3779 = vpop.permute.xlu0 %3778
  %3780 = vrot.lane.b32.xlu0 %v3381, 96
  %v3781 = vpop.permute.xlu0 %3780
  %3782 = vrot.lane.b32.xlu0 %v3383, 96
  %v3783 = vpop.permute.xlu0 %3782
  %3784 = vrot.lane.b32.xlu0 %v3388, 96
  %v3785 = vpop.permute.xlu0 %3784
  %3786 = vrot.lane.b32.xlu0 %v3390, 96
  %v3787 = vpop.permute.xlu0 %3786
  %3788 = vrot.lane.b32.xlu0 %v3392, 96
  %v3789 = vpop.permute.xlu0 %3788
  %v3802 = vcombine.low %v3767, %v3779
  %v3803 = vcombine.high %v3767, %v3779
  %v3805 = vunpack.c.l.s4 1983009808
  %v3806 = vunpack.c.0.s8 %v3805
  %v3807 = vlaneseq
  %v3808 = vshrl.u32 %v3807, 7
  %v3809 = vsub.s32 %v3806, %v3808
  %v3810 = vrot.slane %v3802, %v3809
  %v3812 = vunpack.c.l.s4 1983009808
  %v3813 = vunpack.c.0.s8 %v3812
  %v3814 = vlaneseq
  %v3815 = vshrl.u32 %v3814, 7
  %v3816 = vsub.s32 %v3813, %v3815
  %v3817 = vrot.slane %v3803, %v3816
  %v3818 = vcombine.low %v3773, %v3785
  %v3819 = vcombine.high %v3773, %v3785
  %v3821 = vunpack.c.l.s4 1983009808
  %v3822 = vunpack.c.0.s8 %v3821
  %v3823 = vlaneseq
  %v3824 = vshrl.u32 %v3823, 7
  %v3825 = vsub.s32 %v3822, %v3824
  %v3826 = vrot.slane %v3818, %v3825
  %v3828 = vunpack.c.l.s4 1983009808
  %v3829 = vunpack.c.0.s8 %v3828
  %v3830 = vlaneseq
  %v3831 = vshrl.u32 %v3830, 7
  %v3832 = vsub.s32 %v3829, %v3831
  %v3833 = vrot.slane %v3819, %v3832
  %v3834 = vcombine.low %v3810, %v3826
  %v3835 = vcombine.high %v3810, %v3826
  %v3837 = vunpack.c.l.s4 1934713408
  %v3838 = vunpack.c.0.s8 %v3837
  %v3839 = vlaneseq
  %v3840 = vshrl.u32 %v3839, 7
  %v3841 = vsub.s32 %v3838, %v3840
  %v3842 = vrot.slane %v3834, %v3841
  %v3844 = vunpack.c.l.s4 1934713408
  %v3845 = vunpack.c.0.s8 %v3844
  %v3846 = vlaneseq
  %v3847 = vshrl.u32 %v3846, 7
  %v3848 = vsub.s32 %v3845, %v3847
  %v3849 = vrot.slane %v3835, %v3848
  %v3850 = vcombine.low %v3817, %v3833
  %v3851 = vcombine.high %v3817, %v3833
  %v3853 = vunpack.c.l.s4 1934713408
  %v3854 = vunpack.c.0.s8 %v3853
  %v3855 = vlaneseq
  %v3856 = vshrl.u32 %v3855, 7
  %v3857 = vsub.s32 %v3854, %v3856
  %v3858 = vrot.slane %v3850, %v3857
  %v3860 = vunpack.c.l.s4 1934713408
  %v3861 = vunpack.c.0.s8 %v3860
  %v3862 = vlaneseq
  %v3863 = vshrl.u32 %v3862, 7
  %v3864 = vsub.s32 %v3861, %v3863
  %v3865 = vrot.slane %v3851, %v3864
  %v3866 = vcombine.high %v3842, 0.0
  %v3867 = vcombine.high %v3849, 0.0
  %v3868 = vcombine.high %v3858, 0.0
  %v3869 = vcombine.high %v3865, 0.0
  %v3870 = vcombine.low %v3769, %v3781
  %v3871 = vcombine.high %v3769, %v3781
  %v3873 = vunpack.c.l.s4 1983009808
  %v3874 = vunpack.c.0.s8 %v3873
  %v3875 = vlaneseq
  %v3876 = vshrl.u32 %v3875, 7
  %v3877 = vsub.s32 %v3874, %v3876
  %v3878 = vrot.slane %v3870, %v3877
  %v3880 = vunpack.c.l.s4 1983009808
  %v3881 = vunpack.c.0.s8 %v3880
  %v3882 = vlaneseq
  %v3883 = vshrl.u32 %v3882, 7
  %v3884 = vsub.s32 %v3881, %v3883
  %v3885 = vrot.slane %v3871, %v3884
  %v3886 = vcombine.low %v3775, %v3787
  %v3887 = vcombine.high %v3775, %v3787
  %v3889 = vunpack.c.l.s4 1983009808
  %v3890 = vunpack.c.0.s8 %v3889
  %v3891 = vlaneseq
  %v3892 = vshrl.u32 %v3891, 7
  %v3893 = vsub.s32 %v3890, %v3892
  %v3894 = vrot.slane %v3886, %v3893
  %v3896 = vunpack.c.l.s4 1983009808
  %v3897 = vunpack.c.0.s8 %v3896
  %v3898 = vlaneseq
  %v3899 = vshrl.u32 %v3898, 7
  %v3900 = vsub.s32 %v3897, %v3899
  %v3901 = vrot.slane %v3887, %v3900
  %v3902 = vcombine.low %v3878, %v3894
  %v3903 = vcombine.high %v3878, %v3894
  %v3905 = vunpack.c.l.s4 1934713408
  %v3906 = vunpack.c.0.s8 %v3905
  %v3907 = vlaneseq
  %v3908 = vshrl.u32 %v3907, 7
  %v3909 = vsub.s32 %v3906, %v3908
  %v3910 = vrot.slane %v3902, %v3909
  %v3912 = vunpack.c.l.s4 1934713408
  %v3913 = vunpack.c.0.s8 %v3912
  %v3914 = vlaneseq
  %v3915 = vshrl.u32 %v3914, 7
  %v3916 = vsub.s32 %v3913, %v3915
  %v3917 = vrot.slane %v3903, %v3916
  %v3918 = vcombine.low %v3885, %v3901
  %v3919 = vcombine.high %v3885, %v3901
  %v3921 = vunpack.c.l.s4 1934713408
  %v3922 = vunpack.c.0.s8 %v3921
  %v3923 = vlaneseq
  %v3924 = vshrl.u32 %v3923, 7
  %v3925 = vsub.s32 %v3922, %v3924
  %v3926 = vrot.slane %v3918, %v3925
  %v3928 = vunpack.c.l.s4 1934713408
  %v3929 = vunpack.c.0.s8 %v3928
  %v3930 = vlaneseq
  %v3931 = vshrl.u32 %v3930, 7
  %v3932 = vsub.s32 %v3929, %v3931
  %v3933 = vrot.slane %v3919, %v3932
  %v3934 = vcombine.high %v3917, 0.0
  %v3935 = vcombine.high %v3926, 0.0
  %v3936 = vcombine.high %v3933, 0.0
  %v3937 = vcombine.low %v3771, %v3783
  %v3939 = vunpack.c.l.s4 1983009808
  %v3940 = vunpack.c.0.s8 %v3939
  %v3941 = vlaneseq
  %v3942 = vshrl.u32 %v3941, 7
  %v3943 = vsub.s32 %v3940, %v3942
  %v3944 = vrot.slane %v3937, %v3943
  %v3945 = vcombine.low %v3777, %v3789
  %v3947 = vunpack.c.l.s4 1983009808
  %v3948 = vunpack.c.0.s8 %v3947
  %v3949 = vlaneseq
  %v3950 = vshrl.u32 %v3949, 7
  %v3951 = vsub.s32 %v3948, %v3950
  %v3952 = vrot.slane %v3945, %v3951
  %v3953 = vcombine.low %v3944, %v3952
  %v3954 = vcombine.high %v3944, %v3952
  %v3956 = vunpack.c.l.s4 1934713408
  %v3957 = vunpack.c.0.s8 %v3956
  %v3958 = vlaneseq
  %v3959 = vshrl.u32 %v3958, 7
  %v3960 = vsub.s32 %v3957, %v3959
  %v3961 = vrot.slane %v3953, %v3960
  %v3963 = vunpack.c.l.s4 1934713408
  %v3964 = vunpack.c.0.s8 %v3963
  %v3965 = vlaneseq
  %v3966 = vshrl.u32 %v3965, 7
  %v3967 = vsub.s32 %v3964, %v3966
  %v3968 = vrot.slane %v3954, %v3967
  %v3969 = vcombine.high %v3961, 0.0
  %v3970 = vcombine.low %v3842, %v3849
  %v3972 = vunpack.c.l.s4 1983009808
  %v3973 = vunpack.c.0.s8 %v3972
  %v3974 = vlaneseq
  %v3975 = vshrl.u32 %v3974, 7
  %v3976 = vsub.s32 %v3973, %v3975
  %v3977 = vrot.slane %v3970, %v3976
  %v3978 = vcombine.low %v3866, %v3867
  %v3980 = vunpack.c.l.s4 1983009808
  %v3981 = vunpack.c.0.s8 %v3980
  %v3982 = vlaneseq
  %v3983 = vshrl.u32 %v3982, 7
  %v3984 = vsub.s32 %v3981, %v3983
  %v3985 = vrot.slane %v3978, %v3984
  %v3986 = vcombine.low %v3858, %v3865
  %v3988 = vunpack.c.l.s4 1983009808
  %v3989 = vunpack.c.0.s8 %v3988
  %v3990 = vlaneseq
  %v3991 = vshrl.u32 %v3990, 7
  %v3992 = vsub.s32 %v3989, %v3991
  %v3993 = vrot.slane %v3986, %v3992
  %v3994 = vcombine.low %v3868, %v3869
  %v3996 = vunpack.c.l.s4 1983009808
  %v3997 = vunpack.c.0.s8 %v3996
  %v3998 = vlaneseq
  %v3999 = vshrl.u32 %v3998, 7
  %v4000 = vsub.s32 %v3997, %v3999
  %v4001 = vrot.slane %v3994, %v4000
  %v4002 = vcombine.low %v3977, %v3985
  %v4003 = vcombine.high %v3977, %v3985
  %v4005 = vunpack.c.l.s4 1934713408
  %v4006 = vunpack.c.0.s8 %v4005
  %v4007 = vlaneseq
  %v4008 = vshrl.u32 %v4007, 7
  %v4009 = vsub.s32 %v4006, %v4008
  %v4010 = vrot.slane %v4002, %v4009
  %v4012 = vunpack.c.l.s4 1934713408
  %v4013 = vunpack.c.0.s8 %v4012
  %v4014 = vlaneseq
  %v4015 = vshrl.u32 %v4014, 7
  %v4016 = vsub.s32 %v4013, %v4015
  %v4017 = vrot.slane %v4003, %v4016
  %v4018 = vcombine.low %v3993, %v4001
  %v4019 = vcombine.high %v3993, %v4001
  %v4021 = vunpack.c.l.s4 1934713408
  %v4022 = vunpack.c.0.s8 %v4021
  %v4023 = vlaneseq
  %v4024 = vshrl.u32 %v4023, 7
  %v4025 = vsub.s32 %v4022, %v4024
  %v4026 = vrot.slane %v4018, %v4025
  %v4028 = vunpack.c.l.s4 1934713408
  %v4029 = vunpack.c.0.s8 %v4028
  %v4030 = vlaneseq
  %v4031 = vshrl.u32 %v4030, 7
  %v4032 = vsub.s32 %v4029, %v4031
  %v4033 = vrot.slane %v4019, %v4032
  %v4034 = vcombine.low %v4010, %v4026
  %v4035 = vcombine.high %v4010, %v4026
  %v4036 = vcombine.low %v4017, %v4033
  %v4037 = vcombine.high %v4017, %v4033
  %v4039 = vunpack.c.l.s4 1983009808
  %v4040 = vunpack.c.0.s8 %v4039
  %v4041 = vlaneseq
  %v4042 = vshrl.u32 %v4041, 7
  %v4043 = vsub.s32 %v4040, %v4042
  %v4044 = vrot.slane %v3910, %v4043
  %v4045 = vcombine.high %v3910, 0.0
  %v4047 = vunpack.c.l.s4 1983009808
  %v4048 = vunpack.c.0.s8 %v4047
  %v4049 = vlaneseq
  %v4050 = vshrl.u32 %v4049, 7
  %v4051 = vsub.s32 %v4048, %v4050
  %v4052 = vrot.slane %v4045, %v4051
  %v4053 = vcombine.low %v4044, %v4052
  %v4054 = vcombine.high %v4044, %v4052
  %v4056 = vunpack.c.l.s4 1934713408
  %v4057 = vunpack.c.0.s8 %v4056
  %v4058 = vlaneseq
  %v4059 = vshrl.u32 %v4058, 7
  %v4060 = vsub.s32 %v4057, %v4059
  %v4061 = vrot.slane %v4053, %v4060
  %v4063 = vunpack.c.l.s4 1934713408
  %v4064 = vunpack.c.0.s8 %v4063
  %v4065 = vlaneseq
  %v4066 = vshrl.u32 %v4065, 7
  %v4067 = vsub.s32 %v4064, %v4066
  %v4068 = vrot.slane %v4054, %v4067
  %v4069 = vcombine.high %v4061, 0.0
  %v4070 = vcombine.high %v4068, 0.0
  %v4071 = vcombine.low %v3917, %v3926
  %v4073 = vunpack.c.l.s4 1983009808
  %v4074 = vunpack.c.0.s8 %v4073
  %v4075 = vlaneseq
  %v4076 = vshrl.u32 %v4075, 7
  %v4077 = vsub.s32 %v4074, %v4076
  %v4078 = vrot.slane %v4071, %v4077
  %v4079 = vcombine.low %v3934, %v3935
  %v4081 = vunpack.c.l.s4 1983009808
  %v4082 = vunpack.c.0.s8 %v4081
  %v4083 = vlaneseq
  %v4084 = vshrl.u32 %v4083, 7
  %v4085 = vsub.s32 %v4082, %v4084
  %v4086 = vrot.slane %v4079, %v4085
  %v4087 = vcombine.low %v3933, %v3961
  %v4089 = vunpack.c.l.s4 1983009808
  %v4090 = vunpack.c.0.s8 %v4089
  %v4091 = vlaneseq
  %v4092 = vshrl.u32 %v4091, 7
  %v4093 = vsub.s32 %v4090, %v4092
  %v4094 = vrot.slane %v4087, %v4093
  %v4095 = vcombine.low %v3936, %v3969
  %v4097 = vunpack.c.l.s4 1983009808
  %v4098 = vunpack.c.0.s8 %v4097
  %v4099 = vlaneseq
  %v4100 = vshrl.u32 %v4099, 7
  %v4101 = vsub.s32 %v4098, %v4100
  %v4102 = vrot.slane %v4095, %v4101
  %v4103 = vcombine.low %v4078, %v4086
  %v4104 = vcombine.high %v4078, %v4086
  %v4106 = vunpack.c.l.s4 1934713408
  %v4107 = vunpack.c.0.s8 %v4106
  %v4108 = vlaneseq
  %v4109 = vshrl.u32 %v4108, 7
  %v4110 = vsub.s32 %v4107, %v4109
  %v4111 = vrot.slane %v4103, %v4110
  %v4113 = vunpack.c.l.s4 1934713408
  %v4114 = vunpack.c.0.s8 %v4113
  %v4115 = vlaneseq
  %v4116 = vshrl.u32 %v4115, 7
  %v4117 = vsub.s32 %v4114, %v4116
  %v4118 = vrot.slane %v4104, %v4117
  %v4119 = vcombine.low %v4094, %v4102
  %v4120 = vcombine.high %v4094, %v4102
  %v4122 = vunpack.c.l.s4 1934713408
  %v4123 = vunpack.c.0.s8 %v4122
  %v4124 = vlaneseq
  %v4125 = vshrl.u32 %v4124, 7
  %v4126 = vsub.s32 %v4123, %v4125
  %v4127 = vrot.slane %v4119, %v4126
  %v4129 = vunpack.c.l.s4 1934713408
  %v4130 = vunpack.c.0.s8 %v4129
  %v4131 = vlaneseq
  %v4132 = vshrl.u32 %v4131, 7
  %v4133 = vsub.s32 %v4130, %v4132
  %v4134 = vrot.slane %v4120, %v4133
  %v4135 = vcombine.low %v4111, %v4127
  %v4136 = vcombine.high %v4111, %v4127
  %v4137 = vcombine.low %v4118, %v4134
  %v4138 = vcombine.high %v4118, %v4134
  %v4140 = vunpack.c.l.s4 1983009808
  %v4141 = vunpack.c.0.s8 %v4140
  %v4142 = vlaneseq
  %v4143 = vshrl.u32 %v4142, 7
  %v4144 = vsub.s32 %v4141, %v4143
  %v4145 = vrot.slane %v3968, %v4144
  %v4146 = vcombine.high %v3968, 0.0
  %v4148 = vunpack.c.l.s4 1983009808
  %v4149 = vunpack.c.0.s8 %v4148
  %v4150 = vlaneseq
  %v4151 = vshrl.u32 %v4150, 7
  %v4152 = vsub.s32 %v4149, %v4151
  %v4153 = vrot.slane %v4146, %v4152
  %v4154 = vcombine.low %v4145, %v4153
  %v4155 = vcombine.high %v4145, %v4153
  %v4157 = vunpack.c.l.s4 1934713408
  %v4158 = vunpack.c.0.s8 %v4157
  %v4159 = vlaneseq
  %v4160 = vshrl.u32 %v4159, 7
  %v4161 = vsub.s32 %v4158, %v4160
  %v4162 = vrot.slane %v4154, %v4161
  %v4164 = vunpack.c.l.s4 1934713408
  %v4165 = vunpack.c.0.s8 %v4164
  %v4166 = vlaneseq
  %v4167 = vshrl.u32 %v4166, 7
  %v4168 = vsub.s32 %v4165, %v4167
  %v4169 = vrot.slane %v4155, %v4168
  %v4170 = vcombine.high %v4162, 0.0
  %v4171 = vcombine.high %v4169, 0.0
  %v4173 = vsel %vm1153, %v3294, 0
  %v4176 = vsel %vm1153, %v3628, 0
  %v4179 = vsel %vm1153, %v3655, 0
  %4181 = vmatprep.subr.mxu0 0.0
  %4182 = vmatpush1.xpose.msra.mxu0 %v4176
  %4183 = vmatprep.subr.mxu0 0.0
  %4184 = vmatpush1.xpose.msra.mxu0 %v4179
  %4185 = vmatprep.subr.mxu0 0.0
  %4186 = vmatpush1.xpose.msra.mxu0 0.0
  %4187 = vmatprep.subr.mxu0 0.0
  %4188 = vmatpush1.xpose.msra.mxu0 0.0
  %4189 = vmatprep.subr.mxu0 0.0
  %4190 = vmatpush1.xpose.msra.mxu0 0.0
  %4191 = vmatprep.subr.mxu0 0.0
  %4192 = vmatpush1.xpose.msra.mxu0 0.0
  %4193 = vmatprep.subr.mxu0 0.0
  %4194 = vmatpush1.xpose.msra.mxu0 0.0
  %4195 = vmatprep.subr.mxu0 0.0
  %4196 = vmatpush1.xpose.msra.mxu0 0.0
  %4197 = vmatprep.subr.mxu0 0.0
  %4198 = vmatpush1.xpose.msra.mxu0 0.0
  %4199 = vmatprep.subr.mxu0 0.0
  %4200 = vmatpush1.xpose.msra.mxu0 0.0
  %4201 = vmatprep.subr.mxu0 0.0
  %4202 = vmatpush1.xpose.msra.mxu0 0.0
  %4203 = vmatprep.subr.mxu0 0.0
  %4204 = vmatpush1.xpose.msra.mxu0 0.0
  %4205 = vmatprep.subr.mxu0 0.0
  %4206 = vmatpush1.xpose.msra.mxu0 0.0
  %4207 = vmatprep.subr.mxu0 0.0
  %4208 = vmatpush1.xpose.msra.mxu0 0.0
  %4209 = vmatprep.subr.mxu0 0.0
  %4210 = vmatpush1.xpose.msra.mxu0 0.0
  %4211 = vmatprep.subr.mxu0 0.0
  %4212 = vmatpush1.xpose.msra.mxu0 0.0
  %4213 = vmatprep.subr.mxu0 0.0
  %4214 = vmatpush1.xpose.msra.mxu0 0.0
  %4215 = vmatprep.subr.mxu0 0.0
  %4216 = vmatpush1.xpose.msra.mxu0 0.0
  %4217 = vmatprep.subr.mxu0 0.0
  %4218 = vmatpush1.xpose.msra.mxu0 0.0
  %4219 = vmatprep.subr.mxu0 0.0
  %4220 = vmatpush1.xpose.msra.mxu0 0.0
  %4221 = vmatprep.subr.mxu0 0.0
  %4222 = vmatpush1.xpose.msra.mxu0 0.0
  %4223 = vmatprep.subr.mxu0 0.0
  %4224 = vmatpush1.xpose.msra.mxu0 0.0
  %4225 = vmatprep.subr.mxu0 0.0
  %4226 = vmatpush1.xpose.msra.mxu0 0.0
  %4227 = vmatprep.subr.mxu0 0.0
  %4228 = vmatpush1.xpose.msra.mxu0 0.0
  %4229 = vmatprep.subr.mxu0 0.0
  %4230 = vmatpush1.xpose.msra.mxu0 0.0
  %4231 = vmatprep.subr.mxu0 0.0
  %4232 = vmatpush1.xpose.msra.mxu0 0.0
  %4233 = vmatprep.subr.mxu0 0.0
  %4234 = vmatpush1.xpose.msra.mxu0 0.0
  %4235 = vmatprep.subr.mxu0 0.0
  %4236 = vmatpush1.xpose.msra.mxu0 0.0
  %4237 = vmatprep.subr.mxu0 0.0
  %4238 = vmatpush1.xpose.msra.mxu0 0.0
  %4239 = vmatprep.subr.mxu0 0.0
  %4240 = vmatpush1.xpose.msra.mxu0 0.0
  %4241 = vmatprep.subr.mxu0 0.0
  %4242 = vmatpush1.xpose.msra.mxu0 0.0
  %4243 = vmatprep.subr.mxu0 0.0
  %4244 = vmatpush1.xpose.msra.mxu0 0.0
  %4245 = vmatprep.mubr.f32.mxu0 0.0
  %4246 = vmatmul.mubr.f32.gmra.mrb[0].mxu0 %v4173
  %v4247 = vpop.f32.mrb[0].mxu0
  %v4248 = vadd.f32 0.0, %v4247
  %v4249 = vpop.f32.mrb[0].mxu0
  %4250 = vdwg.mxu0
  %v4252 = vsel %vm1153, %v3295, 0
  %v4255 = vsel %vm1153, %v3629, 0
  %v4258 = vsel %vm1153, %v3663, 0
  %4260 = vmatprep.subr.mxu0 0.0
  %4261 = vmatpush1.xpose.msra.mxu0 %v4255
  %4262 = vmatprep.subr.mxu0 0.0
  %4263 = vmatpush1.xpose.msra.mxu0 %v4258
  %4264 = vmatprep.subr.mxu0 0.0
  %4265 = vmatpush1.xpose.msra.mxu0 0.0
  %4266 = vmatprep.subr.mxu0 0.0
  %4267 = vmatpush1.xpose.msra.mxu0 0.0
  %4268 = vmatprep.subr.mxu0 0.0
  %4269 = vmatpush1.xpose.msra.mxu0 0.0
  %4270 = vmatprep.subr.mxu0 0.0
  %4271 = vmatpush1.xpose.msra.mxu0 0.0
  %4272 = vmatprep.subr.mxu0 0.0
  %4273 = vmatpush1.xpose.msra.mxu0 0.0
  %4274 = vmatprep.subr.mxu0 0.0
  %4275 = vmatpush1.xpose.msra.mxu0 0.0
  %4276 = vmatprep.subr.mxu0 0.0
  %4277 = vmatpush1.xpose.msra.mxu0 0.0
  %4278 = vmatprep.subr.mxu0 0.0
  %4279 = vmatpush1.xpose.msra.mxu0 0.0
  %4280 = vmatprep.subr.mxu0 0.0
  %4281 = vmatpush1.xpose.msra.mxu0 0.0
  %4282 = vmatprep.subr.mxu0 0.0
  %4283 = vmatpush1.xpose.msra.mxu0 0.0
  %4284 = vmatprep.subr.mxu0 0.0
  %4285 = vmatpush1.xpose.msra.mxu0 0.0
  %4286 = vmatprep.subr.mxu0 0.0
  %4287 = vmatpush1.xpose.msra.mxu0 0.0
  %4288 = vmatprep.subr.mxu0 0.0
  %4289 = vmatpush1.xpose.msra.mxu0 0.0
  %4290 = vmatprep.subr.mxu0 0.0
  %4291 = vmatpush1.xpose.msra.mxu0 0.0
  %4292 = vmatprep.subr.mxu0 0.0
  %4293 = vmatpush1.xpose.msra.mxu0 0.0
  %4294 = vmatprep.subr.mxu0 0.0
  %4295 = vmatpush1.xpose.msra.mxu0 0.0
  %4296 = vmatprep.subr.mxu0 0.0
  %4297 = vmatpush1.xpose.msra.mxu0 0.0
  %4298 = vmatprep.subr.mxu0 0.0
  %4299 = vmatpush1.xpose.msra.mxu0 0.0
  %4300 = vmatprep.subr.mxu0 0.0
  %4301 = vmatpush1.xpose.msra.mxu0 0.0
  %4302 = vmatprep.subr.mxu0 0.0
  %4303 = vmatpush1.xpose.msra.mxu0 0.0
  %4304 = vmatprep.subr.mxu0 0.0
  %4305 = vmatpush1.xpose.msra.mxu0 0.0
  %4306 = vmatprep.subr.mxu0 0.0
  %4307 = vmatpush1.xpose.msra.mxu0 0.0
  %4308 = vmatprep.subr.mxu0 0.0
  %4309 = vmatpush1.xpose.msra.mxu0 0.0
  %4310 = vmatprep.subr.mxu0 0.0
  %4311 = vmatpush1.xpose.msra.mxu0 0.0
  %4312 = vmatprep.subr.mxu0 0.0
  %4313 = vmatpush1.xpose.msra.mxu0 0.0
  %4314 = vmatprep.subr.mxu0 0.0
  %4315 = vmatpush1.xpose.msra.mxu0 0.0
  %4316 = vmatprep.subr.mxu0 0.0
  %4317 = vmatpush1.xpose.msra.mxu0 0.0
  %4318 = vmatprep.subr.mxu0 0.0
  %4319 = vmatpush1.xpose.msra.mxu0 0.0
  %4320 = vmatprep.subr.mxu0 0.0
  %4321 = vmatpush1.xpose.msra.mxu0 0.0
  %4322 = vmatprep.subr.mxu0 0.0
  %4323 = vmatpush1.xpose.msra.mxu0 0.0
  %4324 = vmatprep.mubr.f32.mxu0 0.0
  %4325 = vmatmul.mubr.f32.gmra.mrb[0].mxu0 %v4252
  %v4326 = vpop.f32.mrb[0].mxu0
  %v4327 = vadd.f32 0.0, %v4326
  %v4328 = vpop.f32.mrb[0].mxu0
  %4329 = vdwg.mxu0
  %v4331 = vsel %vm1153, %v3296, 0
  %v4334 = vsel %vm1153, %v3630, 0
  %v4337 = vsel %vm1153, %v3662, 0
  %4339 = vmatprep.subr.mxu0 0.0
  %4340 = vmatpush1.xpose.msra.mxu0 %v4334
  %4341 = vmatprep.subr.mxu0 0.0
  %4342 = vmatpush1.xpose.msra.mxu0 %v4337
  %4343 = vmatprep.subr.mxu0 0.0
  %4344 = vmatpush1.xpose.msra.mxu0 0.0
  %4345 = vmatprep.subr.mxu0 0.0
  %4346 = vmatpush1.xpose.msra.mxu0 0.0
  %4347 = vmatprep.subr.mxu0 0.0
  %4348 = vmatpush1.xpose.msra.mxu0 0.0
  %4349 = vmatprep.subr.mxu0 0.0
  %4350 = vmatpush1.xpose.msra.mxu0 0.0
  %4351 = vmatprep.subr.mxu0 0.0
  %4352 = vmatpush1.xpose.msra.mxu0 0.0
  %4353 = vmatprep.subr.mxu0 0.0
  %4354 = vmatpush1.xpose.msra.mxu0 0.0
  %4355 = vmatprep.subr.mxu0 0.0
  %4356 = vmatpush1.xpose.msra.mxu0 0.0
  %4357 = vmatprep.subr.mxu0 0.0
  %4358 = vmatpush1.xpose.msra.mxu0 0.0
  %4359 = vmatprep.subr.mxu0 0.0
  %4360 = vmatpush1.xpose.msra.mxu0 0.0
  %4361 = vmatprep.subr.mxu0 0.0
  %4362 = vmatpush1.xpose.msra.mxu0 0.0
  %4363 = vmatprep.subr.mxu0 0.0
  %4364 = vmatpush1.xpose.msra.mxu0 0.0
  %4365 = vmatprep.subr.mxu0 0.0
  %4366 = vmatpush1.xpose.msra.mxu0 0.0
  %4367 = vmatprep.subr.mxu0 0.0
  %4368 = vmatpush1.xpose.msra.mxu0 0.0
  %4369 = vmatprep.subr.mxu0 0.0
  %4370 = vmatpush1.xpose.msra.mxu0 0.0
  %4371 = vmatprep.subr.mxu0 0.0
  %4372 = vmatpush1.xpose.msra.mxu0 0.0
  %4373 = vmatprep.subr.mxu0 0.0
  %4374 = vmatpush1.xpose.msra.mxu0 0.0
  %4375 = vmatprep.subr.mxu0 0.0
  %4376 = vmatpush1.xpose.msra.mxu0 0.0
  %4377 = vmatprep.subr.mxu0 0.0
  %4378 = vmatpush1.xpose.msra.mxu0 0.0
  %4379 = vmatprep.subr.mxu0 0.0
  %4380 = vmatpush1.xpose.msra.mxu0 0.0
  %4381 = vmatprep.subr.mxu0 0.0
  %4382 = vmatpush1.xpose.msra.mxu0 0.0
  %4383 = vmatprep.subr.mxu0 0.0
  %4384 = vmatpush1.xpose.msra.mxu0 0.0
  %4385 = vmatprep.subr.mxu0 0.0
  %4386 = vmatpush1.xpose.msra.mxu0 0.0
  %4387 = vmatprep.subr.mxu0 0.0
  %4388 = vmatpush1.xpose.msra.mxu0 0.0
  %4389 = vmatprep.subr.mxu0 0.0
  %4390 = vmatpush1.xpose.msra.mxu0 0.0
  %4391 = vmatprep.subr.mxu0 0.0
  %4392 = vmatpush1.xpose.msra.mxu0 0.0
  %4393 = vmatprep.subr.mxu0 0.0
  %4394 = vmatpush1.xpose.msra.mxu0 0.0
  %4395 = vmatprep.subr.mxu0 0.0
  %4396 = vmatpush1.xpose.msra.mxu0 0.0
  %4397 = vmatprep.subr.mxu0 0.0
  %4398 = vmatpush1.xpose.msra.mxu0 0.0
  %4399 = vmatprep.subr.mxu0 0.0
  %4400 = vmatpush1.xpose.msra.mxu0 0.0
  %4401 = vmatprep.subr.mxu0 0.0
  %4402 = vmatpush1.xpose.msra.mxu0 0.0
  %4403 = vmatprep.mubr.f32.mxu0 0.0
  %4404 = vmatmul.mubr.f32.gmra.mrb[0].mxu0 %v4331
  %v4405 = vpop.f32.mrb[0].mxu0
  %v4406 = vadd.f32 0.0, %v4405
  %v4407 = vpop.f32.mrb[0].mxu0
  %4408 = vdwg.mxu0
  %v4410 = vsel %vm1153, %v3297, 0
  %v4413 = vsel %vm1153, %v3631, 0
  %v4416 = vsel %vm1153, %v3664, 0
  %4418 = vmatprep.subr.mxu0 0.0
  %4419 = vmatpush1.xpose.msra.mxu0 %v4413
  %4420 = vmatprep.subr.mxu0 0.0
  %4421 = vmatpush1.xpose.msra.mxu0 %v4416
  %4422 = vmatprep.subr.mxu0 0.0
  %4423 = vmatpush1.xpose.msra.mxu0 0.0
  %4424 = vmatprep.subr.mxu0 0.0
  %4425 = vmatpush1.xpose.msra.mxu0 0.0
  %4426 = vmatprep.subr.mxu0 0.0
  %4427 = vmatpush1.xpose.msra.mxu0 0.0
  %4428 = vmatprep.subr.mxu0 0.0
  %4429 = vmatpush1.xpose.msra.mxu0 0.0
  %4430 = vmatprep.subr.mxu0 0.0
  %4431 = vmatpush1.xpose.msra.mxu0 0.0
  %4432 = vmatprep.subr.mxu0 0.0
  %4433 = vmatpush1.xpose.msra.mxu0 0.0
  %4434 = vmatprep.subr.mxu0 0.0
  %4435 = vmatpush1.xpose.msra.mxu0 0.0
  %4436 = vmatprep.subr.mxu0 0.0
  %4437 = vmatpush1.xpose.msra.mxu0 0.0
  %4438 = vmatprep.subr.mxu0 0.0
  %4439 = vmatpush1.xpose.msra.mxu0 0.0
  %4440 = vmatprep.subr.mxu0 0.0
  %4441 = vmatpush1.xpose.msra.mxu0 0.0
  %4442 = vmatprep.subr.mxu0 0.0
  %4443 = vmatpush1.xpose.msra.mxu0 0.0
  %4444 = vmatprep.subr.mxu0 0.0
  %4445 = vmatpush1.xpose.msra.mxu0 0.0
  %4446 = vmatprep.subr.mxu0 0.0
  %4447 = vmatpush1.xpose.msra.mxu0 0.0
  %4448 = vmatprep.subr.mxu0 0.0
  %4449 = vmatpush1.xpose.msra.mxu0 0.0
  %4450 = vmatprep.subr.mxu0 0.0
  %4451 = vmatpush1.xpose.msra.mxu0 0.0
  %4452 = vmatprep.subr.mxu0 0.0
  %4453 = vmatpush1.xpose.msra.mxu0 0.0
  %4454 = vmatprep.subr.mxu0 0.0
  %4455 = vmatpush1.xpose.msra.mxu0 0.0
  %4456 = vmatprep.subr.mxu0 0.0
  %4457 = vmatpush1.xpose.msra.mxu0 0.0
  %4458 = vmatprep.subr.mxu0 0.0
  %4459 = vmatpush1.xpose.msra.mxu0 0.0
  %4460 = vmatprep.subr.mxu0 0.0
  %4461 = vmatpush1.xpose.msra.mxu0 0.0
  %4462 = vmatprep.subr.mxu0 0.0
  %4463 = vmatpush1.xpose.msra.mxu0 0.0
  %4464 = vmatprep.subr.mxu0 0.0
  %4465 = vmatpush1.xpose.msra.mxu0 0.0
  %4466 = vmatprep.subr.mxu0 0.0
  %4467 = vmatpush1.xpose.msra.mxu0 0.0
  %4468 = vmatprep.subr.mxu0 0.0
  %4469 = vmatpush1.xpose.msra.mxu0 0.0
  %4470 = vmatprep.subr.mxu0 0.0
  %4471 = vmatpush1.xpose.msra.mxu0 0.0
  %4472 = vmatprep.subr.mxu0 0.0
  %4473 = vmatpush1.xpose.msra.mxu0 0.0
  %4474 = vmatprep.subr.mxu0 0.0
  %4475 = vmatpush1.xpose.msra.mxu0 0.0
  %4476 = vmatprep.subr.mxu0 0.0
  %4477 = vmatpush1.xpose.msra.mxu0 0.0
  %4478 = vmatprep.subr.mxu0 0.0
  %4479 = vmatpush1.xpose.msra.mxu0 0.0
  %4480 = vmatprep.subr.mxu0 0.0
  %4481 = vmatpush1.xpose.msra.mxu0 0.0
  %4482 = vmatprep.mubr.f32.mxu0 0.0
  %4483 = vmatmul.mubr.f32.gmra.mrb[0].mxu0 %v4410
  %v4484 = vpop.f32.mrb[0].mxu0
  %v4485 = vadd.f32 0.0, %v4484
  %v4486 = vpop.f32.mrb[0].mxu0
  %4487 = vdwg.mxu0
  %v4489 = vsel %vm1153, %v3362, 0
  %v4492 = vsel %vm1153, %v3729, 0
  %v4495 = vsel %vm1153, %v3756, 0
  %4497 = vmatprep.subr.mxu0 0.0
  %4498 = vmatpush1.xpose.msra.mxu0 %v4492
  %4499 = vmatprep.subr.mxu0 0.0
  %4500 = vmatpush1.xpose.msra.mxu0 %v4495
  %4501 = vmatprep.subr.mxu0 0.0
  %4502 = vmatpush1.xpose.msra.mxu0 0.0
  %4503 = vmatprep.subr.mxu0 0.0
  %4504 = vmatpush1.xpose.msra.mxu0 0.0
  %4505 = vmatprep.subr.mxu0 0.0
  %4506 = vmatpush1.xpose.msra.mxu0 0.0
  %4507 = vmatprep.subr.mxu0 0.0
  %4508 = vmatpush1.xpose.msra.mxu0 0.0
  %4509 = vmatprep.subr.mxu0 0.0
  %4510 = vmatpush1.xpose.msra.mxu0 0.0
  %4511 = vmatprep.subr.mxu0 0.0
  %4512 = vmatpush1.xpose.msra.mxu0 0.0
  %4513 = vmatprep.subr.mxu0 0.0
  %4514 = vmatpush1.xpose.msra.mxu0 0.0
  %4515 = vmatprep.subr.mxu0 0.0
  %4516 = vmatpush1.xpose.msra.mxu0 0.0
  %4517 = vmatprep.subr.mxu0 0.0
  %4518 = vmatpush1.xpose.msra.mxu0 0.0
  %4519 = vmatprep.subr.mxu0 0.0
  %4520 = vmatpush1.xpose.msra.mxu0 0.0
  %4521 = vmatprep.subr.mxu0 0.0
  %4522 = vmatpush1.xpose.msra.mxu0 0.0
  %4523 = vmatprep.subr.mxu0 0.0
  %4524 = vmatpush1.xpose.msra.mxu0 0.0
  %4525 = vmatprep.subr.mxu0 0.0
  %4526 = vmatpush1.xpose.msra.mxu0 0.0
  %4527 = vmatprep.subr.mxu0 0.0
  %4528 = vmatpush1.xpose.msra.mxu0 0.0
  %4529 = vmatprep.subr.mxu0 0.0
  %4530 = vmatpush1.xpose.msra.mxu0 0.0
  %4531 = vmatprep.subr.mxu0 0.0
  %4532 = vmatpush1.xpose.msra.mxu0 0.0
  %4533 = vmatprep.subr.mxu0 0.0
  %4534 = vmatpush1.xpose.msra.mxu0 0.0
  %4535 = vmatprep.subr.mxu0 0.0
  %4536 = vmatpush1.xpose.msra.mxu0 0.0
  %4537 = vmatprep.subr.mxu0 0.0
  %4538 = vmatpush1.xpose.msra.mxu0 0.0
  %4539 = vmatprep.subr.mxu0 0.0
  %4540 = vmatpush1.xpose.msra.mxu0 0.0
  %4541 = vmatprep.subr.mxu0 0.0
  %4542 = vmatpush1.xpose.msra.mxu0 0.0
  %4543 = vmatprep.subr.mxu0 0.0
  %4544 = vmatpush1.xpose.msra.mxu0 0.0
  %4545 = vmatprep.subr.mxu0 0.0
  %4546 = vmatpush1.xpose.msra.mxu0 0.0
  %4547 = vmatprep.subr.mxu0 0.0
  %4548 = vmatpush1.xpose.msra.mxu0 0.0
  %4549 = vmatprep.subr.mxu0 0.0
  %4550 = vmatpush1.xpose.msra.mxu0 0.0
  %4551 = vmatprep.subr.mxu0 0.0
  %4552 = vmatpush1.xpose.msra.mxu0 0.0
  %4553 = vmatprep.subr.mxu0 0.0
  %4554 = vmatpush1.xpose.msra.mxu0 0.0
  %4555 = vmatprep.subr.mxu0 0.0
  %4556 = vmatpush1.xpose.msra.mxu0 0.0
  %4557 = vmatprep.subr.mxu0 0.0
  %4558 = vmatpush1.xpose.msra.mxu0 0.0
  %4559 = vmatprep.subr.mxu0 0.0
  %4560 = vmatpush1.xpose.msra.mxu0 0.0
  %4561 = vmatprep.mubr.f32.mxu0 0.0
  %4562 = vmatmul.mubr.f32.gmra.mrb[0].mxu0 %v4489
  %v4563 = vpop.f32.mrb[0].mxu0
  %v4564 = vadd.f32 0.0, %v4563
  %v4565 = vpop.f32.mrb[0].mxu0
  %4566 = vdwg.mxu0
  %v4568 = vsel %vm1153, %v3363, 0
  %v4571 = vsel %vm1153, %v3730, 0
  %v4574 = vsel %vm1153, %v3764, 0
  %4576 = vmatprep.subr.mxu0 0.0
  %4577 = vmatpush1.xpose.msra.mxu0 %v4571
  %4578 = vmatprep.subr.mxu0 0.0
  %4579 = vmatpush1.xpose.msra.mxu0 %v4574
  %4580 = vmatprep.subr.mxu0 0.0
  %4581 = vmatpush1.xpose.msra.mxu0 0.0
  %4582 = vmatprep.subr.mxu0 0.0
  %4583 = vmatpush1.xpose.msra.mxu0 0.0
  %4584 = vmatprep.subr.mxu0 0.0
  %4585 = vmatpush1.xpose.msra.mxu0 0.0
  %4586 = vmatprep.subr.mxu0 0.0
  %4587 = vmatpush1.xpose.msra.mxu0 0.0
  %4588 = vmatprep.subr.mxu0 0.0
  %4589 = vmatpush1.xpose.msra.mxu0 0.0
  %4590 = vmatprep.subr.mxu0 0.0
  %4591 = vmatpush1.xpose.msra.mxu0 0.0
  %4592 = vmatprep.subr.mxu0 0.0
  %4593 = vmatpush1.xpose.msra.mxu0 0.0
  %4594 = vmatprep.subr.mxu0 0.0
  %4595 = vmatpush1.xpose.msra.mxu0 0.0
  %4596 = vmatprep.subr.mxu0 0.0
  %4597 = vmatpush1.xpose.msra.mxu0 0.0
  %4598 = vmatprep.subr.mxu0 0.0
  %4599 = vmatpush1.xpose.msra.mxu0 0.0
  %4600 = vmatprep.subr.mxu0 0.0
  %4601 = vmatpush1.xpose.msra.mxu0 0.0
  %4602 = vmatprep.subr.mxu0 0.0
  %4603 = vmatpush1.xpose.msra.mxu0 0.0
  %4604 = vmatprep.subr.mxu0 0.0
  %4605 = vmatpush1.xpose.msra.mxu0 0.0
  %4606 = vmatprep.subr.mxu0 0.0
  %4607 = vmatpush1.xpose.msra.mxu0 0.0
  %4608 = vmatprep.subr.mxu0 0.0
  %4609 = vmatpush1.xpose.msra.mxu0 0.0
  %4610 = vmatprep.subr.mxu0 0.0
  %4611 = vmatpush1.xpose.msra.mxu0 0.0
  %4612 = vmatprep.subr.mxu0 0.0
  %4613 = vmatpush1.xpose.msra.mxu0 0.0
  %4614 = vmatprep.subr.mxu0 0.0
  %4615 = vmatpush1.xpose.msra.mxu0 0.0
  %4616 = vmatprep.subr.mxu0 0.0
  %4617 = vmatpush1.xpose.msra.mxu0 0.0
  %4618 = vmatprep.subr.mxu0 0.0
  %4619 = vmatpush1.xpose.msra.mxu0 0.0
  %4620 = vmatprep.subr.mxu0 0.0
  %4621 = vmatpush1.xpose.msra.mxu0 0.0
  %4622 = vmatprep.subr.mxu0 0.0
  %4623 = vmatpush1.xpose.msra.mxu0 0.0
  %4624 = vmatprep.subr.mxu0 0.0
  %4625 = vmatpush1.xpose.msra.mxu0 0.0
  %4626 = vmatprep.subr.mxu0 0.0
  %4627 = vmatpush1.xpose.msra.mxu0 0.0
  %4628 = vmatprep.subr.mxu0 0.0
  %4629 = vmatpush1.xpose.msra.mxu0 0.0
  %4630 = vmatprep.subr.mxu0 0.0
  %4631 = vmatpush1.xpose.msra.mxu0 0.0
  %4632 = vmatprep.subr.mxu0 0.0
  %4633 = vmatpush1.xpose.msra.mxu0 0.0
  %4634 = vmatprep.subr.mxu0 0.0
  %4635 = vmatpush1.xpose.msra.mxu0 0.0
  %4636 = vmatprep.subr.mxu0 0.0
  %4637 = vmatpush1.xpose.msra.mxu0 0.0
  %4638 = vmatprep.subr.mxu0 0.0
  %4639 = vmatpush1.xpose.msra.mxu0 0.0
  %4640 = vmatprep.mubr.f32.mxu0 0.0
  %4641 = vmatmul.mubr.f32.gmra.mrb[0].mxu0 %v4568
  %v4642 = vpop.f32.mrb[0].mxu0
  %v4643 = vadd.f32 0.0, %v4642
  %v4644 = vpop.f32.mrb[0].mxu0
  %4645 = vdwg.mxu0
  %v4647 = vsel %vm1153, %v3364, 0
  %v4650 = vsel %vm1153, %v3731, 0
  %v4653 = vsel %vm1153, %v3763, 0
  %4655 = vmatprep.subr.mxu0 0.0
  %4656 = vmatpush1.xpose.msra.mxu0 %v4650
  %4657 = vmatprep.subr.mxu0 0.0
  %4658 = vmatpush1.xpose.msra.mxu0 %v4653
  %4659 = vmatprep.subr.mxu0 0.0
  %4660 = vmatpush1.xpose.msra.mxu0 0.0
  %4661 = vmatprep.subr.mxu0 0.0
  %4662 = vmatpush1.xpose.msra.mxu0 0.0
  %4663 = vmatprep.subr.mxu0 0.0
  %4664 = vmatpush1.xpose.msra.mxu0 0.0
  %4665 = vmatprep.subr.mxu0 0.0
  %4666 = vmatpush1.xpose.msra.mxu0 0.0
  %4667 = vmatprep.subr.mxu0 0.0
  %4668 = vmatpush1.xpose.msra.mxu0 0.0
  %4669 = vmatprep.subr.mxu0 0.0
  %4670 = vmatpush1.xpose.msra.mxu0 0.0
  %4671 = vmatprep.subr.mxu0 0.0
  %4672 = vmatpush1.xpose.msra.mxu0 0.0
  %4673 = vmatprep.subr.mxu0 0.0
  %4674 = vmatpush1.xpose.msra.mxu0 0.0
  %4675 = vmatprep.subr.mxu0 0.0
  %4676 = vmatpush1.xpose.msra.mxu0 0.0
  %4677 = vmatprep.subr.mxu0 0.0
  %4678 = vmatpush1.xpose.msra.mxu0 0.0
  %4679 = vmatprep.subr.mxu0 0.0
  %4680 = vmatpush1.xpose.msra.mxu0 0.0
  %4681 = vmatprep.subr.mxu0 0.0
  %4682 = vmatpush1.xpose.msra.mxu0 0.0
  %4683 = vmatprep.subr.mxu0 0.0
  %4684 = vmatpush1.xpose.msra.mxu0 0.0
  %4685 = vmatprep.subr.mxu0 0.0
  %4686 = vmatpush1.xpose.msra.mxu0 0.0
  %4687 = vmatprep.subr.mxu0 0.0
  %4688 = vmatpush1.xpose.msra.mxu0 0.0
  %4689 = vmatprep.subr.mxu0 0.0
  %4690 = vmatpush1.xpose.msra.mxu0 0.0
  %4691 = vmatprep.subr.mxu0 0.0
  %4692 = vmatpush1.xpose.msra.mxu0 0.0
  %4693 = vmatprep.subr.mxu0 0.0
  %4694 = vmatpush1.xpose.msra.mxu0 0.0
  %4695 = vmatprep.subr.mxu0 0.0
  %4696 = vmatpush1.xpose.msra.mxu0 0.0
  %4697 = vmatprep.subr.mxu0 0.0
  %4698 = vmatpush1.xpose.msra.mxu0 0.0
  %4699 = vmatprep.subr.mxu0 0.0
  %4700 = vmatpush1.xpose.msra.mxu0 0.0
  %4701 = vmatprep.subr.mxu0 0.0
  %4702 = vmatpush1.xpose.msra.mxu0 0.0
  %4703 = vmatprep.subr.mxu0 0.0
  %4704 = vmatpush1.xpose.msra.mxu0 0.0
  %4705 = vmatprep.subr.mxu0 0.0
  %4706 = vmatpush1.xpose.msra.mxu0 0.0
  %4707 = vmatprep.subr.mxu0 0.0
  %4708 = vmatpush1.xpose.msra.mxu0 0.0
  %4709 = vmatprep.subr.mxu0 0.0
  %4710 = vmatpush1.xpose.msra.mxu0 0.0
  %4711 = vmatprep.subr.mxu0 0.0
  %4712 = vmatpush1.xpose.msra.mxu0 0.0
  %4713 = vmatprep.subr.mxu0 0.0
  %4714 = vmatpush1.xpose.msra.mxu0 0.0
  %4715 = vmatprep.subr.mxu0 0.0
  %4716 = vmatpush1.xpose.msra.mxu0 0.0
  %4717 = vmatprep.subr.mxu0 0.0
  %4718 = vmatpush1.xpose.msra.mxu0 0.0
  %4719 = vmatprep.mubr.f32.mxu0 0.0
  %4720 = vmatmul.mubr.f32.gmra.mrb[0].mxu0 %v4647
  %v4721 = vpop.f32.mrb[0].mxu0
  %v4722 = vadd.f32 0.0, %v4721
  %v4723 = vpop.f32.mrb[0].mxu0
  %4724 = vdwg.mxu0
  %v4726 = vsel %vm1153, %v3365, 0
  %v4729 = vsel %vm1153, %v3732, 0
  %v4732 = vsel %vm1153, %v3765, 0
  %4734 = vmatprep.subr.mxu0 0.0
  %4735 = vmatpush1.xpose.msra.mxu0 %v4729
  %4736 = vmatprep.subr.mxu0 0.0
  %4737 = vmatpush1.xpose.msra.mxu0 %v4732
  %4738 = vmatprep.subr.mxu0 0.0
  %4739 = vmatpush1.xpose.msra.mxu0 0.0
  %4740 = vmatprep.subr.mxu0 0.0
  %4741 = vmatpush1.xpose.msra.mxu0 0.0
  %4742 = vmatprep.subr.mxu0 0.0
  %4743 = vmatpush1.xpose.msra.mxu0 0.0
  %4744 = vmatprep.subr.mxu0 0.0
  %4745 = vmatpush1.xpose.msra.mxu0 0.0
  %4746 = vmatprep.subr.mxu0 0.0
  %4747 = vmatpush1.xpose.msra.mxu0 0.0
  %4748 = vmatprep.subr.mxu0 0.0
  %4749 = vmatpush1.xpose.msra.mxu0 0.0
  %4750 = vmatprep.subr.mxu0 0.0
  %4751 = vmatpush1.xpose.msra.mxu0 0.0
  %4752 = vmatprep.subr.mxu0 0.0
  %4753 = vmatpush1.xpose.msra.mxu0 0.0
  %4754 = vmatprep.subr.mxu0 0.0
  %4755 = vmatpush1.xpose.msra.mxu0 0.0
  %4756 = vmatprep.subr.mxu0 0.0
  %4757 = vmatpush1.xpose.msra.mxu0 0.0
  %4758 = vmatprep.subr.mxu0 0.0
  %4759 = vmatpush1.xpose.msra.mxu0 0.0
  %4760 = vmatprep.subr.mxu0 0.0
  %4761 = vmatpush1.xpose.msra.mxu0 0.0
  %4762 = vmatprep.subr.mxu0 0.0
  %4763 = vmatpush1.xpose.msra.mxu0 0.0
  %4764 = vmatprep.subr.mxu0 0.0
  %4765 = vmatpush1.xpose.msra.mxu0 0.0
  %4766 = vmatprep.subr.mxu0 0.0
  %4767 = vmatpush1.xpose.msra.mxu0 0.0
  %4768 = vmatprep.subr.mxu0 0.0
  %4769 = vmatpush1.xpose.msra.mxu0 0.0
  %4770 = vmatprep.subr.mxu0 0.0
  %4771 = vmatpush1.xpose.msra.mxu0 0.0
  %4772 = vmatprep.subr.mxu0 0.0
  %4773 = vmatpush1.xpose.msra.mxu0 0.0
  %4774 = vmatprep.subr.mxu0 0.0
  %4775 = vmatpush1.xpose.msra.mxu0 0.0
  %4776 = vmatprep.subr.mxu0 0.0
  %4777 = vmatpush1.xpose.msra.mxu0 0.0
  %4778 = vmatprep.subr.mxu0 0.0
  %4779 = vmatpush1.xpose.msra.mxu0 0.0
  %4780 = vmatprep.subr.mxu0 0.0
  %4781 = vmatpush1.xpose.msra.mxu0 0.0
  %4782 = vmatprep.subr.mxu0 0.0
  %4783 = vmatpush1.xpose.msra.mxu0 0.0
  %4784 = vmatprep.subr.mxu0 0.0
  %4785 = vmatpush1.xpose.msra.mxu0 0.0
  %4786 = vmatprep.subr.mxu0 0.0
  %4787 = vmatpush1.xpose.msra.mxu0 0.0
  %4788 = vmatprep.subr.mxu0 0.0
  %4789 = vmatpush1.xpose.msra.mxu0 0.0
  %4790 = vmatprep.subr.mxu0 0.0
  %4791 = vmatpush1.xpose.msra.mxu0 0.0
  %4792 = vmatprep.subr.mxu0 0.0
  %4793 = vmatpush1.xpose.msra.mxu0 0.0
  %4794 = vmatprep.subr.mxu0 0.0
  %4795 = vmatpush1.xpose.msra.mxu0 0.0
  %4796 = vmatprep.subr.mxu0 0.0
  %4797 = vmatpush1.xpose.msra.mxu0 0.0
  %4798 = vmatprep.mubr.f32.mxu0 0.0
  %4799 = vmatmul.mubr.f32.gmra.mrb[0].mxu0 %v4726
  %v4800 = vpop.f32.mrb[0].mxu0
  %v4801 = vadd.f32 0.0, %v4800
  %v4802 = vpop.f32.mrb[0].mxu0
  %4803 = vdwg.mxu0
  %v4804 = vmul.f32 %v4248, 0.35355338
  %v4805 = vmul.f32 %v4327, 0.35355338
  %v4806 = vmul.f32 %v4406, 0.35355338
  %v4807 = vmul.f32 %v4485, 0.35355338
  %v4808 = vmul.f32 %v4564, 0.35355338
  %v4809 = vmul.f32 %v4643, 0.35355338
  %v4810 = vmul.f32 %v4722, 0.35355338
  %v4811 = vmul.f32 %v4801, 0.35355338
  %vm4812 = vcmask 80896
  %v4813 = vsel %vm4812, %v4804, -inf
  %4814 = vmax.xlane.f32.xlu0 %v4813
  %v4815 = vpop.xlane.xlu0 %4814
  %v4816 = vsel %vm4812, %v4805, -inf
  %4817 = vmax.xlane.f32.xlu0 %v4816
  %v4818 = vpop.xlane.xlu0 %4817
  %v4819 = vsel %vm4812, %v4806, -inf
  %4820 = vmax.xlane.f32.xlu0 %v4819
  %v4821 = vpop.xlane.xlu0 %4820
  %v4822 = vsel %vm4812, %v4807, -inf
  %4823 = vmax.xlane.f32.xlu0 %v4822
  %v4824 = vpop.xlane.xlu0 %4823
  %v4825 = vsel %vm4812, %v4808, -inf
  %4826 = vmax.xlane.f32.xlu0 %v4825
  %v4827 = vpop.xlane.xlu0 %4826
  %v4828 = vsel %vm4812, %v4809, -inf
  %4829 = vmax.xlane.f32.xlu0 %v4828
  %v4830 = vpop.xlane.xlu0 %4829
  %v4831 = vsel %vm4812, %v4810, -inf
  %4832 = vmax.xlane.f32.xlu0 %v4831
  %v4833 = vpop.xlane.xlu0 %4832
  %v4834 = vsel %vm4812, %v4811, -inf
  %4835 = vmax.xlane.f32.xlu0 %v4834
  %v4836 = vpop.xlane.xlu0 %4835
  %v4837 = vsub.f32 %v4804, %v4815
  %v4838 = vsub.f32 %v4805, %v4818
  %v4839 = vsub.f32 %v4806, %v4821
  %v4840 = vsub.f32 %v4807, %v4824
  %v4841 = vsub.f32 %v4808, %v4827
  %v4842 = vsub.f32 %v4809, %v4830
  %v4843 = vsub.f32 %v4810, %v4833
  %v4844 = vsub.f32 %v4811, %v4836
  %v4845 = vmul.f32 %v4837, 1.442695
  %v4846 = vpow.pop %v4845
  %v4847 = vmul.f32 %v4838, 1.442695
  %v4848 = vpow.pop %v4847
  %v4849 = vmul.f32 %v4839, 1.442695
  %v4850 = vpow.pop %v4849
  %v4851 = vmul.f32 %v4840, 1.442695
  %v4852 = vpow.pop %v4851
  %v4853 = vmul.f32 %v4841, 1.442695
  %v4854 = vpow.pop %v4853
  %v4855 = vmul.f32 %v4842, 1.442695
  %v4856 = vpow.pop %v4855
  %v4857 = vmul.f32 %v4843, 1.442695
  %v4858 = vpow.pop %v4857
  %v4859 = vmul.f32 %v4844, 1.442695
  %v4860 = vpow.pop %v4859
  %v4861 = vsel %vm4812, %v4846, 0.0
  %4862 = vadd.xlane.f32.xlu0 %v4861
  %v4863 = vpop.xlane.xlu0 %4862
  %v4864 = vsel %vm4812, %v4848, 0.0
  %4865 = vadd.xlane.f32.xlu0 %v4864
  %v4866 = vpop.xlane.xlu0 %4865
  %v4867 = vsel %vm4812, %v4850, 0.0
  %4868 = vadd.xlane.f32.xlu0 %v4867
  %v4869 = vpop.xlane.xlu0 %4868
  %v4870 = vsel %vm4812, %v4852, 0.0
  %4871 = vadd.xlane.f32.xlu0 %v4870
  %v4872 = vpop.xlane.xlu0 %4871
  %v4873 = vsel %vm4812, %v4854, 0.0
  %4874 = vadd.xlane.f32.xlu0 %v4873
  %v4875 = vpop.xlane.xlu0 %4874
  %v4876 = vsel %vm4812, %v4856, 0.0
  %4877 = vadd.xlane.f32.xlu0 %v4876
  %v4878 = vpop.xlane.xlu0 %4877
  %v4879 = vsel %vm4812, %v4858, 0.0
  %4880 = vadd.xlane.f32.xlu0 %v4879
  %v4881 = vpop.xlane.xlu0 %4880
  %v4882 = vsel %vm4812, %v4860, 0.0
  %4883 = vadd.xlane.f32.xlu0 %v4882
  %v4884 = vpop.xlane.xlu0 %4883
  %v4885 = vrcp.pop %v4863
  %v4886 = vrcp.pop %v4866
  %v4887 = vrcp.pop %v4869
  %v4888 = vrcp.pop %v4872
  %v4889 = vrcp.pop %v4875
  %v4890 = vrcp.pop %v4878
  %v4891 = vrcp.pop %v4881
  %v4892 = vrcp.pop %v4884
  %v4893 = vmul.f32 %v4846, %v4885
  %v4894 = vmul.f32 %v4848, %v4886
  %v4895 = vmul.f32 %v4850, %v4887
  %v4896 = vmul.f32 %v4852, %v4888
  %v4897 = vmul.f32 %v4854, %v4889
  %v4898 = vmul.f32 %v4856, %v4890
  %v4899 = vmul.f32 %v4858, %v4891
  %v4900 = vmul.f32 %v4860, %v4892
  %v4902 = vsel %vm4812, %v4893, 0
  %v4905 = vsel %vm59, %v4061, 0
  %4907 = vmatprep.subr.mxu0 0.0
  %4908 = vmatpush1.msra.mxu0 %v4034
  %4909 = vmatprep.subr.mxu0 0.0
  %4910 = vmatpush1.msra.mxu0 %v4905
  %4911 = vmatprep.subr.mxu0 0.0
  %4912 = vmatpush1.msra.mxu0 0.0
  %4913 = vmatprep.subr.mxu0 0.0
  %4914 = vmatpush1.msra.mxu0 0.0
  %4915 = vmatprep.subr.mxu0 0.0
  %4916 = vmatpush1.msra.mxu0 0.0
  %4917 = vmatprep.subr.mxu0 0.0
  %4918 = vmatpush1.msra.mxu0 0.0
  %4919 = vmatprep.subr.mxu0 0.0
  %4920 = vmatpush1.msra.mxu0 0.0
  %4921 = vmatprep.subr.mxu0 0.0
  %4922 = vmatpush1.msra.mxu0 0.0
  %4923 = vmatprep.subr.mxu0 0.0
  %4924 = vmatpush1.msra.mxu0 0.0
  %4925 = vmatprep.subr.mxu0 0.0
  %4926 = vmatpush1.msra.mxu0 0.0
  %4927 = vmatprep.subr.mxu0 0.0
  %4928 = vmatpush1.msra.mxu0 0.0
  %4929 = vmatprep.subr.mxu0 0.0
  %4930 = vmatpush1.msra.mxu0 0.0
  %4931 = vmatprep.subr.mxu0 0.0
  %4932 = vmatpush1.msra.mxu0 0.0
  %4933 = vmatprep.subr.mxu0 0.0
  %4934 = vmatpush1.msra.mxu0 0.0
  %4935 = vmatprep.subr.mxu0 0.0
  %4936 = vmatpush1.msra.mxu0 0.0
  %4937 = vmatprep.subr.mxu0 0.0
  %4938 = vmatpush1.msra.mxu0 0.0
  %4939 = vmatprep.subr.mxu0 0.0
  %4940 = vmatpush1.msra.mxu0 0.0
  %4941 = vmatprep.subr.mxu0 0.0
  %4942 = vmatpush1.msra.mxu0 0.0
  %4943 = vmatprep.subr.mxu0 0.0
  %4944 = vmatpush1.msra.mxu0 0.0
  %4945 = vmatprep.subr.mxu0 0.0
  %4946 = vmatpush1.msra.mxu0 0.0
  %4947 = vmatprep.subr.mxu0 0.0
  %4948 = vmatpush1.msra.mxu0 0.0
  %4949 = vmatprep.subr.mxu0 0.0
  %4950 = vmatpush1.msra.mxu0 0.0
  %4951 = vmatprep.subr.mxu0 0.0
  %4952 = vmatpush1.msra.mxu0 0.0
  %4953 = vmatprep.subr.mxu0 0.0
  %4954 = vmatpush1.msra.mxu0 0.0
  %4955 = vmatprep.subr.mxu0 0.0
  %4956 = vmatpush1.msra.mxu0 0.0
  %4957 = vmatprep.subr.mxu0 0.0
  %4958 = vmatpush1.msra.mxu0 0.0
  %4959 = vmatprep.subr.mxu0 0.0
  %4960 = vmatpush1.msra.mxu0 0.0
  %4961 = vmatprep.subr.mxu0 0.0
  %4962 = vmatpush1.msra.mxu0 0.0
  %4963 = vmatprep.subr.mxu0 0.0
  %4964 = vmatpush1.msra.mxu0 0.0
  %4965 = vmatprep.subr.mxu0 0.0
  %4966 = vmatpush1.msra.mxu0 0.0
  %4967 = vmatprep.subr.mxu0 0.0
  %4968 = vmatpush1.msra.mxu0 0.0
  %4969 = vmatprep.subr.mxu0 0.0
  %4970 = vmatpush1.msra.mxu0 0.0
  %4971 = vmatprep.mubr.f32.mxu0 0.0
  %4972 = vmatmul.mubr.f32.gmra.mrb[0].mxu0 %v4902
  %v4973 = vpop.f32.mrb[0].mxu0
  %v4974 = vadd.f32 0.0, %v4973
  %v4975 = vpop.f32.mrb[0].mxu0
  %4976 = vdwg.mxu0
  %v4978 = vsel %vm4812, %v4894, 0
  %v4981 = vsel %vm59, %v4069, 0
  %4983 = vmatprep.subr.mxu0 0.0
  %4984 = vmatpush1.msra.mxu0 %v4035
  %4985 = vmatprep.subr.mxu0 0.0
  %4986 = vmatpush1.msra.mxu0 %v4981
  %4987 = vmatprep.subr.mxu0 0.0
  %4988 = vmatpush1.msra.mxu0 0.0
  %4989 = vmatprep.subr.mxu0 0.0
  %4990 = vmatpush1.msra.mxu0 0.0
  %4991 = vmatprep.subr.mxu0 0.0
  %4992 = vmatpush1.msra.mxu0 0.0
  %4993 = vmatprep.subr.mxu0 0.0
  %4994 = vmatpush1.msra.mxu0 0.0
  %4995 = vmatprep.subr.mxu0 0.0
  %4996 = vmatpush1.msra.mxu0 0.0
  %4997 = vmatprep.subr.mxu0 0.0
  %4998 = vmatpush1.msra.mxu0 0.0
  %4999 = vmatprep.subr.mxu0 0.0
  %5000 = vmatpush1.msra.mxu0 0.0
  %5001 = vmatprep.subr.mxu0 0.0
  %5002 = vmatpush1.msra.mxu0 0.0
  %5003 = vmatprep.subr.mxu0 0.0
  %5004 = vmatpush1.msra.mxu0 0.0
  %5005 = vmatprep.subr.mxu0 0.0
  %5006 = vmatpush1.msra.mxu0 0.0
  %5007 = vmatprep.subr.mxu0 0.0
  %5008 = vmatpush1.msra.mxu0 0.0
  %5009 = vmatprep.subr.mxu0 0.0
  %5010 = vmatpush1.msra.mxu0 0.0
  %5011 = vmatprep.subr.mxu0 0.0
  %5012 = vmatpush1.msra.mxu0 0.0
  %5013 = vmatprep.subr.mxu0 0.0
  %5014 = vmatpush1.msra.mxu0 0.0
  %5015 = vmatprep.subr.mxu0 0.0
  %5016 = vmatpush1.msra.mxu0 0.0
  %5017 = vmatprep.subr.mxu0 0.0
  %5018 = vmatpush1.msra.mxu0 0.0
  %5019 = vmatprep.subr.mxu0 0.0
  %5020 = vmatpush1.msra.mxu0 0.0
  %5021 = vmatprep.subr.mxu0 0.0
  %5022 = vmatpush1.msra.mxu0 0.0
  %5023 = vmatprep.subr.mxu0 0.0
  %5024 = vmatpush1.msra.mxu0 0.0
  %5025 = vmatprep.subr.mxu0 0.0
  %5026 = vmatpush1.msra.mxu0 0.0
  %5027 = vmatprep.subr.mxu0 0.0
  %5028 = vmatpush1.msra.mxu0 0.0
  %5029 = vmatprep.subr.mxu0 0.0
  %5030 = vmatpush1.msra.mxu0 0.0
  %5031 = vmatprep.subr.mxu0 0.0
  %5032 = vmatpush1.msra.mxu0 0.0
  %5033 = vmatprep.subr.mxu0 0.0
  %5034 = vmatpush1.msra.mxu0 0.0
  %5035 = vmatprep.subr.mxu0 0.0
  %5036 = vmatpush1.msra.mxu0 0.0
  %5037 = vmatprep.subr.mxu0 0.0
  %5038 = vmatpush1.msra.mxu0 0.0
  %5039 = vmatprep.subr.mxu0 0.0
  %5040 = vmatpush1.msra.mxu0 0.0
  %5041 = vmatprep.subr.mxu0 0.0
  %5042 = vmatpush1.msra.mxu0 0.0
  %5043 = vmatprep.subr.mxu0 0.0
  %5044 = vmatpush1.msra.mxu0 0.0
  %5045 = vmatprep.subr.mxu0 0.0
  %5046 = vmatpush1.msra.mxu0 0.0
  %5047 = vmatprep.mubr.f32.mxu0 0.0
  %5048 = vmatmul.mubr.f32.gmra.mrb[0].mxu0 %v4978
  %v5049 = vpop.f32.mrb[0].mxu0
  %v5050 = vadd.f32 0.0, %v5049
  %v5051 = vpop.f32.mrb[0].mxu0
  %5052 = vdwg.mxu0
  %v5054 = vsel %vm4812, %v4895, 0
  %v5057 = vsel %vm59, %v4068, 0
  %5059 = vmatprep.subr.mxu0 0.0
  %5060 = vmatpush1.msra.mxu0 %v4036
  %5061 = vmatprep.subr.mxu0 0.0
  %5062 = vmatpush1.msra.mxu0 %v5057
  %5063 = vmatprep.subr.mxu0 0.0
  %5064 = vmatpush1.msra.mxu0 0.0
  %5065 = vmatprep.subr.mxu0 0.0
  %5066 = vmatpush1.msra.mxu0 0.0
  %5067 = vmatprep.subr.mxu0 0.0
  %5068 = vmatpush1.msra.mxu0 0.0
  %5069 = vmatprep.subr.mxu0 0.0
  %5070 = vmatpush1.msra.mxu0 0.0
  %5071 = vmatprep.subr.mxu0 0.0
  %5072 = vmatpush1.msra.mxu0 0.0
  %5073 = vmatprep.subr.mxu0 0.0
  %5074 = vmatpush1.msra.mxu0 0.0
  %5075 = vmatprep.subr.mxu0 0.0
  %5076 = vmatpush1.msra.mxu0 0.0
  %5077 = vmatprep.subr.mxu0 0.0
  %5078 = vmatpush1.msra.mxu0 0.0
  %5079 = vmatprep.subr.mxu0 0.0
  %5080 = vmatpush1.msra.mxu0 0.0
  %5081 = vmatprep.subr.mxu0 0.0
  %5082 = vmatpush1.msra.mxu0 0.0
  %5083 = vmatprep.subr.mxu0 0.0
  %5084 = vmatpush1.msra.mxu0 0.0
  %5085 = vmatprep.subr.mxu0 0.0
  %5086 = vmatpush1.msra.mxu0 0.0
  %5087 = vmatprep.subr.mxu0 0.0
  %5088 = vmatpush1.msra.mxu0 0.0
  %5089 = vmatprep.subr.mxu0 0.0
  %5090 = vmatpush1.msra.mxu0 0.0
  %5091 = vmatprep.subr.mxu0 0.0
  %5092 = vmatpush1.msra.mxu0 0.0
  %5093 = vmatprep.subr.mxu0 0.0
  %5094 = vmatpush1.msra.mxu0 0.0
  %5095 = vmatprep.subr.mxu0 0.0
  %5096 = vmatpush1.msra.mxu0 0.0
  %5097 = vmatprep.subr.mxu0 0.0
  %5098 = vmatpush1.msra.mxu0 0.0
  %5099 = vmatprep.subr.mxu0 0.0
  %5100 = vmatpush1.msra.mxu0 0.0
  %5101 = vmatprep.subr.mxu0 0.0
  %5102 = vmatpush1.msra.mxu0 0.0
  %5103 = vmatprep.subr.mxu0 0.0
  %5104 = vmatpush1.msra.mxu0 0.0
  %5105 = vmatprep.subr.mxu0 0.0
  %5106 = vmatpush1.msra.mxu0 0.0
  %5107 = vmatprep.subr.mxu0 0.0
  %5108 = vmatpush1.msra.mxu0 0.0
  %5109 = vmatprep.subr.mxu0 0.0
  %5110 = vmatpush1.msra.mxu0 0.0
  %5111 = vmatprep.subr.mxu0 0.0
  %5112 = vmatpush1.msra.mxu0 0.0
  %5113 = vmatprep.subr.mxu0 0.0
  %5114 = vmatpush1.msra.mxu0 0.0
  %5115 = vmatprep.subr.mxu0 0.0
  %5116 = vmatpush1.msra.mxu0 0.0
  %5117 = vmatprep.subr.mxu0 0.0
  %5118 = vmatpush1.msra.mxu0 0.0
  %5119 = vmatprep.subr.mxu0 0.0
  %5120 = vmatpush1.msra.mxu0 0.0
  %5121 = vmatprep.subr.mxu0 0.0
  %5122 = vmatpush1.msra.mxu0 0.0
  %5123 = vmatprep.mubr.f32.mxu0 0.0
  %5124 = vmatmul.mubr.f32.gmra.mrb[0].mxu0 %v5054
  %v5125 = vpop.f32.mrb[0].mxu0
  %v5126 = vadd.f32 0.0, %v5125
  %v5127 = vpop.f32.mrb[0].mxu0
  %5128 = vdwg.mxu0
  %v5130 = vsel %vm4812, %v4896, 0
  %v5133 = vsel %vm59, %v4070, 0
  %5135 = vmatprep.subr.mxu0 0.0
  %5136 = vmatpush1.msra.mxu0 %v4037
  %5137 = vmatprep.subr.mxu0 0.0
  %5138 = vmatpush1.msra.mxu0 %v5133
  %5139 = vmatprep.subr.mxu0 0.0
  %5140 = vmatpush1.msra.mxu0 0.0
  %5141 = vmatprep.subr.mxu0 0.0
  %5142 = vmatpush1.msra.mxu0 0.0
  %5143 = vmatprep.subr.mxu0 0.0
  %5144 = vmatpush1.msra.mxu0 0.0
  %5145 = vmatprep.subr.mxu0 0.0
  %5146 = vmatpush1.msra.mxu0 0.0
  %5147 = vmatprep.subr.mxu0 0.0
  %5148 = vmatpush1.msra.mxu0 0.0
  %5149 = vmatprep.subr.mxu0 0.0
  %5150 = vmatpush1.msra.mxu0 0.0
  %5151 = vmatprep.subr.mxu0 0.0
  %5152 = vmatpush1.msra.mxu0 0.0
  %5153 = vmatprep.subr.mxu0 0.0
  %5154 = vmatpush1.msra.mxu0 0.0
  %5155 = vmatprep.subr.mxu0 0.0
  %5156 = vmatpush1.msra.mxu0 0.0
  %5157 = vmatprep.subr.mxu0 0.0
  %5158 = vmatpush1.msra.mxu0 0.0
  %5159 = vmatprep.subr.mxu0 0.0
  %5160 = vmatpush1.msra.mxu0 0.0
  %5161 = vmatprep.subr.mxu0 0.0
  %5162 = vmatpush1.msra.mxu0 0.0
  %5163 = vmatprep.subr.mxu0 0.0
  %5164 = vmatpush1.msra.mxu0 0.0
  %5165 = vmatprep.subr.mxu0 0.0
  %5166 = vmatpush1.msra.mxu0 0.0
  %5167 = vmatprep.subr.mxu0 0.0
  %5168 = vmatpush1.msra.mxu0 0.0
  %5169 = vmatprep.subr.mxu0 0.0
  %5170 = vmatpush1.msra.mxu0 0.0
  %5171 = vmatprep.subr.mxu0 0.0
  %5172 = vmatpush1.msra.mxu0 0.0
  %5173 = vmatprep.subr.mxu0 0.0
  %5174 = vmatpush1.msra.mxu0 0.0
  %5175 = vmatprep.subr.mxu0 0.0
  %5176 = vmatpush1.msra.mxu0 0.0
  %5177 = vmatprep.subr.mxu0 0.0
  %5178 = vmatpush1.msra.mxu0 0.0
  %5179 = vmatprep.subr.mxu0 0.0
  %5180 = vmatpush1.msra.mxu0 0.0
  %5181 = vmatprep.subr.mxu0 0.0
  %5182 = vmatpush1.msra.mxu0 0.0
  %5183 = vmatprep.subr.mxu0 0.0
  %5184 = vmatpush1.msra.mxu0 0.0
  %5185 = vmatprep.subr.mxu0 0.0
  %5186 = vmatpush1.msra.mxu0 0.0
  %5187 = vmatprep.subr.mxu0 0.0
  %5188 = vmatpush1.msra.mxu0 0.0
  %5189 = vmatprep.subr.mxu0 0.0
  %5190 = vmatpush1.msra.mxu0 0.0
  %5191 = vmatprep.subr.mxu0 0.0
  %5192 = vmatpush1.msra.mxu0 0.0
  %5193 = vmatprep.subr.mxu0 0.0
  %5194 = vmatpush1.msra.mxu0 0.0
  %5195 = vmatprep.subr.mxu0 0.0
  %5196 = vmatpush1.msra.mxu0 0.0
  %5197 = vmatprep.subr.mxu0 0.0
  %5198 = vmatpush1.msra.mxu0 0.0
  %5199 = vmatprep.mubr.f32.mxu0 0.0
  %5200 = vmatmul.mubr.f32.gmra.mrb[0].mxu0 %v5130
  %v5201 = vpop.f32.mrb[0].mxu0
  %v5202 = vadd.f32 0.0, %v5201
  %v5203 = vpop.f32.mrb[0].mxu0
  %5204 = vdwg.mxu0
  %v5206 = vsel %vm4812, %v4897, 0
  %v5209 = vsel %vm59, %v4162, 0
  %5211 = vmatprep.subr.mxu0 0.0
  %5212 = vmatpush1.msra.mxu0 %v4135
  %5213 = vmatprep.subr.mxu0 0.0
  %5214 = vmatpush1.msra.mxu0 %v5209
  %5215 = vmatprep.subr.mxu0 0.0
  %5216 = vmatpush1.msra.mxu0 0.0
  %5217 = vmatprep.subr.mxu0 0.0
  %5218 = vmatpush1.msra.mxu0 0.0
  %5219 = vmatprep.subr.mxu0 0.0
  %5220 = vmatpush1.msra.mxu0 0.0
  %5221 = vmatprep.subr.mxu0 0.0
  %5222 = vmatpush1.msra.mxu0 0.0
  %5223 = vmatprep.subr.mxu0 0.0
  %5224 = vmatpush1.msra.mxu0 0.0
  %5225 = vmatprep.subr.mxu0 0.0
  %5226 = vmatpush1.msra.mxu0 0.0
  %5227 = vmatprep.subr.mxu0 0.0
  %5228 = vmatpush1.msra.mxu0 0.0
  %5229 = vmatprep.subr.mxu0 0.0
  %5230 = vmatpush1.msra.mxu0 0.0
  %5231 = vmatprep.subr.mxu0 0.0
  %5232 = vmatpush1.msra.mxu0 0.0
  %5233 = vmatprep.subr.mxu0 0.0
  %5234 = vmatpush1.msra.mxu0 0.0
  %5235 = vmatprep.subr.mxu0 0.0
  %5236 = vmatpush1.msra.mxu0 0.0
  %5237 = vmatprep.subr.mxu0 0.0
  %5238 = vmatpush1.msra.mxu0 0.0
  %5239 = vmatprep.subr.mxu0 0.0
  %5240 = vmatpush1.msra.mxu0 0.0
  %5241 = vmatprep.subr.mxu0 0.0
  %5242 = vmatpush1.msra.mxu0 0.0
  %5243 = vmatprep.subr.mxu0 0.0
  %5244 = vmatpush1.msra.mxu0 0.0
  %5245 = vmatprep.subr.mxu0 0.0
  %5246 = vmatpush1.msra.mxu0 0.0
  %5247 = vmatprep.subr.mxu0 0.0
  %5248 = vmatpush1.msra.mxu0 0.0
  %5249 = vmatprep.subr.mxu0 0.0
  %5250 = vmatpush1.msra.mxu0 0.0
  %5251 = vmatprep.subr.mxu0 0.0
  %5252 = vmatpush1.msra.mxu0 0.0
  %5253 = vmatprep.subr.mxu0 0.0
  %5254 = vmatpush1.msra.mxu0 0.0
  %5255 = vmatprep.subr.mxu0 0.0
  %5256 = vmatpush1.msra.mxu0 0.0
  %5257 = vmatprep.subr.mxu0 0.0
  %5258 = vmatpush1.msra.mxu0 0.0
  %5259 = vmatprep.subr.mxu0 0.0
  %5260 = vmatpush1.msra.mxu0 0.0
  %5261 = vmatprep.subr.mxu0 0.0
  %5262 = vmatpush1.msra.mxu0 0.0
  %5263 = vmatprep.subr.mxu0 0.0
  %5264 = vmatpush1.msra.mxu0 0.0
  %5265 = vmatprep.subr.mxu0 0.0
  %5266 = vmatpush1.msra.mxu0 0.0
  %5267 = vmatprep.subr.mxu0 0.0
  %5268 = vmatpush1.msra.mxu0 0.0
  %5269 = vmatprep.subr.mxu0 0.0
  %5270 = vmatpush1.msra.mxu0 0.0
  %5271 = vmatprep.subr.mxu0 0.0
  %5272 = vmatpush1.msra.mxu0 0.0
  %5273 = vmatprep.subr.mxu0 0.0
  %5274 = vmatpush1.msra.mxu0 0.0
  %5275 = vmatprep.mubr.f32.mxu0 0.0
  %5276 = vmatmul.mubr.f32.gmra.mrb[0].mxu0 %v5206
  %v5277 = vpop.f32.mrb[0].mxu0
  %v5278 = vadd.f32 0.0, %v5277
  %v5279 = vpop.f32.mrb[0].mxu0
  %5280 = vdwg.mxu0
  %v5282 = vsel %vm4812, %v4898, 0
  %v5285 = vsel %vm59, %v4170, 0
  %5287 = vmatprep.subr.mxu0 0.0
  %5288 = vmatpush1.msra.mxu0 %v4136
  %5289 = vmatprep.subr.mxu0 0.0
  %5290 = vmatpush1.msra.mxu0 %v5285
  %5291 = vmatprep.subr.mxu0 0.0
  %5292 = vmatpush1.msra.mxu0 0.0
  %5293 = vmatprep.subr.mxu0 0.0
  %5294 = vmatpush1.msra.mxu0 0.0
  %5295 = vmatprep.subr.mxu0 0.0
  %5296 = vmatpush1.msra.mxu0 0.0
  %5297 = vmatprep.subr.mxu0 0.0
  %5298 = vmatpush1.msra.mxu0 0.0
  %5299 = vmatprep.subr.mxu0 0.0
  %5300 = vmatpush1.msra.mxu0 0.0
  %5301 = vmatprep.subr.mxu0 0.0
  %5302 = vmatpush1.msra.mxu0 0.0
  %5303 = vmatprep.subr.mxu0 0.0
  %5304 = vmatpush1.msra.mxu0 0.0
  %5305 = vmatprep.subr.mxu0 0.0
  %5306 = vmatpush1.msra.mxu0 0.0
  %5307 = vmatprep.subr.mxu0 0.0
  %5308 = vmatpush1.msra.mxu0 0.0
  %5309 = vmatprep.subr.mxu0 0.0
  %5310 = vmatpush1.msra.mxu0 0.0
  %5311 = vmatprep.subr.mxu0 0.0
  %5312 = vmatpush1.msra.mxu0 0.0
  %5313 = vmatprep.subr.mxu0 0.0
  %5314 = vmatpush1.msra.mxu0 0.0
  %5315 = vmatprep.subr.mxu0 0.0
  %5316 = vmatpush1.msra.mxu0 0.0
  %5317 = vmatprep.subr.mxu0 0.0
  %5318 = vmatpush1.msra.mxu0 0.0
  %5319 = vmatprep.subr.mxu0 0.0
  %5320 = vmatpush1.msra.mxu0 0.0
  %5321 = vmatprep.subr.mxu0 0.0
  %5322 = vmatpush1.msra.mxu0 0.0
  %5323 = vmatprep.subr.mxu0 0.0
  %5324 = vmatpush1.msra.mxu0 0.0
  %5325 = vmatprep.subr.mxu0 0.0
  %5326 = vmatpush1.msra.mxu0 0.0
  %5327 = vmatprep.subr.mxu0 0.0
  %5328 = vmatpush1.msra.mxu0 0.0
  %5329 = vmatprep.subr.mxu0 0.0
  %5330 = vmatpush1.msra.mxu0 0.0
  %5331 = vmatprep.subr.mxu0 0.0
  %5332 = vmatpush1.msra.mxu0 0.0
  %5333 = vmatprep.subr.mxu0 0.0
  %5334 = vmatpush1.msra.mxu0 0.0
  %5335 = vmatprep.subr.mxu0 0.0
  %5336 = vmatpush1.msra.mxu0 0.0
  %5337 = vmatprep.subr.mxu0 0.0
  %5338 = vmatpush1.msra.mxu0 0.0
  %5339 = vmatprep.subr.mxu0 0.0
  %5340 = vmatpush1.msra.mxu0 0.0
  %5341 = vmatprep.subr.mxu0 0.0
  %5342 = vmatpush1.msra.mxu0 0.0
  %5343 = vmatprep.subr.mxu0 0.0
  %5344 = vmatpush1.msra.mxu0 0.0
  %5345 = vmatprep.subr.mxu0 0.0
  %5346 = vmatpush1.msra.mxu0 0.0
  %5347 = vmatprep.subr.mxu0 0.0
  %5348 = vmatpush1.msra.mxu0 0.0
  %5349 = vmatprep.subr.mxu0 0.0
  %5350 = vmatpush1.msra.mxu0 0.0
  %5351 = vmatprep.mubr.f32.mxu0 0.0
  %5352 = vmatmul.mubr.f32.gmra.mrb[0].mxu0 %v5282
  %v5353 = vpop.f32.mrb[0].mxu0
  %v5354 = vadd.f32 0.0, %v5353
  %v5355 = vpop.f32.mrb[0].mxu0
  %5356 = vdwg.mxu0
  %v5358 = vsel %vm4812, %v4899, 0
  %v5361 = vsel %vm59, %v4169, 0
  %5363 = vmatprep.subr.mxu0 0.0
  %5364 = vmatpush1.msra.mxu0 %v4137
  %5365 = vmatprep.subr.mxu0 0.0
  %5366 = vmatpush1.msra.mxu0 %v5361
  %5367 = vmatprep.subr.mxu0 0.0
  %5368 = vmatpush1.msra.mxu0 0.0
  %5369 = vmatprep.subr.mxu0 0.0
  %5370 = vmatpush1.msra.mxu0 0.0
  %5371 = vmatprep.subr.mxu0 0.0
  %5372 = vmatpush1.msra.mxu0 0.0
  %5373 = vmatprep.subr.mxu0 0.0
  %5374 = vmatpush1.msra.mxu0 0.0
  %5375 = vmatprep.subr.mxu0 0.0
  %5376 = vmatpush1.msra.mxu0 0.0
  %5377 = vmatprep.subr.mxu0 0.0
  %5378 = vmatpush1.msra.mxu0 0.0
  %5379 = vmatprep.subr.mxu0 0.0
  %5380 = vmatpush1.msra.mxu0 0.0
  %5381 = vmatprep.subr.mxu0 0.0
  %5382 = vmatpush1.msra.mxu0 0.0
  %5383 = vmatprep.subr.mxu0 0.0
  %5384 = vmatpush1.msra.mxu0 0.0
  %5385 = vmatprep.subr.mxu0 0.0
  %5386 = vmatpush1.msra.mxu0 0.0
  %5387 = vmatprep.subr.mxu0 0.0
  %5388 = vmatpush1.msra.mxu0 0.0
  %5389 = vmatprep.subr.mxu0 0.0
  %5390 = vmatpush1.msra.mxu0 0.0
  %5391 = vmatprep.subr.mxu0 0.0
  %5392 = vmatpush1.msra.mxu0 0.0
  %5393 = vmatprep.subr.mxu0 0.0
  %5394 = vmatpush1.msra.mxu0 0.0
  %5395 = vmatprep.subr.mxu0 0.0
  %5396 = vmatpush1.msra.mxu0 0.0
  %5397 = vmatprep.subr.mxu0 0.0
  %5398 = vmatpush1.msra.mxu0 0.0
  %5399 = vmatprep.subr.mxu0 0.0
  %5400 = vmatpush1.msra.mxu0 0.0
  %5401 = vmatprep.subr.mxu0 0.0
  %5402 = vmatpush1.msra.mxu0 0.0
  %5403 = vmatprep.subr.mxu0 0.0
  %5404 = vmatpush1.msra.mxu0 0.0
  %5405 = vmatprep.subr.mxu0 0.0
  %5406 = vmatpush1.msra.mxu0 0.0
  %5407 = vmatprep.subr.mxu0 0.0
  %5408 = vmatpush1.msra.mxu0 0.0
  %5409 = vmatprep.subr.mxu0 0.0
  %5410 = vmatpush1.msra.mxu0 0.0
  %5411 = vmatprep.subr.mxu0 0.0
  %5412 = vmatpush1.msra.mxu0 0.0
  %5413 = vmatprep.subr.mxu0 0.0
  %5414 = vmatpush1.msra.mxu0 0.0
  %5415 = vmatprep.subr.mxu0 0.0
  %5416 = vmatpush1.msra.mxu0 0.0
  %5417 = vmatprep.subr.mxu0 0.0
  %5418 = vmatpush1.msra.mxu0 0.0
  %5419 = vmatprep.subr.mxu0 0.0
  %5420 = vmatpush1.msra.mxu0 0.0
  %5421 = vmatprep.subr.mxu0 0.0
  %5422 = vmatpush1.msra.mxu0 0.0
  %5423 = vmatprep.subr.mxu0 0.0
  %5424 = vmatpush1.msra.mxu0 0.0
  %5425 = vmatprep.subr.mxu0 0.0
  %5426 = vmatpush1.msra.mxu0 0.0
  %5427 = vmatprep.mubr.f32.mxu0 0.0
  %5428 = vmatmul.mubr.f32.gmra.mrb[0].mxu0 %v5358
  %v5429 = vpop.f32.mrb[0].mxu0
  %v5430 = vadd.f32 0.0, %v5429
  %v5431 = vpop.f32.mrb[0].mxu0
  %5432 = vdwg.mxu0
  %v5434 = vsel %vm4812, %v4900, 0
  %v5437 = vsel %vm59, %v4171, 0
  %5439 = vmatprep.subr.mxu0 0.0
  %5440 = vmatpush1.msra.mxu0 %v4138
  %5441 = vmatprep.subr.mxu0 0.0
  %5442 = vmatpush1.msra.mxu0 %v5437
  %5443 = vmatprep.subr.mxu0 0.0
  %5444 = vmatpush1.msra.mxu0 0.0
  %5445 = vmatprep.subr.mxu0 0.0
  %5446 = vmatpush1.msra.mxu0 0.0
  %5447 = vmatprep.subr.mxu0 0.0
  %5448 = vmatpush1.msra.mxu0 0.0
  %5449 = vmatprep.subr.mxu0 0.0
  %5450 = vmatpush1.msra.mxu0 0.0
  %5451 = vmatprep.subr.mxu0 0.0
  %5452 = vmatpush1.msra.mxu0 0.0
  %5453 = vmatprep.subr.mxu0 0.0
  %5454 = vmatpush1.msra.mxu0 0.0
  %5455 = vmatprep.subr.mxu0 0.0
  %5456 = vmatpush1.msra.mxu0 0.0
  %5457 = vmatprep.subr.mxu0 0.0
  %5458 = vmatpush1.msra.mxu0 0.0
  %5459 = vmatprep.subr.mxu0 0.0
  %5460 = vmatpush1.msra.mxu0 0.0
  %5461 = vmatprep.subr.mxu0 0.0
  %5462 = vmatpush1.msra.mxu0 0.0
  %5463 = vmatprep.subr.mxu0 0.0
  %5464 = vmatpush1.msra.mxu0 0.0
  %5465 = vmatprep.subr.mxu0 0.0
  %5466 = vmatpush1.msra.mxu0 0.0
  %5467 = vmatprep.subr.mxu0 0.0
  %5468 = vmatpush1.msra.mxu0 0.0
  %5469 = vmatprep.subr.mxu0 0.0
  %5470 = vmatpush1.msra.mxu0 0.0
  %5471 = vmatprep.subr.mxu0 0.0
  %5472 = vmatpush1.msra.mxu0 0.0
  %5473 = vmatprep.subr.mxu0 0.0
  %5474 = vmatpush1.msra.mxu0 0.0
  %5475 = vmatprep.subr.mxu0 0.0
  %5476 = vmatpush1.msra.mxu0 0.0
  %5477 = vmatprep.subr.mxu0 0.0
  %5478 = vmatpush1.msra.mxu0 0.0
  %5479 = vmatprep.subr.mxu0 0.0
  %5480 = vmatpush1.msra.mxu0 0.0
  %5481 = vmatprep.subr.mxu0 0.0
  %5482 = vmatpush1.msra.mxu0 0.0
  %5483 = vmatprep.subr.mxu0 0.0
  %5484 = vmatpush1.msra.mxu0 0.0
  %5485 = vmatprep.subr.mxu0 0.0
  %5486 = vmatpush1.msra.mxu0 0.0
  %5487 = vmatprep.subr.mxu0 0.0
  %5488 = vmatpush1.msra.mxu0 0.0
  %5489 = vmatprep.subr.mxu0 0.0
  %5490 = vmatpush1.msra.mxu0 0.0
  %5491 = vmatprep.subr.mxu0 0.0
  %5492 = vmatpush1.msra.mxu0 0.0
  %5493 = vmatprep.subr.mxu0 0.0
  %5494 = vmatpush1.msra.mxu0 0.0
  %5495 = vmatprep.subr.mxu0 0.0
  %5496 = vmatpush1.msra.mxu0 0.0
  %5497 = vmatprep.subr.mxu0 0.0
  %5498 = vmatpush1.msra.mxu0 0.0
  %5499 = vmatprep.subr.mxu0 0.0
  %5500 = vmatpush1.msra.mxu0 0.0
  %5501 = vmatprep.subr.mxu0 0.0
  %5502 = vmatpush1.msra.mxu0 0.0
  %5503 = vmatprep.mubr.f32.mxu0 0.0
  %5504 = vmatmul.mubr.f32.gmra.mrb[0].mxu0 %v5434
  %v5505 = vpop.f32.mrb[0].mxu0
  %v5506 = vadd.f32 0.0, %v5505
  %v5507 = vpop.f32.mrb[0].mxu0
  %5508 = vdwg.mxu0
  %v5509 = vcombine.low %v4974, %v5126
  %v5510 = vcombine.high %v4974, %v5126
  %v5512 = vunpack.c.l.s4 1983009808
  %v5513 = vunpack.c.0.s8 %v5512
  %v5514 = vlaneseq
  %v5515 = vshrl.u32 %v5514, 7
  %v5516 = vsub.s32 %v5513, %v5515
  %v5517 = vrot.slane %v5509, %v5516
  %v5519 = vunpack.c.l.s4 1983009808
  %v5520 = vunpack.c.0.s8 %v5519
  %v5521 = vlaneseq
  %v5522 = vshrl.u32 %v5521, 7
  %v5523 = vsub.s32 %v5520, %v5522
  %v5524 = vrot.slane %v5510, %v5523
  %v5525 = vcombine.low %v5050, %v5202
  %v5526 = vcombine.high %v5050, %v5202
  %v5528 = vunpack.c.l.s4 1983009808
  %v5529 = vunpack.c.0.s8 %v5528
  %v5530 = vlaneseq
  %v5531 = vshrl.u32 %v5530, 7
  %v5532 = vsub.s32 %v5529, %v5531
  %v5533 = vrot.slane %v5525, %v5532
  %v5535 = vunpack.c.l.s4 1983009808
  %v5536 = vunpack.c.0.s8 %v5535
  %v5537 = vlaneseq
  %v5538 = vshrl.u32 %v5537, 7
  %v5539 = vsub.s32 %v5536, %v5538
  %v5540 = vrot.slane %v5526, %v5539
  %v5541 = vcombine.low %v5517, %v5533
  %v5542 = vcombine.high %v5517, %v5533
  %v5544 = vunpack.c.l.s4 1934713408
  %v5545 = vunpack.c.0.s8 %v5544
  %v5546 = vlaneseq
  %v5547 = vshrl.u32 %v5546, 7
  %v5548 = vsub.s32 %v5545, %v5547
  %v5549 = vrot.slane %v5541, %v5548
  %v5551 = vunpack.c.l.s4 1934713408
  %v5552 = vunpack.c.0.s8 %v5551
  %v5553 = vlaneseq
  %v5554 = vshrl.u32 %v5553, 7
  %v5555 = vsub.s32 %v5552, %v5554
  %v5556 = vrot.slane %v5542, %v5555
  %v5557 = vcombine.low %v5524, %v5540
  %v5558 = vcombine.high %v5524, %v5540
  %v5560 = vunpack.c.l.s4 1934713408
  %v5561 = vunpack.c.0.s8 %v5560
  %v5562 = vlaneseq
  %v5563 = vshrl.u32 %v5562, 7
  %v5564 = vsub.s32 %v5561, %v5563
  %v5565 = vrot.slane %v5557, %v5564
  %v5567 = vunpack.c.l.s4 1934713408
  %v5568 = vunpack.c.0.s8 %v5567
  %v5569 = vlaneseq
  %v5570 = vshrl.u32 %v5569, 7
  %v5571 = vsub.s32 %v5568, %v5570
  %v5572 = vrot.slane %v5558, %v5571
  %v5573 = vcombine.high %v5549, 0.0
  %v5574 = vcombine.high %v5556, 0.0
  %v5575 = vcombine.high %v5565, 0.0
  %v5576 = vcombine.high %v5572, 0.0
  %v5577 = vcombine.low %v5278, %v5430
  %v5578 = vcombine.high %v5278, %v5430
  %v5580 = vunpack.c.l.s4 1983009808
  %v5581 = vunpack.c.0.s8 %v5580
  %v5582 = vlaneseq
  %v5583 = vshrl.u32 %v5582, 7
  %v5584 = vsub.s32 %v5581, %v5583
  %v5585 = vrot.slane %v5577, %v5584
  %v5587 = vunpack.c.l.s4 1983009808
  %v5588 = vunpack.c.0.s8 %v5587
  %v5589 = vlaneseq
  %v5590 = vshrl.u32 %v5589, 7
  %v5591 = vsub.s32 %v5588, %v5590
  %v5592 = vrot.slane %v5578, %v5591
  %v5593 = vcombine.low %v5354, %v5506
  %v5594 = vcombine.high %v5354, %v5506
  %v5596 = vunpack.c.l.s4 1983009808
  %v5597 = vunpack.c.0.s8 %v5596
  %v5598 = vlaneseq
  %v5599 = vshrl.u32 %v5598, 7
  %v5600 = vsub.s32 %v5597, %v5599
  %v5601 = vrot.slane %v5593, %v5600
  %v5603 = vunpack.c.l.s4 1983009808
  %v5604 = vunpack.c.0.s8 %v5603
  %v5605 = vlaneseq
  %v5606 = vshrl.u32 %v5605, 7
  %v5607 = vsub.s32 %v5604, %v5606
  %v5608 = vrot.slane %v5594, %v5607
  %v5609 = vcombine.low %v5585, %v5601
  %v5610 = vcombine.high %v5585, %v5601
  %v5612 = vunpack.c.l.s4 1934713408
  %v5613 = vunpack.c.0.s8 %v5612
  %v5614 = vlaneseq
  %v5615 = vshrl.u32 %v5614, 7
  %v5616 = vsub.s32 %v5613, %v5615
  %v5617 = vrot.slane %v5609, %v5616
  %v5619 = vunpack.c.l.s4 1934713408
  %v5620 = vunpack.c.0.s8 %v5619
  %v5621 = vlaneseq
  %v5622 = vshrl.u32 %v5621, 7
  %v5623 = vsub.s32 %v5620, %v5622
  %v5624 = vrot.slane %v5610, %v5623
  %v5625 = vcombine.low %v5592, %v5608
  %v5626 = vcombine.high %v5592, %v5608
  %v5628 = vunpack.c.l.s4 1934713408
  %v5629 = vunpack.c.0.s8 %v5628
  %v5630 = vlaneseq
  %v5631 = vshrl.u32 %v5630, 7
  %v5632 = vsub.s32 %v5629, %v5631
  %v5633 = vrot.slane %v5625, %v5632
  %v5635 = vunpack.c.l.s4 1934713408
  %v5636 = vunpack.c.0.s8 %v5635
  %v5637 = vlaneseq
  %v5638 = vshrl.u32 %v5637, 7
  %v5639 = vsub.s32 %v5636, %v5638
  %v5640 = vrot.slane %v5626, %v5639
  %v5641 = vcombine.high %v5617, 0.0
  %v5642 = vcombine.high %v5624, 0.0
  %v5643 = vcombine.high %v5633, 0.0
  %v5644 = vcombine.high %v5640, 0.0
  %v5645 = vcombine.low %v5549, %v5556
  %v5647 = vunpack.c.l.s4 1983009808
  %v5648 = vunpack.c.0.s8 %v5647
  %v5649 = vlaneseq
  %v5650 = vshrl.u32 %v5649, 7
  %v5651 = vsub.s32 %v5648, %v5650
  %v5652 = vrot.slane %v5645, %v5651
  %v5653 = vcombine.low %v5573, %v5574
  %v5655 = vunpack.c.l.s4 1983009808
  %v5656 = vunpack.c.0.s8 %v5655
  %v5657 = vlaneseq
  %v5658 = vshrl.u32 %v5657, 7
  %v5659 = vsub.s32 %v5656, %v5658
  %v5660 = vrot.slane %v5653, %v5659
  %v5661 = vcombine.low %v5565, %v5572
  %v5663 = vunpack.c.l.s4 1983009808
  %v5664 = vunpack.c.0.s8 %v5663
  %v5665 = vlaneseq
  %v5666 = vshrl.u32 %v5665, 7
  %v5667 = vsub.s32 %v5664, %v5666
  %v5668 = vrot.slane %v5661, %v5667
  %v5669 = vcombine.low %v5575, %v5576
  %v5671 = vunpack.c.l.s4 1983009808
  %v5672 = vunpack.c.0.s8 %v5671
  %v5673 = vlaneseq
  %v5674 = vshrl.u32 %v5673, 7
  %v5675 = vsub.s32 %v5672, %v5674
  %v5676 = vrot.slane %v5669, %v5675
  %v5677 = vcombine.low %v5652, %v5660
  %v5678 = vcombine.high %v5652, %v5660
  %v5680 = vunpack.c.l.s4 1934713408
  %v5681 = vunpack.c.0.s8 %v5680
  %v5682 = vlaneseq
  %v5683 = vshrl.u32 %v5682, 7
  %v5684 = vsub.s32 %v5681, %v5683
  %v5685 = vrot.slane %v5677, %v5684
  %v5687 = vunpack.c.l.s4 1934713408
  %v5688 = vunpack.c.0.s8 %v5687
  %v5689 = vlaneseq
  %v5690 = vshrl.u32 %v5689, 7
  %v5691 = vsub.s32 %v5688, %v5690
  %v5692 = vrot.slane %v5678, %v5691
  %v5693 = vcombine.low %v5668, %v5676
  %v5694 = vcombine.high %v5668, %v5676
  %v5696 = vunpack.c.l.s4 1934713408
  %v5697 = vunpack.c.0.s8 %v5696
  %v5698 = vlaneseq
  %v5699 = vshrl.u32 %v5698, 7
  %v5700 = vsub.s32 %v5697, %v5699
  %v5701 = vrot.slane %v5693, %v5700
  %v5703 = vunpack.c.l.s4 1934713408
  %v5704 = vunpack.c.0.s8 %v5703
  %v5705 = vlaneseq
  %v5706 = vshrl.u32 %v5705, 7
  %v5707 = vsub.s32 %v5704, %v5706
  %v5708 = vrot.slane %v5694, %v5707
  %v5709 = vcombine.low %v5685, %v5701
  %v5710 = vcombine.high %v5685, %v5701
  %v5711 = vcombine.low %v5692, %v5708
  %v5712 = vcombine.high %v5692, %v5708
  %v5713 = vcombine.low %v5617, %v5624
  %v5715 = vunpack.c.l.s4 1983009808
  %v5716 = vunpack.c.0.s8 %v5715
  %v5717 = vlaneseq
  %v5718 = vshrl.u32 %v5717, 7
  %v5719 = vsub.s32 %v5716, %v5718
  %v5720 = vrot.slane %v5713, %v5719
  %v5721 = vcombine.low %v5641, %v5642
  %v5723 = vunpack.c.l.s4 1983009808
  %v5724 = vunpack.c.0.s8 %v5723
  %v5725 = vlaneseq
  %v5726 = vshrl.u32 %v5725, 7
  %v5727 = vsub.s32 %v5724, %v5726
  %v5728 = vrot.slane %v5721, %v5727
  %v5729 = vcombine.low %v5633, %v5640
  %v5731 = vunpack.c.l.s4 1983009808
  %v5732 = vunpack.c.0.s8 %v5731
  %v5733 = vlaneseq
  %v5734 = vshrl.u32 %v5733, 7
  %v5735 = vsub.s32 %v5732, %v5734
  %v5736 = vrot.slane %v5729, %v5735
  %v5737 = vcombine.low %v5643, %v5644
  %v5739 = vunpack.c.l.s4 1983009808
  %v5740 = vunpack.c.0.s8 %v5739
  %v5741 = vlaneseq
  %v5742 = vshrl.u32 %v5741, 7
  %v5743 = vsub.s32 %v5740, %v5742
  %v5744 = vrot.slane %v5737, %v5743
  %v5745 = vcombine.low %v5720, %v5728
  %v5746 = vcombine.high %v5720, %v5728
  %v5748 = vunpack.c.l.s4 1934713408
  %v5749 = vunpack.c.0.s8 %v5748
  %v5750 = vlaneseq
  %v5751 = vshrl.u32 %v5750, 7
  %v5752 = vsub.s32 %v5749, %v5751
  %v5753 = vrot.slane %v5745, %v5752
  %v5755 = vunpack.c.l.s4 1934713408
  %v5756 = vunpack.c.0.s8 %v5755
  %v5757 = vlaneseq
  %v5758 = vshrl.u32 %v5757, 7
  %v5759 = vsub.s32 %v5756, %v5758
  %v5760 = vrot.slane %v5746, %v5759
  %v5761 = vcombine.low %v5736, %v5744
  %v5762 = vcombine.high %v5736, %v5744
  %v5764 = vunpack.c.l.s4 1934713408
  %v5765 = vunpack.c.0.s8 %v5764
  %v5766 = vlaneseq
  %v5767 = vshrl.u32 %v5766, 7
  %v5768 = vsub.s32 %v5765, %v5767
  %v5769 = vrot.slane %v5761, %v5768
  %v5771 = vunpack.c.l.s4 1934713408
  %v5772 = vunpack.c.0.s8 %v5771
  %v5773 = vlaneseq
  %v5774 = vshrl.u32 %v5773, 7
  %v5775 = vsub.s32 %v5772, %v5774
  %v5776 = vrot.slane %v5762, %v5775
  %v5777 = vcombine.low %v5753, %v5769
  %v5778 = vcombine.high %v5753, %v5769
  %v5779 = vcombine.low %v5760, %v5776
  %v5780 = vcombine.high %v5760, %v5776
  %5783 = vrot.lane.b32.xlu0 %v5710, 8
  %v5784 = vpop.permute.xlu0 %5783
  %5785 = vrot.lane.b32.xlu0 %v5778, 8
  %v5786 = vpop.permute.xlu0 %5785
  %5791 = vrot.lane.b32.xlu0 %v5711, 16
  %v5792 = vpop.permute.xlu0 %5791
  %5793 = vrot.lane.b32.xlu0 %v5779, 16
  %v5794 = vpop.permute.xlu0 %5793
  %5799 = vrot.lane.b32.xlu0 %v5712, 24
  %v5800 = vpop.permute.xlu0 %5799
  %5801 = vrot.lane.b32.xlu0 %v5780, 24
  %v5802 = vpop.permute.xlu0 %5801
  %v5805 = vsel %vm1153, %v5709, %v5784
  %v5806 = vsel %vm1153, %v5777, %v5786
  %v5807 = vsel %vm2748, %v5805, %v5792
  %v5808 = vsel %vm2748, %v5806, %v5794
  %v5809 = vsel %vm2751, %v5807, %v5800
  %v5810 = vsel %vm2751, %v5808, %v5802
  %v5811 = vld [vmem:[%s4 + $0x20] sm:$0xff]
  %v5812 = vld [vmem:[%s4 + $0x50] sm:$0xff]
  %v5813 = vld [vmem:[%s4 + $0x80] sm:$0xff]
  %v5814 = vld [vmem:[%s4 + $0xb0] sm:$0xff]
  %v5815 = vld [vmem:[%s4 + $0xe0] ss:$0 sm:$0xff]
  %v5817 = vsel %vm140, %v5809, 0
  %v5820 = vsel %vm140, %v5810, 0
  %5822 = vmatprep.subr.mxu0 0.0
  %5823 = vmatpush1.msra.mxu0 %v5811
  %5824 = vmatprep.subr.mxu0 0.0
  %5825 = vmatpush1.msra.mxu0 %v5812
  %5826 = vmatprep.subr.mxu0 0.0
  %5827 = vmatpush1.msra.mxu0 %v5813
  %5828 = vmatprep.subr.mxu0 0.0
  %5829 = vmatpush1.msra.mxu0 %v5814
  %5830 = vmatprep.subr.mxu0 0.0
  %5831 = vmatpush1.msra.mxu0 0.0
  %5832 = vmatprep.subr.mxu0 0.0
  %5833 = vmatpush1.msra.mxu0 0.0
  %5834 = vmatprep.subr.mxu0 0.0
  %5835 = vmatpush1.msra.mxu0 0.0
  %5836 = vmatprep.subr.mxu0 0.0
  %5837 = vmatpush1.msra.mxu0 0.0
  %5838 = vmatprep.subr.mxu0 0.0
  %5839 = vmatpush1.msra.mxu0 0.0
  %5840 = vmatprep.subr.mxu0 0.0
  %5841 = vmatpush1.msra.mxu0 0.0
  %5842 = vmatprep.subr.mxu0 0.0
  %5843 = vmatpush1.msra.mxu0 0.0
  %5844 = vmatprep.subr.mxu0 0.0
  %5845 = vmatpush1.msra.mxu0 0.0
  %5846 = vmatprep.subr.mxu0 0.0
  %5847 = vmatpush1.msra.mxu0 0.0
  %5848 = vmatprep.subr.mxu0 0.0
  %5849 = vmatpush1.msra.mxu0 0.0
  %5850 = vmatprep.subr.mxu0 0.0
  %5851 = vmatpush1.msra.mxu0 0.0
  %5852 = vmatprep.subr.mxu0 0.0
  %5853 = vmatpush1.msra.mxu0 0.0
  %5854 = vmatprep.subr.mxu0 0.0
  %5855 = vmatpush1.msra.mxu0 0.0
  %5856 = vmatprep.subr.mxu0 0.0
  %5857 = vmatpush1.msra.mxu0 0.0
  %5858 = vmatprep.subr.mxu0 0.0
  %5859 = vmatpush1.msra.mxu0 0.0
  %5860 = vmatprep.subr.mxu0 0.0
  %5861 = vmatpush1.msra.mxu0 0.0
  %5862 = vmatprep.subr.mxu0 0.0
  %5863 = vmatpush1.msra.mxu0 0.0
  %5864 = vmatprep.subr.mxu0 0.0
  %5865 = vmatpush1.msra.mxu0 0.0
  %5866 = vmatprep.subr.mxu0 0.0
  %5867 = vmatpush1.msra.mxu0 0.0
  %5868 = vmatprep.subr.mxu0 0.0
  %5869 = vmatpush1.msra.mxu0 0.0
  %5870 = vmatprep.subr.mxu0 0.0
  %5871 = vmatpush1.msra.mxu0 0.0
  %5872 = vmatprep.subr.mxu0 0.0
  %5873 = vmatpush1.msra.mxu0 0.0
  %5874 = vmatprep.subr.mxu0 0.0
  %5875 = vmatpush1.msra.mxu0 0.0
  %5876 = vmatprep.subr.mxu0 0.0
  %5877 = vmatpush1.msra.mxu0 0.0
  %5878 = vmatprep.subr.mxu0 0.0
  %5879 = vmatpush1.msra.mxu0 0.0
  %5880 = vmatprep.subr.mxu0 0.0
  %5881 = vmatpush1.msra.mxu0 0.0
  %5882 = vmatprep.subr.mxu0 0.0
  %5883 = vmatpush1.msra.mxu0 0.0
  %5884 = vmatprep.subr.mxu0 0.0
  %5885 = vmatpush1.msra.mxu0 0.0
  %5886 = vmatprep.mubr.f32.mxu0 0.0
  %5887 = vmatmul.mubr.f32.gmra.mrb[0].mxu0 %v5817
  %v5888 = vpop.f32.mrb[0].mxu0
  %v5889 = vadd.f32 %v5815, %v5888
  %v5890 = vpop.f32.mrb[0].mxu0
  %5891 = vmatprep.mubr.f32.mxu0 0.0
  %5892 = vmatmul.mubr.f32.gmra.mrb[0].mxu0 %v5820
  %v5893 = vpop.f32.mrb[0].mxu0
  %v5894 = vadd.f32 %v5815, %v5893
  %v5895 = vpop.f32.mrb[0].mxu0
  %5896 = vdwg.mxu0
  %v5897 = vadd.f32 %v5889, %v2892
  %v5898 = vadd.f32 %v5894, %v2893
  %v5899 = vld [vmem:[%s6 + $0x1] sm:$0x1]
  %v5900 = vld [vmem:[%s6 + $0x4] sm:$0x1]
  %v5901 = vsel %vm140, %v5897, 0.0
  %5902 = vadd.xlane.f32.xlu0 %v5901
  %v5903 = vpop.xlane.xlu0 %5902
  %v5904 = vsel %vm140, %v5898, 0.0
  %5905 = vadd.xlane.f32.xlu0 %v5904
  %v5906 = vpop.xlane.xlu0 %5905
  %v5907 = vmul.f32 %v5903, %v147
  %v5908 = vmul.f32 %v5906, %v147
  %v5909 = vsub.f32 %v5897, %v5907
  %v5910 = vsub.f32 %v5898, %v5908
  %v5911 = vmul.f32 %v5909, %v5909
  %v5912 = vmul.f32 %v5910, %v5910
  %v5913 = vsel %vm140, %v5911, 0.0
  %5914 = vadd.xlane.f32.xlu0 %v5913
  %v5915 = vpop.xlane.xlu0 %5914
  %v5916 = vsel %vm140, %v5912, 0.0
  %5917 = vadd.xlane.f32.xlu0 %v5916
  %v5918 = vpop.xlane.xlu0 %5917
  %v5919 = vmul.f32 %v5915, %v147
  %v5920 = vmul.f32 %v5918, %v147
  %v5921 = vadd.f32 %v5919, 1e-12
  %v5922 = vadd.f32 %v5920, 1e-12
  %v5923 = vrsqrt.pop %v5921
  %v5924 = vrsqrt.pop %v5922
  %v5925 = vmul.f32 %v5909, %v5923
  %v5926 = vmul.f32 %v5910, %v5924
  %v5927 = vlaneseq
  %v5928 = vshrl.u32 %v5927, 7
  %v5929 = vsub.s32 0, %v5928
  %v5930 = vrot.slane %v5899, %v5929
  %v5931 = vmul.f32 %v5925, %v5930
  %v5932 = vmul.f32 %v5926, %v5930
  %v5933 = vlaneseq
  %v5934 = vshrl.u32 %v5933, 7
  %v5935 = vsub.s32 0, %v5934
  %v5936 = vrot.slane %v5900, %v5935
  %v5937 = vadd.f32 %v5931, %v5936
  %v5938 = vadd.f32 %v5932, %v5936
  %v5939 = vmul.f32 %v5937, %v2885
  %v5940 = vmul.f32 %v5938, %v2890
  %v5941 = vld [vmem:[%s4 + $0x28] sm:$0xff]
  %v5942 = vld [vmem:[%s4 + $0x58] sm:$0xff]
  %v5943 = vld [vmem:[%s4 + $0x88] sm:$0xff]
  %v5944 = vld [vmem:[%s4 + $0xb8] sm:$0xff]
  %v5945 = vld [vmem:[%s4 + $0xe8] ss:$0 sm:$0xff]
  %v5947 = vsel %vm140, %v5939, 0
  %v5950 = vsel %vm140, %v5940, 0
  %5952 = vmatprep.subr.mxu0 0.0
  %5953 = vmatpush1.msra.mxu0 %v5941
  %5954 = vmatprep.subr.mxu0 0.0
  %5955 = vmatpush1.msra.mxu0 %v5942
  %5956 = vmatprep.subr.mxu0 0.0
  %5957 = vmatpush1.msra.mxu0 %v5943
  %5958 = vmatprep.subr.mxu0 0.0
  %5959 = vmatpush1.msra.mxu0 %v5944
  %5960 = vmatprep.subr.mxu0 0.0
  %5961 = vmatpush1.msra.mxu0 0.0
  %5962 = vmatprep.subr.mxu0 0.0
  %5963 = vmatpush1.msra.mxu0 0.0
  %5964 = vmatprep.subr.mxu0 0.0
  %5965 = vmatpush1.msra.mxu0 0.0
  %5966 = vmatprep.subr.mxu0 0.0
  %5967 = vmatpush1.msra.mxu0 0.0
  %5968 = vmatprep.subr.mxu0 0.0
  %5969 = vmatpush1.msra.mxu0 0.0
  %5970 = vmatprep.subr.mxu0 0.0
  %5971 = vmatpush1.msra.mxu0 0.0
  %5972 = vmatprep.subr.mxu0 0.0
  %5973 = vmatpush1.msra.mxu0 0.0
  %5974 = vmatprep.subr.mxu0 0.0
  %5975 = vmatpush1.msra.mxu0 0.0
  %5976 = vmatprep.subr.mxu0 0.0
  %5977 = vmatpush1.msra.mxu0 0.0
  %5978 = vmatprep.subr.mxu0 0.0
  %5979 = vmatpush1.msra.mxu0 0.0
  %5980 = vmatprep.subr.mxu0 0.0
  %5981 = vmatpush1.msra.mxu0 0.0
  %5982 = vmatprep.subr.mxu0 0.0
  %5983 = vmatpush1.msra.mxu0 0.0
  %5984 = vmatprep.subr.mxu0 0.0
  %5985 = vmatpush1.msra.mxu0 0.0
  %5986 = vmatprep.subr.mxu0 0.0
  %5987 = vmatpush1.msra.mxu0 0.0
  %5988 = vmatprep.subr.mxu0 0.0
  %5989 = vmatpush1.msra.mxu0 0.0
  %5990 = vmatprep.subr.mxu0 0.0
  %5991 = vmatpush1.msra.mxu0 0.0
  %5992 = vmatprep.subr.mxu0 0.0
  %5993 = vmatpush1.msra.mxu0 0.0
  %5994 = vmatprep.subr.mxu0 0.0
  %5995 = vmatpush1.msra.mxu0 0.0
  %5996 = vmatprep.subr.mxu0 0.0
  %5997 = vmatpush1.msra.mxu0 0.0
  %5998 = vmatprep.subr.mxu0 0.0
  %5999 = vmatpush1.msra.mxu0 0.0
  %6000 = vmatprep.subr.mxu0 0.0
  %6001 = vmatpush1.msra.mxu0 0.0
  %6002 = vmatprep.subr.mxu0 0.0
  %6003 = vmatpush1.msra.mxu0 0.0
  %6004 = vmatprep.subr.mxu0 0.0
  %6005 = vmatpush1.msra.mxu0 0.0
  %6006 = vmatprep.subr.mxu0 0.0
  %6007 = vmatpush1.msra.mxu0 0.0
  %6008 = vmatprep.subr.mxu0 0.0
  %6009 = vmatpush1.msra.mxu0 0.0
  %6010 = vmatprep.subr.mxu0 0.0
  %6011 = vmatpush1.msra.mxu0 0.0
  %6012 = vmatprep.subr.mxu0 0.0
  %6013 = vmatpush1.msra.mxu0 0.0
  %6014 = vmatprep.subr.mxu0 0.0
  %6015 = vmatpush1.msra.mxu0 0.0
  %6016 = vmatprep.mubr.f32.mxu0 0.0
  %6017 = vmatmul.mubr.f32.gmra.mrb[0].mxu0 %v5947
  %v6018 = vpop.f32.mrb[0].mxu0
  %v6019 = vadd.f32 %v5945, %v6018
  %v6020 = vpop.f32.mrb[0].mxu0
  %6021 = vmatprep.mubr.f32.mxu0 0.0
  %6022 = vmatmul.mubr.f32.gmra.mrb[0].mxu0 %v5950
  %v6023 = vpop.f32.mrb[0].mxu0
  %v6024 = vadd.f32 %v5945, %v6023
  %v6025 = vpop.f32.mrb[0].mxu0
  %6026 = vdwg.mxu0
  %v6027 = vmul.f32 %v6019, %v6019
  %v6028 = vmul.f32 %v6024, %v6024
  %v6029 = vmul.f32 %v6019, %v6027
  %v6030 = vmul.f32 %v6024, %v6028
  %v6031 = vmul.f32 %v6029, 0.044715
  %v6032 = vmul.f32 %v6030, 0.044715
  %v6033 = vadd.f32 %v6019, %v6031
  %v6034 = vadd.f32 %v6024, %v6032
  %v6035 = vmul.f32 %v6033, 0.7978846
  %v6036 = vmul.f32 %v6034, 0.7978846
  %v6037 = vtanh.pop %v6035
  %v6038 = vtanh.pop %v6036
  %v6039 = vadd.f32 %v6037, 1.0
  %v6040 = vadd.f32 %v6038, 1.0
  %v6041 = vmul.f32 %v6039, 0.5
  %v6042 = vmul.f32 %v6040, 0.5
  %v6043 = vmul.f32 %v6019, %v6041
  %v6044 = vmul.f32 %v6024, %v6042
  %v6045 = vld [vmem:[%s5] sm:$0xff]
  %v6046 = vld [vmem:[%s5 + $0x8] sm:$0xff]
  %v6047 = vld [vmem:[%s5 + $0x10] sm:$0xff]
  %v6048 = vld [vmem:[%s5 + $0x18] sm:$0xff]
  %v6049 = vld [vmem:[%s5 + $0x20] sm:$0xff]
  %v6050 = vld [vmem:[%s5 + $0x28] sm:$0xff]
  %v6051 = vld [vmem:[%s5 + $0x30] sm:$0xff]
  %v6052 = vld [vmem:[%s5 + $0x38] sm:$0xff]
  %v6053 = vld [vmem:[%s6 + $0x6] sm:$0x1]
  %v6054 = vlaneseq
  %v6055 = vshrl.u32 %v6054, 7
  %v6056 = vsub.s32 0, %v6055
  %v6057 = vrot.slane %v6053, %v6056
  %vm6058 = vcmask 523264
  %v6060 = vsel %vm6058, %v6043, 0
  %v6063 = vsel %vm6058, %v6044, 0
  %6065 = vmatprep.subr.mxu0 0.0
  %6066 = vmatpush1.msra.mxu0 %v6045
  %6067 = vmatprep.subr.mxu0 0.0
  %6068 = vmatpush1.msra.mxu0 %v6046
  %6069 = vmatprep.subr.mxu0 0.0
  %6070 = vmatpush1.msra.mxu0 %v6047
  %6071 = vmatprep.subr.mxu0 0.0
  %6072 = vmatpush1.msra.mxu0 %v6048
  %6073 = vmatprep.subr.mxu0 0.0
  %6074 = vmatpush1.msra.mxu0 %v6049
  %6075 = vmatprep.subr.mxu0 0.0
  %6076 = vmatpush1.msra.mxu0 %v6050
  %6077 = vmatprep.subr.mxu0 0.0
  %6078 = vmatpush1.msra.mxu0 %v6051
  %6079 = vmatprep.subr.mxu0 0.0
  %6080 = vmatpush1.msra.mxu0 %v6052
  %6081 = vmatprep.subr.mxu0 0.0
  %6082 = vmatpush1.msra.mxu0 0.0
  %6083 = vmatprep.subr.mxu0 0.0
  %6084 = vmatpush1.msra.mxu0 0.0
  %6085 = vmatprep.subr.mxu0 0.0
  %6086 = vmatpush1.msra.mxu0 0.0
  %6087 = vmatprep.subr.mxu0 0.0
  %6088 = vmatpush1.msra.mxu0 0.0
  %6089 = vmatprep.subr.mxu0 0.0
  %6090 = vmatpush1.msra.mxu0 0.0
  %6091 = vmatprep.subr.mxu0 0.0
  %6092 = vmatpush1.msra.mxu0 0.0
  %6093 = vmatprep.subr.mxu0 0.0
  %6094 = vmatpush1.msra.mxu0 0.0
  %6095 = vmatprep.subr.mxu0 0.0
  %6096 = vmatpush1.msra.mxu0 0.0
  %6097 = vmatprep.subr.mxu0 0.0
  %6098 = vmatpush1.msra.mxu0 0.0
  %6099 = vmatprep.subr.mxu0 0.0
  %6100 = vmatpush1.msra.mxu0 0.0
  %6101 = vmatprep.subr.mxu0 0.0
  %6102 = vmatpush1.msra.mxu0 0.0
  %6103 = vmatprep.subr.mxu0 0.0
  %6104 = vmatpush1.msra.mxu0 0.0
  %6105 = vmatprep.subr.mxu0 0.0
  %6106 = vmatpush1.msra.mxu0 0.0
  %6107 = vmatprep.subr.mxu0 0.0
  %6108 = vmatpush1.msra.mxu0 0.0
  %6109 = vmatprep.subr.mxu0 0.0
  %6110 = vmatpush1.msra.mxu0 0.0
  %6111 = vmatprep.subr.mxu0 0.0
  %6112 = vmatpush1.msra.mxu0 0.0
  %6113 = vmatprep.subr.mxu0 0.0
  %6114 = vmatpush1.msra.mxu0 0.0
  %6115 = vmatprep.subr.mxu0 0.0
  %6116 = vmatpush1.msra.mxu0 0.0
  %6117 = vmatprep.subr.mxu0 0.0
  %6118 = vmatpush1.msra.mxu0 0.0
  %6119 = vmatprep.subr.mxu0 0.0
  %6120 = vmatpush1.msra.mxu0 0.0
  %6121 = vmatprep.subr.mxu0 0.0
  %6122 = vmatpush1.msra.mxu0 0.0
  %6123 = vmatprep.subr.mxu0 0.0
  %6124 = vmatpush1.msra.mxu0 0.0
  %6125 = vmatprep.subr.mxu0 0.0
  %6126 = vmatpush1.msra.mxu0 0.0
  %6127 = vmatprep.subr.mxu0 0.0
  %6128 = vmatpush1.msra.mxu0 0.0
  %6129 = vmatprep.mubr.f32.mxu0 0.0
  %6130 = vmatmul.mubr.f32.gmra.mrb[0].mxu0 %v6060
  %v6131 = vpop.f32.mrb[0].mxu0
  %v6132 = vadd.f32 %v6057, %v6131
  %v6133 = vpop.f32.mrb[0].mxu0
  %6134 = vmatprep.mubr.f32.mxu0 0.0
  %6135 = vmatmul.mubr.f32.gmra.mrb[0].mxu0 %v6063
  %v6136 = vpop.f32.mrb[0].mxu0
  %v6137 = vadd.f32 %v6057, %v6136
  %v6138 = vpop.f32.mrb[0].mxu0
  %6139 = vdwg.mxu0
  %v6140 = vadd.f32 %v6132, %v5939
  %v6141 = vadd.f32 %v6137, %v5940
  %v6142 = vld [vmem:[%s6 + $0x2] sm:$0x1]
  %v6143 = vld [vmem:[%s6 + $0x5] sm:$0x1]
  %v6144 = vsel %vm140, %v6140, 0.0
  %6145 = vadd.xlane.f32.xlu0 %v6144
  %v6146 = vpop.xlane.xlu0 %6145
  %v6147 = vsel %vm140, %v6141, 0.0
  %6148 = vadd.xlane.f32.xlu0 %v6147
  %v6149 = vpop.xlane.xlu0 %6148
  %v6150 = vmul.f32 %v6146, %v147
  %v6151 = vmul.f32 %v6149, %v147
  %v6152 = vsub.f32 %v6140, %v6150
  %v6153 = vsub.f32 %v6141, %v6151
  %v6154 = vmul.f32 %v6152, %v6152
  %v6155 = vmul.f32 %v6153, %v6153
  %v6156 = vsel %vm140, %v6154, 0.0
  %6157 = vadd.xlane.f32.xlu0 %v6156
  %v6158 = vpop.xlane.xlu0 %6157
  %v6159 = vsel %vm140, %v6155, 0.0
  %6160 = vadd.xlane.f32.xlu0 %v6159
  %v6161 = vpop.xlane.xlu0 %6160
  %v6162 = vmul.f32 %v6158, %v147
  %v6163 = vmul.f32 %v6161, %v147
  %v6164 = vadd.f32 %v6162, 1e-12
  %v6165 = vadd.f32 %v6163, 1e-12
  %v6166 = vrsqrt.pop %v6164
  %v6167 = vrsqrt.pop %v6165
  %v6168 = vmul.f32 %v6152, %v6166
  %v6169 = vmul.f32 %v6153, %v6167
  %v6170 = vlaneseq
  %v6171 = vshrl.u32 %v6170, 7
  %v6172 = vsub.s32 0, %v6171
  %v6173 = vrot.slane %v6142, %v6172
  %v6174 = vmul.f32 %v6168, %v6173
  %v6175 = vmul.f32 %v6169, %v6173
  %v6176 = vlaneseq
  %v6177 = vshrl.u32 %v6176, 7
  %v6178 = vsub.s32 0, %v6177
  %v6179 = vrot.slane %v6143, %v6178
  %v6180 = vadd.f32 %v6174, %v6179
  %v6181 = vadd.f32 %v6175, %v6179
  %v6182 = vmul.f32 %v6180, %v2885
  %v6183 = vmul.f32 %v6181, %v2890
  %6184 = vst.msk [vmem:[%s7] sm:$0xff] %vm140, %v6182
  %6185 = vst.msk [vmem:[%s7 + $0x8] sm:$0xff] %vm140, %v6183
  %s6186 = scalar_lea.vmem %s4, 240
  %v6187 = vld [vmem:[%s6186] sm:$0xff]
  %v6188 = vld [vmem:[%s6186 + $0x30] sm:$0xff]
  %v6189 = vld [vmem:[%s6186 + $0x60] sm:$0xff]
  %v6190 = vld [vmem:[%s6186 + $0x90] sm:$0xff]
  %v6191 = vld [vmem:[%s6186 + $0xc0] ss:$0 sm:$0xff]
  %v6193 = vsel %vm140, %v6182, 0
  %v6196 = vsel %vm140, %v6183, 0
  %6198 = vmatprep.subr.mxu0 0.0
  %6199 = vmatpush1.msra.mxu0 %v6187
  %6200 = vmatprep.subr.mxu0 0.0
  %6201 = vmatpush1.msra.mxu0 %v6188
  %6202 = vmatprep.subr.mxu0 0.0
  %6203 = vmatpush1.msra.mxu0 %v6189
  %6204 = vmatprep.subr.mxu0 0.0
  %6205 = vmatpush1.msra.mxu0 %v6190
  %6206 = vmatprep.subr.mxu0 0.0
  %6207 = vmatpush1.msra.mxu0 0.0
  %6208 = vmatprep.subr.mxu0 0.0
  %6209 = vmatpush1.msra.mxu0 0.0
  %6210 = vmatprep.subr.mxu0 0.0
  %6211 = vmatpush1.msra.mxu0 0.0
  %6212 = vmatprep.subr.mxu0 0.0
  %6213 = vmatpush1.msra.mxu0 0.0
  %6214 = vmatprep.subr.mxu0 0.0
  %6215 = vmatpush1.msra.mxu0 0.0
  %6216 = vmatprep.subr.mxu0 0.0
  %6217 = vmatpush1.msra.mxu0 0.0
  %6218 = vmatprep.subr.mxu0 0.0
  %6219 = vmatpush1.msra.mxu0 0.0
  %6220 = vmatprep.subr.mxu0 0.0
  %6221 = vmatpush1.msra.mxu0 0.0
  %6222 = vmatprep.subr.mxu0 0.0
  %6223 = vmatpush1.msra.mxu0 0.0
  %6224 = vmatprep.subr.mxu0 0.0
  %6225 = vmatpush1.msra.mxu0 0.0
  %6226 = vmatprep.subr.mxu0 0.0
  %6227 = vmatpush1.msra.mxu0 0.0
  %6228 = vmatprep.subr.mxu0 0.0
  %6229 = vmatpush1.msra.mxu0 0.0
  %6230 = vmatprep.subr.mxu0 0.0
  %6231 = vmatpush1.msra.mxu0 0.0
  %6232 = vmatprep.subr.mxu0 0.0
  %6233 = vmatpush1.msra.mxu0 0.0
  %6234 = vmatprep.subr.mxu0 0.0
  %6235 = vmatpush1.msra.mxu0 0.0
  %6236 = vmatprep.subr.mxu0 0.0
  %6237 = vmatpush1.msra.mxu0 0.0
  %6238 = vmatprep.subr.mxu0 0.0
  %6239 = vmatpush1.msra.mxu0 0.0
  %6240 = vmatprep.subr.mxu0 0.0
  %6241 = vmatpush1.msra.mxu0 0.0
  %6242 = vmatprep.subr.mxu0 0.0
  %6243 = vmatpush1.msra.mxu0 0.0
  %6244 = vmatprep.subr.mxu0 0.0
  %6245 = vmatpush1.msra.mxu0 0.0
  %6246 = vmatprep.subr.mxu0 0.0
  %6247 = vmatpush1.msra.mxu0 0.0
  %6248 = vmatprep.subr.mxu0 0.0
  %6249 = vmatpush1.msra.mxu0 0.0
  %6250 = vmatprep.subr.mxu0 0.0
  %6251 = vmatpush1.msra.mxu0 0.0
  %6252 = vmatprep.subr.mxu0 0.0
  %6253 = vmatpush1.msra.mxu0 0.0
  %6254 = vmatprep.subr.mxu0 0.0
  %6255 = vmatpush1.msra.mxu0 0.0
  %6256 = vmatprep.subr.mxu0 0.0
  %6257 = vmatpush1.msra.mxu0 0.0
  %6258 = vmatprep.subr.mxu0 0.0
  %6259 = vmatpush1.msra.mxu0 0.0
  %6260 = vmatprep.subr.mxu0 0.0
  %6261 = vmatpush1.msra.mxu0 0.0
  %6262 = vmatprep.mubr.f32.mxu0 0.0
  %6263 = vmatmul.mubr.f32.gmra.mrb[0].mxu0 %v6193
  %v6264 = vpop.f32.mrb[0].mxu0
  %v6265 = vadd.f32 %v6191, %v6264
  %v6266 = vpop.f32.mrb[0].mxu0
  %6267 = vmatprep.mubr.f32.mxu0 0.0
  %6268 = vmatmul.mubr.f32.gmra.mrb[0].mxu0 %v6196
  %v6269 = vpop.f32.mrb[0].mxu0
  %v6270 = vadd.f32 %v6191, %v6269
  %v6271 = vpop.f32.mrb[0].mxu0
  %6272 = vdwg.mxu0
  %6275 = vrot.lane.b32.xlu0 %v6265, 120
  %v6276 = vpop.permute.xlu0 %6275
  %6277 = vrot.lane.b32.xlu0 %v6270, 120
  %v6278 = vpop.permute.xlu0 %6277
  %6281 = vrot.lane.b32.xlu0 %v6265, 112
  %v6282 = vpop.permute.xlu0 %6281
  %6283 = vrot.lane.b32.xlu0 %v6270, 112
  %v6284 = vpop.permute.xlu0 %6283
  %6287 = vrot.lane.b32.xlu0 %v6265, 104
  %v6288 = vpop.permute.xlu0 %6287
  %6289 = vrot.lane.b32.xlu0 %v6270, 104
  %v6290 = vpop.permute.xlu0 %6289
  %v6293 = vcombine.low %v6265, %v6282
  %v6294 = vcombine.high %v6265, %v6282
  %v6296 = vunpack.c.l.s4 1983009808
  %v6297 = vunpack.c.0.s8 %v6296
  %v6298 = vlaneseq
  %v6299 = vshrl.u32 %v6298, 7
  %v6300 = vsub.s32 %v6297, %v6299
  %v6301 = vrot.slane %v6293, %v6300
  %v6303 = vunpack.c.l.s4 1983009808
  %v6304 = vunpack.c.0.s8 %v6303
  %v6305 = vlaneseq
  %v6306 = vshrl.u32 %v6305, 7
  %v6307 = vsub.s32 %v6304, %v6306
  %v6308 = vrot.slane %v6294, %v6307
  %v6309 = vcombine.low %v6276, %v6288
  %v6310 = vcombine.high %v6276, %v6288
  %v6312 = vunpack.c.l.s4 1983009808
  %v6313 = vunpack.c.0.s8 %v6312
  %v6314 = vlaneseq
  %v6315 = vshrl.u32 %v6314, 7
  %v6316 = vsub.s32 %v6313, %v6315
  %v6317 = vrot.slane %v6309, %v6316
  %v6319 = vunpack.c.l.s4 1983009808
  %v6320 = vunpack.c.0.s8 %v6319
  %v6321 = vlaneseq
  %v6322 = vshrl.u32 %v6321, 7
  %v6323 = vsub.s32 %v6320, %v6322
  %v6324 = vrot.slane %v6310, %v6323
  %v6325 = vcombine.low %v6301, %v6317
  %v6326 = vcombine.high %v6301, %v6317
  %v6328 = vunpack.c.l.s4 1934713408
  %v6329 = vunpack.c.0.s8 %v6328
  %v6330 = vlaneseq
  %v6331 = vshrl.u32 %v6330, 7
  %v6332 = vsub.s32 %v6329, %v6331
  %v6333 = vrot.slane %v6325, %v6332
  %v6335 = vunpack.c.l.s4 1934713408
  %v6336 = vunpack.c.0.s8 %v6335
  %v6337 = vlaneseq
  %v6338 = vshrl.u32 %v6337, 7
  %v6339 = vsub.s32 %v6336, %v6338
  %v6340 = vrot.slane %v6326, %v6339
  %v6341 = vcombine.low %v6308, %v6324
  %v6342 = vcombine.high %v6308, %v6324
  %v6344 = vunpack.c.l.s4 1934713408
  %v6345 = vunpack.c.0.s8 %v6344
  %v6346 = vlaneseq
  %v6347 = vshrl.u32 %v6346, 7
  %v6348 = vsub.s32 %v6345, %v6347
  %v6349 = vrot.slane %v6341, %v6348
  %v6351 = vunpack.c.l.s4 1934713408
  %v6352 = vunpack.c.0.s8 %v6351
  %v6353 = vlaneseq
  %v6354 = vshrl.u32 %v6353, 7
  %v6355 = vsub.s32 %v6352, %v6354
  %v6356 = vrot.slane %v6342, %v6355
  %v6357 = vcombine.high %v6333, 0.0
  %v6358 = vcombine.high %v6340, 0.0
  %v6359 = vcombine.high %v6349, 0.0
  %v6360 = vcombine.high %v6356, 0.0
  %v6361 = vcombine.low %v6270, %v6284
  %v6362 = vcombine.high %v6270, %v6284
  %v6364 = vunpack.c.l.s4 1983009808
  %v6365 = vunpack.c.0.s8 %v6364
  %v6366 = vlaneseq
  %v6367 = vshrl.u32 %v6366, 7
  %v6368 = vsub.s32 %v6365, %v6367
  %v6369 = vrot.slane %v6361, %v6368
  %v6371 = vunpack.c.l.s4 1983009808
  %v6372 = vunpack.c.0.s8 %v6371
  %v6373 = vlaneseq
  %v6374 = vshrl.u32 %v6373, 7
  %v6375 = vsub.s32 %v6372, %v6374
  %v6376 = vrot.slane %v6362, %v6375
  %v6377 = vcombine.low %v6278, %v6290
  %v6378 = vcombine.high %v6278, %v6290
  %v6380 = vunpack.c.l.s4 1983009808
  %v6381 = vunpack.c.0.s8 %v6380
  %v6382 = vlaneseq
  %v6383 = vshrl.u32 %v6382, 7
  %v6384 = vsub.s32 %v6381, %v6383
  %v6385 = vrot.slane %v6377, %v6384
  %v6387 = vunpack.c.l.s4 1983009808
  %v6388 = vunpack.c.0.s8 %v6387
  %v6389 = vlaneseq
  %v6390 = vshrl.u32 %v6389, 7
  %v6391 = vsub.s32 %v6388, %v6390
  %v6392 = vrot.slane %v6378, %v6391
  %v6393 = vcombine.low %v6369, %v6385
  %v6394 = vcombine.high %v6369, %v6385
  %v6396 = vunpack.c.l.s4 1934713408
  %v6397 = vunpack.c.0.s8 %v6396
  %v6398 = vlaneseq
  %v6399 = vshrl.u32 %v6398, 7
  %v6400 = vsub.s32 %v6397, %v6399
  %v6401 = vrot.slane %v6393, %v6400
  %v6403 = vunpack.c.l.s4 1934713408
  %v6404 = vunpack.c.0.s8 %v6403
  %v6405 = vlaneseq
  %v6406 = vshrl.u32 %v6405, 7
  %v6407 = vsub.s32 %v6404, %v6406
  %v6408 = vrot.slane %v6394, %v6407
  %v6409 = vcombine.low %v6376, %v6392
  %v6410 = vcombine.high %v6376, %v6392
  %v6412 = vunpack.c.l.s4 1934713408
  %v6413 = vunpack.c.0.s8 %v6412
  %v6414 = vlaneseq
  %v6415 = vshrl.u32 %v6414, 7
  %v6416 = vsub.s32 %v6413, %v6415
  %v6417 = vrot.slane %v6409, %v6416
  %v6419 = vunpack.c.l.s4 1934713408
  %v6420 = vunpack.c.0.s8 %v6419
  %v6421 = vlaneseq
  %v6422 = vshrl.u32 %v6421, 7
  %v6423 = vsub.s32 %v6420, %v6422
  %v6424 = vrot.slane %v6410, %v6423
  %v6425 = vcombine.high %v6401, 0.0
  %v6426 = vcombine.high %v6408, 0.0
  %v6427 = vcombine.high %v6417, 0.0
  %v6428 = vcombine.high %v6424, 0.0
  %v6429 = vcombine.low %v6333, %v6340
  %v6431 = vunpack.c.l.s4 1983009808
  %v6432 = vunpack.c.0.s8 %v6431
  %v6433 = vlaneseq
  %v6434 = vshrl.u32 %v6433, 7
  %v6435 = vsub.s32 %v6432, %v6434
  %v6436 = vrot.slane %v6429, %v6435
  %v6437 = vcombine.low %v6357, %v6358
  %v6439 = vunpack.c.l.s4 1983009808
  %v6440 = vunpack.c.0.s8 %v6439
  %v6441 = vlaneseq
  %v6442 = vshrl.u32 %v6441, 7
  %v6443 = vsub.s32 %v6440, %v6442
  %v6444 = vrot.slane %v6437, %v6443
  %v6445 = vcombine.low %v6349, %v6356
  %v6447 = vunpack.c.l.s4 1983009808
  %v6448 = vunpack.c.0.s8 %v6447
  %v6449 = vlaneseq
  %v6450 = vshrl.u32 %v6449, 7
  %v6451 = vsub.s32 %v6448, %v6450
  %v6452 = vrot.slane %v6445, %v6451
  %v6453 = vcombine.low %v6359, %v6360
  %v6455 = vunpack.c.l.s4 1983009808
  %v6456 = vunpack.c.0.s8 %v6455
  %v6457 = vlaneseq
  %v6458 = vshrl.u32 %v6457, 7
  %v6459 = vsub.s32 %v6456, %v6458
  %v6460 = vrot.slane %v6453, %v6459
  %v6461 = vcombine.low %v6436, %v6444
  %v6462 = vcombine.high %v6436, %v6444
  %v6464 = vunpack.c.l.s4 1934713408
  %v6465 = vunpack.c.0.s8 %v6464
  %v6466 = vlaneseq
  %v6467 = vshrl.u32 %v6466, 7
  %v6468 = vsub.s32 %v6465, %v6467
  %v6469 = vrot.slane %v6461, %v6468
  %v6471 = vunpack.c.l.s4 1934713408
  %v6472 = vunpack.c.0.s8 %v6471
  %v6473 = vlaneseq
  %v6474 = vshrl.u32 %v6473, 7
  %v6475 = vsub.s32 %v6472, %v6474
  %v6476 = vrot.slane %v6462, %v6475
  %v6477 = vcombine.low %v6452, %v6460
  %v6478 = vcombine.high %v6452, %v6460
  %v6480 = vunpack.c.l.s4 1934713408
  %v6481 = vunpack.c.0.s8 %v6480
  %v6482 = vlaneseq
  %v6483 = vshrl.u32 %v6482, 7
  %v6484 = vsub.s32 %v6481, %v6483
  %v6485 = vrot.slane %v6477, %v6484
  %v6487 = vunpack.c.l.s4 1934713408
  %v6488 = vunpack.c.0.s8 %v6487
  %v6489 = vlaneseq
  %v6490 = vshrl.u32 %v6489, 7
  %v6491 = vsub.s32 %v6488, %v6490
  %v6492 = vrot.slane %v6478, %v6491
  %v6493 = vcombine.low %v6469, %v6485
  %v6494 = vcombine.high %v6469, %v6485
  %v6495 = vcombine.low %v6476, %v6492
  %v6496 = vcombine.high %v6476, %v6492
  %v6497 = vcombine.low %v6401, %v6408
  %v6499 = vunpack.c.l.s4 1983009808
  %v6500 = vunpack.c.0.s8 %v6499
  %v6501 = vlaneseq
  %v6502 = vshrl.u32 %v6501, 7
  %v6503 = vsub.s32 %v6500, %v6502
  %v6504 = vrot.slane %v6497, %v6503
  %v6505 = vcombine.low %v6425, %v6426
  %v6507 = vunpack.c.l.s4 1983009808
  %v6508 = vunpack.c.0.s8 %v6507
  %v6509 = vlaneseq
  %v6510 = vshrl.u32 %v6509, 7
  %v6511 = vsub.s32 %v6508, %v6510
  %v6512 = vrot.slane %v6505, %v6511
  %v6513 = vcombine.low %v6417, %v6424
  %v6515 = vunpack.c.l.s4 1983009808
  %v6516 = vunpack.c.0.s8 %v6515
  %v6517 = vlaneseq
  %v6518 = vshrl.u32 %v6517, 7
  %v6519 = vsub.s32 %v6516, %v6518
  %v6520 = vrot.slane %v6513, %v6519
  %v6521 = vcombine.low %v6427, %v6428
  %v6523 = vunpack.c.l.s4 1983009808
  %v6524 = vunpack.c.0.s8 %v6523
  %v6525 = vlaneseq
  %v6526 = vshrl.u32 %v6525, 7
  %v6527 = vsub.s32 %v6524, %v6526
  %v6528 = vrot.slane %v6521, %v6527
  %v6529 = vcombine.low %v6504, %v6512
  %v6530 = vcombine.high %v6504, %v6512
  %v6532 = vunpack.c.l.s4 1934713408
  %v6533 = vunpack.c.0.s8 %v6532
  %v6534 = vlaneseq
  %v6535 = vshrl.u32 %v6534, 7
  %v6536 = vsub.s32 %v6533, %v6535
  %v6537 = vrot.slane %v6529, %v6536
  %v6539 = vunpack.c.l.s4 1934713408
  %v6540 = vunpack.c.0.s8 %v6539
  %v6541 = vlaneseq
  %v6542 = vshrl.u32 %v6541, 7
  %v6543 = vsub.s32 %v6540, %v6542
  %v6544 = vrot.slane %v6530, %v6543
  %v6545 = vcombine.low %v6520, %v6528
  %v6546 = vcombine.high %v6520, %v6528
  %v6548 = vunpack.c.l.s4 1934713408
  %v6549 = vunpack.c.0.s8 %v6548
  %v6550 = vlaneseq
  %v6551 = vshrl.u32 %v6550, 7
  %v6552 = vsub.s32 %v6549, %v6551
  %v6553 = vrot.slane %v6545, %v6552
  %v6555 = vunpack.c.l.s4 1934713408
  %v6556 = vunpack.c.0.s8 %v6555
  %v6557 = vlaneseq
  %v6558 = vshrl.u32 %v6557, 7
  %v6559 = vsub.s32 %v6556, %v6558
  %v6560 = vrot.slane %v6546, %v6559
  %v6561 = vcombine.low %v6537, %v6553
  %v6562 = vcombine.high %v6537, %v6553
  %v6563 = vcombine.low %v6544, %v6560
  %v6564 = vcombine.high %v6544, %v6560
  %6565 = vrot.lane.b32.xlu0 %v6265, 96
  %v6566 = vpop.permute.xlu0 %6565
  %6567 = vrot.lane.b32.xlu0 %v6270, 96
  %v6568 = vpop.permute.xlu0 %6567
  %6569 = vrot.lane.b32.xlu0 %v6276, 96
  %v6570 = vpop.permute.xlu0 %6569
  %6571 = vrot.lane.b32.xlu0 %v6278, 96
  %v6572 = vpop.permute.xlu0 %6571
  %6573 = vrot.lane.b32.xlu0 %v6282, 96
  %v6574 = vpop.permute.xlu0 %6573
  %6575 = vrot.lane.b32.xlu0 %v6284, 96
  %v6576 = vpop.permute.xlu0 %6575
  %6577 = vrot.lane.b32.xlu0 %v6288, 96
  %v6578 = vpop.permute.xlu0 %6577
  %6579 = vrot.lane.b32.xlu0 %v6290, 96
  %v6580 = vpop.permute.xlu0 %6579
  %v6589 = vcombine.low %v6566, %v6574
  %v6590 = vcombine.high %v6566, %v6574
  %v6592 = vunpack.c.l.s4 1983009808
  %v6593 = vunpack.c.0.s8 %v6592
  %v6594 = vlaneseq
  %v6595 = vshrl.u32 %v6594, 7
  %v6596 = vsub.s32 %v6593, %v6595
  %v6597 = vrot.slane %v6589, %v6596
  %v6599 = vunpack.c.l.s4 1983009808
  %v6600 = vunpack.c.0.s8 %v6599
  %v6601 = vlaneseq
  %v6602 = vshrl.u32 %v6601, 7
  %v6603 = vsub.s32 %v6600, %v6602
  %v6604 = vrot.slane %v6590, %v6603
  %v6605 = vcombine.low %v6570, %v6578
  %v6606 = vcombine.high %v6570, %v6578
  %v6608 = vunpack.c.l.s4 1983009808
  %v6609 = vunpack.c.0.s8 %v6608
  %v6610 = vlaneseq
  %v6611 = vshrl.u32 %v6610, 7
  %v6612 = vsub.s32 %v6609, %v6611
  %v6613 = vrot.slane %v6605, %v6612
  %v6615 = vunpack.c.l.s4 1983009808
  %v6616 = vunpack.c.0.s8 %v6615
  %v6617 = vlaneseq
  %v6618 = vshrl.u32 %v6617, 7
  %v6619 = vsub.s32 %v6616, %v6618
  %v6620 = vrot.slane %v6606, %v6619
  %v6621 = vcombine.low %v6597, %v6613
  %v6622 = vcombine.high %v6597, %v6613
  %v6624 = vunpack.c.l.s4 1934713408
  %v6625 = vunpack.c.0.s8 %v6624
  %v6626 = vlaneseq
  %v6627 = vshrl.u32 %v6626, 7
  %v6628 = vsub.s32 %v6625, %v6627
  %v6629 = vrot.slane %v6621, %v6628
  %v6631 = vunpack.c.l.s4 1934713408
  %v6632 = vunpack.c.0.s8 %v6631
  %v6633 = vlaneseq
  %v6634 = vshrl.u32 %v6633, 7
  %v6635 = vsub.s32 %v6632, %v6634
  %v6636 = vrot.slane %v6622, %v6635
  %v6637 = vcombine.low %v6604, %v6620
  %v6638 = vcombine.high %v6604, %v6620
  %v6640 = vunpack.c.l.s4 1934713408
  %v6641 = vunpack.c.0.s8 %v6640
  %v6642 = vlaneseq
  %v6643 = vshrl.u32 %v6642, 7
  %v6644 = vsub.s32 %v6641, %v6643
  %v6645 = vrot.slane %v6637, %v6644
  %v6647 = vunpack.c.l.s4 1934713408
  %v6648 = vunpack.c.0.s8 %v6647
  %v6649 = vlaneseq
  %v6650 = vshrl.u32 %v6649, 7
  %v6651 = vsub.s32 %v6648, %v6650
  %v6652 = vrot.slane %v6638, %v6651
  %v6653 = vcombine.high %v6629, 0.0
  %v6654 = vcombine.high %v6636, 0.0
  %v6655 = vcombine.high %v6645, 0.0
  %v6656 = vcombine.high %v6652, 0.0
  %v6657 = vcombine.low %v6568, %v6576
  %v6658 = vcombine.high %v6568, %v6576
  %v6660 = vunpack.c.l.s4 1983009808
  %v6661 = vunpack.c.0.s8 %v6660
  %v6662 = vlaneseq
  %v6663 = vshrl.u32 %v6662, 7
  %v6664 = vsub.s32 %v6661, %v6663
  %v6665 = vrot.slane %v6657, %v6664
  %v6667 = vunpack.c.l.s4 1983009808
  %v6668 = vunpack.c.0.s8 %v6667
  %v6669 = vlaneseq
  %v6670 = vshrl.u32 %v6669, 7
  %v6671 = vsub.s32 %v6668, %v6670
  %v6672 = vrot.slane %v6658, %v6671
  %v6673 = vcombine.low %v6572, %v6580
  %v6674 = vcombine.high %v6572, %v6580
  %v6676 = vunpack.c.l.s4 1983009808
  %v6677 = vunpack.c.0.s8 %v6676
  %v6678 = vlaneseq
  %v6679 = vshrl.u32 %v6678, 7
  %v6680 = vsub.s32 %v6677, %v6679
  %v6681 = vrot.slane %v6673, %v6680
  %v6683 = vunpack.c.l.s4 1983009808
  %v6684 = vunpack.c.0.s8 %v6683
  %v6685 = vlaneseq
  %v6686 = vshrl.u32 %v6685, 7
  %v6687 = vsub.s32 %v6684, %v6686
  %v6688 = vrot.slane %v6674, %v6687
  %v6689 = vcombine.low %v6665, %v6681
  %v6690 = vcombine.high %v6665, %v6681
  %v6692 = vunpack.c.l.s4 1934713408
  %v6693 = vunpack.c.0.s8 %v6692
  %v6694 = vlaneseq
  %v6695 = vshrl.u32 %v6694, 7
  %v6696 = vsub.s32 %v6693, %v6695
  %v6697 = vrot.slane %v6689, %v6696
  %v6699 = vunpack.c.l.s4 1934713408
  %v6700 = vunpack.c.0.s8 %v6699
  %v6701 = vlaneseq
  %v6702 = vshrl.u32 %v6701, 7
  %v6703 = vsub.s32 %v6700, %v6702
  %v6704 = vrot.slane %v6690, %v6703
  %v6705 = vcombine.low %v6672, %v6688
  %v6706 = vcombine.high %v6672, %v6688
  %v6708 = vunpack.c.l.s4 1934713408
  %v6709 = vunpack.c.0.s8 %v6708
  %v6710 = vlaneseq
  %v6711 = vshrl.u32 %v6710, 7
  %v6712 = vsub.s32 %v6709, %v6711
  %v6713 = vrot.slane %v6705, %v6712
  %v6715 = vunpack.c.l.s4 1934713408
  %v6716 = vunpack.c.0.s8 %v6715
  %v6717 = vlaneseq
  %v6718 = vshrl.u32 %v6717, 7
  %v6719 = vsub.s32 %v6716, %v6718
  %v6720 = vrot.slane %v6706, %v6719
  %v6721 = vcombine.high %v6697, 0.0
  %v6722 = vcombine.high %v6704, 0.0
  %v6723 = vcombine.high %v6713, 0.0
  %v6724 = vcombine.high %v6720, 0.0
  %v6725 = vcombine.low %v6629, %v6636
  %v6727 = vunpack.c.l.s4 1983009808
  %v6728 = vunpack.c.0.s8 %v6727
  %v6729 = vlaneseq
  %v6730 = vshrl.u32 %v6729, 7
  %v6731 = vsub.s32 %v6728, %v6730
  %v6732 = vrot.slane %v6725, %v6731
  %v6733 = vcombine.low %v6653, %v6654
  %v6735 = vunpack.c.l.s4 1983009808
  %v6736 = vunpack.c.0.s8 %v6735
  %v6737 = vlaneseq
  %v6738 = vshrl.u32 %v6737, 7
  %v6739 = vsub.s32 %v6736, %v6738
  %v6740 = vrot.slane %v6733, %v6739
  %v6741 = vcombine.low %v6645, %v6652
  %v6743 = vunpack.c.l.s4 1983009808
  %v6744 = vunpack.c.0.s8 %v6743
  %v6745 = vlaneseq
  %v6746 = vshrl.u32 %v6745, 7
  %v6747 = vsub.s32 %v6744, %v6746
  %v6748 = vrot.slane %v6741, %v6747
  %v6749 = vcombine.low %v6655, %v6656
  %v6751 = vunpack.c.l.s4 1983009808
  %v6752 = vunpack.c.0.s8 %v6751
  %v6753 = vlaneseq
  %v6754 = vshrl.u32 %v6753, 7
  %v6755 = vsub.s32 %v6752, %v6754
  %v6756 = vrot.slane %v6749, %v6755
  %v6757 = vcombine.low %v6732, %v6740
  %v6758 = vcombine.high %v6732, %v6740
  %v6760 = vunpack.c.l.s4 1934713408
  %v6761 = vunpack.c.0.s8 %v6760
  %v6762 = vlaneseq
  %v6763 = vshrl.u32 %v6762, 7
  %v6764 = vsub.s32 %v6761, %v6763
  %v6765 = vrot.slane %v6757, %v6764
  %v6767 = vunpack.c.l.s4 1934713408
  %v6768 = vunpack.c.0.s8 %v6767
  %v6769 = vlaneseq
  %v6770 = vshrl.u32 %v6769, 7
  %v6771 = vsub.s32 %v6768, %v6770
  %v6772 = vrot.slane %v6758, %v6771
  %v6773 = vcombine.low %v6748, %v6756
  %v6774 = vcombine.high %v6748, %v6756
  %v6776 = vunpack.c.l.s4 1934713408
  %v6777 = vunpack.c.0.s8 %v6776
  %v6778 = vlaneseq
  %v6779 = vshrl.u32 %v6778, 7
  %v6780 = vsub.s32 %v6777, %v6779
  %v6781 = vrot.slane %v6773, %v6780
  %v6783 = vunpack.c.l.s4 1934713408
  %v6784 = vunpack.c.0.s8 %v6783
  %v6785 = vlaneseq
  %v6786 = vshrl.u32 %v6785, 7
  %v6787 = vsub.s32 %v6784, %v6786
  %v6788 = vrot.slane %v6774, %v6787
  %v6789 = vcombine.low %v6765, %v6781
  %v6790 = vcombine.high %v6765, %v6781
  %v6791 = vcombine.low %v6772, %v6788
  %v6792 = vcombine.high %v6772, %v6788
  %v6793 = vcombine.low %v6697, %v6704
  %v6795 = vunpack.c.l.s4 1983009808
  %v6796 = vunpack.c.0.s8 %v6795
  %v6797 = vlaneseq
  %v6798 = vshrl.u32 %v6797, 7
  %v6799 = vsub.s32 %v6796, %v6798
  %v6800 = vrot.slane %v6793, %v6799
  %v6801 = vcombine.low %v6721, %v6722
  %v6803 = vunpack.c.l.s4 1983009808
  %v6804 = vunpack.c.0.s8 %v6803
  %v6805 = vlaneseq
  %v6806 = vshrl.u32 %v6805, 7
  %v6807 = vsub.s32 %v6804, %v6806
  %v6808 = vrot.slane %v6801, %v6807
  %v6809 = vcombine.low %v6713, %v6720
  %v6811 = vunpack.c.l.s4 1983009808
  %v6812 = vunpack.c.0.s8 %v6811
  %v6813 = vlaneseq
  %v6814 = vshrl.u32 %v6813, 7
  %v6815 = vsub.s32 %v6812, %v6814
  %v6816 = vrot.slane %v6809, %v6815
  %v6817 = vcombine.low %v6723, %v6724
  %v6819 = vunpack.c.l.s4 1983009808
  %v6820 = vunpack.c.0.s8 %v6819
  %v6821 = vlaneseq
  %v6822 = vshrl.u32 %v6821, 7
  %v6823 = vsub.s32 %v6820, %v6822
  %v6824 = vrot.slane %v6817, %v6823
  %v6825 = vcombine.low %v6800, %v6808
  %v6826 = vcombine.high %v6800, %v6808
  %v6828 = vunpack.c.l.s4 1934713408
  %v6829 = vunpack.c.0.s8 %v6828
  %v6830 = vlaneseq
  %v6831 = vshrl.u32 %v6830, 7
  %v6832 = vsub.s32 %v6829, %v6831
  %v6833 = vrot.slane %v6825, %v6832
  %v6835 = vunpack.c.l.s4 1934713408
  %v6836 = vunpack.c.0.s8 %v6835
  %v6837 = vlaneseq
  %v6838 = vshrl.u32 %v6837, 7
  %v6839 = vsub.s32 %v6836, %v6838
  %v6840 = vrot.slane %v6826, %v6839
  %v6841 = vcombine.low %v6816, %v6824
  %v6842 = vcombine.high %v6816, %v6824
  %v6844 = vunpack.c.l.s4 1934713408
  %v6845 = vunpack.c.0.s8 %v6844
  %v6846 = vlaneseq
  %v6847 = vshrl.u32 %v6846, 7
  %v6848 = vsub.s32 %v6845, %v6847
  %v6849 = vrot.slane %v6841, %v6848
  %v6851 = vunpack.c.l.s4 1934713408
  %v6852 = vunpack.c.0.s8 %v6851
  %v6853 = vlaneseq
  %v6854 = vshrl.u32 %v6853, 7
  %v6855 = vsub.s32 %v6852, %v6854
  %v6856 = vrot.slane %v6842, %v6855
  %v6857 = vcombine.low %v6833, %v6849
  %v6858 = vcombine.high %v6833, %v6849
  %v6859 = vcombine.low %v6840, %v6856
  %v6860 = vcombine.high %v6840, %v6856
  %6861 = vrot.lane.b32.xlu0 %v6265, 64
  %v6862 = vpop.permute.xlu0 %6861
  %6863 = vrot.lane.b32.xlu0 %v6270, 64
  %v6864 = vpop.permute.xlu0 %6863
  %6865 = vrot.lane.b32.xlu0 %v6276, 64
  %v6866 = vpop.permute.xlu0 %6865
  %6867 = vrot.lane.b32.xlu0 %v6278, 64
  %v6868 = vpop.permute.xlu0 %6867
  %6869 = vrot.lane.b32.xlu0 %v6282, 64
  %v6870 = vpop.permute.xlu0 %6869
  %6871 = vrot.lane.b32.xlu0 %v6284, 64
  %v6872 = vpop.permute.xlu0 %6871
  %6873 = vrot.lane.b32.xlu0 %v6288, 64
  %v6874 = vpop.permute.xlu0 %6873
  %6875 = vrot.lane.b32.xlu0 %v6290, 64
  %v6876 = vpop.permute.xlu0 %6875
  %v6885 = vcombine.low %v6862, %v6870
  %v6886 = vcombine.high %v6862, %v6870
  %v6888 = vunpack.c.l.s4 1983009808
  %v6889 = vunpack.c.0.s8 %v6888
  %v6890 = vlaneseq
  %v6891 = vshrl.u32 %v6890, 7
  %v6892 = vsub.s32 %v6889, %v6891
  %v6893 = vrot.slane %v6885, %v6892
  %v6895 = vunpack.c.l.s4 1983009808
  %v6896 = vunpack.c.0.s8 %v6895
  %v6897 = vlaneseq
  %v6898 = vshrl.u32 %v6897, 7
  %v6899 = vsub.s32 %v6896, %v6898
  %v6900 = vrot.slane %v6886, %v6899
  %v6901 = vcombine.low %v6866, %v6874
  %v6902 = vcombine.high %v6866, %v6874
  %v6904 = vunpack.c.l.s4 1983009808
  %v6905 = vunpack.c.0.s8 %v6904
  %v6906 = vlaneseq
  %v6907 = vshrl.u32 %v6906, 7
  %v6908 = vsub.s32 %v6905, %v6907
  %v6909 = vrot.slane %v6901, %v6908
  %v6911 = vunpack.c.l.s4 1983009808
  %v6912 = vunpack.c.0.s8 %v6911
  %v6913 = vlaneseq
  %v6914 = vshrl.u32 %v6913, 7
  %v6915 = vsub.s32 %v6912, %v6914
  %v6916 = vrot.slane %v6902, %v6915
  %v6917 = vcombine.low %v6893, %v6909
  %v6918 = vcombine.high %v6893, %v6909
  %v6920 = vunpack.c.l.s4 1934713408
  %v6921 = vunpack.c.0.s8 %v6920
  %v6922 = vlaneseq
  %v6923 = vshrl.u32 %v6922, 7
  %v6924 = vsub.s32 %v6921, %v6923
  %v6925 = vrot.slane %v6917, %v6924
  %v6927 = vunpack.c.l.s4 1934713408
  %v6928 = vunpack.c.0.s8 %v6927
  %v6929 = vlaneseq
  %v6930 = vshrl.u32 %v6929, 7
  %v6931 = vsub.s32 %v6928, %v6930
  %v6932 = vrot.slane %v6918, %v6931
  %v6933 = vcombine.low %v6900, %v6916
  %v6934 = vcombine.high %v6900, %v6916
  %v6936 = vunpack.c.l.s4 1934713408
  %v6937 = vunpack.c.0.s8 %v6936
  %v6938 = vlaneseq
  %v6939 = vshrl.u32 %v6938, 7
  %v6940 = vsub.s32 %v6937, %v6939
  %v6941 = vrot.slane %v6933, %v6940
  %v6943 = vunpack.c.l.s4 1934713408
  %v6944 = vunpack.c.0.s8 %v6943
  %v6945 = vlaneseq
  %v6946 = vshrl.u32 %v6945, 7
  %v6947 = vsub.s32 %v6944, %v6946
  %v6948 = vrot.slane %v6934, %v6947
  %v6949 = vcombine.high %v6925, 0.0
  %v6950 = vcombine.high %v6932, 0.0
  %v6951 = vcombine.high %v6941, 0.0
  %v6952 = vcombine.high %v6948, 0.0
  %v6953 = vcombine.low %v6864, %v6872
  %v6954 = vcombine.high %v6864, %v6872
  %v6956 = vunpack.c.l.s4 1983009808
  %v6957 = vunpack.c.0.s8 %v6956
  %v6958 = vlaneseq
  %v6959 = vshrl.u32 %v6958, 7
  %v6960 = vsub.s32 %v6957, %v6959
  %v6961 = vrot.slane %v6953, %v6960
  %v6963 = vunpack.c.l.s4 1983009808
  %v6964 = vunpack.c.0.s8 %v6963
  %v6965 = vlaneseq
  %v6966 = vshrl.u32 %v6965, 7
  %v6967 = vsub.s32 %v6964, %v6966
  %v6968 = vrot.slane %v6954, %v6967
  %v6969 = vcombine.low %v6868, %v6876
  %v6970 = vcombine.high %v6868, %v6876
  %v6972 = vunpack.c.l.s4 1983009808
  %v6973 = vunpack.c.0.s8 %v6972
  %v6974 = vlaneseq
  %v6975 = vshrl.u32 %v6974, 7
  %v6976 = vsub.s32 %v6973, %v6975
  %v6977 = vrot.slane %v6969, %v6976
  %v6979 = vunpack.c.l.s4 1983009808
  %v6980 = vunpack.c.0.s8 %v6979
  %v6981 = vlaneseq
  %v6982 = vshrl.u32 %v6981, 7
  %v6983 = vsub.s32 %v6980, %v6982
  %v6984 = vrot.slane %v6970, %v6983
  %v6985 = vcombine.low %v6961, %v6977
  %v6986 = vcombine.high %v6961, %v6977
  %v6988 = vunpack.c.l.s4 1934713408
  %v6989 = vunpack.c.0.s8 %v6988
  %v6990 = vlaneseq
  %v6991 = vshrl.u32 %v6990, 7
  %v6992 = vsub.s32 %v6989, %v6991
  %v6993 = vrot.slane %v6985, %v6992
  %v6995 = vunpack.c.l.s4 1934713408
  %v6996 = vunpack.c.0.s8 %v6995
  %v6997 = vlaneseq
  %v6998 = vshrl.u32 %v6997, 7
  %v6999 = vsub.s32 %v6996, %v6998
  %v7000 = vrot.slane %v6986, %v6999
  %v7001 = vcombine.low %v6968, %v6984
  %v7002 = vcombine.high %v6968, %v6984
  %v7004 = vunpack.c.l.s4 1934713408
  %v7005 = vunpack.c.0.s8 %v7004
  %v7006 = vlaneseq
  %v7007 = vshrl.u32 %v7006, 7
  %v7008 = vsub.s32 %v7005, %v7007
  %v7009 = vrot.slane %v7001, %v7008
  %v7011 = vunpack.c.l.s4 1934713408
  %v7012 = vunpack.c.0.s8 %v7011
  %v7013 = vlaneseq
  %v7014 = vshrl.u32 %v7013, 7
  %v7015 = vsub.s32 %v7012, %v7014
  %v7016 = vrot.slane %v7002, %v7015
  %v7017 = vcombine.high %v6993, 0.0
  %v7018 = vcombine.high %v7000, 0.0
  %v7019 = vcombine.high %v7009, 0.0
  %v7020 = vcombine.high %v7016, 0.0
  %v7021 = vcombine.low %v6925, %v6932
  %v7023 = vunpack.c.l.s4 1983009808
  %v7024 = vunpack.c.0.s8 %v7023
  %v7025 = vlaneseq
  %v7026 = vshrl.u32 %v7025, 7
  %v7027 = vsub.s32 %v7024, %v7026
  %v7028 = vrot.slane %v7021, %v7027
  %v7029 = vcombine.low %v6949, %v6950
  %v7031 = vunpack.c.l.s4 1983009808
  %v7032 = vunpack.c.0.s8 %v7031
  %v7033 = vlaneseq
  %v7034 = vshrl.u32 %v7033, 7
  %v7035 = vsub.s32 %v7032, %v7034
  %v7036 = vrot.slane %v7029, %v7035
  %v7037 = vcombine.low %v6941, %v6948
  %v7039 = vunpack.c.l.s4 1983009808
  %v7040 = vunpack.c.0.s8 %v7039
  %v7041 = vlaneseq
  %v7042 = vshrl.u32 %v7041, 7
  %v7043 = vsub.s32 %v7040, %v7042
  %v7044 = vrot.slane %v7037, %v7043
  %v7045 = vcombine.low %v6951, %v6952
  %v7047 = vunpack.c.l.s4 1983009808
  %v7048 = vunpack.c.0.s8 %v7047
  %v7049 = vlaneseq
  %v7050 = vshrl.u32 %v7049, 7
  %v7051 = vsub.s32 %v7048, %v7050
  %v7052 = vrot.slane %v7045, %v7051
  %v7053 = vcombine.low %v7028, %v7036
  %v7054 = vcombine.high %v7028, %v7036
  %v7056 = vunpack.c.l.s4 1934713408
  %v7057 = vunpack.c.0.s8 %v7056
  %v7058 = vlaneseq
  %v7059 = vshrl.u32 %v7058, 7
  %v7060 = vsub.s32 %v7057, %v7059
  %v7061 = vrot.slane %v7053, %v7060
  %v7063 = vunpack.c.l.s4 1934713408
  %v7064 = vunpack.c.0.s8 %v7063
  %v7065 = vlaneseq
  %v7066 = vshrl.u32 %v7065, 7
  %v7067 = vsub.s32 %v7064, %v7066
  %v7068 = vrot.slane %v7054, %v7067
  %v7069 = vcombine.low %v7044, %v7052
  %v7070 = vcombine.high %v7044, %v7052
  %v7072 = vunpack.c.l.s4 1934713408
  %v7073 = vunpack.c.0.s8 %v7072
  %v7074 = vlaneseq
  %v7075 = vshrl.u32 %v7074, 7
  %v7076 = vsub.s32 %v7073, %v7075
  %v7077 = vrot.slane %v7069, %v7076
  %v7079 = vunpack.c.l.s4 1934713408
  %v7080 = vunpack.c.0.s8 %v7079
  %v7081 = vlaneseq
  %v7082 = vshrl.u32 %v7081, 7
  %v7083 = vsub.s32 %v7080, %v7082
  %v7084 = vrot.slane %v7070, %v7083
  %v7085 = vcombine.low %v7061, %v7077
  %v7086 = vcombine.high %v7061, %v7077
  %v7087 = vcombine.low %v7068, %v7084
  %v7088 = vcombine.high %v7068, %v7084
  %v7089 = vcombine.low %v6993, %v7000
  %v7091 = vunpack.c.l.s4 1983009808
  %v7092 = vunpack.c.0.s8 %v7091
  %v7093 = vlaneseq
  %v7094 = vshrl.u32 %v7093, 7
  %v7095 = vsub.s32 %v7092, %v7094
  %v7096 = vrot.slane %v7089, %v7095
  %v7097 = vcombine.low %v7017, %v7018
  %v7099 = vunpack.c.l.s4 1983009808
  %v7100 = vunpack.c.0.s8 %v7099
  %v7101 = vlaneseq
  %v7102 = vshrl.u32 %v7101, 7
  %v7103 = vsub.s32 %v7100, %v7102
  %v7104 = vrot.slane %v7097, %v7103
  %v7105 = vcombine.low %v7009, %v7016
  %v7107 = vunpack.c.l.s4 1983009808
  %v7108 = vunpack.c.0.s8 %v7107
  %v7109 = vlaneseq
  %v7110 = vshrl.u32 %v7109, 7
  %v7111 = vsub.s32 %v7108, %v7110
  %v7112 = vrot.slane %v7105, %v7111
  %v7113 = vcombine.low %v7019, %v7020
  %v7115 = vunpack.c.l.s4 1983009808
  %v7116 = vunpack.c.0.s8 %v7115
  %v7117 = vlaneseq
  %v7118 = vshrl.u32 %v7117, 7
  %v7119 = vsub.s32 %v7116, %v7118
  %v7120 = vrot.slane %v7113, %v7119
  %v7121 = vcombine.low %v7096, %v7104
  %v7122 = vcombine.high %v7096, %v7104
  %v7124 = vunpack.c.l.s4 1934713408
  %v7125 = vunpack.c.0.s8 %v7124
  %v7126 = vlaneseq
  %v7127 = vshrl.u32 %v7126, 7
  %v7128 = vsub.s32 %v7125, %v7127
  %v7129 = vrot.slane %v7121, %v7128
  %v7131 = vunpack.c.l.s4 1934713408
  %v7132 = vunpack.c.0.s8 %v7131
  %v7133 = vlaneseq
  %v7134 = vshrl.u32 %v7133, 7
  %v7135 = vsub.s32 %v7132, %v7134
  %v7136 = vrot.slane %v7122, %v7135
  %v7137 = vcombine.low %v7112, %v7120
  %v7138 = vcombine.high %v7112, %v7120
  %v7140 = vunpack.c.l.s4 1934713408
  %v7141 = vunpack.c.0.s8 %v7140
  %v7142 = vlaneseq
  %v7143 = vshrl.u32 %v7142, 7
  %v7144 = vsub.s32 %v7141, %v7143
  %v7145 = vrot.slane %v7137, %v7144
  %v7147 = vunpack.c.l.s4 1934713408
  %v7148 = vunpack.c.0.s8 %v7147
  %v7149 = vlaneseq
  %v7150 = vshrl.u32 %v7149, 7
  %v7151 = vsub.s32 %v7148, %v7150
  %v7152 = vrot.slane %v7138, %v7151
  %v7153 = vcombine.low %v7129, %v7145
  %v7154 = vcombine.high %v7129, %v7145
  %v7155 = vcombine.low %v7136, %v7152
  %v7156 = vcombine.high %v7136, %v7152
  %v7158 = vsel %vm1153, %v6493, 0
  %v7161 = vsel %vm1153, %v6789, 0
  %7163 = vmatprep.subr.mxu0 0.0
  %7164 = vmatpush1.xpose.msra.mxu0 %v7161
  %7165 = vmatprep.subr.mxu0 0.0
  %7166 = vmatpush1.xpose.msra.mxu0 0.0
  %7167 = vmatprep.subr.mxu0 0.0
  %7168 = vmatpush1.xpose.msra.mxu0 0.0
  %7169 = vmatprep.subr.mxu0 0.0
  %7170 = vmatpush1.xpose.msra.mxu0 0.0
  %7171 = vmatprep.subr.mxu0 0.0
  %7172 = vmatpush1.xpose.msra.mxu0 0.0
  %7173 = vmatprep.subr.mxu0 0.0
  %7174 = vmatpush1.xpose.msra.mxu0 0.0
  %7175 = vmatprep.subr.mxu0 0.0
  %7176 = vmatpush1.xpose.msra.mxu0 0.0
  %7177 = vmatprep.subr.mxu0 0.0
  %7178 = vmatpush1.xpose.msra.mxu0 0.0
  %7179 = vmatprep.subr.mxu0 0.0
  %7180 = vmatpush1.xpose.msra.mxu0 0.0
  %7181 = vmatprep.subr.mxu0 0.0
  %7182 = vmatpush1.xpose.msra.mxu0 0.0
  %7183 = vmatprep.subr.mxu0 0.0
  %7184 = vmatpush1.xpose.msra.mxu0 0.0
  %7185 = vmatprep.subr.mxu0 0.0
  %7186 = vmatpush1.xpose.msra.mxu0 0.0
  %7187 = vmatprep.subr.mxu0 0.0
  %7188 = vmatpush1.xpose.msra.mxu0 0.0
  %7189 = vmatprep.subr.mxu0 0.0
  %7190 = vmatpush1.xpose.msra.mxu0 0.0
  %7191 = vmatprep.subr.mxu0 0.0
  %7192 = vmatpush1.xpose.msra.mxu0 0.0
  %7193 = vmatprep.subr.mxu0 0.0
  %7194 = vmatpush1.xpose.msra.mxu0 0.0
  %7195 = vmatprep.subr.mxu0 0.0
  %7196 = vmatpush1.xpose.msra.mxu0 0.0
  %7197 = vmatprep.subr.mxu0 0.0
  %7198 = vmatpush1.xpose.msra.mxu0 0.0
  %7199 = vmatprep.subr.mxu0 0.0
  %7200 = vmatpush1.xpose.msra.mxu0 0.0
  %7201 = vmatprep.subr.mxu0 0.0
  %7202 = vmatpush1.xpose.msra.mxu0 0.0
  %7203 = vmatprep.subr.mxu0 0.0
  %7204 = vmatpush1.xpose.msra.mxu0 0.0
  %7205 = vmatprep.subr.mxu0 0.0
  %7206 = vmatpush1.xpose.msra.mxu0 0.0
  %7207 = vmatprep.subr.mxu0 0.0
  %7208 = vmatpush1.xpose.msra.mxu0 0.0
  %7209 = vmatprep.subr.mxu0 0.0
  %7210 = vmatpush1.xpose.msra.mxu0 0.0
  %7211 = vmatprep.subr.mxu0 0.0
  %7212 = vmatpush1.xpose.msra.mxu0 0.0
  %7213 = vmatprep.subr.mxu0 0.0
  %7214 = vmatpush1.xpose.msra.mxu0 0.0
  %7215 = vmatprep.subr.mxu0 0.0
  %7216 = vmatpush1.xpose.msra.mxu0 0.0
  %7217 = vmatprep.subr.mxu0 0.0
  %7218 = vmatpush1.xpose.msra.mxu0 0.0
  %7219 = vmatprep.subr.mxu0 0.0
  %7220 = vmatpush1.xpose.msra.mxu0 0.0
  %7221 = vmatprep.subr.mxu0 0.0
  %7222 = vmatpush1.xpose.msra.mxu0 0.0
  %7223 = vmatprep.subr.mxu0 0.0
  %7224 = vmatpush1.xpose.msra.mxu0 0.0
  %7225 = vmatprep.subr.mxu0 0.0
  %7226 = vmatpush1.xpose.msra.mxu0 0.0
  %7227 = vmatprep.mubr.f32.mxu0 0.0
  %7228 = vmatmul.mubr.f32.gmra.mrb[0].mxu0 %v7158
  %v7229 = vpop.f32.mrb[0].mxu0
  %v7230 = vadd.f32 0.0, %v7229
  %v7231 = vpop.f32.mrb[0].mxu0
  %7232 = vdwg.mxu0
  %v7234 = vsel %vm1153, %v6494, 0
  %v7237 = vsel %vm1153, %v6790, 0
  %7239 = vmatprep.subr.mxu0 0.0
  %7240 = vmatpush1.xpose.msra.mxu0 %v7237
  %7241 = vmatprep.subr.mxu0 0.0
  %7242 = vmatpush1.xpose.msra.mxu0 0.0
  %7243 = vmatprep.subr.mxu0 0.0
  %7244 = vmatpush1.xpose.msra.mxu0 0.0
  %7245 = vmatprep.subr.mxu0 0.0
  %7246 = vmatpush1.xpose.msra.mxu0 0.0
  %7247 = vmatprep.subr.mxu0 0.0
  %7248 = vmatpush1.xpose.msra.mxu0 0.0
  %7249 = vmatprep.subr.mxu0 0.0
  %7250 = vmatpush1.xpose.msra.mxu0 0.0
  %7251 = vmatprep.subr.mxu0 0.0
  %7252 = vmatpush1.xpose.msra.mxu0 0.0
  %7253 = vmatprep.subr.mxu0 0.0
  %7254 = vmatpush1.xpose.msra.mxu0 0.0
  %7255 = vmatprep.subr.mxu0 0.0
  %7256 = vmatpush1.xpose.msra.mxu0 0.0
  %7257 = vmatprep.subr.mxu0 0.0
  %7258 = vmatpush1.xpose.msra.mxu0 0.0
  %7259 = vmatprep.subr.mxu0 0.0
  %7260 = vmatpush1.xpose.msra.mxu0 0.0
  %7261 = vmatprep.subr.mxu0 0.0
  %7262 = vmatpush1.xpose.msra.mxu0 0.0
  %7263 = vmatprep.subr.mxu0 0.0
  %7264 = vmatpush1.xpose.msra.mxu0 0.0
  %7265 = vmatprep.subr.mxu0 0.0
  %7266 = vmatpush1.xpose.msra.mxu0 0.0
  %7267 = vmatprep.subr.mxu0 0.0
  %7268 = vmatpush1.xpose.msra.mxu0 0.0
  %7269 = vmatprep.subr.mxu0 0.0
  %7270 = vmatpush1.xpose.msra.mxu0 0.0
  %7271 = vmatprep.subr.mxu0 0.0
  %7272 = vmatpush1.xpose.msra.mxu0 0.0
  %7273 = vmatprep.subr.mxu0 0.0
  %7274 = vmatpush1.xpose.msra.mxu0 0.0
  %7275 = vmatprep.subr.mxu0 0.0
  %7276 = vmatpush1.xpose.msra.mxu0 0.0
  %7277 = vmatprep.subr.mxu0 0.0
  %7278 = vmatpush1.xpose.msra.mxu0 0.0
  %7279 = vmatprep.subr.mxu0 0.0
  %7280 = vmatpush1.xpose.msra.mxu0 0.0
  %7281 = vmatprep.subr.mxu0 0.0
  %7282 = vmatpush1.xpose.msra.mxu0 0.0
  %7283 = vmatprep.subr.mxu0 0.0
  %7284 = vmatpush1.xpose.msra.mxu0 0.0
  %7285 = vmatprep.subr.mxu0 0.0
  %7286 = vmatpush1.xpose.msra.mxu0 0.0
  %7287 = vmatprep.subr.mxu0 0.0
  %7288 = vmatpush1.xpose.msra.mxu0 0.0
  %7289 = vmatprep.subr.mxu0 0.0
  %7290 = vmatpush1.xpose.msra.mxu0 0.0
  %7291 = vmatprep.subr.mxu0 0.0
  %7292 = vmatpush1.xpose.msra.mxu0 0.0
  %7293 = vmatprep.subr.mxu0 0.0
  %7294 = vmatpush1.xpose.msra.mxu0 0.0
  %7295 = vmatprep.subr.mxu0 0.0
  %7296 = vmatpush1.xpose.msra.mxu0 0.0
  %7297 = vmatprep.subr.mxu0 0.0
  %7298 = vmatpush1.xpose.msra.mxu0 0.0
  %7299 = vmatprep.subr.mxu0 0.0
  %7300 = vmatpush1.xpose.msra.mxu0 0.0
  %7301 = vmatprep.subr.mxu0 0.0
  %7302 = vmatpush1.xpose.msra.mxu0 0.0
  %7303 = vmatprep.mubr.f32.mxu0 0.0
  %7304 = vmatmul.mubr.f32.gmra.mrb[0].mxu0 %v7234
  %v7305 = vpop.f32.mrb[0].mxu0
  %v7306 = vadd.f32 0.0, %v7305
  %v7307 = vpop.f32.mrb[0].mxu0
  %7308 = vdwg.mxu0
  %v7310 = vsel %vm1153, %v6495, 0
  %v7313 = vsel %vm1153, %v6791, 0
  %7315 = vmatprep.subr.mxu0 0.0
  %7316 = vmatpush1.xpose.msra.mxu0 %v7313
  %7317 = vmatprep.subr.mxu0 0.0
  %7318 = vmatpush1.xpose.msra.mxu0 0.0
  %7319 = vmatprep.subr.mxu0 0.0
  %7320 = vmatpush1.xpose.msra.mxu0 0.0
  %7321 = vmatprep.subr.mxu0 0.0
  %7322 = vmatpush1.xpose.msra.mxu0 0.0
  %7323 = vmatprep.subr.mxu0 0.0
  %7324 = vmatpush1.xpose.msra.mxu0 0.0
  %7325 = vmatprep.subr.mxu0 0.0
  %7326 = vmatpush1.xpose.msra.mxu0 0.0
  %7327 = vmatprep.subr.mxu0 0.0
  %7328 = vmatpush1.xpose.msra.mxu0 0.0
  %7329 = vmatprep.subr.mxu0 0.0
  %7330 = vmatpush1.xpose.msra.mxu0 0.0
  %7331 = vmatprep.subr.mxu0 0.0
  %7332 = vmatpush1.xpose.msra.mxu0 0.0
  %7333 = vmatprep.subr.mxu0 0.0
  %7334 = vmatpush1.xpose.msra.mxu0 0.0
  %7335 = vmatprep.subr.mxu0 0.0
  %7336 = vmatpush1.xpose.msra.mxu0 0.0
  %7337 = vmatprep.subr.mxu0 0.0
  %7338 = vmatpush1.xpose.msra.mxu0 0.0
  %7339 = vmatprep.subr.mxu0 0.0
  %7340 = vmatpush1.xpose.msra.mxu0 0.0
  %7341 = vmatprep.subr.mxu0 0.0
  %7342 = vmatpush1.xpose.msra.mxu0 0.0
  %7343 = vmatprep.subr.mxu0 0.0
  %7344 = vmatpush1.xpose.msra.mxu0 0.0
  %7345 = vmatprep.subr.mxu0 0.0
  %7346 = vmatpush1.xpose.msra.mxu0 0.0
  %7347 = vmatprep.subr.mxu0 0.0
  %7348 = vmatpush1.xpose.msra.mxu0 0.0
  %7349 = vmatprep.subr.mxu0 0.0
  %7350 = vmatpush1.xpose.msra.mxu0 0.0
  %7351 = vmatprep.subr.mxu0 0.0
  %7352 = vmatpush1.xpose.msra.mxu0 0.0
  %7353 = vmatprep.subr.mxu0 0.0
  %7354 = vmatpush1.xpose.msra.mxu0 0.0
  %7355 = vmatprep.subr.mxu0 0.0
  %7356 = vmatpush1.xpose.msra.mxu0 0.0
  %7357 = vmatprep.subr.mxu0 0.0
  %7358 = vmatpush1.xpose.msra.mxu0 0.0
  %7359 = vmatprep.subr.mxu0 0.0
  %7360 = vmatpush1.xpose.msra.mxu0 0.0
  %7361 = vmatprep.subr.mxu0 0.0
  %7362 = vmatpush1.xpose.msra.mxu0 0.0
  %7363 = vmatprep.subr.mxu0 0.0
  %7364 = vmatpush1.xpose.msra.mxu0 0.0
  %7365 = vmatprep.subr.mxu0 0.0
  %7366 = vmatpush1.xpose.msra.mxu0 0.0
  %7367 = vmatprep.subr.mxu0 0.0
  %7368 = vmatpush1.xpose.msra.mxu0 0.0
  %7369 = vmatprep.subr.mxu0 0.0
  %7370 = vmatpush1.xpose.msra.mxu0 0.0
  %7371 = vmatprep.subr.mxu0 0.0
  %7372 = vmatpush1.xpose.msra.mxu0 0.0
  %7373 = vmatprep.subr.mxu0 0.0
  %7374 = vmatpush1.xpose.msra.mxu0 0.0
  %7375 = vmatprep.subr.mxu0 0.0
  %7376 = vmatpush1.xpose.msra.mxu0 0.0
  %7377 = vmatprep.subr.mxu0 0.0
  %7378 = vmatpush1.xpose.msra.mxu0 0.0
  %7379 = vmatprep.mubr.f32.mxu0 0.0
  %7380 = vmatmul.mubr.f32.gmra.mrb[0].mxu0 %v7310
  %v7381 = vpop.f32.mrb[0].mxu0
  %v7382 = vadd.f32 0.0, %v7381
  %v7383 = vpop.f32.mrb[0].mxu0
  %7384 = vdwg.mxu0
  %v7386 = vsel %vm1153, %v6496, 0
  %v7389 = vsel %vm1153, %v6792, 0
  %7391 = vmatprep.subr.mxu0 0.0
  %7392 = vmatpush1.xpose.msra.mxu0 %v7389
  %7393 = vmatprep.subr.mxu0 0.0
  %7394 = vmatpush1.xpose.msra.mxu0 0.0
  %7395 = vmatprep.subr.mxu0 0.0
  %7396 = vmatpush1.xpose.msra.mxu0 0.0
  %7397 = vmatprep.subr.mxu0 0.0
  %7398 = vmatpush1.xpose.msra.mxu0 0.0
  %7399 = vmatprep.subr.mxu0 0.0
  %7400 = vmatpush1.xpose.msra.mxu0 0.0
  %7401 = vmatprep.subr.mxu0 0.0
  %7402 = vmatpush1.xpose.msra.mxu0 0.0
  %7403 = vmatprep.subr.mxu0 0.0
  %7404 = vmatpush1.xpose.msra.mxu0 0.0
  %7405 = vmatprep.subr.mxu0 0.0
  %7406 = vmatpush1.xpose.msra.mxu0 0.0
  %7407 = vmatprep.subr.mxu0 0.0
  %7408 = vmatpush1.xpose.msra.mxu0 0.0
  %7409 = vmatprep.subr.mxu0 0.0
  %7410 = vmatpush1.xpose.msra.mxu0 0.0
  %7411 = vmatprep.subr.mxu0 0.0
  %7412 = vmatpush1.xpose.msra.mxu0 0.0
  %7413 = vmatprep.subr.mxu0 0.0
  %7414 = vmatpush1.xpose.msra.mxu0 0.0
  %7415 = vmatprep.subr.mxu0 0.0
  %7416 = vmatpush1.xpose.msra.mxu0 0.0
  %7417 = vmatprep.subr.mxu0 0.0
  %7418 = vmatpush1.xpose.msra.mxu0 0.0
  %7419 = vmatprep.subr.mxu0 0.0
  %7420 = vmatpush1.xpose.msra.mxu0 0.0
  %7421 = vmatprep.subr.mxu0 0.0
  %7422 = vmatpush1.xpose.msra.mxu0 0.0
  %7423 = vmatprep.subr.mxu0 0.0
  %7424 = vmatpush1.xpose.msra.mxu0 0.0
  %7425 = vmatprep.subr.mxu0 0.0
  %7426 = vmatpush1.xpose.msra.mxu0 0.0
  %7427 = vmatprep.subr.mxu0 0.0
  %7428 = vmatpush1.xpose.msra.mxu0 0.0
  %7429 = vmatprep.subr.mxu0 0.0
  %7430 = vmatpush1.xpose.msra.mxu0 0.0
  %7431 = vmatprep.subr.mxu0 0.0
  %7432 = vmatpush1.xpose.msra.mxu0 0.0
  %7433 = vmatprep.subr.mxu0 0.0
  %7434 = vmatpush1.xpose.msra.mxu0 0.0
  %7435 = vmatprep.subr.mxu0 0.0
  %7436 = vmatpush1.xpose.msra.mxu0 0.0
  %7437 = vmatprep.subr.mxu0 0.0
  %7438 = vmatpush1.xpose.msra.mxu0 0.0
  %7439 = vmatprep.subr.mxu0 0.0
  %7440 = vmatpush1.xpose.msra.mxu0 0.0
  %7441 = vmatprep.subr.mxu0 0.0
  %7442 = vmatpush1.xpose.msra.mxu0 0.0
  %7443 = vmatprep.subr.mxu0 0.0
  %7444 = vmatpush1.xpose.msra.mxu0 0.0
  %7445 = vmatprep.subr.mxu0 0.0
  %7446 = vmatpush1.xpose.msra.mxu0 0.0
  %7447 = vmatprep.subr.mxu0 0.0
  %7448 = vmatpush1.xpose.msra.mxu0 0.0
  %7449 = vmatprep.subr.mxu0 0.0
  %7450 = vmatpush1.xpose.msra.mxu0 0.0
  %7451 = vmatprep.subr.mxu0 0.0
  %7452 = vmatpush1.xpose.msra.mxu0 0.0
  %7453 = vmatprep.subr.mxu0 0.0
  %7454 = vmatpush1.xpose.msra.mxu0 0.0
  %7455 = vmatprep.mubr.f32.mxu0 0.0
  %7456 = vmatmul.mubr.f32.gmra.mrb[0].mxu0 %v7386
  %v7457 = vpop.f32.mrb[0].mxu0
  %v7458 = vadd.f32 0.0, %v7457
  %v7459 = vpop.f32.mrb[0].mxu0
  %7460 = vdwg.mxu0
  %v7462 = vsel %vm1153, %v6561, 0
  %v7465 = vsel %vm1153, %v6857, 0
  %7467 = vmatprep.subr.mxu0 0.0
  %7468 = vmatpush1.xpose.msra.mxu0 %v7465
  %7469 = vmatprep.subr.mxu0 0.0
  %7470 = vmatpush1.xpose.msra.mxu0 0.0
  %7471 = vmatprep.subr.mxu0 0.0
  %7472 = vmatpush1.xpose.msra.mxu0 0.0
  %7473 = vmatprep.subr.mxu0 0.0
  %7474 = vmatpush1.xpose.msra.mxu0 0.0
  %7475 = vmatprep.subr.mxu0 0.0
  %7476 = vmatpush1.xpose.msra.mxu0 0.0
  %7477 = vmatprep.subr.mxu0 0.0
  %7478 = vmatpush1.xpose.msra.mxu0 0.0
  %7479 = vmatprep.subr.mxu0 0.0
  %7480 = vmatpush1.xpose.msra.mxu0 0.0
  %7481 = vmatprep.subr.mxu0 0.0
  %7482 = vmatpush1.xpose.msra.mxu0 0.0
  %7483 = vmatprep.subr.mxu0 0.0
  %7484 = vmatpush1.xpose.msra.mxu0 0.0
  %7485 = vmatprep.subr.mxu0 0.0
  %7486 = vmatpush1.xpose.msra.mxu0 0.0
  %7487 = vmatprep.subr.mxu0 0.0
  %7488 = vmatpush1.xpose.msra.mxu0 0.0
  %7489 = vmatprep.subr.mxu0 0.0
  %7490 = vmatpush1.xpose.msra.mxu0 0.0
  %7491 = vmatprep.subr.mxu0 0.0
  %7492 = vmatpush1.xpose.msra.mxu0 0.0
  %7493 = vmatprep.subr.mxu0 0.0
  %7494 = vmatpush1.xpose.msra.mxu0 0.0
  %7495 = vmatprep.subr.mxu0 0.0
  %7496 = vmatpush1.xpose.msra.mxu0 0.0
  %7497 = vmatprep.subr.mxu0 0.0
  %7498 = vmatpush1.xpose.msra.mxu0 0.0
  %7499 = vmatprep.subr.mxu0 0.0
  %7500 = vmatpush1.xpose.msra.mxu0 0.0
  %7501 = vmatprep.subr.mxu0 0.0
  %7502 = vmatpush1.xpose.msra.mxu0 0.0
  %7503 = vmatprep.subr.mxu0 0.0
  %7504 = vmatpush1.xpose.msra.mxu0 0.0
  %7505 = vmatprep.subr.mxu0 0.0
  %7506 = vmatpush1.xpose.msra.mxu0 0.0
  %7507 = vmatprep.subr.mxu0 0.0
  %7508 = vmatpush1.xpose.msra.mxu0 0.0
  %7509 = vmatprep.subr.mxu0 0.0
  %7510 = vmatpush1.xpose.msra.mxu0 0.0
  %7511 = vmatprep.subr.mxu0 0.0
  %7512 = vmatpush1.xpose.msra.mxu0 0.0
  %7513 = vmatprep.subr.mxu0 0.0
  %7514 = vmatpush1.xpose.msra.mxu0 0.0
  %7515 = vmatprep.subr.mxu0 0.0
  %7516 = vmatpush1.xpose.msra.mxu0 0.0
  %7517 = vmatprep.subr.mxu0 0.0
  %7518 = vmatpush1.xpose.msra.mxu0 0.0
  %7519 = vmatprep.subr.mxu0 0.0
  %7520 = vmatpush1.xpose.msra.mxu0 0.0
  %7521 = vmatprep.subr.mxu0 0.0
  %7522 = vmatpush1.xpose.msra.mxu0 0.0
  %7523 = vmatprep.subr.mxu0 0.0
  %7524 = vmatpush1.xpose.msra.mxu0 0.0
  %7525 = vmatprep.subr.mxu0 0.0
  %7526 = vmatpush1.xpose.msra.mxu0 0.0
  %7527 = vmatprep.subr.mxu0 0.0
  %7528 = vmatpush1.xpose.msra.mxu0 0.0
  %7529 = vmatprep.subr.mxu0 0.0
  %7530 = vmatpush1.xpose.msra.mxu0 0.0
  %7531 = vmatprep.mubr.f32.mxu0 0.0
  %7532 = vmatmul.mubr.f32.gmra.mrb[0].mxu0 %v7462
  %v7533 = vpop.f32.mrb[0].mxu0
  %v7534 = vadd.f32 0.0, %v7533
  %v7535 = vpop.f32.mrb[0].mxu0
  %7536 = vdwg.mxu0
  %v7538 = vsel %vm1153, %v6562, 0
  %v7541 = vsel %vm1153, %v6858, 0
  %7543 = vmatprep.subr.mxu0 0.0
  %7544 = vmatpush1.xpose.msra.mxu0 %v7541
  %7545 = vmatprep.subr.mxu0 0.0
  %7546 = vmatpush1.xpose.msra.mxu0 0.0
  %7547 = vmatprep.subr.mxu0 0.0
  %7548 = vmatpush1.xpose.msra.mxu0 0.0
  %7549 = vmatprep.subr.mxu0 0.0
  %7550 = vmatpush1.xpose.msra.mxu0 0.0
  %7551 = vmatprep.subr.mxu0 0.0
  %7552 = vmatpush1.xpose.msra.mxu0 0.0
  %7553 = vmatprep.subr.mxu0 0.0
  %7554 = vmatpush1.xpose.msra.mxu0 0.0
  %7555 = vmatprep.subr.mxu0 0.0
  %7556 = vmatpush1.xpose.msra.mxu0 0.0
  %7557 = vmatprep.subr.mxu0 0.0
  %7558 = vmatpush1.xpose.msra.mxu0 0.0
  %7559 = vmatprep.subr.mxu0 0.0
  %7560 = vmatpush1.xpose.msra.mxu0 0.0
  %7561 = vmatprep.subr.mxu0 0.0
  %7562 = vmatpush1.xpose.msra.mxu0 0.0
  %7563 = vmatprep.subr.mxu0 0.0
  %7564 = vmatpush1.xpose.msra.mxu0 0.0
  %7565 = vmatprep.subr.mxu0 0.0
  %7566 = vmatpush1.xpose.msra.mxu0 0.0
  %7567 = vmatprep.subr.mxu0 0.0
  %7568 = vmatpush1.xpose.msra.mxu0 0.0
  %7569 = vmatprep.subr.mxu0 0.0
  %7570 = vmatpush1.xpose.msra.mxu0 0.0
  %7571 = vmatprep.subr.mxu0 0.0
  %7572 = vmatpush1.xpose.msra.mxu0 0.0
  %7573 = vmatprep.subr.mxu0 0.0
  %7574 = vmatpush1.xpose.msra.mxu0 0.0
  %7575 = vmatprep.subr.mxu0 0.0
  %7576 = vmatpush1.xpose.msra.mxu0 0.0
  %7577 = vmatprep.subr.mxu0 0.0
  %7578 = vmatpush1.xpose.msra.mxu0 0.0
  %7579 = vmatprep.subr.mxu0 0.0
  %7580 = vmatpush1.xpose.msra.mxu0 0.0
  %7581 = vmatprep.subr.mxu0 0.0
  %7582 = vmatpush1.xpose.msra.mxu0 0.0
  %7583 = vmatprep.subr.mxu0 0.0
  %7584 = vmatpush1.xpose.msra.mxu0 0.0
  %7585 = vmatprep.subr.mxu0 0.0
  %7586 = vmatpush1.xpose.msra.mxu0 0.0
  %7587 = vmatprep.subr.mxu0 0.0
  %7588 = vmatpush1.xpose.msra.mxu0 0.0
  %7589 = vmatprep.subr.mxu0 0.0
  %7590 = vmatpush1.xpose.msra.mxu0 0.0
  %7591 = vmatprep.subr.mxu0 0.0
  %7592 = vmatpush1.xpose.msra.mxu0 0.0
  %7593 = vmatprep.subr.mxu0 0.0
  %7594 = vmatpush1.xpose.msra.mxu0 0.0
  %7595 = vmatprep.subr.mxu0 0.0
  %7596 = vmatpush1.xpose.msra.mxu0 0.0
  %7597 = vmatprep.subr.mxu0 0.0
  %7598 = vmatpush1.xpose.msra.mxu0 0.0
  %7599 = vmatprep.subr.mxu0 0.0
  %7600 = vmatpush1.xpose.msra.mxu0 0.0
  %7601 = vmatprep.subr.mxu0 0.0
  %7602 = vmatpush1.xpose.msra.mxu0 0.0
  %7603 = vmatprep.subr.mxu0 0.0
  %7604 = vmatpush1.xpose.msra.mxu0 0.0
  %7605 = vmatprep.subr.mxu0 0.0
  %7606 = vmatpush1.xpose.msra.mxu0 0.0
  %7607 = vmatprep.mubr.f32.mxu0 0.0
  %7608 = vmatmul.mubr.f32.gmra.mrb[0].mxu0 %v7538
  %v7609 = vpop.f32.mrb[0].mxu0
  %v7610 = vadd.f32 0.0, %v7609
  %v7611 = vpop.f32.mrb[0].mxu0
  %7612 = vdwg.mxu0
  %v7614 = vsel %vm1153, %v6563, 0
  %v7617 = vsel %vm1153, %v6859, 0
  %7619 = vmatprep.subr.mxu0 0.0
  %7620 = vmatpush1.xpose.msra.mxu0 %v7617
  %7621 = vmatprep.subr.mxu0 0.0
  %7622 = vmatpush1.xpose.msra.mxu0 0.0
  %7623 = vmatprep.subr.mxu0 0.0
  %7624 = vmatpush1.xpose.msra.mxu0 0.0
  %7625 = vmatprep.subr.mxu0 0.0
  %7626 = vmatpush1.xpose.msra.mxu0 0.0
  %7627 = vmatprep.subr.mxu0 0.0
  %7628 = vmatpush1.xpose.msra.mxu0 0.0
  %7629 = vmatprep.subr.mxu0 0.0
  %7630 = vmatpush1.xpose.msra.mxu0 0.0
  %7631 = vmatprep.subr.mxu0 0.0
  %7632 = vmatpush1.xpose.msra.mxu0 0.0
  %7633 = vmatprep.subr.mxu0 0.0
  %7634 = vmatpush1.xpose.msra.mxu0 0.0
  %7635 = vmatprep.subr.mxu0 0.0
  %7636 = vmatpush1.xpose.msra.mxu0 0.0
  %7637 = vmatprep.subr.mxu0 0.0
  %7638 = vmatpush1.xpose.msra.mxu0 0.0
  %7639 = vmatprep.subr.mxu0 0.0
  %7640 = vmatpush1.xpose.msra.mxu0 0.0
  %7641 = vmatprep.subr.mxu0 0.0
  %7642 = vmatpush1.xpose.msra.mxu0 0.0
  %7643 = vmatprep.subr.mxu0 0.0
  %7644 = vmatpush1.xpose.msra.mxu0 0.0
  %7645 = vmatprep.subr.mxu0 0.0
  %7646 = vmatpush1.xpose.msra.mxu0 0.0
  %7647 = vmatprep.subr.mxu0 0.0
  %7648 = vmatpush1.xpose.msra.mxu0 0.0
  %7649 = vmatprep.subr.mxu0 0.0
  %7650 = vmatpush1.xpose.msra.mxu0 0.0
  %7651 = vmatprep.subr.mxu0 0.0
  %7652 = vmatpush1.xpose.msra.mxu0 0.0
  %7653 = vmatprep.subr.mxu0 0.0
  %7654 = vmatpush1.xpose.msra.mxu0 0.0
  %7655 = vmatprep.subr.mxu0 0.0
  %7656 = vmatpush1.xpose.msra.mxu0 0.0
  %7657 = vmatprep.subr.mxu0 0.0
  %7658 = vmatpush1.xpose.msra.mxu0 0.0
  %7659 = vmatprep.subr.mxu0 0.0
  %7660 = vmatpush1.xpose.msra.mxu0 0.0
  %7661 = vmatprep.subr.mxu0 0.0
  %7662 = vmatpush1.xpose.msra.mxu0 0.0
  %7663 = vmatprep.subr.mxu0 0.0
  %7664 = vmatpush1.xpose.msra.mxu0 0.0
  %7665 = vmatprep.subr.mxu0 0.0
  %7666 = vmatpush1.xpose.msra.mxu0 0.0
  %7667 = vmatprep.subr.mxu0 0.0
  %7668 = vmatpush1.xpose.msra.mxu0 0.0
  %7669 = vmatprep.subr.mxu0 0.0
  %7670 = vmatpush1.xpose.msra.mxu0 0.0
  %7671 = vmatprep.subr.mxu0 0.0
  %7672 = vmatpush1.xpose.msra.mxu0 0.0
  %7673 = vmatprep.subr.mxu0 0.0
  %7674 = vmatpush1.xpose.msra.mxu0 0.0
  %7675 = vmatprep.subr.mxu0 0.0
  %7676 = vmatpush1.xpose.msra.mxu0 0.0
  %7677 = vmatprep.subr.mxu0 0.0
  %7678 = vmatpush1.xpose.msra.mxu0 0.0
  %7679 = vmatprep.subr.mxu0 0.0
  %7680 = vmatpush1.xpose.msra.mxu0 0.0
  %7681 = vmatprep.subr.mxu0 0.0
  %7682 = vmatpush1.xpose.msra.mxu0 0.0
  %7683 = vmatprep.mubr.f32.mxu0 0.0
  %7684 = vmatmul.mubr.f32.gmra.mrb[0].mxu0 %v7614
  %v7685 = vpop.f32.mrb[0].mxu0
  %v7686 = vadd.f32 0.0, %v7685
  %v7687 = vpop.f32.mrb[0].mxu0
  %7688 = vdwg.mxu0
  %v7690 = vsel %vm1153, %v6564, 0
  %v7693 = vsel %vm1153, %v6860, 0
  %7695 = vmatprep.subr.mxu0 0.0
  %7696 = vmatpush1.xpose.msra.mxu0 %v7693
  %7697 = vmatprep.subr.mxu0 0.0
  %7698 = vmatpush1.xpose.msra.mxu0 0.0
  %7699 = vmatprep.subr.mxu0 0.0
  %7700 = vmatpush1.xpose.msra.mxu0 0.0
  %7701 = vmatprep.subr.mxu0 0.0
  %7702 = vmatpush1.xpose.msra.mxu0 0.0
  %7703 = vmatprep.subr.mxu0 0.0
  %7704 = vmatpush1.xpose.msra.mxu0 0.0
  %7705 = vmatprep.subr.mxu0 0.0
  %7706 = vmatpush1.xpose.msra.mxu0 0.0
  %7707 = vmatprep.subr.mxu0 0.0
  %7708 = vmatpush1.xpose.msra.mxu0 0.0
  %7709 = vmatprep.subr.mxu0 0.0
  %7710 = vmatpush1.xpose.msra.mxu0 0.0
  %7711 = vmatprep.subr.mxu0 0.0
  %7712 = vmatpush1.xpose.msra.mxu0 0.0
  %7713 = vmatprep.subr.mxu0 0.0
  %7714 = vmatpush1.xpose.msra.mxu0 0.0
  %7715 = vmatprep.subr.mxu0 0.0
  %7716 = vmatpush1.xpose.msra.mxu0 0.0
  %7717 = vmatprep.subr.mxu0 0.0
  %7718 = vmatpush1.xpose.msra.mxu0 0.0
  %7719 = vmatprep.subr.mxu0 0.0
  %7720 = vmatpush1.xpose.msra.mxu0 0.0
  %7721 = vmatprep.subr.mxu0 0.0
  %7722 = vmatpush1.xpose.msra.mxu0 0.0
  %7723 = vmatprep.subr.mxu0 0.0
  %7724 = vmatpush1.xpose.msra.mxu0 0.0
  %7725 = vmatprep.subr.mxu0 0.0
  %7726 = vmatpush1.xpose.msra.mxu0 0.0
  %7727 = vmatprep.subr.mxu0 0.0
  %7728 = vmatpush1.xpose.msra.mxu0 0.0
  %7729 = vmatprep.subr.mxu0 0.0
  %7730 = vmatpush1.xpose.msra.mxu0 0.0
  %7731 = vmatprep.subr.mxu0 0.0
  %7732 = vmatpush1.xpose.msra.mxu0 0.0
  %7733 = vmatprep.subr.mxu0 0.0
  %7734 = vmatpush1.xpose.msra.mxu0 0.0
  %7735 = vmatprep.subr.mxu0 0.0
  %7736 = vmatpush1.xpose.msra.mxu0 0.0
  %7737 = vmatprep.subr.mxu0 0.0
  %7738 = vmatpush1.xpose.msra.mxu0 0.0
  %7739 = vmatprep.subr.mxu0 0.0
  %7740 = vmatpush1.xpose.msra.mxu0 0.0
  %7741 = vmatprep.subr.mxu0 0.0
  %7742 = vmatpush1.xpose.msra.mxu0 0.0
  %7743 = vmatprep.subr.mxu0 0.0
  %7744 = vmatpush1.xpose.msra.mxu0 0.0
  %7745 = vmatprep.subr.mxu0 0.0
  %7746 = vmatpush1.xpose.msra.mxu0 0.0
  %7747 = vmatprep.subr.mxu0 0.0
  %7748 = vmatpush1.xpose.msra.mxu0 0.0
  %7749 = vmatprep.subr.mxu0 0.0
  %7750 = vmatpush1.xpose.msra.mxu0 0.0
  %7751 = vmatprep.subr.mxu0 0.0
  %7752 = vmatpush1.xpose.msra.mxu0 0.0
  %7753 = vmatprep.subr.mxu0 0.0
  %7754 = vmatpush1.xpose.msra.mxu0 0.0
  %7755 = vmatprep.subr.mxu0 0.0
  %7756 = vmatpush1.xpose.msra.mxu0 0.0
  %7757 = vmatprep.subr.mxu0 0.0
  %7758 = vmatpush1.xpose.msra.mxu0 0.0
  %7759 = vmatprep.mubr.f32.mxu0 0.0
  %7760 = vmatmul.mubr.f32.gmra.mrb[0].mxu0 %v7690
  %v7761 = vpop.f32.mrb[0].mxu0
  %v7762 = vadd.f32 0.0, %v7761
  %v7763 = vpop.f32.mrb[0].mxu0
  %7764 = vdwg.mxu0
  %v7765 = vmul.f32 %v7230, 0.35355338
  %v7766 = vmul.f32 %v7306, 0.35355338
  %v7767 = vmul.f32 %v7382, 0.35355338
  %v7768 = vmul.f32 %v7458, 0.35355338
  %v7769 = vmul.f32 %v7534, 0.35355338
  %v7770 = vmul.f32 %v7610, 0.35355338
  %v7771 = vmul.f32 %v7686, 0.35355338
  %v7772 = vmul.f32 %v7762, 0.35355338
  %v7773 = vadd.f32 %v7765, %v26
  %v7774 = vadd.f32 %v7766, %v26
  %v7775 = vadd.f32 %v7767, %v26
  %v7776 = vadd.f32 %v7768, %v26
  %v7777 = vadd.f32 %v7769, %v27
  %v7778 = vadd.f32 %v7770, %v27
  %v7779 = vadd.f32 %v7771, %v27
  %v7780 = vadd.f32 %v7772, %v27
  %v7781 = vsel %vm1153, %v7773, -inf
  %7782 = vmax.xlane.f32.xlu0 %v7781
  %v7783 = vpop.xlane.xlu0 %7782
  %v7784 = vsel %vm1153, %v7774, -inf
  %7785 = vmax.xlane.f32.xlu0 %v7784
  %v7786 = vpop.xlane.xlu0 %7785
  %v7787 = vsel %vm1153, %v7775, -inf
  %7788 = vmax.xlane.f32.xlu0 %v7787
  %v7789 = vpop.xlane.xlu0 %7788
  %v7790 = vsel %vm1153, %v7776, -inf
  %7791 = vmax.xlane.f32.xlu0 %v7790
  %v7792 = vpop.xlane.xlu0 %7791
  %v7793 = vsel %vm1153, %v7777, -inf
  %7794 = vmax.xlane.f32.xlu0 %v7793
  %v7795 = vpop.xlane.xlu0 %7794
  %v7796 = vsel %vm1153, %v7778, -inf
  %7797 = vmax.xlane.f32.xlu0 %v7796
  %v7798 = vpop.xlane.xlu0 %7797
  %v7799 = vsel %vm1153, %v7779, -inf
  %7800 = vmax.xlane.f32.xlu0 %v7799
  %v7801 = vpop.xlane.xlu0 %7800
  %v7802 = vsel %vm1153, %v7780, -inf
  %7803 = vmax.xlane.f32.xlu0 %v7802
  %v7804 = vpop.xlane.xlu0 %7803
  %v7805 = vsub.f32 %v7773, %v7783
  %v7806 = vsub.f32 %v7774, %v7786
  %v7807 = vsub.f32 %v7775, %v7789
  %v7808 = vsub.f32 %v7776, %v7792
  %v7809 = vsub.f32 %v7777, %v7795
  %v7810 = vsub.f32 %v7778, %v7798
  %v7811 = vsub.f32 %v7779, %v7801
  %v7812 = vsub.f32 %v7780, %v7804
  %v7813 = vmul.f32 %v7805, 1.442695
  %v7814 = vpow.pop %v7813
  %v7815 = vmul.f32 %v7806, 1.442695
  %v7816 = vpow.pop %v7815
  %v7817 = vmul.f32 %v7807, 1.442695
  %v7818 = vpow.pop %v7817
  %v7819 = vmul.f32 %v7808, 1.442695
  %v7820 = vpow.pop %v7819
  %v7821 = vmul.f32 %v7809, 1.442695
  %v7822 = vpow.pop %v7821
  %v7823 = vmul.f32 %v7810, 1.442695
  %v7824 = vpow.pop %v7823
  %v7825 = vmul.f32 %v7811, 1.442695
  %v7826 = vpow.pop %v7825
  %v7827 = vmul.f32 %v7812, 1.442695
  %v7828 = vpow.pop %v7827
  %v7829 = vsel %vm1153, %v7814, 0.0
  %7830 = vadd.xlane.f32.xlu0 %v7829
  %v7831 = vpop.xlane.xlu0 %7830
  %v7832 = vsel %vm1153, %v7816, 0.0
  %7833 = vadd.xlane.f32.xlu0 %v7832
  %v7834 = vpop.xlane.xlu0 %7833
  %v7835 = vsel %vm1153, %v7818, 0.0
  %7836 = vadd.xlane.f32.xlu0 %v7835
  %v7837 = vpop.xlane.xlu0 %7836
  %v7838 = vsel %vm1153, %v7820, 0.0
  %7839 = vadd.xlane.f32.xlu0 %v7838
  %v7840 = vpop.xlane.xlu0 %7839
  %v7841 = vsel %vm1153, %v7822, 0.0
  %7842 = vadd.xlane.f32.xlu0 %v7841
  %v7843 = vpop.xlane.xlu0 %7842
  %v7844 = vsel %vm1153, %v7824, 0.0
  %7845 = vadd.xlane.f32.xlu0 %v7844
  %v7846 = vpop.xlane.xlu0 %7845
  %v7847 = vsel %vm1153, %v7826, 0.0
  %7848 = vadd.xlane.f32.xlu0 %v7847
  %v7849 = vpop.xlane.xlu0 %7848
  %v7850 = vsel %vm1153, %v7828, 0.0
  %7851 = vadd.xlane.f32.xlu0 %v7850
  %v7852 = vpop.xlane.xlu0 %7851
  %v7853 = vrcp.pop %v7831
  %v7854 = vrcp.pop %v7834
  %v7855 = vrcp.pop %v7837
  %v7856 = vrcp.pop %v7840
  %v7857 = vrcp.pop %v7843
  %v7858 = vrcp.pop %v7846
  %v7859 = vrcp.pop %v7849
  %v7860 = vrcp.pop %v7852
  %v7861 = vmul.f32 %v7814, %v7853
  %v7862 = vmul.f32 %v7816, %v7854
  %v7863 = vmul.f32 %v7818, %v7855
  %v7864 = vmul.f32 %v7820, %v7856
  %v7865 = vmul.f32 %v7822, %v7857
  %v7866 = vmul.f32 %v7824, %v7858
  %v7867 = vmul.f32 %v7826, %v7859
  %v7868 = vmul.f32 %v7828, %v7860
  %v7870 = vsel %vm1153, %v7861, 0
  %7872 = vmatprep.subr.mxu0 0.0
  %7873 = vmatpush1.msra.mxu0 %v7085
  %7874 = vmatprep.subr.mxu0 0.0
  %7875 = vmatpush1.msra.mxu0 0.0
  %7876 = vmatprep.subr.mxu0 0.0
  %7877 = vmatpush1.msra.mxu0 0.0
  %7878 = vmatprep.subr.mxu0 0.0
  %7879 = vmatpush1.msra.mxu0 0.0
  %7880 = vmatprep.subr.mxu0 0.0
  %7881 = vmatpush1.msra.mxu0 0.0
  %7882 = vmatprep.subr.mxu0 0.0
  %7883 = vmatpush1.msra.mxu0 0.0
  %7884 = vmatprep.subr.mxu0 0.0
  %7885 = vmatpush1.msra.mxu0 0.0
  %7886 = vmatprep.subr.mxu0 0.0
  %7887 = vmatpush1.msra.mxu0 0.0
  %7888 = vmatprep.subr.mxu0 0.0
  %7889 = vmatpush1.msra.mxu0 0.0
  %7890 = vmatprep.subr.mxu0 0.0
  %7891 = vmatpush1.msra.mxu0 0.0
  %7892 = vmatprep.subr.mxu0 0.0
  %7893 = vmatpush1.msra.mxu0 0.0
  %7894 = vmatprep.subr.mxu0 0.0
  %7895 = vmatpush1.msra.mxu0 0.0
  %7896 = vmatprep.subr.mxu0 0.0
  %7897 = vmatpush1.msra.mxu0 0.0
  %7898 = vmatprep.subr.mxu0 0.0
  %7899 = vmatpush1.msra.mxu0 0.0
  %7900 = vmatprep.subr.mxu0 0.0
  %7901 = vmatpush1.msra.mxu0 0.0
  %7902 = vmatprep.subr.mxu0 0.0
  %7903 = vmatpush1.msra.mxu0 0.0
  %7904 = vmatprep.subr.mxu0 0.0
  %7905 = vmatpush1.msra.mxu0 0.0
  %7906 = vmatprep.subr.mxu0 0.0
  %7907 = vmatpush1.msra.mxu0 0.0
  %7908 = vmatprep.subr.mxu0 0.0
  %7909 = vmatpush1.msra.mxu0 0.0
  %7910 = vmatprep.subr.mxu0 0.0
  %7911 = vmatpush1.msra.mxu0 0.0
  %7912 = vmatprep.subr.mxu0 0.0
  %7913 = vmatpush1.msra.mxu0 0.0
  %7914 = vmatprep.subr.mxu0 0.0
  %7915 = vmatpush1.msra.mxu0 0.0
  %7916 = vmatprep.subr.mxu0 0.0
  %7917 = vmatpush1.msra.mxu0 0.0
  %7918 = vmatprep.subr.mxu0 0.0
  %7919 = vmatpush1.msra.mxu0 0.0
  %7920 = vmatprep.subr.mxu0 0.0
  %7921 = vmatpush1.msra.mxu0 0.0
  %7922 = vmatprep.subr.mxu0 0.0
  %7923 = vmatpush1.msra.mxu0 0.0
  %7924 = vmatprep.subr.mxu0 0.0
  %7925 = vmatpush1.msra.mxu0 0.0
  %7926 = vmatprep.subr.mxu0 0.0
  %7927 = vmatpush1.msra.mxu0 0.0
  %7928 = vmatprep.subr.mxu0 0.0
  %7929 = vmatpush1.msra.mxu0 0.0
  %7930 = vmatprep.subr.mxu0 0.0
  %7931 = vmatpush1.msra.mxu0 0.0
  %7932 = vmatprep.subr.mxu0 0.0
  %7933 = vmatpush1.msra.mxu0 0.0
  %7934 = vmatprep.subr.mxu0 0.0
  %7935 = vmatpush1.msra.mxu0 0.0
  %7936 = vmatprep.mubr.f32.mxu0 0.0
  %7937 = vmatmul.mubr.f32.gmra.mrb[0].mxu0 %v7870
  %v7938 = vpop.f32.mrb[0].mxu0
  %v7939 = vadd.f32 0.0, %v7938
  %v7940 = vpop.f32.mrb[0].mxu0
  %7941 = vdwg.mxu0
  %v7943 = vsel %vm1153, %v7862, 0
  %7945 = vmatprep.subr.mxu0 0.0
  %7946 = vmatpush1.msra.mxu0 %v7086
  %7947 = vmatprep.subr.mxu0 0.0
  %7948 = vmatpush1.msra.mxu0 0.0
  %7949 = vmatprep.subr.mxu0 0.0
  %7950 = vmatpush1.msra.mxu0 0.0
  %7951 = vmatprep.subr.mxu0 0.0
  %7952 = vmatpush1.msra.mxu0 0.0
  %7953 = vmatprep.subr.mxu0 0.0
  %7954 = vmatpush1.msra.mxu0 0.0
  %7955 = vmatprep.subr.mxu0 0.0
  %7956 = vmatpush1.msra.mxu0 0.0
  %7957 = vmatprep.subr.mxu0 0.0
  %7958 = vmatpush1.msra.mxu0 0.0
  %7959 = vmatprep.subr.mxu0 0.0
  %7960 = vmatpush1.msra.mxu0 0.0
  %7961 = vmatprep.subr.mxu0 0.0
  %7962 = vmatpush1.msra.mxu0 0.0
  %7963 = vmatprep.subr.mxu0 0.0
  %7964 = vmatpush1.msra.mxu0 0.0
  %7965 = vmatprep.subr.mxu0 0.0
  %7966 = vmatpush1.msra.mxu0 0.0
  %7967 = vmatprep.subr.mxu0 0.0
  %7968 = vmatpush1.msra.mxu0 0.0
  %7969 = vmatprep.subr.mxu0 0.0
  %7970 = vmatpush1.msra.mxu0 0.0
  %7971 = vmatprep.subr.mxu0 0.0
  %7972 = vmatpush1.msra.mxu0 0.0
  %7973 = vmatprep.subr.mxu0 0.0
  %7974 = vmatpush1.msra.mxu0 0.0
  %7975 = vmatprep.subr.mxu0 0.0
  %7976 = vmatpush1.msra.mxu0 0.0
  %7977 = vmatprep.subr.mxu0 0.0
  %7978 = vmatpush1.msra.mxu0 0.0
  %7979 = vmatprep.subr.mxu0 0.0
  %7980 = vmatpush1.msra.mxu0 0.0
  %7981 = vmatprep.subr.mxu0 0.0
  %7982 = vmatpush1.msra.mxu0 0.0
  %7983 = vmatprep.subr.mxu0 0.0
  %7984 = vmatpush1.msra.mxu0 0.0
  %7985 = vmatprep.subr.mxu0 0.0
  %7986 = vmatpush1.msra.mxu0 0.0
  %7987 = vmatprep.subr.mxu0 0.0
  %7988 = vmatpush1.msra.mxu0 0.0
  %7989 = vmatprep.subr.mxu0 0.0
  %7990 = vmatpush1.msra.mxu0 0.0
  %7991 = vmatprep.subr.mxu0 0.0
  %7992 = vmatpush1.msra.mxu0 0.0
  %7993 = vmatprep.subr.mxu0 0.0
  %7994 = vmatpush1.msra.mxu0 0.0
  %7995 = vmatprep.subr.mxu0 0.0
  %7996 = vmatpush1.msra.mxu0 0.0
  %7997 = vmatprep.subr.mxu0 0.0
  %7998 = vmatpush1.msra.mxu0 0.0
  %7999 = vmatprep.subr.mxu0 0.0
  %8000 = vmatpush1.msra.mxu0 0.0
  %8001 = vmatprep.subr.mxu0 0.0
  %8002 = vmatpush1.msra.mxu0 0.0
  %8003 = vmatprep.subr.mxu0 0.0
  %8004 = vmatpush1.msra.mxu0 0.0
  %8005 = vmatprep.subr.mxu0 0.0
  %8006 = vmatpush1.msra.mxu0 0.0
  %8007 = vmatprep.subr.mxu0 0.0
  %8008 = vmatpush1.msra.mxu0 0.0
  %8009 = vmatprep.mubr.f32.mxu0 0.0
  %8010 = vmatmul.mubr.f32.gmra.mrb[0].mxu0 %v7943
  %v8011 = vpop.f32.mrb[0].mxu0
  %v8012 = vadd.f32 0.0, %v8011
  %v8013 = vpop.f32.mrb[0].mxu0
  %8014 = vdwg.mxu0
  %v8016 = vsel %vm1153, %v7863, 0
  %8018 = vmatprep.subr.mxu0 0.0
  %8019 = vmatpush1.msra.mxu0 %v7087
  %8020 = vmatprep.subr.mxu0 0.0
  %8021 = vmatpush1.msra.mxu0 0.0
  %8022 = vmatprep.subr.mxu0 0.0
  %8023 = vmatpush1.msra.mxu0 0.0
  %8024 = vmatprep.subr.mxu0 0.0
  %8025 = vmatpush1.msra.mxu0 0.0
  %8026 = vmatprep.subr.mxu0 0.0
  %8027 = vmatpush1.msra.mxu0 0.0
  %8028 = vmatprep.subr.mxu0 0.0
  %8029 = vmatpush1.msra.mxu0 0.0
  %8030 = vmatprep.subr.mxu0 0.0
  %8031 = vmatpush1.msra.mxu0 0.0
  %8032 = vmatprep.subr.mxu0 0.0
  %8033 = vmatpush1.msra.mxu0 0.0
  %8034 = vmatprep.subr.mxu0 0.0
  %8035 = vmatpush1.msra.mxu0 0.0
  %8036 = vmatprep.subr.mxu0 0.0
  %8037 = vmatpush1.msra.mxu0 0.0
  %8038 = vmatprep.subr.mxu0 0.0
  %8039 = vmatpush1.msra.mxu0 0.0
  %8040 = vmatprep.subr.mxu0 0.0
  %8041 = vmatpush1.msra.mxu0 0.0
  %8042 = vmatprep.subr.mxu0 0.0
  %8043 = vmatpush1.msra.mxu0 0.0
  %8044 = vmatprep.subr.mxu0 0.0
  %8045 = vmatpush1.msra.mxu0 0.0
  %8046 = vmatprep.subr.mxu0 0.0
  %8047 = vmatpush1.msra.mxu0 0.0
  %8048 = vmatprep.subr.mxu0 0.0
  %8049 = vmatpush1.msra.mxu0 0.0
  %8050 = vmatprep.subr.mxu0 0.0
  %8051 = vmatpush1.msra.mxu0 0.0
  %8052 = vmatprep.subr.mxu0 0.0
  %8053 = vmatpush1.msra.mxu0 0.0
  %8054 = vmatprep.subr.mxu0 0.0
  %8055 = vmatpush1.msra.mxu0 0.0
  %8056 = vmatprep.subr.mxu0 0.0
  %8057 = vmatpush1.msra.mxu0 0.0
  %8058 = vmatprep.subr.mxu0 0.0
  %8059 = vmatpush1.msra.mxu0 0.0
  %8060 = vmatprep.subr.mxu0 0.0
  %8061 = vmatpush1.msra.mxu0 0.0
  %8062 = vmatprep.subr.mxu0 0.0
  %8063 = vmatpush1.msra.mxu0 0.0
  %8064 = vmatprep.subr.mxu0 0.0
  %8065 = vmatpush1.msra.mxu0 0.0
  %8066 = vmatprep.subr.mxu0 0.0
  %8067 = vmatpush1.msra.mxu0 0.0
  %8068 = vmatprep.subr.mxu0 0.0
  %8069 = vmatpush1.msra.mxu0 0.0
  %8070 = vmatprep.subr.mxu0 0.0
  %8071 = vmatpush1.msra.mxu0 0.0
  %8072 = vmatprep.subr.mxu0 0.0
  %8073 = vmatpush1.msra.mxu0 0.0
  %8074 = vmatprep.subr.mxu0 0.0
  %8075 = vmatpush1.msra.mxu0 0.0
  %8076 = vmatprep.subr.mxu0 0.0
  %8077 = vmatpush1.msra.mxu0 0.0
  %8078 = vmatprep.subr.mxu0 0.0
  %8079 = vmatpush1.msra.mxu0 0.0
  %8080 = vmatprep.subr.mxu0 0.0
  %8081 = vmatpush1.msra.mxu0 0.0
  %8082 = vmatprep.mubr.f32.mxu0 0.0
  %8083 = vmatmul.mubr.f32.gmra.mrb[0].mxu0 %v8016
  %v8084 = vpop.f32.mrb[0].mxu0
  %v8085 = vadd.f32 0.0, %v8084
  %v8086 = vpop.f32.mrb[0].mxu0
  %8087 = vdwg.mxu0
  %v8089 = vsel %vm1153, %v7864, 0
  %8091 = vmatprep.subr.mxu0 0.0
  %8092 = vmatpush1.msra.mxu0 %v7088
  %8093 = vmatprep.subr.mxu0 0.0
  %8094 = vmatpush1.msra.mxu0 0.0
  %8095 = vmatprep.subr.mxu0 0.0
  %8096 = vmatpush1.msra.mxu0 0.0
  %8097 = vmatprep.subr.mxu0 0.0
  %8098 = vmatpush1.msra.mxu0 0.0
  %8099 = vmatprep.subr.mxu0 0.0
  %8100 = vmatpush1.msra.mxu0 0.0
  %8101 = vmatprep.subr.mxu0 0.0
  %8102 = vmatpush1.msra.mxu0 0.0
  %8103 = vmatprep.subr.mxu0 0.0
  %8104 = vmatpush1.msra.mxu0 0.0
  %8105 = vmatprep.subr.mxu0 0.0
  %8106 = vmatpush1.msra.mxu0 0.0
  %8107 = vmatprep.subr.mxu0 0.0
  %8108 = vmatpush1.msra.mxu0 0.0
  %8109 = vmatprep.subr.mxu0 0.0
  %8110 = vmatpush1.msra.mxu0 0.0
  %8111 = vmatprep.subr.mxu0 0.0
  %8112 = vmatpush1.msra.mxu0 0.0
  %8113 = vmatprep.subr.mxu0 0.0
  %8114 = vmatpush1.msra.mxu0 0.0
  %8115 = vmatprep.subr.mxu0 0.0
  %8116 = vmatpush1.msra.mxu0 0.0
  %8117 = vmatprep.subr.mxu0 0.0
  %8118 = vmatpush1.msra.mxu0 0.0
  %8119 = vmatprep.subr.mxu0 0.0
  %8120 = vmatpush1.msra.mxu0 0.0
  %8121 = vmatprep.subr.mxu0 0.0
  %8122 = vmatpush1.msra.mxu0 0.0
  %8123 = vmatprep.subr.mxu0 0.0
  %8124 = vmatpush1.msra.mxu0 0.0
  %8125 = vmatprep.subr.mxu0 0.0
  %8126 = vmatpush1.msra.mxu0 0.0
  %8127 = vmatprep.subr.mxu0 0.0
  %8128 = vmatpush1.msra.mxu0 0.0
  %8129 = vmatprep.subr.mxu0 0.0
  %8130 = vmatpush1.msra.mxu0 0.0
  %8131 = vmatprep.subr.mxu0 0.0
  %8132 = vmatpush1.msra.mxu0 0.0
  %8133 = vmatprep.subr.mxu0 0.0
  %8134 = vmatpush1.msra.mxu0 0.0
  %8135 = vmatprep.subr.mxu0 0.0
  %8136 = vmatpush1.msra.mxu0 0.0
  %8137 = vmatprep.subr.mxu0 0.0
  %8138 = vmatpush1.msra.mxu0 0.0
  %8139 = vmatprep.subr.mxu0 0.0
  %8140 = vmatpush1.msra.mxu0 0.0
  %8141 = vmatprep.subr.mxu0 0.0
  %8142 = vmatpush1.msra.mxu0 0.0
  %8143 = vmatprep.subr.mxu0 0.0
  %8144 = vmatpush1.msra.mxu0 0.0
  %8145 = vmatprep.subr.mxu0 0.0
  %8146 = vmatpush1.msra.mxu0 0.0
  %8147 = vmatprep.subr.mxu0 0.0
  %8148 = vmatpush1.msra.mxu0 0.0
  %8149 = vmatprep.subr.mxu0 0.0
  %8150 = vmatpush1.msra.mxu0 0.0
  %8151 = vmatprep.subr.mxu0 0.0
  %8152 = vmatpush1.msra.mxu0 0.0
  %8153 = vmatprep.subr.mxu0 0.0
  %8154 = vmatpush1.msra.mxu0 0.0
  %8155 = vmatprep.mubr.f32.mxu0 0.0
  %8156 = vmatmul.mubr.f32.gmra.mrb[0].mxu0 %v8089
  %v8157 = vpop.f32.mrb[0].mxu0
  %v8158 = vadd.f32 0.0, %v8157
  %v8159 = vpop.f32.mrb[0].mxu0
  %8160 = vdwg.mxu0
  %v8162 = vsel %vm1153, %v7865, 0
  %8164 = vmatprep.subr.mxu0 0.0
  %8165 = vmatpush1.msra.mxu0 %v7153
  %8166 = vmatprep.subr.mxu0 0.0
  %8167 = vmatpush1.msra.mxu0 0.0
  %8168 = vmatprep.subr.mxu0 0.0
  %8169 = vmatpush1.msra.mxu0 0.0
  %8170 = vmatprep.subr.mxu0 0.0
  %8171 = vmatpush1.msra.mxu0 0.0
  %8172 = vmatprep.subr.mxu0 0.0
  %8173 = vmatpush1.msra.mxu0 0.0
  %8174 = vmatprep.subr.mxu0 0.0
  %8175 = vmatpush1.msra.mxu0 0.0
  %8176 = vmatprep.subr.mxu0 0.0
  %8177 = vmatpush1.msra.mxu0 0.0
  %8178 = vmatprep.subr.mxu0 0.0
  %8179 = vmatpush1.msra.mxu0 0.0
  %8180 = vmatprep.subr.mxu0 0.0
  %8181 = vmatpush1.msra.mxu0 0.0
  %8182 = vmatprep.subr.mxu0 0.0
  %8183 = vmatpush1.msra.mxu0 0.0
  %8184 = vmatprep.subr.mxu0 0.0
  %8185 = vmatpush1.msra.mxu0 0.0
  %8186 = vmatprep.subr.mxu0 0.0
  %8187 = vmatpush1.msra.mxu0 0.0
  %8188 = vmatprep.subr.mxu0 0.0
  %8189 = vmatpush1.msra.mxu0 0.0
  %8190 = vmatprep.subr.mxu0 0.0
  %8191 = vmatpush1.msra.mxu0 0.0
  %8192 = vmatprep.subr.mxu0 0.0
  %8193 = vmatpush1.msra.mxu0 0.0
  %8194 = vmatprep.subr.mxu0 0.0
  %8195 = vmatpush1.msra.mxu0 0.0
  %8196 = vmatprep.subr.mxu0 0.0
  %8197 = vmatpush1.msra.mxu0 0.0
  %8198 = vmatprep.subr.mxu0 0.0
  %8199 = vmatpush1.msra.mxu0 0.0
  %8200 = vmatprep.subr.mxu0 0.0
  %8201 = vmatpush1.msra.mxu0 0.0
  %8202 = vmatprep.subr.mxu0 0.0
  %8203 = vmatpush1.msra.mxu0 0.0
  %8204 = vmatprep.subr.mxu0 0.0
  %8205 = vmatpush1.msra.mxu0 0.0
  %8206 = vmatprep.subr.mxu0 0.0
  %8207 = vmatpush1.msra.mxu0 0.0
  %8208 = vmatprep.subr.mxu0 0.0
  %8209 = vmatpush1.msra.mxu0 0.0
  %8210 = vmatprep.subr.mxu0 0.0
  %8211 = vmatpush1.msra.mxu0 0.0
  %8212 = vmatprep.subr.mxu0 0.0
  %8213 = vmatpush1.msra.mxu0 0.0
  %8214 = vmatprep.subr.mxu0 0.0
  %8215 = vmatpush1.msra.mxu0 0.0
  %8216 = vmatprep.subr.mxu0 0.0
  %8217 = vmatpush1.msra.mxu0 0.0
  %8218 = vmatprep.subr.mxu0 0.0
  %8219 = vmatpush1.msra.mxu0 0.0
  %8220 = vmatprep.subr.mxu0 0.0
  %8221 = vmatpush1.msra.mxu0 0.0
  %8222 = vmatprep.subr.mxu0 0.0
  %8223 = vmatpush1.msra.mxu0 0.0
  %8224 = vmatprep.subr.mxu0 0.0
  %8225 = vmatpush1.msra.mxu0 0.0
  %8226 = vmatprep.subr.mxu0 0.0
  %8227 = vmatpush1.msra.mxu0 0.0
  %8228 = vmatprep.mubr.f32.mxu0 0.0
  %8229 = vmatmul.mubr.f32.gmra.mrb[0].mxu0 %v8162
  %v8230 = vpop.f32.mrb[0].mxu0
  %v8231 = vadd.f32 0.0, %v8230
  %v8232 = vpop.f32.mrb[0].mxu0
  %8233 = vdwg.mxu0
  %v8235 = vsel %vm1153, %v7866, 0
  %8237 = vmatprep.subr.mxu0 0.0
  %8238 = vmatpush1.msra.mxu0 %v7154
  %8239 = vmatprep.subr.mxu0 0.0
  %8240 = vmatpush1.msra.mxu0 0.0
  %8241 = vmatprep.subr.mxu0 0.0
  %8242 = vmatpush1.msra.mxu0 0.0
  %8243 = vmatprep.subr.mxu0 0.0
  %8244 = vmatpush1.msra.mxu0 0.0
  %8245 = vmatprep.subr.mxu0 0.0
  %8246 = vmatpush1.msra.mxu0 0.0
  %8247 = vmatprep.subr.mxu0 0.0
  %8248 = vmatpush1.msra.mxu0 0.0
  %8249 = vmatprep.subr.mxu0 0.0
  %8250 = vmatpush1.msra.mxu0 0.0
  %8251 = vmatprep.subr.mxu0 0.0
  %8252 = vmatpush1.msra.mxu0 0.0
  %8253 = vmatprep.subr.mxu0 0.0
  %8254 = vmatpush1.msra.mxu0 0.0
  %8255 = vmatprep.subr.mxu0 0.0
  %8256 = vmatpush1.msra.mxu0 0.0
  %8257 = vmatprep.subr.mxu0 0.0
  %8258 = vmatpush1.msra.mxu0 0.0
  %8259 = vmatprep.subr.mxu0 0.0
  %8260 = vmatpush1.msra.mxu0 0.0
  %8261 = vmatprep.subr.mxu0 0.0
  %8262 = vmatpush1.msra.mxu0 0.0
  %8263 = vmatprep.subr.mxu0 0.0
  %8264 = vmatpush1.msra.mxu0 0.0
  %8265 = vmatprep.subr.mxu0 0.0
  %8266 = vmatpush1.msra.mxu0 0.0
  %8267 = vmatprep.subr.mxu0 0.0
  %8268 = vmatpush1.msra.mxu0 0.0
  %8269 = vmatprep.subr.mxu0 0.0
  %8270 = vmatpush1.msra.mxu0 0.0
  %8271 = vmatprep.subr.mxu0 0.0
  %8272 = vmatpush1.msra.mxu0 0.0
  %8273 = vmatprep.subr.mxu0 0.0
  %8274 = vmatpush1.msra.mxu0 0.0
  %8275 = vmatprep.subr.mxu0 0.0
  %8276 = vmatpush1.msra.mxu0 0.0
  %8277 = vmatprep.subr.mxu0 0.0
  %8278 = vmatpush1.msra.mxu0 0.0
  %8279 = vmatprep.subr.mxu0 0.0
  %8280 = vmatpush1.msra.mxu0 0.0
  %8281 = vmatprep.subr.mxu0 0.0
  %8282 = vmatpush1.msra.mxu0 0.0
  %8283 = vmatprep.subr.mxu0 0.0
  %8284 = vmatpush1.msra.mxu0 0.0
  %8285 = vmatprep.subr.mxu0 0.0
  %8286 = vmatpush1.msra.mxu0 0.0
  %8287 = vmatprep.subr.mxu0 0.0
  %8288 = vmatpush1.msra.mxu0 0.0
  %8289 = vmatprep.subr.mxu0 0.0
  %8290 = vmatpush1.msra.mxu0 0.0
  %8291 = vmatprep.subr.mxu0 0.0
  %8292 = vmatpush1.msra.mxu0 0.0
  %8293 = vmatprep.subr.mxu0 0.0
  %8294 = vmatpush1.msra.mxu0 0.0
  %8295 = vmatprep.subr.mxu0 0.0
  %8296 = vmatpush1.msra.mxu0 0.0
  %8297 = vmatprep.subr.mxu0 0.0
  %8298 = vmatpush1.msra.mxu0 0.0
  %8299 = vmatprep.subr.mxu0 0.0
  %8300 = vmatpush1.msra.mxu0 0.0
  %8301 = vmatprep.mubr.f32.mxu0 0.0
  %8302 = vmatmul.mubr.f32.gmra.mrb[0].mxu0 %v8235
  %v8303 = vpop.f32.mrb[0].mxu0
  %v8304 = vadd.f32 0.0, %v8303
  %v8305 = vpop.f32.mrb[0].mxu0
  %8306 = vdwg.mxu0
  %v8308 = vsel %vm1153, %v7867, 0
  %8310 = vmatprep.subr.mxu0 0.0
  %8311 = vmatpush1.msra.mxu0 %v7155
  %8312 = vmatprep.subr.mxu0 0.0
  %8313 = vmatpush1.msra.mxu0 0.0
  %8314 = vmatprep.subr.mxu0 0.0
  %8315 = vmatpush1.msra.mxu0 0.0
  %8316 = vmatprep.subr.mxu0 0.0
  %8317 = vmatpush1.msra.mxu0 0.0
  %8318 = vmatprep.subr.mxu0 0.0
  %8319 = vmatpush1.msra.mxu0 0.0
  %8320 = vmatprep.subr.mxu0 0.0
  %8321 = vmatpush1.msra.mxu0 0.0
  %8322 = vmatprep.subr.mxu0 0.0
  %8323 = vmatpush1.msra.mxu0 0.0
  %8324 = vmatprep.subr.mxu0 0.0
  %8325 = vmatpush1.msra.mxu0 0.0
  %8326 = vmatprep.subr.mxu0 0.0
  %8327 = vmatpush1.msra.mxu0 0.0
  %8328 = vmatprep.subr.mxu0 0.0
  %8329 = vmatpush1.msra.mxu0 0.0
  %8330 = vmatprep.subr.mxu0 0.0
  %8331 = vmatpush1.msra.mxu0 0.0
  %8332 = vmatprep.subr.mxu0 0.0
  %8333 = vmatpush1.msra.mxu0 0.0
  %8334 = vmatprep.subr.mxu0 0.0
  %8335 = vmatpush1.msra.mxu0 0.0
  %8336 = vmatprep.subr.mxu0 0.0
  %8337 = vmatpush1.msra.mxu0 0.0
  %8338 = vmatprep.subr.mxu0 0.0
  %8339 = vmatpush1.msra.mxu0 0.0
  %8340 = vmatprep.subr.mxu0 0.0
  %8341 = vmatpush1.msra.mxu0 0.0
  %8342 = vmatprep.subr.mxu0 0.0
  %8343 = vmatpush1.msra.mxu0 0.0
  %8344 = vmatprep.subr.mxu0 0.0
  %8345 = vmatpush1.msra.mxu0 0.0
  %8346 = vmatprep.subr.mxu0 0.0
  %8347 = vmatpush1.msra.mxu0 0.0
  %8348 = vmatprep.subr.mxu0 0.0
  %8349 = vmatpush1.msra.mxu0 0.0
  %8350 = vmatprep.subr.mxu0 0.0
  %8351 = vmatpush1.msra.mxu0 0.0
  %8352 = vmatprep.subr.mxu0 0.0
  %8353 = vmatpush1.msra.mxu0 0.0
  %8354 = vmatprep.subr.mxu0 0.0
  %8355 = vmatpush1.msra.mxu0 0.0
  %8356 = vmatprep.subr.mxu0 0.0
  %8357 = vmatpush1.msra.mxu0 0.0
  %8358 = vmatprep.subr.mxu0 0.0
  %8359 = vmatpush1.msra.mxu0 0.0
  %8360 = vmatprep.subr.mxu0 0.0
  %8361 = vmatpush1.msra.mxu0 0.0
  %8362 = vmatprep.subr.mxu0 0.0
  %8363 = vmatpush1.msra.mxu0 0.0
  %8364 = vmatprep.subr.mxu0 0.0
  %8365 = vmatpush1.msra.mxu0 0.0
  %8366 = vmatprep.subr.mxu0 0.0
  %8367 = vmatpush1.msra.mxu0 0.0
  %8368 = vmatprep.subr.mxu0 0.0
  %8369 = vmatpush1.msra.mxu0 0.0
  %8370 = vmatprep.subr.mxu0 0.0
  %8371 = vmatpush1.msra.mxu0 0.0
  %8372 = vmatprep.subr.mxu0 0.0
  %8373 = vmatpush1.msra.mxu0 0.0
  %8374 = vmatprep.mubr.f32.mxu0 0.0
  %8375 = vmatmul.mubr.f32.gmra.mrb[0].mxu0 %v8308
  %v8376 = vpop.f32.mrb[0].mxu0
  %v8377 = vadd.f32 0.0, %v8376
  %v8378 = vpop.f32.mrb[0].mxu0
  %8379 = vdwg.mxu0
  %v8381 = vsel %vm1153, %v7868, 0
  %8383 = vmatprep.subr.mxu0 0.0
  %8384 = vmatpush1.msra.mxu0 %v7156
  %8385 = vmatprep.subr.mxu0 0.0
  %8386 = vmatpush1.msra.mxu0 0.0
  %8387 = vmatprep.subr.mxu0 0.0
  %8388 = vmatpush1.msra.mxu0 0.0
  %8389 = vmatprep.subr.mxu0 0.0
  %8390 = vmatpush1.msra.mxu0 0.0
  %8391 = vmatprep.subr.mxu0 0.0
  %8392 = vmatpush1.msra.mxu0 0.0
  %8393 = vmatprep.subr.mxu0 0.0
  %8394 = vmatpush1.msra.mxu0 0.0
  %8395 = vmatprep.subr.mxu0 0.0
  %8396 = vmatpush1.msra.mxu0 0.0
  %8397 = vmatprep.subr.mxu0 0.0
  %8398 = vmatpush1.msra.mxu0 0.0
  %8399 = vmatprep.subr.mxu0 0.0
  %8400 = vmatpush1.msra.mxu0 0.0
  %8401 = vmatprep.subr.mxu0 0.0
  %8402 = vmatpush1.msra.mxu0 0.0
  %8403 = vmatprep.subr.mxu0 0.0
  %8404 = vmatpush1.msra.mxu0 0.0
  %8405 = vmatprep.subr.mxu0 0.0
  %8406 = vmatpush1.msra.mxu0 0.0
  %8407 = vmatprep.subr.mxu0 0.0
  %8408 = vmatpush1.msra.mxu0 0.0
  %8409 = vmatprep.subr.mxu0 0.0
  %8410 = vmatpush1.msra.mxu0 0.0
  %8411 = vmatprep.subr.mxu0 0.0
  %8412 = vmatpush1.msra.mxu0 0.0
  %8413 = vmatprep.subr.mxu0 0.0
  %8414 = vmatpush1.msra.mxu0 0.0
  %8415 = vmatprep.subr.mxu0 0.0
  %8416 = vmatpush1.msra.mxu0 0.0
  %8417 = vmatprep.subr.mxu0 0.0
  %8418 = vmatpush1.msra.mxu0 0.0
  %8419 = vmatprep.subr.mxu0 0.0
  %8420 = vmatpush1.msra.mxu0 0.0
  %8421 = vmatprep.subr.mxu0 0.0
  %8422 = vmatpush1.msra.mxu0 0.0
  %8423 = vmatprep.subr.mxu0 0.0
  %8424 = vmatpush1.msra.mxu0 0.0
  %8425 = vmatprep.subr.mxu0 0.0
  %8426 = vmatpush1.msra.mxu0 0.0
  %8427 = vmatprep.subr.mxu0 0.0
  %8428 = vmatpush1.msra.mxu0 0.0
  %8429 = vmatprep.subr.mxu0 0.0
  %8430 = vmatpush1.msra.mxu0 0.0
  %8431 = vmatprep.subr.mxu0 0.0
  %8432 = vmatpush1.msra.mxu0 0.0
  %8433 = vmatprep.subr.mxu0 0.0
  %8434 = vmatpush1.msra.mxu0 0.0
  %8435 = vmatprep.subr.mxu0 0.0
  %8436 = vmatpush1.msra.mxu0 0.0
  %8437 = vmatprep.subr.mxu0 0.0
  %8438 = vmatpush1.msra.mxu0 0.0
  %8439 = vmatprep.subr.mxu0 0.0
  %8440 = vmatpush1.msra.mxu0 0.0
  %8441 = vmatprep.subr.mxu0 0.0
  %8442 = vmatpush1.msra.mxu0 0.0
  %8443 = vmatprep.subr.mxu0 0.0
  %8444 = vmatpush1.msra.mxu0 0.0
  %8445 = vmatprep.subr.mxu0 0.0
  %8446 = vmatpush1.msra.mxu0 0.0
  %8447 = vmatprep.mubr.f32.mxu0 0.0
  %8448 = vmatmul.mubr.f32.gmra.mrb[0].mxu0 %v8381
  %v8449 = vpop.f32.mrb[0].mxu0
  %v8450 = vadd.f32 0.0, %v8449
  %v8451 = vpop.f32.mrb[0].mxu0
  %8452 = vdwg.mxu0
  %v8453 = vcombine.low %v7939, %v8085
  %v8454 = vcombine.high %v7939, %v8085
  %v8456 = vunpack.c.l.s4 1983009808
  %v8457 = vunpack.c.0.s8 %v8456
  %v8458 = vlaneseq
  %v8459 = vshrl.u32 %v8458, 7
  %v8460 = vsub.s32 %v8457, %v8459
  %v8461 = vrot.slane %v8453, %v8460
  %v8463 = vunpack.c.l.s4 1983009808
  %v8464 = vunpack.c.0.s8 %v8463
  %v8465 = vlaneseq
  %v8466 = vshrl.u32 %v8465, 7
  %v8467 = vsub.s32 %v8464, %v8466
  %v8468 = vrot.slane %v8454, %v8467
  %v8469 = vcombine.low %v8012, %v8158
  %v8470 = vcombine.high %v8012, %v8158
  %v8472 = vunpack.c.l.s4 1983009808
  %v8473 = vunpack.c.0.s8 %v8472
  %v8474 = vlaneseq
  %v8475 = vshrl.u32 %v8474, 7
  %v8476 = vsub.s32 %v8473, %v8475
  %v8477 = vrot.slane %v8469, %v8476
  %v8479 = vunpack.c.l.s4 1983009808
  %v8480 = vunpack.c.0.s8 %v8479
  %v8481 = vlaneseq
  %v8482 = vshrl.u32 %v8481, 7
  %v8483 = vsub.s32 %v8480, %v8482
  %v8484 = vrot.slane %v8470, %v8483
  %v8485 = vcombine.low %v8461, %v8477
  %v8486 = vcombine.high %v8461, %v8477
  %v8488 = vunpack.c.l.s4 1934713408
  %v8489 = vunpack.c.0.s8 %v8488
  %v8490 = vlaneseq
  %v8491 = vshrl.u32 %v8490, 7
  %v8492 = vsub.s32 %v8489, %v8491
  %v8493 = vrot.slane %v8485, %v8492
  %v8495 = vunpack.c.l.s4 1934713408
  %v8496 = vunpack.c.0.s8 %v8495
  %v8497 = vlaneseq
  %v8498 = vshrl.u32 %v8497, 7
  %v8499 = vsub.s32 %v8496, %v8498
  %v8500 = vrot.slane %v8486, %v8499
  %v8501 = vcombine.low %v8468, %v8484
  %v8502 = vcombine.high %v8468, %v8484
  %v8504 = vunpack.c.l.s4 1934713408
  %v8505 = vunpack.c.0.s8 %v8504
  %v8506 = vlaneseq
  %v8507 = vshrl.u32 %v8506, 7
  %v8508 = vsub.s32 %v8505, %v8507
  %v8509 = vrot.slane %v8501, %v8508
  %v8511 = vunpack.c.l.s4 1934713408
  %v8512 = vunpack.c.0.s8 %v8511
  %v8513 = vlaneseq
  %v8514 = vshrl.u32 %v8513, 7
  %v8515 = vsub.s32 %v8512, %v8514
  %v8516 = vrot.slane %v8502, %v8515
  %v8517 = vcombine.high %v8493, 0.0
  %v8518 = vcombine.high %v8500, 0.0
  %v8519 = vcombine.high %v8509, 0.0
  %v8520 = vcombine.high %v8516, 0.0
  %v8521 = vcombine.low %v8231, %v8377
  %v8522 = vcombine.high %v8231, %v8377
  %v8524 = vunpack.c.l.s4 1983009808
  %v8525 = vunpack.c.0.s8 %v8524
  %v8526 = vlaneseq
  %v8527 = vshrl.u32 %v8526, 7
  %v8528 = vsub.s32 %v8525, %v8527
  %v8529 = vrot.slane %v8521, %v8528
  %v8531 = vunpack.c.l.s4 1983009808
  %v8532 = vunpack.c.0.s8 %v8531
  %v8533 = vlaneseq
  %v8534 = vshrl.u32 %v8533, 7
  %v8535 = vsub.s32 %v8532, %v8534
  %v8536 = vrot.slane %v8522, %v8535
  %v8537 = vcombine.low %v8304, %v8450
  %v8538 = vcombine.high %v8304, %v8450
  %v8540 = vunpack.c.l.s4 1983009808
  %v8541 = vunpack.c.0.s8 %v8540
  %v8542 = vlaneseq
  %v8543 = vshrl.u32 %v8542, 7
  %v8544 = vsub.s32 %v8541, %v8543
  %v8545 = vrot.slane %v8537, %v8544
  %v8547 = vunpack.c.l.s4 1983009808
  %v8548 = vunpack.c.0.s8 %v8547
  %v8549 = vlaneseq
  %v8550 = vshrl.u32 %v8549, 7
  %v8551 = vsub.s32 %v8548, %v8550
  %v8552 = vrot.slane %v8538, %v8551
  %v8553 = vcombine.low %v8529, %v8545
  %v8554 = vcombine.high %v8529, %v8545
  %v8556 = vunpack.c.l.s4 1934713408
  %v8557 = vunpack.c.0.s8 %v8556
  %v8558 = vlaneseq
  %v8559 = vshrl.u32 %v8558, 7
  %v8560 = vsub.s32 %v8557, %v8559
  %v8561 = vrot.slane %v8553, %v8560
  %v8563 = vunpack.c.l.s4 1934713408
  %v8564 = vunpack.c.0.s8 %v8563
  %v8565 = vlaneseq
  %v8566 = vshrl.u32 %v8565, 7
  %v8567 = vsub.s32 %v8564, %v8566
  %v8568 = vrot.slane %v8554, %v8567
  %v8569 = vcombine.low %v8536, %v8552
  %v8570 = vcombine.high %v8536, %v8552
  %v8572 = vunpack.c.l.s4 1934713408
  %v8573 = vunpack.c.0.s8 %v8572
  %v8574 = vlaneseq
  %v8575 = vshrl.u32 %v8574, 7
  %v8576 = vsub.s32 %v8573, %v8575
  %v8577 = vrot.slane %v8569, %v8576
  %v8579 = vunpack.c.l.s4 1934713408
  %v8580 = vunpack.c.0.s8 %v8579
  %v8581 = vlaneseq
  %v8582 = vshrl.u32 %v8581, 7
  %v8583 = vsub.s32 %v8580, %v8582
  %v8584 = vrot.slane %v8570, %v8583
  %v8585 = vcombine.high %v8561, 0.0
  %v8586 = vcombine.high %v8568, 0.0
  %v8587 = vcombine.high %v8577, 0.0
  %v8588 = vcombine.high %v8584, 0.0
  %v8589 = vcombine.low %v8493, %v8500
  %v8591 = vunpack.c.l.s4 1983009808
  %v8592 = vunpack.c.0.s8 %v8591
  %v8593 = vlaneseq
  %v8594 = vshrl.u32 %v8593, 7
  %v8595 = vsub.s32 %v8592, %v8594
  %v8596 = vrot.slane %v8589, %v8595
  %v8597 = vcombine.low %v8517, %v8518
  %v8599 = vunpack.c.l.s4 1983009808
  %v8600 = vunpack.c.0.s8 %v8599
  %v8601 = vlaneseq
  %v8602 = vshrl.u32 %v8601, 7
  %v8603 = vsub.s32 %v8600, %v8602
  %v8604 = vrot.slane %v8597, %v8603
  %v8605 = vcombine.low %v8509, %v8516
  %v8607 = vunpack.c.l.s4 1983009808
  %v8608 = vunpack.c.0.s8 %v8607
  %v8609 = vlaneseq
  %v8610 = vshrl.u32 %v8609, 7
  %v8611 = vsub.s32 %v8608, %v8610
  %v8612 = vrot.slane %v8605, %v8611
  %v8613 = vcombine.low %v8519, %v8520
  %v8615 = vunpack.c.l.s4 1983009808
  %v8616 = vunpack.c.0.s8 %v8615
  %v8617 = vlaneseq
  %v8618 = vshrl.u32 %v8617, 7
  %v8619 = vsub.s32 %v8616, %v8618
  %v8620 = vrot.slane %v8613, %v8619
  %v8621 = vcombine.low %v8596, %v8604
  %v8622 = vcombine.high %v8596, %v8604
  %v8624 = vunpack.c.l.s4 1934713408
  %v8625 = vunpack.c.0.s8 %v8624
  %v8626 = vlaneseq
  %v8627 = vshrl.u32 %v8626, 7
  %v8628 = vsub.s32 %v8625, %v8627
  %v8629 = vrot.slane %v8621, %v8628
  %v8631 = vunpack.c.l.s4 1934713408
  %v8632 = vunpack.c.0.s8 %v8631
  %v8633 = vlaneseq
  %v8634 = vshrl.u32 %v8633, 7
  %v8635 = vsub.s32 %v8632, %v8634
  %v8636 = vrot.slane %v8622, %v8635
  %v8637 = vcombine.low %v8612, %v8620
  %v8638 = vcombine.high %v8612, %v8620
  %v8640 = vunpack.c.l.s4 1934713408
  %v8641 = vunpack.c.0.s8 %v8640
  %v8642 = vlaneseq
  %v8643 = vshrl.u32 %v8642, 7
  %v8644 = vsub.s32 %v8641, %v8643
  %v8645 = vrot.slane %v8637, %v8644
  %v8647 = vunpack.c.l.s4 1934713408
  %v8648 = vunpack.c.0.s8 %v8647
  %v8649 = vlaneseq
  %v8650 = vshrl.u32 %v8649, 7
  %v8651 = vsub.s32 %v8648, %v8650
  %v8652 = vrot.slane %v8638, %v8651
  %v8653 = vcombine.low %v8629, %v8645
  %v8654 = vcombine.high %v8629, %v8645
  %v8655 = vcombine.low %v8636, %v8652
  %v8656 = vcombine.high %v8636, %v8652
  %v8657 = vcombine.low %v8561, %v8568
  %v8659 = vunpack.c.l.s4 1983009808
  %v8660 = vunpack.c.0.s8 %v8659
  %v8661 = vlaneseq
  %v8662 = vshrl.u32 %v8661, 7
  %v8663 = vsub.s32 %v8660, %v8662
  %v8664 = vrot.slane %v8657, %v8663
  %v8665 = vcombine.low %v8585, %v8586
  %v8667 = vunpack.c.l.s4 1983009808
  %v8668 = vunpack.c.0.s8 %v8667
  %v8669 = vlaneseq
  %v8670 = vshrl.u32 %v8669, 7
  %v8671 = vsub.s32 %v8668, %v8670
  %v8672 = vrot.slane %v8665, %v8671
  %v8673 = vcombine.low %v8577, %v8584
  %v8675 = vunpack.c.l.s4 1983009808
  %v8676 = vunpack.c.0.s8 %v8675
  %v8677 = vlaneseq
  %v8678 = vshrl.u32 %v8677, 7
  %v8679 = vsub.s32 %v8676, %v8678
  %v8680 = vrot.slane %v8673, %v8679
  %v8681 = vcombine.low %v8587, %v8588
  %v8683 = vunpack.c.l.s4 1983009808
  %v8684 = vunpack.c.0.s8 %v8683
  %v8685 = vlaneseq
  %v8686 = vshrl.u32 %v8685, 7
  %v8687 = vsub.s32 %v8684, %v8686
  %v8688 = vrot.slane %v8681, %v8687
  %v8689 = vcombine.low %v8664, %v8672
  %v8690 = vcombine.high %v8664, %v8672
  %v8692 = vunpack.c.l.s4 1934713408
  %v8693 = vunpack.c.0.s8 %v8692
  %v8694 = vlaneseq
  %v8695 = vshrl.u32 %v8694, 7
  %v8696 = vsub.s32 %v8693, %v8695
  %v8697 = vrot.slane %v8689, %v8696
  %v8699 = vunpack.c.l.s4 1934713408
  %v8700 = vunpack.c.0.s8 %v8699
  %v8701 = vlaneseq
  %v8702 = vshrl.u32 %v8701, 7
  %v8703 = vsub.s32 %v8700, %v8702
  %v8704 = vrot.slane %v8690, %v8703
  %v8705 = vcombine.low %v8680, %v8688
  %v8706 = vcombine.high %v8680, %v8688
  %v8708 = vunpack.c.l.s4 1934713408
  %v8709 = vunpack.c.0.s8 %v8708
  %v8710 = vlaneseq
  %v8711 = vshrl.u32 %v8710, 7
  %v8712 = vsub.s32 %v8709, %v8711
  %v8713 = vrot.slane %v8705, %v8712
  %v8715 = vunpack.c.l.s4 1934713408
  %v8716 = vunpack.c.0.s8 %v8715
  %v8717 = vlaneseq
  %v8718 = vshrl.u32 %v8717, 7
  %v8719 = vsub.s32 %v8716, %v8718
  %v8720 = vrot.slane %v8706, %v8719
  %v8721 = vcombine.low %v8697, %v8713
  %v8722 = vcombine.high %v8697, %v8713
  %v8723 = vcombine.low %v8704, %v8720
  %v8724 = vcombine.high %v8704, %v8720
  %8727 = vrot.lane.b32.xlu0 %v8654, 8
  %v8728 = vpop.permute.xlu0 %8727
  %8729 = vrot.lane.b32.xlu0 %v8722, 8
  %v8730 = vpop.permute.xlu0 %8729
  %8735 = vrot.lane.b32.xlu0 %v8655, 16
  %v8736 = vpop.permute.xlu0 %8735
  %8737 = vrot.lane.b32.xlu0 %v8723, 16
  %v8738 = vpop.permute.xlu0 %8737
  %8743 = vrot.lane.b32.xlu0 %v8656, 24
  %v8744 = vpop.permute.xlu0 %8743
  %8745 = vrot.lane.b32.xlu0 %v8724, 24
  %v8746 = vpop.permute.xlu0 %8745
  %v8749 = vsel %vm1153, %v8653, %v8728
  %v8750 = vsel %vm1153, %v8721, %v8730
  %v8751 = vsel %vm2748, %v8749, %v8736
  %v8752 = vsel %vm2748, %v8750, %v8738
  %v8753 = vsel %vm2751, %v8751, %v8744
  %v8754 = vsel %vm2751, %v8752, %v8746
  %v8755 = vld [vmem:[%s6186 + $0x8] sm:$0xff]
  %v8756 = vld [vmem:[%s6186 + $0x38] sm:$0xff]
  %v8757 = vld [vmem:[%s6186 + $0x68] sm:$0xff]
  %v8758 = vld [vmem:[%s6186 + $0x98] sm:$0xff]
  %v8759 = vld [vmem:[%s6186 + $0xc8] ss:$0 sm:$0xff]
  %v8761 = vsel %vm140, %v8753, 0
  %v8764 = vsel %vm140, %v8754, 0
  %8766 = vmatprep.subr.mxu0 0.0
  %8767 = vmatpush1.msra.mxu0 %v8755
  %8768 = vmatprep.subr.mxu0 0.0
  %8769 = vmatpush1.msra.mxu0 %v8756
  %8770 = vmatprep.subr.mxu0 0.0
  %8771 = vmatpush1.msra.mxu0 %v8757
  %8772 = vmatprep.subr.mxu0 0.0
  %8773 = vmatpush1.msra.mxu0 %v8758
  %8774 = vmatprep.subr.mxu0 0.0
  %8775 = vmatpush1.msra.mxu0 0.0
  %8776 = vmatprep.subr.mxu0 0.0
  %8777 = vmatpush1.msra.mxu0 0.0
  %8778 = vmatprep.subr.mxu0 0.0
  %8779 = vmatpush1.msra.mxu0 0.0
  %8780 = vmatprep.subr.mxu0 0.0
  %8781 = vmatpush1.msra.mxu0 0.0
  %8782 = vmatprep.subr.mxu0 0.0
  %8783 = vmatpush1.msra.mxu0 0.0
  %8784 = vmatprep.subr.mxu0 0.0
  %8785 = vmatpush1.msra.mxu0 0.0
  %8786 = vmatprep.subr.mxu0 0.0
  %8787 = vmatpush1.msra.mxu0 0.0
  %8788 = vmatprep.subr.mxu0 0.0
  %8789 = vmatpush1.msra.mxu0 0.0
  %8790 = vmatprep.subr.mxu0 0.0
  %8791 = vmatpush1.msra.mxu0 0.0
  %8792 = vmatprep.subr.mxu0 0.0
  %8793 = vmatpush1.msra.mxu0 0.0
  %8794 = vmatprep.subr.mxu0 0.0
  %8795 = vmatpush1.msra.mxu0 0.0
  %8796 = vmatprep.subr.mxu0 0.0
  %8797 = vmatpush1.msra.mxu0 0.0
  %8798 = vmatprep.subr.mxu0 0.0
  %8799 = vmatpush1.msra.mxu0 0.0
  %8800 = vmatprep.subr.mxu0 0.0
  %8801 = vmatpush1.msra.mxu0 0.0
  %8802 = vmatprep.subr.mxu0 0.0
  %8803 = vmatpush1.msra.mxu0 0.0
  %8804 = vmatprep.subr.mxu0 0.0
  %8805 = vmatpush1.msra.mxu0 0.0
  %8806 = vmatprep.subr.mxu0 0.0
  %8807 = vmatpush1.msra.mxu0 0.0
  %8808 = vmatprep.subr.mxu0 0.0
  %8809 = vmatpush1.msra.mxu0 0.0
  %8810 = vmatprep.subr.mxu0 0.0
  %8811 = vmatpush1.msra.mxu0 0.0
  %8812 = vmatprep.subr.mxu0 0.0
  %8813 = vmatpush1.msra.mxu0 0.0
  %8814 = vmatprep.subr.mxu0 0.0
  %8815 = vmatpush1.msra.mxu0 0.0
  %8816 = vmatprep.subr.mxu0 0.0
  %8817 = vmatpush1.msra.mxu0 0.0
  %8818 = vmatprep.subr.mxu0 0.0
  %8819 = vmatpush1.msra.mxu0 0.0
  %8820 = vmatprep.subr.mxu0 0.0
  %8821 = vmatpush1.msra.mxu0 0.0
  %8822 = vmatprep.subr.mxu0 0.0
  %8823 = vmatpush1.msra.mxu0 0.0
  %8824 = vmatprep.subr.mxu0 0.0
  %8825 = vmatpush1.msra.mxu0 0.0
  %8826 = vmatprep.subr.mxu0 0.0
  %8827 = vmatpush1.msra.mxu0 0.0
  %8828 = vmatprep.subr.mxu0 0.0
  %8829 = vmatpush1.msra.mxu0 0.0
  %8830 = vmatprep.mubr.f32.mxu0 0.0
  %8831 = vmatmul.mubr.f32.gmra.mrb[0].mxu0 %v8761
  %v8832 = vpop.f32.mrb[0].mxu0
  %v8833 = vadd.f32 %v8759, %v8832
  %v8834 = vpop.f32.mrb[0].mxu0
  %8835 = vmatprep.mubr.f32.mxu0 0.0
  %8836 = vmatmul.mubr.f32.gmra.mrb[0].mxu0 %v8764
  %v8837 = vpop.f32.mrb[0].mxu0
  %v8838 = vadd.f32 %v8759, %v8837
  %v8839 = vpop.f32.mrb[0].mxu0
  %8840 = vdwg.mxu0
  %v8841 = vadd.f32 %v8833, %v6182
  %v8842 = vadd.f32 %v8838, %v6183
  %s8843 = scalar_lea.vmem %s6, 8
  %v8844 = vld [vmem:[%s8843] sm:$0x1]
  %v8845 = vld [vmem:[%s8843 + $0x3] sm:$0x1]
  %v8846 = vsel %vm140, %v8841, 0.0
  %8847 = vadd.xlane.f32.xlu0 %v8846
  %v8848 = vpop.xlane.xlu0 %8847
  %v8849 = vsel %vm140, %v8842, 0.0
  %8850 = vadd.xlane.f32.xlu0 %v8849
  %v8851 = vpop.xlane.xlu0 %8850
  %v8852 = vmul.f32 %v8848, %v147
  %v8853 = vmul.f32 %v8851, %v147
  %v8854 = vsub.f32 %v8841, %v8852
  %v8855 = vsub.f32 %v8842, %v8853
  %v8856 = vmul.f32 %v8854, %v8854
  %v8857 = vmul.f32 %v8855, %v8855
  %v8858 = vsel %vm140, %v8856, 0.0
  %8859 = vadd.xlane.f32.xlu0 %v8858
  %v8860 = vpop.xlane.xlu0 %8859
  %v8861 = vsel %vm140, %v8857, 0.0
  %8862 = vadd.xlane.f32.xlu0 %v8861
  %v8863 = vpop.xlane.xlu0 %8862
  %v8864 = vmul.f32 %v8860, %v147
  %v8865 = vmul.f32 %v8863, %v147
  %v8866 = vadd.f32 %v8864, 1e-12
  %v8867 = vadd.f32 %v8865, 1e-12
  %v8868 = vrsqrt.pop %v8866
  %v8869 = vrsqrt.pop %v8867
  %v8870 = vmul.f32 %v8854, %v8868
  %v8871 = vmul.f32 %v8855, %v8869
  %v8872 = vlaneseq
  %v8873 = vshrl.u32 %v8872, 7
  %v8874 = vsub.s32 0, %v8873
  %v8875 = vrot.slane %v8844, %v8874
  %v8876 = vmul.f32 %v8870, %v8875
  %v8877 = vmul.f32 %v8871, %v8875
  %v8878 = vlaneseq
  %v8879 = vshrl.u32 %v8878, 7
  %v8880 = vsub.s32 0, %v8879
  %v8881 = vrot.slane %v8845, %v8880
  %v8882 = vadd.f32 %v8876, %v8881
  %v8883 = vadd.f32 %v8877, %v8881
  %v8884 = vmul.f32 %v8882, %v2885
  %v8885 = vmul.f32 %v8883, %v2890
  %v8886 = vld [vmem:[%s6186 + $0x10] sm:$0xff]
  %v8887 = vld [vmem:[%s6186 + $0x40] sm:$0xff]
  %v8888 = vld [vmem:[%s6186 + $0x70] sm:$0xff]
  %v8889 = vld [vmem:[%s6186 + $0xa0] sm:$0xff]
  %v8890 = vld [vmem:[%s6186 + $0xd0] ss:$0 sm:$0xff]
  %v8892 = vsel %vm140, %v8884, 0
  %v8895 = vsel %vm140, %v8885, 0
  %8897 = vmatprep.subr.mxu0 0.0
  %8898 = vmatpush1.msra.mxu0 %v8886
  %8899 = vmatprep.subr.mxu0 0.0
  %8900 = vmatpush1.msra.mxu0 %v8887
  %8901 = vmatprep.subr.mxu0 0.0
  %8902 = vmatpush1.msra.mxu0 %v8888
  %8903 = vmatprep.subr.mxu0 0.0
  %8904 = vmatpush1.msra.mxu0 %v8889
  %8905 = vmatprep.subr.mxu0 0.0
  %8906 = vmatpush1.msra.mxu0 0.0
  %8907 = vmatprep.subr.mxu0 0.0
  %8908 = vmatpush1.msra.mxu0 0.0
  %8909 = vmatprep.subr.mxu0 0.0
  %8910 = vmatpush1.msra.mxu0 0.0
  %8911 = vmatprep.subr.mxu0 0.0
  %8912 = vmatpush1.msra.mxu0 0.0
  %8913 = vmatprep.subr.mxu0 0.0
  %8914 = vmatpush1.msra.mxu0 0.0
  %8915 = vmatprep.subr.mxu0 0.0
  %8916 = vmatpush1.msra.mxu0 0.0
  %8917 = vmatprep.subr.mxu0 0.0
  %8918 = vmatpush1.msra.mxu0 0.0
  %8919 = vmatprep.subr.mxu0 0.0
  %8920 = vmatpush1.msra.mxu0 0.0
  %8921 = vmatprep.subr.mxu0 0.0
  %8922 = vmatpush1.msra.mxu0 0.0
  %8923 = vmatprep.subr.mxu0 0.0
  %8924 = vmatpush1.msra.mxu0 0.0
  %8925 = vmatprep.subr.mxu0 0.0
  %8926 = vmatpush1.msra.mxu0 0.0
  %8927 = vmatprep.subr.mxu0 0.0
  %8928 = vmatpush1.msra.mxu0 0.0
  %8929 = vmatprep.subr.mxu0 0.0
  %8930 = vmatpush1.msra.mxu0 0.0
  %8931 = vmatprep.subr.mxu0 0.0
  %8932 = vmatpush1.msra.mxu0 0.0
  %8933 = vmatprep.subr.mxu0 0.0
  %8934 = vmatpush1.msra.mxu0 0.0
  %8935 = vmatprep.subr.mxu0 0.0
  %8936 = vmatpush1.msra.mxu0 0.0
  %8937 = vmatprep.subr.mxu0 0.0
  %8938 = vmatpush1.msra.mxu0 0.0
  %8939 = vmatprep.subr.mxu0 0.0
  %8940 = vmatpush1.msra.mxu0 0.0
  %8941 = vmatprep.subr.mxu0 0.0
  %8942 = vmatpush1.msra.mxu0 0.0
  %8943 = vmatprep.subr.mxu0 0.0
  %8944 = vmatpush1.msra.mxu0 0.0
  %8945 = vmatprep.subr.mxu0 0.0
  %8946 = vmatpush1.msra.mxu0 0.0
  %8947 = vmatprep.subr.mxu0 0.0
  %8948 = vmatpush1.msra.mxu0 0.0
  %8949 = vmatprep.subr.mxu0 0.0
  %8950 = vmatpush1.msra.mxu0 0.0
  %8951 = vmatprep.subr.mxu0 0.0
  %8952 = vmatpush1.msra.mxu0 0.0
  %8953 = vmatprep.subr.mxu0 0.0
  %8954 = vmatpush1.msra.mxu0 0.0
  %8955 = vmatprep.subr.mxu0 0.0
  %8956 = vmatpush1.msra.mxu0 0.0
  %8957 = vmatprep.subr.mxu0 0.0
  %8958 = vmatpush1.msra.mxu0 0.0
  %8959 = vmatprep.subr.mxu0 0.0
  %8960 = vmatpush1.msra.mxu0 0.0
  %8961 = vmatprep.mubr.f32.mxu0 0.0
  %8962 = vmatmul.mubr.f32.gmra.mrb[0].mxu0 %v8892
  %v8963 = vpop.f32.mrb[0].mxu0
  %v8964 = vadd.f32 %v8890, %v8963
  %v8965 = vpop.f32.mrb[0].mxu0
  %8966 = vmatprep.mubr.f32.mxu0 0.0
  %8967 = vmatmul.mubr.f32.gmra.mrb[0].mxu0 %v8895
  %v8968 = vpop.f32.mrb[0].mxu0
  %v8969 = vadd.f32 %v8890, %v8968
  %v8970 = vpop.f32.mrb[0].mxu0
  %8971 = vdwg.mxu0
  %v8972 = vld [vmem:[%s6186 + $0x18] sm:$0xff]
  %v8973 = vld [vmem:[%s6186 + $0x48] sm:$0xff]
  %v8974 = vld [vmem:[%s6186 + $0x78] sm:$0xff]
  %v8975 = vld [vmem:[%s6186 + $0xa8] sm:$0xff]
  %v8976 = vld [vmem:[%s6186 + $0xd8] ss:$0 sm:$0xff]
  %8977 = vmatprep.subr.mxu0 0.0
  %8978 = vmatpush1.msra.mxu0 %v8972
  %8979 = vmatprep.subr.mxu0 0.0
  %8980 = vmatpush1.msra.mxu0 %v8973
  %8981 = vmatprep.subr.mxu0 0.0
  %8982 = vmatpush1.msra.mxu0 %v8974
  %8983 = vmatprep.subr.mxu0 0.0
  %8984 = vmatpush1.msra.mxu0 %v8975
  %8985 = vmatprep.subr.mxu0 0.0
  %8986 = vmatpush1.msra.mxu0 0.0
  %8987 = vmatprep.subr.mxu0 0.0
  %8988 = vmatpush1.msra.mxu0 0.0
  %8989 = vmatprep.subr.mxu0 0.0
  %8990 = vmatpush1.msra.mxu0 0.0
  %8991 = vmatprep.subr.mxu0 0.0
  %8992 = vmatpush1.msra.mxu0 0.0
  %8993 = vmatprep.subr.mxu0 0.0
  %8994 = vmatpush1.msra.mxu0 0.0
  %8995 = vmatprep.subr.mxu0 0.0
  %8996 = vmatpush1.msra.mxu0 0.0
  %8997 = vmatprep.subr.mxu0 0.0
  %8998 = vmatpush1.msra.mxu0 0.0
  %8999 = vmatprep.subr.mxu0 0.0
  %9000 = vmatpush1.msra.mxu0 0.0
  %9001 = vmatprep.subr.mxu0 0.0
  %9002 = vmatpush1.msra.mxu0 0.0
  %9003 = vmatprep.subr.mxu0 0.0
  %9004 = vmatpush1.msra.mxu0 0.0
  %9005 = vmatprep.subr.mxu0 0.0
  %9006 = vmatpush1.msra.mxu0 0.0
  %9007 = vmatprep.subr.mxu0 0.0
  %9008 = vmatpush1.msra.mxu0 0.0
  %9009 = vmatprep.subr.mxu0 0.0
  %9010 = vmatpush1.msra.mxu0 0.0
  %9011 = vmatprep.subr.mxu0 0.0
  %9012 = vmatpush1.msra.mxu0 0.0
  %9013 = vmatprep.subr.mxu0 0.0
  %9014 = vmatpush1.msra.mxu0 0.0
  %9015 = vmatprep.subr.mxu0 0.0
  %9016 = vmatpush1.msra.mxu0 0.0
  %9017 = vmatprep.subr.mxu0 0.0
  %9018 = vmatpush1.msra.mxu0 0.0
  %9019 = vmatprep.subr.mxu0 0.0
  %9020 = vmatpush1.msra.mxu0 0.0
  %9021 = vmatprep.subr.mxu0 0.0
  %9022 = vmatpush1.msra.mxu0 0.0
  %9023 = vmatprep.subr.mxu0 0.0
  %9024 = vmatpush1.msra.mxu0 0.0
  %9025 = vmatprep.subr.mxu0 0.0
  %9026 = vmatpush1.msra.mxu0 0.0
  %9027 = vmatprep.subr.mxu0 0.0
  %9028 = vmatpush1.msra.mxu0 0.0
  %9029 = vmatprep.subr.mxu0 0.0
  %9030 = vmatpush1.msra.mxu0 0.0
  %9031 = vmatprep.subr.mxu0 0.0
  %9032 = vmatpush1.msra.mxu0 0.0
  %9033 = vmatprep.subr.mxu0 0.0
  %9034 = vmatpush1.msra.mxu0 0.0
  %9035 = vmatprep.subr.mxu0 0.0
  %9036 = vmatpush1.msra.mxu0 0.0
  %9037 = vmatprep.subr.mxu0 0.0
  %9038 = vmatpush1.msra.mxu0 0.0
  %9039 = vmatprep.subr.mxu0 0.0
  %9040 = vmatpush1.msra.mxu0 0.0
  %9041 = vmatprep.mubr.f32.mxu0 0.0
  %9042 = vmatmul.mubr.f32.gmra.mrb[0].mxu0 %v2986
  %v9043 = vpop.f32.mrb[0].mxu0
  %v9044 = vadd.f32 %v8976, %v9043
  %v9045 = vpop.f32.mrb[0].mxu0
  %9046 = vmatprep.mubr.f32.mxu0 0.0
  %9047 = vmatmul.mubr.f32.gmra.mrb[0].mxu0 %v2989
  %v9048 = vpop.f32.mrb[0].mxu0
  %v9049 = vadd.f32 %v8976, %v9048
  %v9050 = vpop.f32.mrb[0].mxu0
  %9051 = vmatprep.mubr.f32.mxu0 0.0
  %9052 = vmatmul.mubr.f32.gmra.mrb[0].mxu0 %v2992
  %v9053 = vpop.f32.mrb[0].mxu0
  %v9054 = vadd.f32 %v8976, %v9053
  %v9055 = vpop.f32.mrb[0].mxu0
  %9056 = vdwg.mxu0
  %9059 = vrot.lane.b32.xlu0 %v8964, 120
  %v9060 = vpop.permute.xlu0 %9059
  %9061 = vrot.lane.b32.xlu0 %v8969, 120
  %v9062 = vpop.permute.xlu0 %9061
  %9065 = vrot.lane.b32.xlu0 %v8964, 112
  %v9066 = vpop.permute.xlu0 %9065
  %9067 = vrot.lane.b32.xlu0 %v8969, 112
  %v9068 = vpop.permute.xlu0 %9067
  %9071 = vrot.lane.b32.xlu0 %v8964, 104
  %v9072 = vpop.permute.xlu0 %9071
  %9073 = vrot.lane.b32.xlu0 %v8969, 104
  %v9074 = vpop.permute.xlu0 %9073
  %v9077 = vcombine.low %v8964, %v9066
  %v9078 = vcombine.high %v8964, %v9066
  %v9080 = vunpack.c.l.s4 1983009808
  %v9081 = vunpack.c.0.s8 %v9080
  %v9082 = vlaneseq
  %v9083 = vshrl.u32 %v9082, 7
  %v9084 = vsub.s32 %v9081, %v9083
  %v9085 = vrot.slane %v9077, %v9084
  %v9087 = vunpack.c.l.s4 1983009808
  %v9088 = vunpack.c.0.s8 %v9087
  %v9089 = vlaneseq
  %v9090 = vshrl.u32 %v9089, 7
  %v9091 = vsub.s32 %v9088, %v9090
  %v9092 = vrot.slane %v9078, %v9091
  %v9093 = vcombine.low %v9060, %v9072
  %v9094 = vcombine.high %v9060, %v9072
  %v9096 = vunpack.c.l.s4 1983009808
  %v9097 = vunpack.c.0.s8 %v9096
  %v9098 = vlaneseq
  %v9099 = vshrl.u32 %v9098, 7
  %v9100 = vsub.s32 %v9097, %v9099
  %v9101 = vrot.slane %v9093, %v9100
  %v9103 = vunpack.c.l.s4 1983009808
  %v9104 = vunpack.c.0.s8 %v9103
  %v9105 = vlaneseq
  %v9106 = vshrl.u32 %v9105, 7
  %v9107 = vsub.s32 %v9104, %v9106
  %v9108 = vrot.slane %v9094, %v9107
  %v9109 = vcombine.low %v9085, %v9101
  %v9110 = vcombine.high %v9085, %v9101
  %v9112 = vunpack.c.l.s4 1934713408
  %v9113 = vunpack.c.0.s8 %v9112
  %v9114 = vlaneseq
  %v9115 = vshrl.u32 %v9114, 7
  %v9116 = vsub.s32 %v9113, %v9115
  %v9117 = vrot.slane %v9109, %v9116
  %v9119 = vunpack.c.l.s4 1934713408
  %v9120 = vunpack.c.0.s8 %v9119
  %v9121 = vlaneseq
  %v9122 = vshrl.u32 %v9121, 7
  %v9123 = vsub.s32 %v9120, %v9122
  %v9124 = vrot.slane %v9110, %v9123
  %v9125 = vcombine.low %v9092, %v9108
  %v9126 = vcombine.high %v9092, %v9108
  %v9128 = vunpack.c.l.s4 1934713408
  %v9129 = vunpack.c.0.s8 %v9128
  %v9130 = vlaneseq
  %v9131 = vshrl.u32 %v9130, 7
  %v9132 = vsub.s32 %v9129, %v9131
  %v9133 = vrot.slane %v9125, %v9132
  %v9135 = vunpack.c.l.s4 1934713408
  %v9136 = vunpack.c.0.s8 %v9135
  %v9137 = vlaneseq
  %v9138 = vshrl.u32 %v9137, 7
  %v9139 = vsub.s32 %v9136, %v9138
  %v9140 = vrot.slane %v9126, %v9139
  %v9141 = vcombine.high %v9117, 0.0
  %v9142 = vcombine.high %v9124, 0.0
  %v9143 = vcombine.high %v9133, 0.0
  %v9144 = vcombine.high %v9140, 0.0
  %v9145 = vcombine.low %v8969, %v9068
  %v9146 = vcombine.high %v8969, %v9068
  %v9148 = vunpack.c.l.s4 1983009808
  %v9149 = vunpack.c.0.s8 %v9148
  %v9150 = vlaneseq
  %v9151 = vshrl.u32 %v9150, 7
  %v9152 = vsub.s32 %v9149, %v9151
  %v9153 = vrot.slane %v9145, %v9152
  %v9155 = vunpack.c.l.s4 1983009808
  %v9156 = vunpack.c.0.s8 %v9155
  %v9157 = vlaneseq
  %v9158 = vshrl.u32 %v9157, 7
  %v9159 = vsub.s32 %v9156, %v9158
  %v9160 = vrot.slane %v9146, %v9159
  %v9161 = vcombine.low %v9062, %v9074
  %v9162 = vcombine.high %v9062, %v9074
  %v9164 = vunpack.c.l.s4 1983009808
  %v9165 = vunpack.c.0.s8 %v9164
  %v9166 = vlaneseq
  %v9167 = vshrl.u32 %v9166, 7
  %v9168 = vsub.s32 %v9165, %v9167
  %v9169 = vrot.slane %v9161, %v9168
  %v9171 = vunpack.c.l.s4 1983009808
  %v9172 = vunpack.c.0.s8 %v9171
  %v9173 = vlaneseq
  %v9174 = vshrl.u32 %v9173, 7
  %v9175 = vsub.s32 %v9172, %v9174
  %v9176 = vrot.slane %v9162, %v9175
  %v9177 = vcombine.low %v9153, %v9169
  %v9178 = vcombine.high %v9153, %v9169
  %v9180 = vunpack.c.l.s4 1934713408
  %v9181 = vunpack.c.0.s8 %v9180
  %v9182 = vlaneseq
  %v9183 = vshrl.u32 %v9182, 7
  %v9184 = vsub.s32 %v9181, %v9183
  %v9185 = vrot.slane %v9177, %v9184
  %v9187 = vunpack.c.l.s4 1934713408
  %v9188 = vunpack.c.0.s8 %v9187
  %v9189 = vlaneseq
  %v9190 = vshrl.u32 %v9189, 7
  %v9191 = vsub.s32 %v9188, %v9190
  %v9192 = vrot.slane %v9178, %v9191
  %v9193 = vcombine.low %v9160, %v9176
  %v9194 = vcombine.high %v9160, %v9176
  %v9196 = vunpack.c.l.s4 1934713408
  %v9197 = vunpack.c.0.s8 %v9196
  %v9198 = vlaneseq
  %v9199 = vshrl.u32 %v9198, 7
  %v9200 = vsub.s32 %v9197, %v9199
  %v9201 = vrot.slane %v9193, %v9200
  %v9203 = vunpack.c.l.s4 1934713408
  %v9204 = vunpack.c.0.s8 %v9203
  %v9205 = vlaneseq
  %v9206 = vshrl.u32 %v9205, 7
  %v9207 = vsub.s32 %v9204, %v9206
  %v9208 = vrot.slane %v9194, %v9207
  %v9209 = vcombine.high %v9185, 0.0
  %v9210 = vcombine.high %v9192, 0.0
  %v9211 = vcombine.high %v9201, 0.0
  %v9212 = vcombine.high %v9208, 0.0
  %v9213 = vcombine.low %v9117, %v9124
  %v9215 = vunpack.c.l.s4 1983009808
  %v9216 = vunpack.c.0.s8 %v9215
  %v9217 = vlaneseq
  %v9218 = vshrl.u32 %v9217, 7
  %v9219 = vsub.s32 %v9216, %v9218
  %v9220 = vrot.slane %v9213, %v9219
  %v9221 = vcombine.low %v9141, %v9142
  %v9223 = vunpack.c.l.s4 1983009808
  %v9224 = vunpack.c.0.s8 %v9223
  %v9225 = vlaneseq
  %v9226 = vshrl.u32 %v9225, 7
  %v9227 = vsub.s32 %v9224, %v9226
  %v9228 = vrot.slane %v9221, %v9227
  %v9229 = vcombine.low %v9133, %v9140
  %v9231 = vunpack.c.l.s4 1983009808
  %v9232 = vunpack.c.0.s8 %v9231
  %v9233 = vlaneseq
  %v9234 = vshrl.u32 %v9233, 7
  %v9235 = vsub.s32 %v9232, %v9234
  %v9236 = vrot.slane %v9229, %v9235
  %v9237 = vcombine.low %v9143, %v9144
  %v9239 = vunpack.c.l.s4 1983009808
  %v9240 = vunpack.c.0.s8 %v9239
  %v9241 = vlaneseq
  %v9242 = vshrl.u32 %v9241, 7
  %v9243 = vsub.s32 %v9240, %v9242
  %v9244 = vrot.slane %v9237, %v9243
  %v9245 = vcombine.low %v9220, %v9228
  %v9246 = vcombine.high %v9220, %v9228
  %v9248 = vunpack.c.l.s4 1934713408
  %v9249 = vunpack.c.0.s8 %v9248
  %v9250 = vlaneseq
  %v9251 = vshrl.u32 %v9250, 7
  %v9252 = vsub.s32 %v9249, %v9251
  %v9253 = vrot.slane %v9245, %v9252
  %v9255 = vunpack.c.l.s4 1934713408
  %v9256 = vunpack.c.0.s8 %v9255
  %v9257 = vlaneseq
  %v9258 = vshrl.u32 %v9257, 7
  %v9259 = vsub.s32 %v9256, %v9258
  %v9260 = vrot.slane %v9246, %v9259
  %v9261 = vcombine.low %v9236, %v9244
  %v9262 = vcombine.high %v9236, %v9244
  %v9264 = vunpack.c.l.s4 1934713408
  %v9265 = vunpack.c.0.s8 %v9264
  %v9266 = vlaneseq
  %v9267 = vshrl.u32 %v9266, 7
  %v9268 = vsub.s32 %v9265, %v9267
  %v9269 = vrot.slane %v9261, %v9268
  %v9271 = vunpack.c.l.s4 1934713408
  %v9272 = vunpack.c.0.s8 %v9271
  %v9273 = vlaneseq
  %v9274 = vshrl.u32 %v9273, 7
  %v9275 = vsub.s32 %v9272, %v9274
  %v9276 = vrot.slane %v9262, %v9275
  %v9277 = vcombine.low %v9253, %v9269
  %v9278 = vcombine.high %v9253, %v9269
  %v9279 = vcombine.low %v9260, %v9276
  %v9280 = vcombine.high %v9260, %v9276
  %v9281 = vcombine.low %v9185, %v9192
  %v9283 = vunpack.c.l.s4 1983009808
  %v9284 = vunpack.c.0.s8 %v9283
  %v9285 = vlaneseq
  %v9286 = vshrl.u32 %v9285, 7
  %v9287 = vsub.s32 %v9284, %v9286
  %v9288 = vrot.slane %v9281, %v9287
  %v9289 = vcombine.low %v9209, %v9210
  %v9291 = vunpack.c.l.s4 1983009808
  %v9292 = vunpack.c.0.s8 %v9291
  %v9293 = vlaneseq
  %v9294 = vshrl.u32 %v9293, 7
  %v9295 = vsub.s32 %v9292, %v9294
  %v9296 = vrot.slane %v9289, %v9295
  %v9297 = vcombine.low %v9201, %v9208
  %v9299 = vunpack.c.l.s4 1983009808
  %v9300 = vunpack.c.0.s8 %v9299
  %v9301 = vlaneseq
  %v9302 = vshrl.u32 %v9301, 7
  %v9303 = vsub.s32 %v9300, %v9302
  %v9304 = vrot.slane %v9297, %v9303
  %v9305 = vcombine.low %v9211, %v9212
  %v9307 = vunpack.c.l.s4 1983009808
  %v9308 = vunpack.c.0.s8 %v9307
  %v9309 = vlaneseq
  %v9310 = vshrl.u32 %v9309, 7
  %v9311 = vsub.s32 %v9308, %v9310
  %v9312 = vrot.slane %v9305, %v9311
  %v9313 = vcombine.low %v9288, %v9296
  %v9314 = vcombine.high %v9288, %v9296
  %v9316 = vunpack.c.l.s4 1934713408
  %v9317 = vunpack.c.0.s8 %v9316
  %v9318 = vlaneseq
  %v9319 = vshrl.u32 %v9318, 7
  %v9320 = vsub.s32 %v9317, %v9319
  %v9321 = vrot.slane %v9313, %v9320
  %v9323 = vunpack.c.l.s4 1934713408
  %v9324 = vunpack.c.0.s8 %v9323
  %v9325 = vlaneseq
  %v9326 = vshrl.u32 %v9325, 7
  %v9327 = vsub.s32 %v9324, %v9326
  %v9328 = vrot.slane %v9314, %v9327
  %v9329 = vcombine.low %v9304, %v9312
  %v9330 = vcombine.high %v9304, %v9312
  %v9332 = vunpack.c.l.s4 1934713408
  %v9333 = vunpack.c.0.s8 %v9332
  %v9334 = vlaneseq
  %v9335 = vshrl.u32 %v9334, 7
  %v9336 = vsub.s32 %v9333, %v9335
  %v9337 = vrot.slane %v9329, %v9336
  %v9339 = vunpack.c.l.s4 1934713408
  %v9340 = vunpack.c.0.s8 %v9339
  %v9341 = vlaneseq
  %v9342 = vshrl.u32 %v9341, 7
  %v9343 = vsub.s32 %v9340, %v9342
  %v9344 = vrot.slane %v9330, %v9343
  %v9345 = vcombine.low %v9321, %v9337
  %v9346 = vcombine.high %v9321, %v9337
  %v9347 = vcombine.low %v9328, %v9344
  %v9348 = vcombine.high %v9328, %v9344
  %9352 = vrot.lane.b32.xlu0 %v9044, 120
  %v9353 = vpop.permute.xlu0 %9352
  %9354 = vrot.lane.b32.xlu0 %v9049, 120
  %v9355 = vpop.permute.xlu0 %9354
  %9356 = vrot.lane.b32.xlu0 %v9054, 120
  %v9357 = vpop.permute.xlu0 %9356
  %9361 = vrot.lane.b32.xlu0 %v9044, 112
  %v9362 = vpop.permute.xlu0 %9361
  %9363 = vrot.lane.b32.xlu0 %v9049, 112
  %v9364 = vpop.permute.xlu0 %9363
  %9365 = vrot.lane.b32.xlu0 %v9054, 112
  %v9366 = vpop.permute.xlu0 %9365
  %9370 = vrot.lane.b32.xlu0 %v9044, 104
  %v9371 = vpop.permute.xlu0 %9370
  %9372 = vrot.lane.b32.xlu0 %v9049, 104
  %v9373 = vpop.permute.xlu0 %9372
  %9374 = vrot.lane.b32.xlu0 %v9054, 104
  %v9375 = vpop.permute.xlu0 %9374
  %v9379 = vcombine.low %v9044, %v9362
  %v9380 = vcombine.high %v9044, %v9362
  %v9382 = vunpack.c.l.s4 1983009808
  %v9383 = vunpack.c.0.s8 %v9382
  %v9384 = vlaneseq
  %v9385 = vshrl.u32 %v9384, 7
  %v9386 = vsub.s32 %v9383, %v9385
  %v9387 = vrot.slane %v9379, %v9386
  %v9389 = vunpack.c.l.s4 1983009808
  %v9390 = vunpack.c.0.s8 %v9389
  %v9391 = vlaneseq
  %v9392 = vshrl.u32 %v9391, 7
  %v9393 = vsub.s32 %v9390, %v9392
  %v9394 = vrot.slane %v9380, %v9393
  %v9395 = vcombine.low %v9353, %v9371
  %v9396 = vcombine.high %v9353, %v9371
  %v9398 = vunpack.c.l.s4 1983009808
  %v9399 = vunpack.c.0.s8 %v9398
  %v9400 = vlaneseq
  %v9401 = vshrl.u32 %v9400, 7
  %v9402 = vsub.s32 %v9399, %v9401
  %v9403 = vrot.slane %v9395, %v9402
  %v9405 = vunpack.c.l.s4 1983009808
  %v9406 = vunpack.c.0.s8 %v9405
  %v9407 = vlaneseq
  %v9408 = vshrl.u32 %v9407, 7
  %v9409 = vsub.s32 %v9406, %v9408
  %v9410 = vrot.slane %v9396, %v9409
  %v9411 = vcombine.low %v9387, %v9403
  %v9412 = vcombine.high %v9387, %v9403
  %v9414 = vunpack.c.l.s4 1934713408
  %v9415 = vunpack.c.0.s8 %v9414
  %v9416 = vlaneseq
  %v9417 = vshrl.u32 %v9416, 7
  %v9418 = vsub.s32 %v9415, %v9417
  %v9419 = vrot.slane %v9411, %v9418
  %v9421 = vunpack.c.l.s4 1934713408
  %v9422 = vunpack.c.0.s8 %v9421
  %v9423 = vlaneseq
  %v9424 = vshrl.u32 %v9423, 7
  %v9425 = vsub.s32 %v9422, %v9424
  %v9426 = vrot.slane %v9412, %v9425
  %v9427 = vcombine.low %v9394, %v9410
  %v9428 = vcombine.high %v9394, %v9410
  %v9430 = vunpack.c.l.s4 1934713408
  %v9431 = vunpack.c.0.s8 %v9430
  %v9432 = vlaneseq
  %v9433 = vshrl.u32 %v9432, 7
  %v9434 = vsub.s32 %v9431, %v9433
  %v9435 = vrot.slane %v9427, %v9434
  %v9437 = vunpack.c.l.s4 1934713408
  %v9438 = vunpack.c.0.s8 %v9437
  %v9439 = vlaneseq
  %v9440 = vshrl.u32 %v9439, 7
  %v9441 = vsub.s32 %v9438, %v9440
  %v9442 = vrot.slane %v9428, %v9441
  %v9443 = vcombine.high %v9419, 0.0
  %v9444 = vcombine.high %v9426, 0.0
  %v9445 = vcombine.high %v9435, 0.0
  %v9446 = vcombine.high %v9442, 0.0
  %v9447 = vcombine.low %v9049, %v9364
  %v9448 = vcombine.high %v9049, %v9364
  %v9450 = vunpack.c.l.s4 1983009808
  %v9451 = vunpack.c.0.s8 %v9450
  %v9452 = vlaneseq
  %v9453 = vshrl.u32 %v9452, 7
  %v9454 = vsub.s32 %v9451, %v9453
  %v9455 = vrot.slane %v9447, %v9454
  %v9457 = vunpack.c.l.s4 1983009808
  %v9458 = vunpack.c.0.s8 %v9457
  %v9459 = vlaneseq
  %v9460 = vshrl.u32 %v9459, 7
  %v9461 = vsub.s32 %v9458, %v9460
  %v9462 = vrot.slane %v9448, %v9461
  %v9463 = vcombine.low %v9355, %v9373
  %v9464 = vcombine.high %v9355, %v9373
  %v9466 = vunpack.c.l.s4 1983009808
  %v9467 = vunpack.c.0.s8 %v9466
  %v9468 = vlaneseq
  %v9469 = vshrl.u32 %v9468, 7
  %v9470 = vsub.s32 %v9467, %v9469
  %v9471 = vrot.slane %v9463, %v9470
  %v9473 = vunpack.c.l.s4 1983009808
  %v9474 = vunpack.c.0.s8 %v9473
  %v9475 = vlaneseq
  %v9476 = vshrl.u32 %v9475, 7
  %v9477 = vsub.s32 %v9474, %v9476
  %v9478 = vrot.slane %v9464, %v9477
  %v9479 = vcombine.low %v9455, %v9471
  %v9480 = vcombine.high %v9455, %v9471
  %v9482 = vunpack.c.l.s4 1934713408
  %v9483 = vunpack.c.0.s8 %v9482
  %v9484 = vlaneseq
  %v9485 = vshrl.u32 %v9484, 7
  %v9486 = vsub.s32 %v9483, %v9485
  %v9487 = vrot.slane %v9479, %v9486
  %v9489 = vunpack.c.l.s4 1934713408
  %v9490 = vunpack.c.0.s8 %v9489
  %v9491 = vlaneseq
  %v9492 = vshrl.u32 %v9491, 7
  %v9493 = vsub.s32 %v9490, %v9492
  %v9494 = vrot.slane %v9480, %v9493
  %v9495 = vcombine.low %v9462, %v9478
  %v9496 = vcombine.high %v9462, %v9478
  %v9498 = vunpack.c.l.s4 1934713408
  %v9499 = vunpack.c.0.s8 %v9498
  %v9500 = vlaneseq
  %v9501 = vshrl.u32 %v9500, 7
  %v9502 = vsub.s32 %v9499, %v9501
  %v9503 = vrot.slane %v9495, %v9502
  %v9505 = vunpack.c.l.s4 1934713408
  %v9506 = vunpack.c.0.s8 %v9505
  %v9507 = vlaneseq
  %v9508 = vshrl.u32 %v9507, 7
  %v9509 = vsub.s32 %v9506, %v9508
  %v9510 = vrot.slane %v9496, %v9509
  %v9511 = vcombine.high %v9494, 0.0
  %v9512 = vcombine.high %v9503, 0.0
  %v9513 = vcombine.high %v9510, 0.0
  %v9514 = vcombine.low %v9054, %v9366
  %v9516 = vunpack.c.l.s4 1983009808
  %v9517 = vunpack.c.0.s8 %v9516
  %v9518 = vlaneseq
  %v9519 = vshrl.u32 %v9518, 7
  %v9520 = vsub.s32 %v9517, %v9519
  %v9521 = vrot.slane %v9514, %v9520
  %v9522 = vcombine.low %v9357, %v9375
  %v9524 = vunpack.c.l.s4 1983009808
  %v9525 = vunpack.c.0.s8 %v9524
  %v9526 = vlaneseq
  %v9527 = vshrl.u32 %v9526, 7
  %v9528 = vsub.s32 %v9525, %v9527
  %v9529 = vrot.slane %v9522, %v9528
  %v9530 = vcombine.low %v9521, %v9529
  %v9531 = vcombine.high %v9521, %v9529
  %v9533 = vunpack.c.l.s4 1934713408
  %v9534 = vunpack.c.0.s8 %v9533
  %v9535 = vlaneseq
  %v9536 = vshrl.u32 %v9535, 7
  %v9537 = vsub.s32 %v9534, %v9536
  %v9538 = vrot.slane %v9530, %v9537
  %v9540 = vunpack.c.l.s4 1934713408
  %v9541 = vunpack.c.0.s8 %v9540
  %v9542 = vlaneseq
  %v9543 = vshrl.u32 %v9542, 7
  %v9544 = vsub.s32 %v9541, %v9543
  %v9545 = vrot.slane %v9531, %v9544
  %v9546 = vcombine.high %v9538, 0.0
  %v9547 = vcombine.low %v9419, %v9426
  %v9549 = vunpack.c.l.s4 1983009808
  %v9550 = vunpack.c.0.s8 %v9549
  %v9551 = vlaneseq
  %v9552 = vshrl.u32 %v9551, 7
  %v9553 = vsub.s32 %v9550, %v9552
  %v9554 = vrot.slane %v9547, %v9553
  %v9555 = vcombine.low %v9443, %v9444
  %v9557 = vunpack.c.l.s4 1983009808
  %v9558 = vunpack.c.0.s8 %v9557
  %v9559 = vlaneseq
  %v9560 = vshrl.u32 %v9559, 7
  %v9561 = vsub.s32 %v9558, %v9560
  %v9562 = vrot.slane %v9555, %v9561
  %v9563 = vcombine.low %v9435, %v9442
  %v9565 = vunpack.c.l.s4 1983009808
  %v9566 = vunpack.c.0.s8 %v9565
  %v9567 = vlaneseq
  %v9568 = vshrl.u32 %v9567, 7
  %v9569 = vsub.s32 %v9566, %v9568
  %v9570 = vrot.slane %v9563, %v9569
  %v9571 = vcombine.low %v9445, %v9446
  %v9573 = vunpack.c.l.s4 1983009808
  %v9574 = vunpack.c.0.s8 %v9573
  %v9575 = vlaneseq
  %v9576 = vshrl.u32 %v9575, 7
  %v9577 = vsub.s32 %v9574, %v9576
  %v9578 = vrot.slane %v9571, %v9577
  %v9579 = vcombine.low %v9554, %v9562
  %v9580 = vcombine.high %v9554, %v9562
  %v9582 = vunpack.c.l.s4 1934713408
  %v9583 = vunpack.c.0.s8 %v9582
  %v9584 = vlaneseq
  %v9585 = vshrl.u32 %v9584, 7
  %v9586 = vsub.s32 %v9583, %v9585
  %v9587 = vrot.slane %v9579, %v9586
  %v9589 = vunpack.c.l.s4 1934713408
  %v9590 = vunpack.c.0.s8 %v9589
  %v9591 = vlaneseq
  %v9592 = vshrl.u32 %v9591, 7
  %v9593 = vsub.s32 %v9590, %v9592
  %v9594 = vrot.slane %v9580, %v9593
  %v9595 = vcombine.low %v9570, %v9578
  %v9596 = vcombine.high %v9570, %v9578
  %v9598 = vunpack.c.l.s4 1934713408
  %v9599 = vunpack.c.0.s8 %v9598
  %v9600 = vlaneseq
  %v9601 = vshrl.u32 %v9600, 7
  %v9602 = vsub.s32 %v9599, %v9601
  %v9603 = vrot.slane %v9595, %v9602
  %v9605 = vunpack.c.l.s4 1934713408
  %v9606 = vunpack.c.0.s8 %v9605
  %v9607 = vlaneseq
  %v9608 = vshrl.u32 %v9607, 7
  %v9609 = vsub.s32 %v9606, %v9608
  %v9610 = vrot.slane %v9596, %v9609
  %v9611 = vcombine.low %v9587, %v9603
  %v9612 = vcombine.high %v9587, %v9603
  %v9613 = vcombine.low %v9594, %v9610
  %v9614 = vcombine.high %v9594, %v9610
  %v9616 = vunpack.c.l.s4 1983009808
  %v9617 = vunpack.c.0.s8 %v9616
  %v9618 = vlaneseq
  %v9619 = vshrl.u32 %v9618, 7
  %v9620 = vsub.s32 %v9617, %v9619
  %v9621 = vrot.slane %v9487, %v9620
  %v9622 = vcombine.high %v9487, 0.0
  %v9624 = vunpack.c.l.s4 1983009808
  %v9625 = vunpack.c.0.s8 %v9624
  %v9626 = vlaneseq
  %v9627 = vshrl.u32 %v9626, 7
  %v9628 = vsub.s32 %v9625, %v9627
  %v9629 = vrot.slane %v9622, %v9628
  %v9630 = vcombine.low %v9621, %v9629
  %v9631 = vcombine.high %v9621, %v9629
  %v9633 = vunpack.c.l.s4 1934713408
  %v9634 = vunpack.c.0.s8 %v9633
  %v9635 = vlaneseq
  %v9636 = vshrl.u32 %v9635, 7
  %v9637 = vsub.s32 %v9634, %v9636
  %v9638 = vrot.slane %v9630, %v9637
  %v9640 = vunpack.c.l.s4 1934713408
  %v9641 = vunpack.c.0.s8 %v9640
  %v9642 = vlaneseq
  %v9643 = vshrl.u32 %v9642, 7
  %v9644 = vsub.s32 %v9641, %v9643
  %v9645 = vrot.slane %v9631, %v9644
  %v9646 = vcombine.high %v9638, 0.0
  %v9647 = vcombine.high %v9645, 0.0
  %v9648 = vcombine.low %v9494, %v9503
  %v9650 = vunpack.c.l.s4 1983009808
  %v9651 = vunpack.c.0.s8 %v9650
  %v9652 = vlaneseq
  %v9653 = vshrl.u32 %v9652, 7
  %v9654 = vsub.s32 %v9651, %v9653
  %v9655 = vrot.slane %v9648, %v9654
  %v9656 = vcombine.low %v9511, %v9512
  %v9658 = vunpack.c.l.s4 1983009808
  %v9659 = vunpack.c.0.s8 %v9658
  %v9660 = vlaneseq
  %v9661 = vshrl.u32 %v9660, 7
  %v9662 = vsub.s32 %v9659, %v9661
  %v9663 = vrot.slane %v9656, %v9662
  %v9664 = vcombine.low %v9510, %v9538
  %v9666 = vunpack.c.l.s4 1983009808
  %v9667 = vunpack.c.0.s8 %v9666
  %v9668 = vlaneseq
  %v9669 = vshrl.u32 %v9668, 7
  %v9670 = vsub.s32 %v9667, %v9669
  %v9671 = vrot.slane %v9664, %v9670
  %v9672 = vcombine.low %v9513, %v9546
  %v9674 = vunpack.c.l.s4 1983009808
  %v9675 = vunpack.c.0.s8 %v9674
  %v9676 = vlaneseq
  %v9677 = vshrl.u32 %v9676, 7
  %v9678 = vsub.s32 %v9675, %v9677
  %v9679 = vrot.slane %v9672, %v9678
  %v9680 = vcombine.low %v9655, %v9663
  %v9681 = vcombine.high %v9655, %v9663
  %v9683 = vunpack.c.l.s4 1934713408
  %v9684 = vunpack.c.0.s8 %v9683
  %v9685 = vlaneseq
  %v9686 = vshrl.u32 %v9685, 7
  %v9687 = vsub.s32 %v9684, %v9686
  %v9688 = vrot.slane %v9680, %v9687
  %v9690 = vunpack.c.l.s4 1934713408
  %v9691 = vunpack.c.0.s8 %v9690
  %v9692 = vlaneseq
  %v9693 = vshrl.u32 %v9692, 7
  %v9694 = vsub.s32 %v9691, %v9693
  %v9695 = vrot.slane %v9681, %v9694
  %v9696 = vcombine.low %v9671, %v9679
  %v9697 = vcombine.high %v9671, %v9679
  %v9699 = vunpack.c.l.s4 1934713408
  %v9700 = vunpack.c.0.s8 %v9699
  %v9701 = vlaneseq
  %v9702 = vshrl.u32 %v9701, 7
  %v9703 = vsub.s32 %v9700, %v9702
  %v9704 = vrot.slane %v9696, %v9703
  %v9706 = vunpack.c.l.s4 1934713408
  %v9707 = vunpack.c.0.s8 %v9706
  %v9708 = vlaneseq
  %v9709 = vshrl.u32 %v9708, 7
  %v9710 = vsub.s32 %v9707, %v9709
  %v9711 = vrot.slane %v9697, %v9710
  %v9712 = vcombine.low %v9688, %v9704
  %v9713 = vcombine.high %v9688, %v9704
  %v9714 = vcombine.low %v9695, %v9711
  %v9715 = vcombine.high %v9695, %v9711
  %v9717 = vunpack.c.l.s4 1983009808
  %v9718 = vunpack.c.0.s8 %v9717
  %v9719 = vlaneseq
  %v9720 = vshrl.u32 %v9719, 7
  %v9721 = vsub.s32 %v9718, %v9720
  %v9722 = vrot.slane %v9545, %v9721
  %v9723 = vcombine.high %v9545, 0.0
  %v9725 = vunpack.c.l.s4 1983009808
  %v9726 = vunpack.c.0.s8 %v9725
  %v9727 = vlaneseq
  %v9728 = vshrl.u32 %v9727, 7
  %v9729 = vsub.s32 %v9726, %v9728
  %v9730 = vrot.slane %v9723, %v9729
  %v9731 = vcombine.low %v9722, %v9730
  %v9732 = vcombine.high %v9722, %v9730
  %v9734 = vunpack.c.l.s4 1934713408
  %v9735 = vunpack.c.0.s8 %v9734
  %v9736 = vlaneseq
  %v9737 = vshrl.u32 %v9736, 7
  %v9738 = vsub.s32 %v9735, %v9737
  %v9739 = vrot.slane %v9731, %v9738
  %v9741 = vunpack.c.l.s4 1934713408
  %v9742 = vunpack.c.0.s8 %v9741
  %v9743 = vlaneseq
  %v9744 = vshrl.u32 %v9743, 7
  %v9745 = vsub.s32 %v9742, %v9744
  %v9746 = vrot.slane %v9732, %v9745
  %v9747 = vcombine.high %v9739, 0.0
  %v9748 = vcombine.high %v9746, 0.0
  %9749 = vrot.lane.b32.xlu0 %v9044, 96
  %v9750 = vpop.permute.xlu0 %9749
  %9751 = vrot.lane.b32.xlu0 %v9049, 96
  %v9752 = vpop.permute.xlu0 %9751
  %9753 = vrot.lane.b32.xlu0 %v9054, 96
  %v9754 = vpop.permute.xlu0 %9753
  %9755 = vrot.lane.b32.xlu0 %v9353, 96
  %v9756 = vpop.permute.xlu0 %9755
  %9757 = vrot.lane.b32.xlu0 %v9355, 96
  %v9758 = vpop.permute.xlu0 %9757
  %9759 = vrot.lane.b32.xlu0 %v9357, 96
  %v9760 = vpop.permute.xlu0 %9759
  %9761 = vrot.lane.b32.xlu0 %v9362, 96
  %v9762 = vpop.permute.xlu0 %9761
  %9763 = vrot.lane.b32.xlu0 %v9364, 96
  %v9764 = vpop.permute.xlu0 %9763
  %9765 = vrot.lane.b32.xlu0 %v9366, 96
  %v9766 = vpop.permute.xlu0 %9765
  %9767 = vrot.lane.b32.xlu0 %v9371, 96
  %v9768 = vpop.permute.xlu0 %9767
  %9769 = vrot.lane.b32.xlu0 %v9373, 96
  %v9770 = vpop.permute.xlu0 %9769
  %9771 = vrot.lane.b32.xlu0 %v9375, 96
  %v9772 = vpop.permute.xlu0 %9771
  %v9785 = vcombine.low %v9750, %v9762
  %v9786 = vcombine.high %v9750, %v9762
  %v9788 = vunpack.c.l.s4 1983009808
  %v9789 = vunpack.c.0.s8 %v9788
  %v9790 = vlaneseq
  %v9791 = vshrl.u32 %v9790, 7
  %v9792 = vsub.s32 %v9789, %v9791
  %v9793 = vrot.slane %v9785, %v9792
  %v9795 = vunpack.c.l.s4 1983009808
  %v9796 = vunpack.c.0.s8 %v9795
  %v9797 = vlaneseq
  %v9798 = vshrl.u32 %v9797, 7
  %v9799 = vsub.s32 %v9796, %v9798
  %v9800 = vrot.slane %v9786, %v9799
  %v9801 = vcombine.low %v9756, %v9768
  %v9802 = vcombine.high %v9756, %v9768
  %v9804 = vunpack.c.l.s4 1983009808
  %v9805 = vunpack.c.0.s8 %v9804
  %v9806 = vlaneseq
  %v9807 = vshrl.u32 %v9806, 7
  %v9808 = vsub.s32 %v9805, %v9807
  %v9809 = vrot.slane %v9801, %v9808
  %v9811 = vunpack.c.l.s4 1983009808
  %v9812 = vunpack.c.0.s8 %v9811
  %v9813 = vlaneseq
  %v9814 = vshrl.u32 %v9813, 7
  %v9815 = vsub.s32 %v9812, %v9814
  %v9816 = vrot.slane %v9802, %v9815
  %v9817 = vcombine.low %v9793, %v9809
  %v9818 = vcombine.high %v9793, %v9809
  %v9820 = vunpack.c.l.s4 1934713408
  %v9821 = vunpack.c.0.s8 %v9820
  %v9822 = vlaneseq
  %v9823 = vshrl.u32 %v9822, 7
  %v9824 = vsub.s32 %v9821, %v9823
  %v9825 = vrot.slane %v9817, %v9824
  %v9827 = vunpack.c.l.s4 1934713408
  %v9828 = vunpack.c.0.s8 %v9827
  %v9829 = vlaneseq
  %v9830 = vshrl.u32 %v9829, 7
  %v9831 = vsub.s32 %v9828, %v9830
  %v9832 = vrot.slane %v9818, %v9831
  %v9833 = vcombine.low %v9800, %v9816
  %v9834 = vcombine.high %v9800, %v9816
  %v9836 = vunpack.c.l.s4 1934713408
  %v9837 = vunpack.c.0.s8 %v9836
  %v9838 = vlaneseq
  %v9839 = vshrl.u32 %v9838, 7
  %v9840 = vsub.s32 %v9837, %v9839
  %v9841 = vrot.slane %v9833, %v9840
  %v9843 = vunpack.c.l.s4 1934713408
  %v9844 = vunpack.c.0.s8 %v9843
  %v9845 = vlaneseq
  %v9846 = vshrl.u32 %v9845, 7
  %v9847 = vsub.s32 %v9844, %v9846
  %v9848 = vrot.slane %v9834, %v9847
  %v9849 = vcombine.high %v9825, 0.0
  %v9850 = vcombine.high %v9832, 0.0
  %v9851 = vcombine.high %v9841, 0.0
  %v9852 = vcombine.high %v9848, 0.0
  %v9853 = vcombine.low %v9752, %v9764
  %v9854 = vcombine.high %v9752, %v9764
  %v9856 = vunpack.c.l.s4 1983009808
  %v9857 = vunpack.c.0.s8 %v9856
  %v9858 = vlaneseq
  %v9859 = vshrl.u32 %v9858, 7
  %v9860 = vsub.s32 %v9857, %v9859
  %v9861 = vrot.slane %v9853, %v9860
  %v9863 = vunpack.c.l.s4 1983009808
  %v9864 = vunpack.c.0.s8 %v9863
  %v9865 = vlaneseq
  %v9866 = vshrl.u32 %v9865, 7
  %v9867 = vsub.s32 %v9864, %v9866
  %v9868 = vrot.slane %v9854, %v9867
  %v9869 = vcombine.low %v9758, %v9770
  %v9870 = vcombine.high %v9758, %v9770
  %v9872 = vunpack.c.l.s4 1983009808
  %v9873 = vunpack.c.0.s8 %v9872
  %v9874 = vlaneseq
  %v9875 = vshrl.u32 %v9874, 7
  %v9876 = vsub.s32 %v9873, %v9875
  %v9877 = vrot.slane %v9869, %v9876
  %v9879 = vunpack.c.l.s4 1983009808
  %v9880 = vunpack.c.0.s8 %v9879
  %v9881 = vlaneseq
  %v9882 = vshrl.u32 %v9881, 7
  %v9883 = vsub.s32 %v9880, %v9882
  %v9884 = vrot.slane %v9870, %v9883
  %v9885 = vcombine.low %v9861, %v9877
  %v9886 = vcombine.high %v9861, %v9877
  %v9888 = vunpack.c.l.s4 1934713408
  %v9889 = vunpack.c.0.s8 %v9888
  %v9890 = vlaneseq
  %v9891 = vshrl.u32 %v9890, 7
  %v9892 = vsub.s32 %v9889, %v9891
  %v9893 = vrot.slane %v9885, %v9892
  %v9895 = vunpack.c.l.s4 1934713408
  %v9896 = vunpack.c.0.s8 %v9895
  %v9897 = vlaneseq
  %v9898 = vshrl.u32 %v9897, 7
  %v9899 = vsub.s32 %v9896, %v9898
  %v9900 = vrot.slane %v9886, %v9899
  %v9901 = vcombine.low %v9868, %v9884
  %v9902 = vcombine.high %v9868, %v9884
  %v9904 = vunpack.c.l.s4 1934713408
  %v9905 = vunpack.c.0.s8 %v9904
  %v9906 = vlaneseq
  %v9907 = vshrl.u32 %v9906, 7
  %v9908 = vsub.s32 %v9905, %v9907
  %v9909 = vrot.slane %v9901, %v9908
  %v9911 = vunpack.c.l.s4 1934713408
  %v9912 = vunpack.c.0.s8 %v9911
  %v9913 = vlaneseq
  %v9914 = vshrl.u32 %v9913, 7
  %v9915 = vsub.s32 %v9912, %v9914
  %v9916 = vrot.slane %v9902, %v9915
  %v9917 = vcombine.high %v9900, 0.0
  %v9918 = vcombine.high %v9909, 0.0
  %v9919 = vcombine.high %v9916, 0.0
  %v9920 = vcombine.low %v9754, %v9766
  %v9922 = vunpack.c.l.s4 1983009808
  %v9923 = vunpack.c.0.s8 %v9922
  %v9924 = vlaneseq
  %v9925 = vshrl.u32 %v9924, 7
  %v9926 = vsub.s32 %v9923, %v9925
  %v9927 = vrot.slane %v9920, %v9926
  %v9928 = vcombine.low %v9760, %v9772
  %v9930 = vunpack.c.l.s4 1983009808
  %v9931 = vunpack.c.0.s8 %v9930
  %v9932 = vlaneseq
  %v9933 = vshrl.u32 %v9932, 7
  %v9934 = vsub.s32 %v9931, %v9933
  %v9935 = vrot.slane %v9928, %v9934
  %v9936 = vcombine.low %v9927, %v9935
  %v9937 = vcombine.high %v9927, %v9935
  %v9939 = vunpack.c.l.s4 1934713408
  %v9940 = vunpack.c.0.s8 %v9939
  %v9941 = vlaneseq
  %v9942 = vshrl.u32 %v9941, 7
  %v9943 = vsub.s32 %v9940, %v9942
  %v9944 = vrot.slane %v9936, %v9943
  %v9946 = vunpack.c.l.s4 1934713408
  %v9947 = vunpack.c.0.s8 %v9946
  %v9948 = vlaneseq
  %v9949 = vshrl.u32 %v9948, 7
  %v9950 = vsub.s32 %v9947, %v9949
  %v9951 = vrot.slane %v9937, %v9950
  %v9952 = vcombine.high %v9944, 0.0
  %v9953 = vcombine.low %v9825, %v9832
  %v9955 = vunpack.c.l.s4 1983009808
  %v9956 = vunpack.c.0.s8 %v9955
  %v9957 = vlaneseq
  %v9958 = vshrl.u32 %v9957, 7
  %v9959 = vsub.s32 %v9956, %v9958
  %v9960 = vrot.slane %v9953, %v9959
  %v9961 = vcombine.low %v9849, %v9850
  %v9963 = vunpack.c.l.s4 1983009808
  %v9964 = vunpack.c.0.s8 %v9963
  %v9965 = vlaneseq
  %v9966 = vshrl.u32 %v9965, 7
  %v9967 = vsub.s32 %v9964, %v9966
  %v9968 = vrot.slane %v9961, %v9967
  %v9969 = vcombine.low %v9841, %v9848
  %v9971 = vunpack.c.l.s4 1983009808
  %v9972 = vunpack.c.0.s8 %v9971
  %v9973 = vlaneseq
  %v9974 = vshrl.u32 %v9973, 7
  %v9975 = vsub.s32 %v9972, %v9974
  %v9976 = vrot.slane %v9969, %v9975
  %v9977 = vcombine.low %v9851, %v9852
  %v9979 = vunpack.c.l.s4 1983009808
  %v9980 = vunpack.c.0.s8 %v9979
  %v9981 = vlaneseq
  %v9982 = vshrl.u32 %v9981, 7
  %v9983 = vsub.s32 %v9980, %v9982
  %v9984 = vrot.slane %v9977, %v9983
  %v9985 = vcombine.low %v9960, %v9968
  %v9986 = vcombine.high %v9960, %v9968
  %v9988 = vunpack.c.l.s4 1934713408
  %v9989 = vunpack.c.0.s8 %v9988
  %v9990 = vlaneseq
  %v9991 = vshrl.u32 %v9990, 7
  %v9992 = vsub.s32 %v9989, %v9991
  %v9993 = vrot.slane %v9985, %v9992
  %v9995 = vunpack.c.l.s4 1934713408
  %v9996 = vunpack.c.0.s8 %v9995
  %v9997 = vlaneseq
  %v9998 = vshrl.u32 %v9997, 7
  %v9999 = vsub.s32 %v9996, %v9998
  %v10000 = vrot.slane %v9986, %v9999
  %v10001 = vcombine.low %v9976, %v9984
  %v10002 = vcombine.high %v9976, %v9984
  %v10004 = vunpack.c.l.s4 1934713408
  %v10005 = vunpack.c.0.s8 %v10004
  %v10006 = vlaneseq
  %v10007 = vshrl.u32 %v10006, 7
  %v10008 = vsub.s32 %v10005, %v10007
  %v10009 = vrot.slane %v10001, %v10008
  %v10011 = vunpack.c.l.s4 1934713408
  %v10012 = vunpack.c.0.s8 %v10011
  %v10013 = vlaneseq
  %v10014 = vshrl.u32 %v10013, 7
  %v10015 = vsub.s32 %v10012, %v10014
  %v10016 = vrot.slane %v10002, %v10015
  %v10017 = vcombine.low %v9993, %v10009
  %v10018 = vcombine.high %v9993, %v10009
  %v10019 = vcombine.low %v10000, %v10016
  %v10020 = vcombine.high %v10000, %v10016
  %v10022 = vunpack.c.l.s4 1983009808
  %v10023 = vunpack.c.0.s8 %v10022
  %v10024 = vlaneseq
  %v10025 = vshrl.u32 %v10024, 7
  %v10026 = vsub.s32 %v10023, %v10025
  %v10027 = vrot.slane %v9893, %v10026
  %v10028 = vcombine.high %v9893, 0.0
  %v10030 = vunpack.c.l.s4 1983009808
  %v10031 = vunpack.c.0.s8 %v10030
  %v10032 = vlaneseq
  %v10033 = vshrl.u32 %v10032, 7
  %v10034 = vsub.s32 %v10031, %v10033
  %v10035 = vrot.slane %v10028, %v10034
  %v10036 = vcombine.low %v10027, %v10035
  %v10037 = vcombine.high %v10027, %v10035
  %v10039 = vunpack.c.l.s4 1934713408
  %v10040 = vunpack.c.0.s8 %v10039
  %v10041 = vlaneseq
  %v10042 = vshrl.u32 %v10041, 7
  %v10043 = vsub.s32 %v10040, %v10042
  %v10044 = vrot.slane %v10036, %v10043
  %v10046 = vunpack.c.l.s4 1934713408
  %v10047 = vunpack.c.0.s8 %v10046
  %v10048 = vlaneseq
  %v10049 = vshrl.u32 %v10048, 7
  %v10050 = vsub.s32 %v10047, %v10049
  %v10051 = vrot.slane %v10037, %v10050
  %v10052 = vcombine.high %v10044, 0.0
  %v10053 = vcombine.high %v10051, 0.0
  %v10054 = vcombine.low %v9900, %v9909
  %v10056 = vunpack.c.l.s4 1983009808
  %v10057 = vunpack.c.0.s8 %v10056
  %v10058 = vlaneseq
  %v10059 = vshrl.u32 %v10058, 7
  %v10060 = vsub.s32 %v10057, %v10059
  %v10061 = vrot.slane %v10054, %v10060
  %v10062 = vcombine.low %v9917, %v9918
  %v10064 = vunpack.c.l.s4 1983009808
  %v10065 = vunpack.c.0.s8 %v10064
  %v10066 = vlaneseq
  %v10067 = vshrl.u32 %v10066, 7
  %v10068 = vsub.s32 %v10065, %v10067
  %v10069 = vrot.slane %v10062, %v10068
  %v10070 = vcombine.low %v9916, %v9944
  %v10072 = vunpack.c.l.s4 1983009808
  %v10073 = vunpack.c.0.s8 %v10072
  %v10074 = vlaneseq
  %v10075 = vshrl.u32 %v10074, 7
  %v10076 = vsub.s32 %v10073, %v10075
  %v10077 = vrot.slane %v10070, %v10076
  %v10078 = vcombine.low %v9919, %v9952
  %v10080 = vunpack.c.l.s4 1983009808
  %v10081 = vunpack.c.0.s8 %v10080
  %v10082 = vlaneseq
  %v10083 = vshrl.u32 %v10082, 7
  %v10084 = vsub.s32 %v10081, %v10083
  %v10085 = vrot.slane %v10078, %v10084
  %v10086 = vcombine.low %v10061, %v10069
  %v10087 = vcombine.high %v10061, %v10069
  %v10089 = vunpack.c.l.s4 1934713408
  %v10090 = vunpack.c.0.s8 %v10089
  %v10091 = vlaneseq
  %v10092 = vshrl.u32 %v10091, 7
  %v10093 = vsub.s32 %v10090, %v10092
  %v10094 = vrot.slane %v10086, %v10093
  %v10096 = vunpack.c.l.s4 1934713408
  %v10097 = vunpack.c.0.s8 %v10096
  %v10098 = vlaneseq
  %v10099 = vshrl.u32 %v10098, 7
  %v10100 = vsub.s32 %v10097, %v10099
  %v10101 = vrot.slane %v10087, %v10100
  %v10102 = vcombine.low %v10077, %v10085
  %v10103 = vcombine.high %v10077, %v10085
  %v10105 = vunpack.c.l.s4 1934713408
  %v10106 = vunpack.c.0.s8 %v10105
  %v10107 = vlaneseq
  %v10108 = vshrl.u32 %v10107, 7
  %v10109 = vsub.s32 %v10106, %v10108
  %v10110 = vrot.slane %v10102, %v10109
  %v10112 = vunpack.c.l.s4 1934713408
  %v10113 = vunpack.c.0.s8 %v10112
  %v10114 = vlaneseq
  %v10115 = vshrl.u32 %v10114, 7
  %v10116 = vsub.s32 %v10113, %v10115
  %v10117 = vrot.slane %v10103, %v10116
  %v10118 = vcombine.low %v10094, %v10110
  %v10119 = vcombine.high %v10094, %v10110
  %v10120 = vcombine.low %v10101, %v10117
  %v10121 = vcombine.high %v10101, %v10117
  %v10123 = vunpack.c.l.s4 1983009808
  %v10124 = vunpack.c.0.s8 %v10123
  %v10125 = vlaneseq
  %v10126 = vshrl.u32 %v10125, 7
  %v10127 = vsub.s32 %v10124, %v10126
  %v10128 = vrot.slane %v9951, %v10127
  %v10129 = vcombine.high %v9951, 0.0
  %v10131 = vunpack.c.l.s4 1983009808
  %v10132 = vunpack.c.0.s8 %v10131
  %v10133 = vlaneseq
  %v10134 = vshrl.u32 %v10133, 7
  %v10135 = vsub.s32 %v10132, %v10134
  %v10136 = vrot.slane %v10129, %v10135
  %v10137 = vcombine.low %v10128, %v10136
  %v10138 = vcombine.high %v10128, %v10136
  %v10140 = vunpack.c.l.s4 1934713408
  %v10141 = vunpack.c.0.s8 %v10140
  %v10142 = vlaneseq
  %v10143 = vshrl.u32 %v10142, 7
  %v10144 = vsub.s32 %v10141, %v10143
  %v10145 = vrot.slane %v10137, %v10144
  %v10147 = vunpack.c.l.s4 1934713408
  %v10148 = vunpack.c.0.s8 %v10147
  %v10149 = vlaneseq
  %v10150 = vshrl.u32 %v10149, 7
  %v10151 = vsub.s32 %v10148, %v10150
  %v10152 = vrot.slane %v10138, %v10151
  %v10153 = vcombine.high %v10145, 0.0
  %v10154 = vcombine.high %v10152, 0.0
  %v10156 = vsel %vm1153, %v9277, 0
  %v10159 = vsel %vm1153, %v9611, 0
  %v10162 = vsel %vm1153, %v9638, 0
  %10164 = vmatprep.subr.mxu0 0.0
  %10165 = vmatpush1.xpose.msra.mxu0 %v10159
  %10166 = vmatprep.subr.mxu0 0.0
  %10167 = vmatpush1.xpose.msra.mxu0 %v10162
  %10168 = vmatprep.subr.mxu0 0.0
  %10169 = vmatpush1.xpose.msra.mxu0 0.0
  %10170 = vmatprep.subr.mxu0 0.0
  %10171 = vmatpush1.xpose.msra.mxu0 0.0
  %10172 = vmatprep.subr.mxu0 0.0
  %10173 = vmatpush1.xpose.msra.mxu0 0.0
  %10174 = vmatprep.subr.mxu0 0.0
  %10175 = vmatpush1.xpose.msra.mxu0 0.0
  %10176 = vmatprep.subr.mxu0 0.0
  %10177 = vmatpush1.xpose.msra.mxu0 0.0
  %10178 = vmatprep.subr.mxu0 0.0
  %10179 = vmatpush1.xpose.msra.mxu0 0.0
  %10180 = vmatprep.subr.mxu0 0.0
  %10181 = vmatpush1.xpose.msra.mxu0 0.0
  %10182 = vmatprep.subr.mxu0 0.0
  %10183 = vmatpush1.xpose.msra.mxu0 0.0
  %10184 = vmatprep.subr.mxu0 0.0
  %10185 = vmatpush1.xpose.msra.mxu0 0.0
  %10186 = vmatprep.subr.mxu0 0.0
  %10187 = vmatpush1.xpose.msra.mxu0 0.0
  %10188 = vmatprep.subr.mxu0 0.0
  %10189 = vmatpush1.xpose.msra.mxu0 0.0
  %10190 = vmatprep.subr.mxu0 0.0
  %10191 = vmatpush1.xpose.msra.mxu0 0.0
  %10192 = vmatprep.subr.mxu0 0.0
  %10193 = vmatpush1.xpose.msra.mxu0 0.0
  %10194 = vmatprep.subr.mxu0 0.0
  %10195 = vmatpush1.xpose.msra.mxu0 0.0
  %10196 = vmatprep.subr.mxu0 0.0
  %10197 = vmatpush1.xpose.msra.mxu0 0.0
  %10198 = vmatprep.subr.mxu0 0.0
  %10199 = vmatpush1.xpose.msra.mxu0 0.0
  %10200 = vmatprep.subr.mxu0 0.0
  %10201 = vmatpush1.xpose.msra.mxu0 0.0
  %10202 = vmatprep.subr.mxu0 0.0
  %10203 = vmatpush1.xpose.msra.mxu0 0.0
  %10204 = vmatprep.subr.mxu0 0.0
  %10205 = vmatpush1.xpose.msra.mxu0 0.0
  %10206 = vmatprep.subr.mxu0 0.0
  %10207 = vmatpush1.xpose.msra.mxu0 0.0
  %10208 = vmatprep.subr.mxu0 0.0
  %10209 = vmatpush1.xpose.msra.mxu0 0.0
  %10210 = vmatprep.subr.mxu0 0.0
  %10211 = vmatpush1.xpose.msra.mxu0 0.0
  %10212 = vmatprep.subr.mxu0 0.0
  %10213 = vmatpush1.xpose.msra.mxu0 0.0
  %10214 = vmatprep.subr.mxu0 0.0
  %10215 = vmatpush1.xpose.msra.mxu0 0.0
  %10216 = vmatprep.subr.mxu0 0.0
  %10217 = vmatpush1.xpose.msra.mxu0 0.0
  %10218 = vmatprep.subr.mxu0 0.0
  %10219 = vmatpush1.xpose.msra.mxu0 0.0
  %10220 = vmatprep.subr.mxu0 0.0
  %10221 = vmatpush1.xpose.msra.mxu0 0.0
  %10222 = vmatprep.subr.mxu0 0.0
  %10223 = vmatpush1.xpose.msra.mxu0 0.0
  %10224 = vmatprep.subr.mxu0 0.0
  %10225 = vmatpush1.xpose.msra.mxu0 0.0
  %10226 = vmatprep.subr.mxu0 0.0
  %10227 = vmatpush1.xpose.msra.mxu0 0.0
  %10228 = vmatprep.mubr.f32.mxu0 0.0
  %10229 = vmatmul.mubr.f32.gmra.mrb[0].mxu0 %v10156
  %v10230 = vpop.f32.mrb[0].mxu0
  %v10231 = vadd.f32 0.0, %v10230
  %v10232 = vpop.f32.mrb[0].mxu0
  %10233 = vdwg.mxu0
  %v10235 = vsel %vm1153, %v9278, 0
  %v10238 = vsel %vm1153, %v9612, 0
  %v10241 = vsel %vm1153, %v9646, 0
  %10243 = vmatprep.subr.mxu0 0.0
  %10244 = vmatpush1.xpose.msra.mxu0 %v10238
  %10245 = vmatprep.subr.mxu0 0.0
  %10246 = vmatpush1.xpose.msra.mxu0 %v10241
  %10247 = vmatprep.subr.mxu0 0.0
  %10248 = vmatpush1.xpose.msra.mxu0 0.0
  %10249 = vmatprep.subr.mxu0 0.0
  %10250 = vmatpush1.xpose.msra.mxu0 0.0
  %10251 = vmatprep.subr.mxu0 0.0
  %10252 = vmatpush1.xpose.msra.mxu0 0.0
  %10253 = vmatprep.subr.mxu0 0.0
  %10254 = vmatpush1.xpose.msra.mxu0 0.0
  %10255 = vmatprep.subr.mxu0 0.0
  %10256 = vmatpush1.xpose.msra.mxu0 0.0
  %10257 = vmatprep.subr.mxu0 0.0
  %10258 = vmatpush1.xpose.msra.mxu0 0.0
  %10259 = vmatprep.subr.mxu0 0.0
  %10260 = vmatpush1.xpose.msra.mxu0 0.0
  %10261 = vmatprep.subr.mxu0 0.0
  %10262 = vmatpush1.xpose.msra.mxu0 0.0
  %10263 = vmatprep.subr.mxu0 0.0
  %10264 = vmatpush1.xpose.msra.mxu0 0.0
  %10265 = vmatprep.subr.mxu0 0.0
  %10266 = vmatpush1.xpose.msra.mxu0 0.0
  %10267 = vmatprep.subr.mxu0 0.0
  %10268 = vmatpush1.xpose.msra.mxu0 0.0
  %10269 = vmatprep.subr.mxu0 0.0
  %10270 = vmatpush1.xpose.msra.mxu0 0.0
  %10271 = vmatprep.subr.mxu0 0.0
  %10272 = vmatpush1.xpose.msra.mxu0 0.0
  %10273 = vmatprep.subr.mxu0 0.0
  %10274 = vmatpush1.xpose.msra.mxu0 0.0
  %10275 = vmatprep.subr.mxu0 0.0
  %10276 = vmatpush1.xpose.msra.mxu0 0.0
  %10277 = vmatprep.subr.mxu0 0.0
  %10278 = vmatpush1.xpose.msra.mxu0 0.0
  %10279 = vmatprep.subr.mxu0 0.0
  %10280 = vmatpush1.xpose.msra.mxu0 0.0
  %10281 = vmatprep.subr.mxu0 0.0
  %10282 = vmatpush1.xpose.msra.mxu0 0.0
  %10283 = vmatprep.subr.mxu0 0.0
  %10284 = vmatpush1.xpose.msra.mxu0 0.0
  %10285 = vmatprep.subr.mxu0 0.0
  %10286 = vmatpush1.xpose.msra.mxu0 0.0
  %10287 = vmatprep.subr.mxu0 0.0
  %10288 = vmatpush1.xpose.msra.mxu0 0.0
  %10289 = vmatprep.subr.mxu0 0.0
  %10290 = vmatpush1.xpose.msra.mxu0 0.0
  %10291 = vmatprep.subr.mxu0 0.0
  %10292 = vmatpush1.xpose.msra.mxu0 0.0
  %10293 = vmatprep.subr.mxu0 0.0
  %10294 = vmatpush1.xpose.msra.mxu0 0.0
  %10295 = vmatprep.subr.mxu0 0.0
  %10296 = vmatpush1.xpose.msra.mxu0 0.0
  %10297 = vmatprep.subr.mxu0 0.0
  %10298 = vmatpush1.xpose.msra.mxu0 0.0
  %10299 = vmatprep.subr.mxu0 0.0
  %10300 = vmatpush1.xpose.msra.mxu0 0.0
  %10301 = vmatprep.subr.mxu0 0.0
  %10302 = vmatpush1.xpose.msra.mxu0 0.0
  %10303 = vmatprep.subr.mxu0 0.0
  %10304 = vmatpush1.xpose.msra.mxu0 0.0
  %10305 = vmatprep.subr.mxu0 0.0
  %10306 = vmatpush1.xpose.msra.mxu0 0.0
  %10307 = vmatprep.mubr.f32.mxu0 0.0
  %10308 = vmatmul.mubr.f32.gmra.mrb[0].mxu0 %v10235
  %v10309 = vpop.f32.mrb[0].mxu0
  %v10310 = vadd.f32 0.0, %v10309
  %v10311 = vpop.f32.mrb[0].mxu0
  %10312 = vdwg.mxu0
  %v10314 = vsel %vm1153, %v9279, 0
  %v10317 = vsel %vm1153, %v9613, 0
  %v10320 = vsel %vm1153, %v9645, 0
  %10322 = vmatprep.subr.mxu0 0.0
  %10323 = vmatpush1.xpose.msra.mxu0 %v10317
  %10324 = vmatprep.subr.mxu0 0.0
  %10325 = vmatpush1.xpose.msra.mxu0 %v10320
  %10326 = vmatprep.subr.mxu0 0.0
  %10327 = vmatpush1.xpose.msra.mxu0 0.0
  %10328 = vmatprep.subr.mxu0 0.0
  %10329 = vmatpush1.xpose.msra.mxu0 0.0
  %10330 = vmatprep.subr.mxu0 0.0
  %10331 = vmatpush1.xpose.msra.mxu0 0.0
  %10332 = vmatprep.subr.mxu0 0.0
  %10333 = vmatpush1.xpose.msra.mxu0 0.0
  %10334 = vmatprep.subr.mxu0 0.0
  %10335 = vmatpush1.xpose.msra.mxu0 0.0
  %10336 = vmatprep.subr.mxu0 0.0
  %10337 = vmatpush1.xpose.msra.mxu0 0.0
  %10338 = vmatprep.subr.mxu0 0.0
  %10339 = vmatpush1.xpose.msra.mxu0 0.0
  %10340 = vmatprep.subr.mxu0 0.0
  %10341 = vmatpush1.xpose.msra.mxu0 0.0
  %10342 = vmatprep.subr.mxu0 0.0
  %10343 = vmatpush1.xpose.msra.mxu0 0.0
  %10344 = vmatprep.subr.mxu0 0.0
  %10345 = vmatpush1.xpose.msra.mxu0 0.0
  %10346 = vmatprep.subr.mxu0 0.0
  %10347 = vmatpush1.xpose.msra.mxu0 0.0
  %10348 = vmatprep.subr.mxu0 0.0
  %10349 = vmatpush1.xpose.msra.mxu0 0.0
  %10350 = vmatprep.subr.mxu0 0.0
  %10351 = vmatpush1.xpose.msra.mxu0 0.0
  %10352 = vmatprep.subr.mxu0 0.0
  %10353 = vmatpush1.xpose.msra.mxu0 0.0
  %10354 = vmatprep.subr.mxu0 0.0
  %10355 = vmatpush1.xpose.msra.mxu0 0.0
  %10356 = vmatprep.subr.mxu0 0.0
  %10357 = vmatpush1.xpose.msra.mxu0 0.0
  %10358 = vmatprep.subr.mxu0 0.0
  %10359 = vmatpush1.xpose.msra.mxu0 0.0
  %10360 = vmatprep.subr.mxu0 0.0
  %10361 = vmatpush1.xpose.msra.mxu0 0.0
  %10362 = vmatprep.subr.mxu0 0.0
  %10363 = vmatpush1.xpose.msra.mxu0 0.0
  %10364 = vmatprep.subr.mxu0 0.0
  %10365 = vmatpush1.xpose.msra.mxu0 0.0
  %10366 = vmatprep.subr.mxu0 0.0
  %10367 = vmatpush1.xpose.msra.mxu0 0.0
  %10368 = vmatprep.subr.mxu0 0.0
  %10369 = vmatpush1.xpose.msra.mxu0 0.0
  %10370 = vmatprep.subr.mxu0 0.0
  %10371 = vmatpush1.xpose.msra.mxu0 0.0
  %10372 = vmatprep.subr.mxu0 0.0
  %10373 = vmatpush1.xpose.msra.mxu0 0.0
  %10374 = vmatprep.subr.mxu0 0.0
  %10375 = vmatpush1.xpose.msra.mxu0 0.0
  %10376 = vmatprep.subr.mxu0 0.0
  %10377 = vmatpush1.xpose.msra.mxu0 0.0
  %10378 = vmatprep.subr.mxu0 0.0
  %10379 = vmatpush1.xpose.msra.mxu0 0.0
  %10380 = vmatprep.subr.mxu0 0.0
  %10381 = vmatpush1.xpose.msra.mxu0 0.0
  %10382 = vmatprep.subr.mxu0 0.0
  %10383 = vmatpush1.xpose.msra.mxu0 0.0
  %10384 = vmatprep.subr.mxu0 0.0
  %10385 = vmatpush1.xpose.msra.mxu0 0.0
  %10386 = vmatprep.mubr.f32.mxu0 0.0
  %10387 = vmatmul.mubr.f32.gmra.mrb[0].mxu0 %v10314
  %v10388 = vpop.f32.mrb[0].mxu0
  %v10389 = vadd.f32 0.0, %v10388
  %v10390 = vpop.f32.mrb[0].mxu0
  %10391 = vdwg.mxu0
  %v10393 = vsel %vm1153, %v9280, 0
  %v10396 = vsel %vm1153, %v9614, 0
  %v10399 = vsel %vm1153, %v9647, 0
  %10401 = vmatprep.subr.mxu0 0.0
  %10402 = vmatpush1.xpose.msra.mxu0 %v10396
  %10403 = vmatprep.subr.mxu0 0.0
  %10404 = vmatpush1.xpose.msra.mxu0 %v10399
  %10405 = vmatprep.subr.mxu0 0.0
  %10406 = vmatpush1.xpose.msra.mxu0 0.0
  %10407 = vmatprep.subr.mxu0 0.0
  %10408 = vmatpush1.xpose.msra.mxu0 0.0
  %10409 = vmatprep.subr.mxu0 0.0
  %10410 = vmatpush1.xpose.msra.mxu0 0.0
  %10411 = vmatprep.subr.mxu0 0.0
  %10412 = vmatpush1.xpose.msra.mxu0 0.0
  %10413 = vmatprep.subr.mxu0 0.0
  %10414 = vmatpush1.xpose.msra.mxu0 0.0
  %10415 = vmatprep.subr.mxu0 0.0
  %10416 = vmatpush1.xpose.msra.mxu0 0.0
  %10417 = vmatprep.subr.mxu0 0.0
  %10418 = vmatpush1.xpose.msra.mxu0 0.0
  %10419 = vmatprep.subr.mxu0 0.0
  %10420 = vmatpush1.xpose.msra.mxu0 0.0
  %10421 = vmatprep.subr.mxu0 0.0
  %10422 = vmatpush1.xpose.msra.mxu0 0.0
  %10423 = vmatprep.subr.mxu0 0.0
  %10424 = vmatpush1.xpose.msra.mxu0 0.0
  %10425 = vmatprep.subr.mxu0 0.0
  %10426 = vmatpush1.xpose.msra.mxu0 0.0
  %10427 = vmatprep.subr.mxu0 0.0
  %10428 = vmatpush1.xpose.msra.mxu0 0.0
  %10429 = vmatprep.subr.mxu0 0.0
  %10430 = vmatpush1.xpose.msra.mxu0 0.0
  %10431 = vmatprep.subr.mxu0 0.0
  %10432 = vmatpush1.xpose.msra.mxu0 0.0
  %10433 = vmatprep.subr.mxu0 0.0
  %10434 = vmatpush1.xpose.msra.mxu0 0.0
  %10435 = vmatprep.subr.mxu0 0.0
  %10436 = vmatpush1.xpose.msra.mxu0 0.0
  %10437 = vmatprep.subr.mxu0 0.0
  %10438 = vmatpush1.xpose.msra.mxu0 0.0
  %10439 = vmatprep.subr.mxu0 0.0
  %10440 = vmatpush1.xpose.msra.mxu0 0.0
  %10441 = vmatprep.subr.mxu0 0.0
  %10442 = vmatpush1.xpose.msra.mxu0 0.0
  %10443 = vmatprep.subr.mxu0 0.0
  %10444 = vmatpush1.xpose.msra.mxu0 0.0
  %10445 = vmatprep.subr.mxu0 0.0
  %10446 = vmatpush1.xpose.msra.mxu0 0.0
  %10447 = vmatprep.subr.mxu0 0.0
  %10448 = vmatpush1.xpose.msra.mxu0 0.0
  %10449 = vmatprep.subr.mxu0 0.0
  %10450 = vmatpush1.xpose.msra.mxu0 0.0
  %10451 = vmatprep.subr.mxu0 0.0
  %10452 = vmatpush1.xpose.msra.mxu0 0.0
  %10453 = vmatprep.subr.mxu0 0.0
  %10454 = vmatpush1.xpose.msra.mxu0 0.0
  %10455 = vmatprep.subr.mxu0 0.0
  %10456 = vmatpush1.xpose.msra.mxu0 0.0
  %10457 = vmatprep.subr.mxu0 0.0
  %10458 = vmatpush1.xpose.msra.mxu0 0.0
  %10459 = vmatprep.subr.mxu0 0.0
  %10460 = vmatpush1.xpose.msra.mxu0 0.0
  %10461 = vmatprep.subr.mxu0 0.0
  %10462 = vmatpush1.xpose.msra.mxu0 0.0
  %10463 = vmatprep.subr.mxu0 0.0
  %10464 = vmatpush1.xpose.msra.mxu0 0.0
  %10465 = vmatprep.mubr.f32.mxu0 0.0
  %10466 = vmatmul.mubr.f32.gmra.mrb[0].mxu0 %v10393
  %v10467 = vpop.f32.mrb[0].mxu0
  %v10468 = vadd.f32 0.0, %v10467
  %v10469 = vpop.f32.mrb[0].mxu0
  %10470 = vdwg.mxu0
  %v10472 = vsel %vm1153, %v9345, 0
  %v10475 = vsel %vm1153, %v9712, 0
  %v10478 = vsel %vm1153, %v9739, 0
  %10480 = vmatprep.subr.mxu0 0.0
  %10481 = vmatpush1.xpose.msra.mxu0 %v10475
  %10482 = vmatprep.subr.mxu0 0.0
  %10483 = vmatpush1.xpose.msra.mxu0 %v10478
  %10484 = vmatprep.subr.mxu0 0.0
  %10485 = vmatpush1.xpose.msra.mxu0 0.0
  %10486 = vmatprep.subr.mxu0 0.0
  %10487 = vmatpush1.xpose.msra.mxu0 0.0
  %10488 = vmatprep.subr.mxu0 0.0
  %10489 = vmatpush1.xpose.msra.mxu0 0.0
  %10490 = vmatprep.subr.mxu0 0.0
  %10491 = vmatpush1.xpose.msra.mxu0 0.0
  %10492 = vmatprep.subr.mxu0 0.0
  %10493 = vmatpush1.xpose.msra.mxu0 0.0
  %10494 = vmatprep.subr.mxu0 0.0
  %10495 = vmatpush1.xpose.msra.mxu0 0.0
  %10496 = vmatprep.subr.mxu0 0.0
  %10497 = vmatpush1.xpose.msra.mxu0 0.0
  %10498 = vmatprep.subr.mxu0 0.0
  %10499 = vmatpush1.xpose.msra.mxu0 0.0
  %10500 = vmatprep.subr.mxu0 0.0
  %10501 = vmatpush1.xpose.msra.mxu0 0.0
  %10502 = vmatprep.subr.mxu0 0.0
  %10503 = vmatpush1.xpose.msra.mxu0 0.0
  %10504 = vmatprep.subr.mxu0 0.0
  %10505 = vmatpush1.xpose.msra.mxu0 0.0
  %10506 = vmatprep.subr.mxu0 0.0
  %10507 = vmatpush1.xpose.msra.mxu0 0.0
  %10508 = vmatprep.subr.mxu0 0.0
  %10509 = vmatpush1.xpose.msra.mxu0 0.0
  %10510 = vmatprep.subr.mxu0 0.0
  %10511 = vmatpush1.xpose.msra.mxu0 0.0
  %10512 = vmatprep.subr.mxu0 0.0
  %10513 = vmatpush1.xpose.msra.mxu0 0.0
  %10514 = vmatprep.subr.mxu0 0.0
  %10515 = vmatpush1.xpose.msra.mxu0 0.0
  %10516 = vmatprep.subr.mxu0 0.0
  %10517 = vmatpush1.xpose.msra.mxu0 0.0
  %10518 = vmatprep.subr.mxu0 0.0
  %10519 = vmatpush1.xpose.msra.mxu0 0.0
  %10520 = vmatprep.subr.mxu0 0.0
  %10521 = vmatpush1.xpose.msra.mxu0 0.0
  %10522 = vmatprep.subr.mxu0 0.0
  %10523 = vmatpush1.xpose.msra.mxu0 0.0
  %10524 = vmatprep.subr.mxu0 0.0
  %10525 = vmatpush1.xpose.msra.mxu0 0.0
  %10526 = vmatprep.subr.mxu0 0.0
  %10527 = vmatpush1.xpose.msra.mxu0 0.0
  %10528 = vmatprep.subr.mxu0 0.0
  %10529 = vmatpush1.xpose.msra.mxu0 0.0
  %10530 = vmatprep.subr.mxu0 0.0
  %10531 = vmatpush1.xpose.msra.mxu0 0.0
  %10532 = vmatprep.subr.mxu0 0.0
  %10533 = vmatpush1.xpose.msra.mxu0 0.0
  %10534 = vmatprep.subr.mxu0 0.0
  %10535 = vmatpush1.xpose.msra.mxu0 0.0
  %10536 = vmatprep.subr.mxu0 0.0
  %10537 = vmatpush1.xpose.msra.mxu0 0.0
  %10538 = vmatprep.subr.mxu0 0.0
  %10539 = vmatpush1.xpose.msra.mxu0 0.0
  %10540 = vmatprep.subr.mxu0 0.0
  %10541 = vmatpush1.xpose.msra.mxu0 0.0
  %10542 = vmatprep.subr.mxu0 0.0
  %10543 = vmatpush1.xpose.msra.mxu0 0.0
  %10544 = vmatprep.mubr.f32.mxu0 0.0
  %10545 = vmatmul.mubr.f32.gmra.mrb[0].mxu0 %v10472
  %v10546 = vpop.f32.mrb[0].mxu0
  %v10547 = vadd.f32 0.0, %v10546
  %v10548 = vpop.f32.mrb[0].mxu0
  %10549 = vdwg.mxu0
  %v10551 = vsel %vm1153, %v9346, 0
  %v10554 = vsel %vm1153, %v9713, 0
  %v10557 = vsel %vm1153, %v9747, 0
  %10559 = vmatprep.subr.mxu0 0.0
  %10560 = vmatpush1.xpose.msra.mxu0 %v10554
  %10561 = vmatprep.subr.mxu0 0.0
  %10562 = vmatpush1.xpose.msra.mxu0 %v10557
  %10563 = vmatprep.subr.mxu0 0.0
  %10564 = vmatpush1.xpose.msra.mxu0 0.0
  %10565 = vmatprep.subr.mxu0 0.0
  %10566 = vmatpush1.xpose.msra.mxu0 0.0
  %10567 = vmatprep.subr.mxu0 0.0
  %10568 = vmatpush1.xpose.msra.mxu0 0.0
  %10569 = vmatprep.subr.mxu0 0.0
  %10570 = vmatpush1.xpose.msra.mxu0 0.0
  %10571 = vmatprep.subr.mxu0 0.0
  %10572 = vmatpush1.xpose.msra.mxu0 0.0
  %10573 = vmatprep.subr.mxu0 0.0
  %10574 = vmatpush1.xpose.msra.mxu0 0.0
  %10575 = vmatprep.subr.mxu0 0.0
  %10576 = vmatpush1.xpose.msra.mxu0 0.0
  %10577 = vmatprep.subr.mxu0 0.0
  %10578 = vmatpush1.xpose.msra.mxu0 0.0
  %10579 = vmatprep.subr.mxu0 0.0
  %10580 = vmatpush1.xpose.msra.mxu0 0.0
  %10581 = vmatprep.subr.mxu0 0.0
  %10582 = vmatpush1.xpose.msra.mxu0 0.0
  %10583 = vmatprep.subr.mxu0 0.0
  %10584 = vmatpush1.xpose.msra.mxu0 0.0
  %10585 = vmatprep.subr.mxu0 0.0
  %10586 = vmatpush1.xpose.msra.mxu0 0.0
  %10587 = vmatprep.subr.mxu0 0.0
  %10588 = vmatpush1.xpose.msra.mxu0 0.0
  %10589 = vmatprep.subr.mxu0 0.0
  %10590 = vmatpush1.xpose.msra.mxu0 0.0
  %10591 = vmatprep.subr.mxu0 0.0
  %10592 = vmatpush1.xpose.msra.mxu0 0.0
  %10593 = vmatprep.subr.mxu0 0.0
  %10594 = vmatpush1.xpose.msra.mxu0 0.0
  %10595 = vmatprep.subr.mxu0 0.0
  %10596 = vmatpush1.xpose.msra.mxu0 0.0
  %10597 = vmatprep.subr.mxu0 0.0
  %10598 = vmatpush1.xpose.msra.mxu0 0.0
  %10599 = vmatprep.subr.mxu0 0.0
  %10600 = vmatpush1.xpose.msra.mxu0 0.0
  %10601 = vmatprep.subr.mxu0 0.0
  %10602 = vmatpush1.xpose.msra.mxu0 0.0
  %10603 = vmatprep.subr.mxu0 0.0
  %10604 = vmatpush1.xpose.msra.mxu0 0.0
  %10605 = vmatprep.subr.mxu0 0.0
  %10606 = vmatpush1.xpose.msra.mxu0 0.0
  %10607 = vmatprep.subr.mxu0 0.0
  %10608 = vmatpush1.xpose.msra.mxu0 0.0
  %10609 = vmatprep.subr.mxu0 0.0
  %10610 = vmatpush1.xpose.msra.mxu0 0.0
  %10611 = vmatprep.subr.mxu0 0.0
  %10612 = vmatpush1.xpose.msra.mxu0 0.0
  %10613 = vmatprep.subr.mxu0 0.0
  %10614 = vmatpush1.xpose.msra.mxu0 0.0
  %10615 = vmatprep.subr.mxu0 0.0
  %10616 = vmatpush1.xpose.msra.mxu0 0.0
  %10617 = vmatprep.subr.mxu0 0.0
  %10618 = vmatpush1.xpose.msra.mxu0 0.0
  %10619 = vmatprep.subr.mxu0 0.0
  %10620 = vmatpush1.xpose.msra.mxu0 0.0
  %10621 = vmatprep.subr.mxu0 0.0
  %10622 = vmatpush1.xpose.msra.mxu0 0.0
  %10623 = vmatprep.mubr.f32.mxu0 0.0
  %10624 = vmatmul.mubr.f32.gmra.mrb[0].mxu0 %v10551
  %v10625 = vpop.f32.mrb[0].mxu0
  %v10626 = vadd.f32 0.0, %v10625
  %v10627 = vpop.f32.mrb[0].mxu0
  %10628 = vdwg.mxu0
  %v10630 = vsel %vm1153, %v9347, 0
  %v10633 = vsel %vm1153, %v9714, 0
  %v10636 = vsel %vm1153, %v9746, 0
  %10638 = vmatprep.subr.mxu0 0.0
  %10639 = vmatpush1.xpose.msra.mxu0 %v10633
  %10640 = vmatprep.subr.mxu0 0.0
  %10641 = vmatpush1.xpose.msra.mxu0 %v10636
  %10642 = vmatprep.subr.mxu0 0.0
  %10643 = vmatpush1.xpose.msra.mxu0 0.0
  %10644 = vmatprep.subr.mxu0 0.0
  %10645 = vmatpush1.xpose.msra.mxu0 0.0
  %10646 = vmatprep.subr.mxu0 0.0
  %10647 = vmatpush1.xpose.msra.mxu0 0.0
  %10648 = vmatprep.subr.mxu0 0.0
  %10649 = vmatpush1.xpose.msra.mxu0 0.0
  %10650 = vmatprep.subr.mxu0 0.0
  %10651 = vmatpush1.xpose.msra.mxu0 0.0
  %10652 = vmatprep.subr.mxu0 0.0
  %10653 = vmatpush1.xpose.msra.mxu0 0.0
  %10654 = vmatprep.subr.mxu0 0.0
  %10655 = vmatpush1.xpose.msra.mxu0 0.0
  %10656 = vmatprep.subr.mxu0 0.0
  %10657 = vmatpush1.xpose.msra.mxu0 0.0
  %10658 = vmatprep.subr.mxu0 0.0
  %10659 = vmatpush1.xpose.msra.mxu0 0.0
  %10660 = vmatprep.subr.mxu0 0.0
  %10661 = vmatpush1.xpose.msra.mxu0 0.0
  %10662 = vmatprep.subr.mxu0 0.0
  %10663 = vmatpush1.xpose.msra.mxu0 0.0
  %10664 = vmatprep.subr.mxu0 0.0
  %10665 = vmatpush1.xpose.msra.mxu0 0.0
  %10666 = vmatprep.subr.mxu0 0.0
  %10667 = vmatpush1.xpose.msra.mxu0 0.0
  %10668 = vmatprep.subr.mxu0 0.0
  %10669 = vmatpush1.xpose.msra.mxu0 0.0
  %10670 = vmatprep.subr.mxu0 0.0
  %10671 = vmatpush1.xpose.msra.mxu0 0.0
  %10672 = vmatprep.subr.mxu0 0.0
  %10673 = vmatpush1.xpose.msra.mxu0 0.0
  %10674 = vmatprep.subr.mxu0 0.0
  %10675 = vmatpush1.xpose.msra.mxu0 0.0
  %10676 = vmatprep.subr.mxu0 0.0
  %10677 = vmatpush1.xpose.msra.mxu0 0.0
  %10678 = vmatprep.subr.mxu0 0.0
  %10679 = vmatpush1.xpose.msra.mxu0 0.0
  %10680 = vmatprep.subr.mxu0 0.0
  %10681 = vmatpush1.xpose.msra.mxu0 0.0
  %10682 = vmatprep.subr.mxu0 0.0
  %10683 = vmatpush1.xpose.msra.mxu0 0.0
  %10684 = vmatprep.subr.mxu0 0.0
  %10685 = vmatpush1.xpose.msra.mxu0 0.0
  %10686 = vmatprep.subr.mxu0 0.0
  %10687 = vmatpush1.xpose.msra.mxu0 0.0
  %10688 = vmatprep.subr.mxu0 0.0
  %10689 = vmatpush1.xpose.msra.mxu0 0.0
  %10690 = vmatprep.subr.mxu0 0.0
  %10691 = vmatpush1.xpose.msra.mxu0 0.0
  %10692 = vmatprep.subr.mxu0 0.0
  %10693 = vmatpush1.xpose.msra.mxu0 0.0
  %10694 = vmatprep.subr.mxu0 0.0
  %10695 = vmatpush1.xpose.msra.mxu0 0.0
  %10696 = vmatprep.subr.mxu0 0.0
  %10697 = vmatpush1.xpose.msra.mxu0 0.0
  %10698 = vmatprep.subr.mxu0 0.0
  %10699 = vmatpush1.xpose.msra.mxu0 0.0
  %10700 = vmatprep.subr.mxu0 0.0
  %10701 = vmatpush1.xpose.msra.mxu0 0.0
  %10702 = vmatprep.mubr.f32.mxu0 0.0
  %10703 = vmatmul.mubr.f32.gmra.mrb[0].mxu0 %v10630
  %v10704 = vpop.f32.mrb[0].mxu0
  %v10705 = vadd.f32 0.0, %v10704
  %v10706 = vpop.f32.mrb[0].mxu0
  %10707 = vdwg.mxu0
  %v10709 = vsel %vm1153, %v9348, 0
  %v10712 = vsel %vm1153, %v9715, 0
  %v10715 = vsel %vm1153, %v9748, 0
  %10717 = vmatprep.subr.mxu0 0.0
  %10718 = vmatpush1.xpose.msra.mxu0 %v10712
  %10719 = vmatprep.subr.mxu0 0.0
  %10720 = vmatpush1.xpose.msra.mxu0 %v10715
  %10721 = vmatprep.subr.mxu0 0.0
  %10722 = vmatpush1.xpose.msra.mxu0 0.0
  %10723 = vmatprep.subr.mxu0 0.0
  %10724 = vmatpush1.xpose.msra.mxu0 0.0
  %10725 = vmatprep.subr.mxu0 0.0
  %10726 = vmatpush1.xpose.msra.mxu0 0.0
  %10727 = vmatprep.subr.mxu0 0.0
  %10728 = vmatpush1.xpose.msra.mxu0 0.0
  %10729 = vmatprep.subr.mxu0 0.0
  %10730 = vmatpush1.xpose.msra.mxu0 0.0
  %10731 = vmatprep.subr.mxu0 0.0
  %10732 = vmatpush1.xpose.msra.mxu0 0.0
  %10733 = vmatprep.subr.mxu0 0.0
  %10734 = vmatpush1.xpose.msra.mxu0 0.0
  %10735 = vmatprep.subr.mxu0 0.0
  %10736 = vmatpush1.xpose.msra.mxu0 0.0
  %10737 = vmatprep.subr.mxu0 0.0
  %10738 = vmatpush1.xpose.msra.mxu0 0.0
  %10739 = vmatprep.subr.mxu0 0.0
  %10740 = vmatpush1.xpose.msra.mxu0 0.0
  %10741 = vmatprep.subr.mxu0 0.0
  %10742 = vmatpush1.xpose.msra.mxu0 0.0
  %10743 = vmatprep.subr.mxu0 0.0
  %10744 = vmatpush1.xpose.msra.mxu0 0.0
  %10745 = vmatprep.subr.mxu0 0.0
  %10746 = vmatpush1.xpose.msra.mxu0 0.0
  %10747 = vmatprep.subr.mxu0 0.0
  %10748 = vmatpush1.xpose.msra.mxu0 0.0
  %10749 = vmatprep.subr.mxu0 0.0
  %10750 = vmatpush1.xpose.msra.mxu0 0.0
  %10751 = vmatprep.subr.mxu0 0.0
  %10752 = vmatpush1.xpose.msra.mxu0 0.0
  %10753 = vmatprep.subr.mxu0 0.0
  %10754 = vmatpush1.xpose.msra.mxu0 0.0
  %10755 = vmatprep.subr.mxu0 0.0
  %10756 = vmatpush1.xpose.msra.mxu0 0.0
  %10757 = vmatprep.subr.mxu0 0.0
  %10758 = vmatpush1.xpose.msra.mxu0 0.0
  %10759 = vmatprep.subr.mxu0 0.0
  %10760 = vmatpush1.xpose.msra.mxu0 0.0
  %10761 = vmatprep.subr.mxu0 0.0
  %10762 = vmatpush1.xpose.msra.mxu0 0.0
  %10763 = vmatprep.subr.mxu0 0.0
  %10764 = vmatpush1.xpose.msra.mxu0 0.0
  %10765 = vmatprep.subr.mxu0 0.0
  %10766 = vmatpush1.xpose.msra.mxu0 0.0
  %10767 = vmatprep.subr.mxu0 0.0
  %10768 = vmatpush1.xpose.msra.mxu0 0.0
  %10769 = vmatprep.subr.mxu0 0.0
  %10770 = vmatpush1.xpose.msra.mxu0 0.0
  %10771 = vmatprep.subr.mxu0 0.0
  %10772 = vmatpush1.xpose.msra.mxu0 0.0
  %10773 = vmatprep.subr.mxu0 0.0
  %10774 = vmatpush1.xpose.msra.mxu0 0.0
  %10775 = vmatprep.subr.mxu0 0.0
  %10776 = vmatpush1.xpose.msra.mxu0 0.0
  %10777 = vmatprep.subr.mxu0 0.0
  %10778 = vmatpush1.xpose.msra.mxu0 0.0
  %10779 = vmatprep.subr.mxu0 0.0
  %10780 = vmatpush1.xpose.msra.mxu0 0.0
  %10781 = vmatprep.mubr.f32.mxu0 0.0
  %10782 = vmatmul.mubr.f32.gmra.mrb[0].mxu0 %v10709
  %v10783 = vpop.f32.mrb[0].mxu0
  %v10784 = vadd.f32 0.0, %v10783
  %v10785 = vpop.f32.mrb[0].mxu0
  %10786 = vdwg.mxu0
  %v10787 = vmul.f32 %v10231, 0.35355338
  %v10788 = vmul.f32 %v10310, 0.35355338
  %v10789 = vmul.f32 %v10389, 0.35355338
  %v10790 = vmul.f32 %v10468, 0.35355338
  %v10791 = vmul.f32 %v10547, 0.35355338
  %v10792 = vmul.f32 %v10626, 0.35355338
  %v10793 = vmul.f32 %v10705, 0.35355338
  %v10794 = vmul.f32 %v10784, 0.35355338
  %v10795 = vsel %vm4812, %v10787, -inf
  %10796 = vmax.xlane.f32.xlu0 %v10795
  %v10797 = vpop.xlane.xlu0 %10796
  %v10798 = vsel %vm4812, %v10788, -inf
  %10799 = vmax.xlane.f32.xlu0 %v10798
  %v10800 = vpop.xlane.xlu0 %10799
  %v10801 = vsel %vm4812, %v10789, -inf
  %10802 = vmax.xlane.f32.xlu0 %v10801
  %v10803 = vpop.xlane.xlu0 %10802
  %v10804 = vsel %vm4812, %v10790, -inf
  %10805 = vmax.xlane.f32.xlu0 %v10804
  %v10806 = vpop.xlane.xlu0 %10805
  %v10807 = vsel %vm4812, %v10791, -inf
  %10808 = vmax.xlane.f32.xlu0 %v10807
  %v10809 = vpop.xlane.xlu0 %10808
  %v10810 = vsel %vm4812, %v10792, -inf
  %10811 = vmax.xlane.f32.xlu0 %v10810
  %v10812 = vpop.xlane.xlu0 %10811
  %v10813 = vsel %vm4812, %v10793, -inf
  %10814 = vmax.xlane.f32.xlu0 %v10813
  %v10815 = vpop.xlane.xlu0 %10814
  %v10816 = vsel %vm4812, %v10794, -inf
  %10817 = vmax.xlane.f32.xlu0 %v10816
  %v10818 = vpop.xlane.xlu0 %10817
  %v10819 = vsub.f32 %v10787, %v10797
  %v10820 = vsub.f32 %v10788, %v10800
  %v10821 = vsub.f32 %v10789, %v10803
  %v10822 = vsub.f32 %v10790, %v10806
  %v10823 = vsub.f32 %v10791, %v10809
  %v10824 = vsub.f32 %v10792, %v10812
  %v10825 = vsub.f32 %v10793, %v10815
  %v10826 = vsub.f32 %v10794, %v10818
  %v10827 = vmul.f32 %v10819, 1.442695
  %v10828 = vpow.pop %v10827
  %v10829 = vmul.f32 %v10820, 1.442695
  %v10830 = vpow.pop %v10829
  %v10831 = vmul.f32 %v10821, 1.442695
  %v10832 = vpow.pop %v10831
  %v10833 = vmul.f32 %v10822, 1.442695
  %v10834 = vpow.pop %v10833
  %v10835 = vmul.f32 %v10823, 1.442695
  %v10836 = vpow.pop %v10835
  %v10837 = vmul.f32 %v10824, 1.442695
  %v10838 = vpow.pop %v10837
  %v10839 = vmul.f32 %v10825, 1.442695
  %v10840 = vpow.pop %v10839
  %v10841 = vmul.f32 %v10826, 1.442695
  %v10842 = vpow.pop %v10841
  %v10843 = vsel %vm4812, %v10828, 0.0
  %10844 = vadd.xlane.f32.xlu0 %v10843
  %v10845 = vpop.xlane.xlu0 %10844
  %v10846 = vsel %vm4812, %v10830, 0.0
  %10847 = vadd.xlane.f32.xlu0 %v10846
  %v10848 = vpop.xlane.xlu0 %10847
  %v10849 = vsel %vm4812, %v10832, 0.0
  %10850 = vadd.xlane.f32.xlu0 %v10849
  %v10851 = vpop.xlane.xlu0 %10850
  %v10852 = vsel %vm4812, %v10834, 0.0
  %10853 = vadd.xlane.f32.xlu0 %v10852
  %v10854 = vpop.xlane.xlu0 %10853
  %v10855 = vsel %vm4812, %v10836, 0.0
  %10856 = vadd.xlane.f32.xlu0 %v10855
  %v10857 = vpop.xlane.xlu0 %10856
  %v10858 = vsel %vm4812, %v10838, 0.0
  %10859 = vadd.xlane.f32.xlu0 %v10858
  %v10860 = vpop.xlane.xlu0 %10859
  %v10861 = vsel %vm4812, %v10840, 0.0
  %10862 = vadd.xlane.f32.xlu0 %v10861
  %v10863 = vpop.xlane.xlu0 %10862
  %v10864 = vsel %vm4812, %v10842, 0.0
  %10865 = vadd.xlane.f32.xlu0 %v10864
  %v10866 = vpop.xlane.xlu0 %10865
  %v10867 = vrcp.pop %v10845
  %v10868 = vrcp.pop %v10848
  %v10869 = vrcp.pop %v10851
  %v10870 = vrcp.pop %v10854
  %v10871 = vrcp.pop %v10857
  %v10872 = vrcp.pop %v10860
  %v10873 = vrcp.pop %v10863
  %v10874 = vrcp.pop %v10866
  %v10875 = vmul.f32 %v10828, %v10867
  %v10876 = vmul.f32 %v10830, %v10868
  %v10877 = vmul.f32 %v10832, %v10869
  %v10878 = vmul.f32 %v10834, %v10870
  %v10879 = vmul.f32 %v10836, %v10871
  %v10880 = vmul.f32 %v10838, %v10872
  %v10881 = vmul.f32 %v10840, %v10873
  %v10882 = vmul.f32 %v10842, %v10874
  %v10884 = vsel %vm4812, %v10875, 0
  %v10887 = vsel %vm59, %v10044, 0
  %10889 = vmatprep.subr.mxu0 0.0
  %10890 = vmatpush1.msra.mxu0 %v10017
  %10891 = vmatprep.subr.mxu0 0.0
  %10892 = vmatpush1.msra.mxu0 %v10887
  %10893 = vmatprep.subr.mxu0 0.0
  %10894 = vmatpush1.msra.mxu0 0.0
  %10895 = vmatprep.subr.mxu0 0.0
  %10896 = vmatpush1.msra.mxu0 0.0
  %10897 = vmatprep.subr.mxu0 0.0
  %10898 = vmatpush1.msra.mxu0 0.0
  %10899 = vmatprep.subr.mxu0 0.0
  %10900 = vmatpush1.msra.mxu0 0.0
  %10901 = vmatprep.subr.mxu0 0.0
  %10902 = vmatpush1.msra.mxu0 0.0
  %10903 = vmatprep.subr.mxu0 0.0
  %10904 = vmatpush1.msra.mxu0 0.0
  %10905 = vmatprep.subr.mxu0 0.0
  %10906 = vmatpush1.msra.mxu0 0.0
  %10907 = vmatprep.subr.mxu0 0.0
  %10908 = vmatpush1.msra.mxu0 0.0
  %10909 = vmatprep.subr.mxu0 0.0
  %10910 = vmatpush1.msra.mxu0 0.0
  %10911 = vmatprep.subr.mxu0 0.0
  %10912 = vmatpush1.msra.mxu0 0.0
  %10913 = vmatprep.subr.mxu0 0.0
  %10914 = vmatpush1.msra.mxu0 0.0
  %10915 = vmatprep.subr.mxu0 0.0
  %10916 = vmatpush1.msra.mxu0 0.0
  %10917 = vmatprep.subr.mxu0 0.0
  %10918 = vmatpush1.msra.mxu0 0.0
  %10919 = vmatprep.subr.mxu0 0.0
  %10920 = vmatpush1.msra.mxu0 0.0
  %10921 = vmatprep.subr.mxu0 0.0
  %10922 = vmatpush1.msra.mxu0 0.0
  %10923 = vmatprep.subr.mxu0 0.0
  %10924 = vmatpush1.msra.mxu0 0.0
  %10925 = vmatprep.subr.mxu0 0.0
  %10926 = vmatpush1.msra.mxu0 0.0
  %10927 = vmatprep.subr.mxu0 0.0
  %10928 = vmatpush1.msra.mxu0 0.0
  %10929 = vmatprep.subr.mxu0 0.0
  %10930 = vmatpush1.msra.mxu0 0.0
  %10931 = vmatprep.subr.mxu0 0.0
  %10932 = vmatpush1.msra.mxu0 0.0
  %10933 = vmatprep.subr.mxu0 0.0
  %10934 = vmatpush1.msra.mxu0 0.0
  %10935 = vmatprep.subr.mxu0 0.0
  %10936 = vmatpush1.msra.mxu0 0.0
  %10937 = vmatprep.subr.mxu0 0.0
  %10938 = vmatpush1.msra.mxu0 0.0
  %10939 = vmatprep.subr.mxu0 0.0
  %10940 = vmatpush1.msra.mxu0 0.0
  %10941 = vmatprep.subr.mxu0 0.0
  %10942 = vmatpush1.msra.mxu0 0.0
  %10943 = vmatprep.subr.mxu0 0.0
  %10944 = vmatpush1.msra.mxu0 0.0
  %10945 = vmatprep.subr.mxu0 0.0
  %10946 = vmatpush1.msra.mxu0 0.0
  %10947 = vmatprep.subr.mxu0 0.0
  %10948 = vmatpush1.msra.mxu0 0.0
  %10949 = vmatprep.subr.mxu0 0.0
  %10950 = vmatpush1.msra.mxu0 0.0
  %10951 = vmatprep.subr.mxu0 0.0
  %10952 = vmatpush1.msra.mxu0 0.0
  %10953 = vmatprep.mubr.f32.mxu0 0.0
  %10954 = vmatmul.mubr.f32.gmra.mrb[0].mxu0 %v10884
  %v10955 = vpop.f32.mrb[0].mxu0
  %v10956 = vadd.f32 0.0, %v10955
  %v10957 = vpop.f32.mrb[0].mxu0
  %10958 = vdwg.mxu0
  %v10960 = vsel %vm4812, %v10876, 0
  %v10963 = vsel %vm59, %v10052, 0
  %10965 = vmatprep.subr.mxu0 0.0
  %10966 = vmatpush1.msra.mxu0 %v10018
  %10967 = vmatprep.subr.mxu0 0.0
  %10968 = vmatpush1.msra.mxu0 %v10963
  %10969 = vmatprep.subr.mxu0 0.0
  %10970 = vmatpush1.msra.mxu0 0.0
  %10971 = vmatprep.subr.mxu0 0.0
  %10972 = vmatpush1.msra.mxu0 0.0
  %10973 = vmatprep.subr.mxu0 0.0
  %10974 = vmatpush1.msra.mxu0 0.0
  %10975 = vmatprep.subr.mxu0 0.0
  %10976 = vmatpush1.msra.mxu0 0.0
  %10977 = vmatprep.subr.mxu0 0.0
  %10978 = vmatpush1.msra.mxu0 0.0
  %10979 = vmatprep.subr.mxu0 0.0
  %10980 = vmatpush1.msra.mxu0 0.0
  %10981 = vmatprep.subr.mxu0 0.0
  %10982 = vmatpush1.msra.mxu0 0.0
  %10983 = vmatprep.subr.mxu0 0.0
  %10984 = vmatpush1.msra.mxu0 0.0
  %10985 = vmatprep.subr.mxu0 0.0
  %10986 = vmatpush1.msra.mxu0 0.0
  %10987 = vmatprep.subr.mxu0 0.0
  %10988 = vmatpush1.msra.mxu0 0.0
  %10989 = vmatprep.subr.mxu0 0.0
  %10990 = vmatpush1.msra.mxu0 0.0
  %10991 = vmatprep.subr.mxu0 0.0
  %10992 = vmatpush1.msra.mxu0 0.0
  %10993 = vmatprep.subr.mxu0 0.0
  %10994 = vmatpush1.msra.mxu0 0.0
  %10995 = vmatprep.subr.mxu0 0.0
  %10996 = vmatpush1.msra.mxu0 0.0
  %10997 = vmatprep.subr.mxu0 0.0
  %10998 = vmatpush1.msra.mxu0 0.0
  %10999 = vmatprep.subr.mxu0 0.0
  %11000 = vmatpush1.msra.mxu0 0.0
  %11001 = vmatprep.subr.mxu0 0.0
  %11002 = vmatpush1.msra.mxu0 0.0
  %11003 = vmatprep.subr.mxu0 0.0
  %11004 = vmatpush1.msra.mxu0 0.0
  %11005 = vmatprep.subr.mxu0 0.0
  %11006 = vmatpush1.msra.mxu0 0.0
  %11007 = vmatprep.subr.mxu0 0.0
  %11008 = vmatpush1.msra.mxu0 0.0
  %11009 = vmatprep.subr.mxu0 0.0
  %11010 = vmatpush1.msra.mxu0 0.0
  %11011 = vmatprep.subr.mxu0 0.0
  %11012 = vmatpush1.msra.mxu0 0.0
  %11013 = vmatprep.subr.mxu0 0.0
  %11014 = vmatpush1.msra.mxu0 0.0
  %11015 = vmatprep.subr.mxu0 0.0
  %11016 = vmatpush1.msra.mxu0 0.0
  %11017 = vmatprep.subr.mxu0 0.0
  %11018 = vmatpush1.msra.mxu0 0.0
  %11019 = vmatprep.subr.mxu0 0.0
  %11020 = vmatpush1.msra.mxu0 0.0
  %11021 = vmatprep.subr.mxu0 0.0
  %11022 = vmatpush1.msra.mxu0 0.0
  %11023 = vmatprep.subr.mxu0 0.0
  %11024 = vmatpush1.msra.mxu0 0.0
  %11025 = vmatprep.subr.mxu0 0.0
  %11026 = vmatpush1.msra.mxu0 0.0
  %11027 = vmatprep.subr.mxu0 0.0
  %11028 = vmatpush1.msra.mxu0 0.0
  %11029 = vmatprep.mubr.f32.mxu0 0.0
  %11030 = vmatmul.mubr.f32.gmra.mrb[0].mxu0 %v10960
  %v11031 = vpop.f32.mrb[0].mxu0
  %v11032 = vadd.f32 0.0, %v11031
  %v11033 = vpop.f32.mrb[0].mxu0
  %11034 = vdwg.mxu0
  %v11036 = vsel %vm4812, %v10877, 0
  %v11039 = vsel %vm59, %v10051, 0
  %11041 = vmatprep.subr.mxu0 0.0
  %11042 = vmatpush1.msra.mxu0 %v10019
  %11043 = vmatprep.subr.mxu0 0.0
  %11044 = vmatpush1.msra.mxu0 %v11039
  %11045 = vmatprep.subr.mxu0 0.0
  %11046 = vmatpush1.msra.mxu0 0.0
  %11047 = vmatprep.subr.mxu0 0.0
  %11048 = vmatpush1.msra.mxu0 0.0
  %11049 = vmatprep.subr.mxu0 0.0
  %11050 = vmatpush1.msra.mxu0 0.0
  %11051 = vmatprep.subr.mxu0 0.0
  %11052 = vmatpush1.msra.mxu0 0.0
  %11053 = vmatprep.subr.mxu0 0.0
  %11054 = vmatpush1.msra.mxu0 0.0
  %11055 = vmatprep.subr.mxu0 0.0
  %11056 = vmatpush1.msra.mxu0 0.0
  %11057 = vmatprep.subr.mxu0 0.0
  %11058 = vmatpush1.msra.mxu0 0.0
  %11059 = vmatprep.subr.mxu0 0.0
  %11060 = vmatpush1.msra.mxu0 0.0
  %11061 = vmatprep.subr.mxu0 0.0
  %11062 = vmatpush1.msra.mxu0 0.0
  %11063 = vmatprep.subr.mxu0 0.0
  %11064 = vmatpush1.msra.mxu0 0.0
  %11065 = vmatprep.subr.mxu0 0.0
  %11066 = vmatpush1.msra.mxu0 0.0
  %11067 = vmatprep.subr.mxu0 0.0
  %11068 = vmatpush1.msra.mxu0 0.0
  %11069 = vmatprep.subr.mxu0 0.0
  %11070 = vmatpush1.msra.mxu0 0.0
  %11071 = vmatprep.subr.mxu0 0.0
  %11072 = vmatpush1.msra.mxu0 0.0
  %11073 = vmatprep.subr.mxu0 0.0
  %11074 = vmatpush1.msra.mxu0 0.0
  %11075 = vmatprep.subr.mxu0 0.0
  %11076 = vmatpush1.msra.mxu0 0.0
  %11077 = vmatprep.subr.mxu0 0.0
  %11078 = vmatpush1.msra.mxu0 0.0
  %11079 = vmatprep.subr.mxu0 0.0
  %11080 = vmatpush1.msra.mxu0 0.0
  %11081 = vmatprep.subr.mxu0 0.0
  %11082 = vmatpush1.msra.mxu0 0.0
  %11083 = vmatprep.subr.mxu0 0.0
  %11084 = vmatpush1.msra.mxu0 0.0
  %11085 = vmatprep.subr.mxu0 0.0
  %11086 = vmatpush1.msra.mxu0 0.0
  %11087 = vmatprep.subr.mxu0 0.0
  %11088 = vmatpush1.msra.mxu0 0.0
  %11089 = vmatprep.subr.mxu0 0.0
  %11090 = vmatpush1.msra.mxu0 0.0
  %11091 = vmatprep.subr.mxu0 0.0
  %11092 = vmatpush1.msra.mxu0 0.0
  %11093 = vmatprep.subr.mxu0 0.0
  %11094 = vmatpush1.msra.mxu0 0.0
  %11095 = vmatprep.subr.mxu0 0.0
  %11096 = vmatpush1.msra.mxu0 0.0
  %11097 = vmatprep.subr.mxu0 0.0
  %11098 = vmatpush1.msra.mxu0 0.0
  %11099 = vmatprep.subr.mxu0 0.0
  %11100 = vmatpush1.msra.mxu0 0.0
  %11101 = vmatprep.subr.mxu0 0.0
  %11102 = vmatpush1.msra.mxu0 0.0
  %11103 = vmatprep.subr.mxu0 0.0
  %11104 = vmatpush1.msra.mxu0 0.0
  %11105 = vmatprep.mubr.f32.mxu0 0.0
  %11106 = vmatmul.mubr.f32.gmra.mrb[0].mxu0 %v11036
  %v11107 = vpop.f32.mrb[0].mxu0
  %v11108 = vadd.f32 0.0, %v11107
  %v11109 = vpop.f32.mrb[0].mxu0
  %11110 = vdwg.mxu0
  %v11112 = vsel %vm4812, %v10878, 0
  %v11115 = vsel %vm59, %v10053, 0
  %11117 = vmatprep.subr.mxu0 0.0
  %11118 = vmatpush1.msra.mxu0 %v10020
  %11119 = vmatprep.subr.mxu0 0.0
  %11120 = vmatpush1.msra.mxu0 %v11115
  %11121 = vmatprep.subr.mxu0 0.0
  %11122 = vmatpush1.msra.mxu0 0.0
  %11123 = vmatprep.subr.mxu0 0.0
  %11124 = vmatpush1.msra.mxu0 0.0
  %11125 = vmatprep.subr.mxu0 0.0
  %11126 = vmatpush1.msra.mxu0 0.0
  %11127 = vmatprep.subr.mxu0 0.0
  %11128 = vmatpush1.msra.mxu0 0.0
  %11129 = vmatprep.subr.mxu0 0.0
  %11130 = vmatpush1.msra.mxu0 0.0
  %11131 = vmatprep.subr.mxu0 0.0
  %11132 = vmatpush1.msra.mxu0 0.0
  %11133 = vmatprep.subr.mxu0 0.0
  %11134 = vmatpush1.msra.mxu0 0.0
  %11135 = vmatprep.subr.mxu0 0.0
  %11136 = vmatpush1.msra.mxu0 0.0
  %11137 = vmatprep.subr.mxu0 0.0
  %11138 = vmatpush1.msra.mxu0 0.0
  %11139 = vmatprep.subr.mxu0 0.0
  %11140 = vmatpush1.msra.mxu0 0.0
  %11141 = vmatprep.subr.mxu0 0.0
  %11142 = vmatpush1.msra.mxu0 0.0
  %11143 = vmatprep.subr.mxu0 0.0
  %11144 = vmatpush1.msra.mxu0 0.0
  %11145 = vmatprep.subr.mxu0 0.0
  %11146 = vmatpush1.msra.mxu0 0.0
  %11147 = vmatprep.subr.mxu0 0.0
  %11148 = vmatpush1.msra.mxu0 0.0
  %11149 = vmatprep.subr.mxu0 0.0
  %11150 = vmatpush1.msra.mxu0 0.0
  %11151 = vmatprep.subr.mxu0 0.0
  %11152 = vmatpush1.msra.mxu0 0.0
  %11153 = vmatprep.subr.mxu0 0.0
  %11154 = vmatpush1.msra.mxu0 0.0
  %11155 = vmatprep.subr.mxu0 0.0
  %11156 = vmatpush1.msra.mxu0 0.0
  %11157 = vmatprep.subr.mxu0 0.0
  %11158 = vmatpush1.msra.mxu0 0.0
  %11159 = vmatprep.subr.mxu0 0.0
  %11160 = vmatpush1.msra.mxu0 0.0
  %11161 = vmatprep.subr.mxu0 0.0
  %11162 = vmatpush1.msra.mxu0 0.0
  %11163 = vmatprep.subr.mxu0 0.0
  %11164 = vmatpush1.msra.mxu0 0.0
  %11165 = vmatprep.subr.mxu0 0.0
  %11166 = vmatpush1.msra.mxu0 0.0
  %11167 = vmatprep.subr.mxu0 0.0
  %11168 = vmatpush1.msra.mxu0 0.0
  %11169 = vmatprep.subr.mxu0 0.0
  %11170 = vmatpush1.msra.mxu0 0.0
  %11171 = vmatprep.subr.mxu0 0.0
  %11172 = vmatpush1.msra.mxu0 0.0
  %11173 = vmatprep.subr.mxu0 0.0
  %11174 = vmatpush1.msra.mxu0 0.0
  %11175 = vmatprep.subr.mxu0 0.0
  %11176 = vmatpush1.msra.mxu0 0.0
  %11177 = vmatprep.subr.mxu0 0.0
  %11178 = vmatpush1.msra.mxu0 0.0
  %11179 = vmatprep.subr.mxu0 0.0
  %11180 = vmatpush1.msra.mxu0 0.0
  %11181 = vmatprep.mubr.f32.mxu0 0.0
  %11182 = vmatmul.mubr.f32.gmra.mrb[0].mxu0 %v11112
  %v11183 = vpop.f32.mrb[0].mxu0
  %v11184 = vadd.f32 0.0, %v11183
  %v11185 = vpop.f32.mrb[0].mxu0
  %11186 = vdwg.mxu0
  %v11188 = vsel %vm4812, %v10879, 0
  %v11191 = vsel %vm59, %v10145, 0
  %11193 = vmatprep.subr.mxu0 0.0
  %11194 = vmatpush1.msra.mxu0 %v10118
  %11195 = vmatprep.subr.mxu0 0.0
  %11196 = vmatpush1.msra.mxu0 %v11191
  %11197 = vmatprep.subr.mxu0 0.0
  %11198 = vmatpush1.msra.mxu0 0.0
  %11199 = vmatprep.subr.mxu0 0.0
  %11200 = vmatpush1.msra.mxu0 0.0
  %11201 = vmatprep.subr.mxu0 0.0
  %11202 = vmatpush1.msra.mxu0 0.0
  %11203 = vmatprep.subr.mxu0 0.0
  %11204 = vmatpush1.msra.mxu0 0.0
  %11205 = vmatprep.subr.mxu0 0.0
  %11206 = vmatpush1.msra.mxu0 0.0
  %11207 = vmatprep.subr.mxu0 0.0
  %11208 = vmatpush1.msra.mxu0 0.0
  %11209 = vmatprep.subr.mxu0 0.0
  %11210 = vmatpush1.msra.mxu0 0.0
  %11211 = vmatprep.subr.mxu0 0.0
  %11212 = vmatpush1.msra.mxu0 0.0
  %11213 = vmatprep.subr.mxu0 0.0
  %11214 = vmatpush1.msra.mxu0 0.0
  %11215 = vmatprep.subr.mxu0 0.0
  %11216 = vmatpush1.msra.mxu0 0.0
  %11217 = vmatprep.subr.mxu0 0.0
  %11218 = vmatpush1.msra.mxu0 0.0
  %11219 = vmatprep.subr.mxu0 0.0
  %11220 = vmatpush1.msra.mxu0 0.0
  %11221 = vmatprep.subr.mxu0 0.0
  %11222 = vmatpush1.msra.mxu0 0.0
  %11223 = vmatprep.subr.mxu0 0.0
  %11224 = vmatpush1.msra.mxu0 0.0
  %11225 = vmatprep.subr.mxu0 0.0
  %11226 = vmatpush1.msra.mxu0 0.0
  %11227 = vmatprep.subr.mxu0 0.0
  %11228 = vmatpush1.msra.mxu0 0.0
  %11229 = vmatprep.subr.mxu0 0.0
  %11230 = vmatpush1.msra.mxu0 0.0
  %11231 = vmatprep.subr.mxu0 0.0
  %11232 = vmatpush1.msra.mxu0 0.0
  %11233 = vmatprep.subr.mxu0 0.0
  %11234 = vmatpush1.msra.mxu0 0.0
  %11235 = vmatprep.subr.mxu0 0.0
  %11236 = vmatpush1.msra.mxu0 0.0
  %11237 = vmatprep.subr.mxu0 0.0
  %11238 = vmatpush1.msra.mxu0 0.0
  %11239 = vmatprep.subr.mxu0 0.0
  %11240 = vmatpush1.msra.mxu0 0.0
  %11241 = vmatprep.subr.mxu0 0.0
  %11242 = vmatpush1.msra.mxu0 0.0
  %11243 = vmatprep.subr.mxu0 0.0
  %11244 = vmatpush1.msra.mxu0 0.0
  %11245 = vmatprep.subr.mxu0 0.0
  %11246 = vmatpush1.msra.mxu0 0.0
  %11247 = vmatprep.subr.mxu0 0.0
  %11248 = vmatpush1.msra.mxu0 0.0
  %11249 = vmatprep.subr.mxu0 0.0
  %11250 = vmatpush1.msra.mxu0 0.0
  %11251 = vmatprep.subr.mxu0 0.0
  %11252 = vmatpush1.msra.mxu0 0.0
  %11253 = vmatprep.subr.mxu0 0.0
  %11254 = vmatpush1.msra.mxu0 0.0
  %11255 = vmatprep.subr.mxu0 0.0
  %11256 = vmatpush1.msra.mxu0 0.0
  %11257 = vmatprep.mubr.f32.mxu0 0.0
  %11258 = vmatmul.mubr.f32.gmra.mrb[0].mxu0 %v11188
  %v11259 = vpop.f32.mrb[0].mxu0
  %v11260 = vadd.f32 0.0, %v11259
  %v11261 = vpop.f32.mrb[0].mxu0
  %11262 = vdwg.mxu0
  %v11264 = vsel %vm4812, %v10880, 0
  %v11267 = vsel %vm59, %v10153, 0
  %11269 = vmatprep.subr.mxu0 0.0
  %11270 = vmatpush1.msra.mxu0 %v10119
  %11271 = vmatprep.subr.mxu0 0.0
  %11272 = vmatpush1.msra.mxu0 %v11267
  %11273 = vmatprep.subr.mxu0 0.0
  %11274 = vmatpush1.msra.mxu0 0.0
  %11275 = vmatprep.subr.mxu0 0.0
  %11276 = vmatpush1.msra.mxu0 0.0
  %11277 = vmatprep.subr.mxu0 0.0
  %11278 = vmatpush1.msra.mxu0 0.0
  %11279 = vmatprep.subr.mxu0 0.0
  %11280 = vmatpush1.msra.mxu0 0.0
  %11281 = vmatprep.subr.mxu0 0.0
  %11282 = vmatpush1.msra.mxu0 0.0
  %11283 = vmatprep.subr.mxu0 0.0
  %11284 = vmatpush1.msra.mxu0 0.0
  %11285 = vmatprep.subr.mxu0 0.0
  %11286 = vmatpush1.msra.mxu0 0.0
  %11287 = vmatprep.subr.mxu0 0.0
  %11288 = vmatpush1.msra.mxu0 0.0
  %11289 = vmatprep.subr.mxu0 0.0
  %11290 = vmatpush1.msra.mxu0 0.0
  %11291 = vmatprep.subr.mxu0 0.0
  %11292 = vmatpush1.msra.mxu0 0.0
  %11293 = vmatprep.subr.mxu0 0.0
  %11294 = vmatpush1.msra.mxu0 0.0
  %11295 = vmatprep.subr.mxu0 0.0
  %11296 = vmatpush1.msra.mxu0 0.0
  %11297 = vmatprep.subr.mxu0 0.0
  %11298 = vmatpush1.msra.mxu0 0.0
  %11299 = vmatprep.subr.mxu0 0.0
  %11300 = vmatpush1.msra.mxu0 0.0
  %11301 = vmatprep.subr.mxu0 0.0
  %11302 = vmatpush1.msra.mxu0 0.0
  %11303 = vmatprep.subr.mxu0 0.0
  %11304 = vmatpush1.msra.mxu0 0.0
  %11305 = vmatprep.subr.mxu0 0.0
  %11306 = vmatpush1.msra.mxu0 0.0
  %11307 = vmatprep.subr.mxu0 0.0
  %11308 = vmatpush1.msra.mxu0 0.0
  %11309 = vmatprep.subr.mxu0 0.0
  %11310 = vmatpush1.msra.mxu0 0.0
  %11311 = vmatprep.subr.mxu0 0.0
  %11312 = vmatpush1.msra.mxu0 0.0
  %11313 = vmatprep.subr.mxu0 0.0
  %11314 = vmatpush1.msra.mxu0 0.0
  %11315 = vmatprep.subr.mxu0 0.0
  %11316 = vmatpush1.msra.mxu0 0.0
  %11317 = vmatprep.subr.mxu0 0.0
  %11318 = vmatpush1.msra.mxu0 0.0
  %11319 = vmatprep.subr.mxu0 0.0
  %11320 = vmatpush1.msra.mxu0 0.0
  %11321 = vmatprep.subr.mxu0 0.0
  %11322 = vmatpush1.msra.mxu0 0.0
  %11323 = vmatprep.subr.mxu0 0.0
  %11324 = vmatpush1.msra.mxu0 0.0
  %11325 = vmatprep.subr.mxu0 0.0
  %11326 = vmatpush1.msra.mxu0 0.0
  %11327 = vmatprep.subr.mxu0 0.0
  %11328 = vmatpush1.msra.mxu0 0.0
  %11329 = vmatprep.subr.mxu0 0.0
  %11330 = vmatpush1.msra.mxu0 0.0
  %11331 = vmatprep.subr.mxu0 0.0
  %11332 = vmatpush1.msra.mxu0 0.0
  %11333 = vmatprep.mubr.f32.mxu0 0.0
  %11334 = vmatmul.mubr.f32.gmra.mrb[0].mxu0 %v11264
  %v11335 = vpop.f32.mrb[0].mxu0
  %v11336 = vadd.f32 0.0, %v11335
  %v11337 = vpop.f32.mrb[0].mxu0
  %11338 = vdwg.mxu0
  %v11340 = vsel %vm4812, %v10881, 0
  %v11343 = vsel %vm59, %v10152, 0
  %11345 = vmatprep.subr.mxu0 0.0
  %11346 = vmatpush1.msra.mxu0 %v10120
  %11347 = vmatprep.subr.mxu0 0.0
  %11348 = vmatpush1.msra.mxu0 %v11343
  %11349 = vmatprep.subr.mxu0 0.0
  %11350 = vmatpush1.msra.mxu0 0.0
  %11351 = vmatprep.subr.mxu0 0.0
  %11352 = vmatpush1.msra.mxu0 0.0
  %11353 = vmatprep.subr.mxu0 0.0
  %11354 = vmatpush1.msra.mxu0 0.0
  %11355 = vmatprep.subr.mxu0 0.0
  %11356 = vmatpush1.msra.mxu0 0.0
  %11357 = vmatprep.subr.mxu0 0.0
  %11358 = vmatpush1.msra.mxu0 0.0
  %11359 = vmatprep.subr.mxu0 0.0
  %11360 = vmatpush1.msra.mxu0 0.0
  %11361 = vmatprep.subr.mxu0 0.0
  %11362 = vmatpush1.msra.mxu0 0.0
  %11363 = vmatprep.subr.mxu0 0.0
  %11364 = vmatpush1.msra.mxu0 0.0
  %11365 = vmatprep.subr.mxu0 0.0
  %11366 = vmatpush1.msra.mxu0 0.0
  %11367 = vmatprep.subr.mxu0 0.0
  %11368 = vmatpush1.msra.mxu0 0.0
  %11369 = vmatprep.subr.mxu0 0.0
  %11370 = vmatpush1.msra.mxu0 0.0
  %11371 = vmatprep.subr.mxu0 0.0
  %11372 = vmatpush1.msra.mxu0 0.0
  %11373 = vmatprep.subr.mxu0 0.0
  %11374 = vmatpush1.msra.mxu0 0.0
  %11375 = vmatprep.subr.mxu0 0.0
  %11376 = vmatpush1.msra.mxu0 0.0
  %11377 = vmatprep.subr.mxu0 0.0
  %11378 = vmatpush1.msra.mxu0 0.0
  %11379 = vmatprep.subr.mxu0 0.0
  %11380 = vmatpush1.msra.mxu0 0.0
  %11381 = vmatprep.subr.mxu0 0.0
  %11382 = vmatpush1.msra.mxu0 0.0
  %11383 = vmatprep.subr.mxu0 0.0
  %11384 = vmatpush1.msra.mxu0 0.0
  %11385 = vmatprep.subr.mxu0 0.0
  %11386 = vmatpush1.msra.mxu0 0.0
  %11387 = vmatprep.subr.mxu0 0.0
  %11388 = vmatpush1.msra.mxu0 0.0
  %11389 = vmatprep.subr.mxu0 0.0
  %11390 = vmatpush1.msra.mxu0 0.0
  %11391 = vmatprep.subr.mxu0 0.0
  %11392 = vmatpush1.msra.mxu0 0.0
  %11393 = vmatprep.subr.mxu0 0.0
  %11394 = vmatpush1.msra.mxu0 0.0
  %11395 = vmatprep.subr.mxu0 0.0
  %11396 = vmatpush1.msra.mxu0 0.0
  %11397 = vmatprep.subr.mxu0 0.0
  %11398 = vmatpush1.msra.mxu0 0.0
  %11399 = vmatprep.subr.mxu0 0.0
  %11400 = vmatpush1.msra.mxu0 0.0
  %11401 = vmatprep.subr.mxu0 0.0
  %11402 = vmatpush1.msra.mxu0 0.0
  %11403 = vmatprep.subr.mxu0 0.0
  %11404 = vmatpush1.msra.mxu0 0.0
  %11405 = vmatprep.subr.mxu0 0.0
  %11406 = vmatpush1.msra.mxu0 0.0
  %11407 = vmatprep.subr.mxu0 0.0
  %11408 = vmatpush1.msra.mxu0 0.0
  %11409 = vmatprep.mubr.f32.mxu0 0.0
  %11410 = vmatmul.mubr.f32.gmra.mrb[0].mxu0 %v11340
  %v11411 = vpop.f32.mrb[0].mxu0
  %v11412 = vadd.f32 0.0, %v11411
  %v11413 = vpop.f32.mrb[0].mxu0
  %11414 = vdwg.mxu0
  %v11416 = vsel %vm4812, %v10882, 0
  %v11419 = vsel %vm59, %v10154, 0
  %11421 = vmatprep.subr.mxu0 0.0
  %11422 = vmatpush1.msra.mxu0 %v10121
  %11423 = vmatprep.subr.mxu0 0.0
  %11424 = vmatpush1.msra.mxu0 %v11419
  %11425 = vmatprep.subr.mxu0 0.0
  %11426 = vmatpush1.msra.mxu0 0.0
  %11427 = vmatprep.subr.mxu0 0.0
  %11428 = vmatpush1.msra.mxu0 0.0
  %11429 = vmatprep.subr.mxu0 0.0
  %11430 = vmatpush1.msra.mxu0 0.0
  %11431 = vmatprep.subr.mxu0 0.0
  %11432 = vmatpush1.msra.mxu0 0.0
  %11433 = vmatprep.subr.mxu0 0.0
  %11434 = vmatpush1.msra.mxu0 0.0
  %11435 = vmatprep.subr.mxu0 0.0
  %11436 = vmatpush1.msra.mxu0 0.0
  %11437 = vmatprep.subr.mxu0 0.0
  %11438 = vmatpush1.msra.mxu0 0.0
  %11439 = vmatprep.subr.mxu0 0.0
  %11440 = vmatpush1.msra.mxu0 0.0
  %11441 = vmatprep.subr.mxu0 0.0
  %11442 = vmatpush1.msra.mxu0 0.0
  %11443 = vmatprep.subr.mxu0 0.0
  %11444 = vmatpush1.msra.mxu0 0.0
  %11445 = vmatprep.subr.mxu0 0.0
  %11446 = vmatpush1.msra.mxu0 0.0
  %11447 = vmatprep.subr.mxu0 0.0
  %11448 = vmatpush1.msra.mxu0 0.0
  %11449 = vmatprep.subr.mxu0 0.0
  %11450 = vmatpush1.msra.mxu0 0.0
  %11451 = vmatprep.subr.mxu0 0.0
  %11452 = vmatpush1.msra.mxu0 0.0
  %11453 = vmatprep.subr.mxu0 0.0
  %11454 = vmatpush1.msra.mxu0 0.0
  %11455 = vmatprep.subr.mxu0 0.0
  %11456 = vmatpush1.msra.mxu0 0.0
  %11457 = vmatprep.subr.mxu0 0.0
  %11458 = vmatpush1.msra.mxu0 0.0
  %11459 = vmatprep.subr.mxu0 0.0
  %11460 = vmatpush1.msra.mxu0 0.0
  %11461 = vmatprep.subr.mxu0 0.0
  %11462 = vmatpush1.msra.mxu0 0.0
  %11463 = vmatprep.subr.mxu0 0.0
  %11464 = vmatpush1.msra.mxu0 0.0
  %11465 = vmatprep.subr.mxu0 0.0
  %11466 = vmatpush1.msra.mxu0 0.0
  %11467 = vmatprep.subr.mxu0 0.0
  %11468 = vmatpush1.msra.mxu0 0.0
  %11469 = vmatprep.subr.mxu0 0.0
  %11470 = vmatpush1.msra.mxu0 0.0
  %11471 = vmatprep.subr.mxu0 0.0
  %11472 = vmatpush1.msra.mxu0 0.0
  %11473 = vmatprep.subr.mxu0 0.0
  %11474 = vmatpush1.msra.mxu0 0.0
  %11475 = vmatprep.subr.mxu0 0.0
  %11476 = vmatpush1.msra.mxu0 0.0
  %11477 = vmatprep.subr.mxu0 0.0
  %11478 = vmatpush1.msra.mxu0 0.0
  %11479 = vmatprep.subr.mxu0 0.0
  %11480 = vmatpush1.msra.mxu0 0.0
  %11481 = vmatprep.subr.mxu0 0.0
  %11482 = vmatpush1.msra.mxu0 0.0
  %11483 = vmatprep.subr.mxu0 0.0
  %11484 = vmatpush1.msra.mxu0 0.0
  %11485 = vmatprep.mubr.f32.mxu0 0.0
  %11486 = vmatmul.mubr.f32.gmra.mrb[0].mxu0 %v11416
  %v11487 = vpop.f32.mrb[0].mxu0
  %v11488 = vadd.f32 0.0, %v11487
  %v11489 = vpop.f32.mrb[0].mxu0
  %11490 = vdwg.mxu0
  %v11491 = vcombine.low %v10956, %v11108
  %v11492 = vcombine.high %v10956, %v11108
  %v11494 = vunpack.c.l.s4 1983009808
  %v11495 = vunpack.c.0.s8 %v11494
  %v11496 = vlaneseq
  %v11497 = vshrl.u32 %v11496, 7
  %v11498 = vsub.s32 %v11495, %v11497
  %v11499 = vrot.slane %v11491, %v11498
  %v11501 = vunpack.c.l.s4 1983009808
  %v11502 = vunpack.c.0.s8 %v11501
  %v11503 = vlaneseq
  %v11504 = vshrl.u32 %v11503, 7
  %v11505 = vsub.s32 %v11502, %v11504
  %v11506 = vrot.slane %v11492, %v11505
  %v11507 = vcombine.low %v11032, %v11184
  %v11508 = vcombine.high %v11032, %v11184
  %v11510 = vunpack.c.l.s4 1983009808
  %v11511 = vunpack.c.0.s8 %v11510
  %v11512 = vlaneseq
  %v11513 = vshrl.u32 %v11512, 7
  %v11514 = vsub.s32 %v11511, %v11513
  %v11515 = vrot.slane %v11507, %v11514
  %v11517 = vunpack.c.l.s4 1983009808
  %v11518 = vunpack.c.0.s8 %v11517
  %v11519 = vlaneseq
  %v11520 = vshrl.u32 %v11519, 7
  %v11521 = vsub.s32 %v11518, %v11520
  %v11522 = vrot.slane %v11508, %v11521
  %v11523 = vcombine.low %v11499, %v11515
  %v11524 = vcombine.high %v11499, %v11515
  %v11526 = vunpack.c.l.s4 1934713408
  %v11527 = vunpack.c.0.s8 %v11526
  %v11528 = vlaneseq
  %v11529 = vshrl.u32 %v11528, 7
  %v11530 = vsub.s32 %v11527, %v11529
  %v11531 = vrot.slane %v11523, %v11530
  %v11533 = vunpack.c.l.s4 1934713408
  %v11534 = vunpack.c.0.s8 %v11533
  %v11535 = vlaneseq
  %v11536 = vshrl.u32 %v11535, 7
  %v11537 = vsub.s32 %v11534, %v11536
  %v11538 = vrot.slane %v11524, %v11537
  %v11539 = vcombine.low %v11506, %v11522
  %v11540 = vcombine.high %v11506, %v11522
  %v11542 = vunpack.c.l.s4 1934713408
  %v11543 = vunpack.c.0.s8 %v11542
  %v11544 = vlaneseq
  %v11545 = vshrl.u32 %v11544, 7
  %v11546 = vsub.s32 %v11543, %v11545
  %v11547 = vrot.slane %v11539, %v11546
  %v11549 = vunpack.c.l.s4 1934713408
  %v11550 = vunpack.c.0.s8 %v11549
  %v11551 = vlaneseq
  %v11552 = vshrl.u32 %v11551, 7
  %v11553 = vsub.s32 %v11550, %v11552
  %v11554 = vrot.slane %v11540, %v11553
  %v11555 = vcombine.high %v11531, 0.0
  %v11556 = vcombine.high %v11538, 0.0
  %v11557 = vcombine.high %v11547, 0.0
  %v11558 = vcombine.high %v11554, 0.0
  %v11559 = vcombine.low %v11260, %v11412
  %v11560 = vcombine.high %v11260, %v11412
  %v11562 = vunpack.c.l.s4 1983009808
  %v11563 = vunpack.c.0.s8 %v11562
  %v11564 = vlaneseq
  %v11565 = vshrl.u32 %v11564, 7
  %v11566 = vsub.s32 %v11563, %v11565
  %v11567 = vrot.slane %v11559, %v11566
  %v11569 = vunpack.c.l.s4 1983009808
  %v11570 = vunpack.c.0.s8 %v11569
  %v11571 = vlaneseq
  %v11572 = vshrl.u32 %v11571, 7
  %v11573 = vsub.s32 %v11570, %v11572
  %v11574 = vrot.slane %v11560, %v11573
  %v11575 = vcombine.low %v11336, %v11488
  %v11576 = vcombine.high %v11336, %v11488
  %v11578 = vunpack.c.l.s4 1983009808
  %v11579 = vunpack.c.0.s8 %v11578
  %v11580 = vlaneseq
  %v11581 = vshrl.u32 %v11580, 7
  %v11582 = vsub.s32 %v11579, %v11581
  %v11583 = vrot.slane %v11575, %v11582
  %v11585 = vunpack.c.l.s4 1983009808
  %v11586 = vunpack.c.0.s8 %v11585
  %v11587 = vlaneseq
  %v11588 = vshrl.u32 %v11587, 7
  %v11589 = vsub.s32 %v11586, %v11588
  %v11590 = vrot.slane %v11576, %v11589
  %v11591 = vcombine.low %v11567, %v11583
  %v11592 = vcombine.high %v11567, %v11583
  %v11594 = vunpack.c.l.s4 1934713408
  %v11595 = vunpack.c.0.s8 %v11594
  %v11596 = vlaneseq
  %v11597 = vshrl.u32 %v11596, 7
  %v11598 = vsub.s32 %v11595, %v11597
  %v11599 = vrot.slane %v11591, %v11598
  %v11601 = vunpack.c.l.s4 1934713408
  %v11602 = vunpack.c.0.s8 %v11601
  %v11603 = vlaneseq
  %v11604 = vshrl.u32 %v11603, 7
  %v11605 = vsub.s32 %v11602, %v11604
  %v11606 = vrot.slane %v11592, %v11605
  %v11607 = vcombine.low %v11574, %v11590
  %v11608 = vcombine.high %v11574, %v11590
  %v11610 = vunpack.c.l.s4 1934713408
  %v11611 = vunpack.c.0.s8 %v11610
  %v11612 = vlaneseq
  %v11613 = vshrl.u32 %v11612, 7
  %v11614 = vsub.s32 %v11611, %v11613
  %v11615 = vrot.slane %v11607, %v11614
  %v11617 = vunpack.c.l.s4 1934713408
  %v11618 = vunpack.c.0.s8 %v11617
  %v11619 = vlaneseq
  %v11620 = vshrl.u32 %v11619, 7
  %v11621 = vsub.s32 %v11618, %v11620
  %v11622 = vrot.slane %v11608, %v11621
  %v11623 = vcombine.high %v11599, 0.0
  %v11624 = vcombine.high %v11606, 0.0
  %v11625 = vcombine.high %v11615, 0.0
  %v11626 = vcombine.high %v11622, 0.0
  %v11627 = vcombine.low %v11531, %v11538
  %v11629 = vunpack.c.l.s4 1983009808
  %v11630 = vunpack.c.0.s8 %v11629
  %v11631 = vlaneseq
  %v11632 = vshrl.u32 %v11631, 7
  %v11633 = vsub.s32 %v11630, %v11632
  %v11634 = vrot.slane %v11627, %v11633
  %v11635 = vcombine.low %v11555, %v11556
  %v11637 = vunpack.c.l.s4 1983009808
  %v11638 = vunpack.c.0.s8 %v11637
  %v11639 = vlaneseq
  %v11640 = vshrl.u32 %v11639, 7
  %v11641 = vsub.s32 %v11638, %v11640
  %v11642 = vrot.slane %v11635, %v11641
  %v11643 = vcombine.low %v11547, %v11554
  %v11645 = vunpack.c.l.s4 1983009808
  %v11646 = vunpack.c.0.s8 %v11645
  %v11647 = vlaneseq
  %v11648 = vshrl.u32 %v11647, 7
  %v11649 = vsub.s32 %v11646, %v11648
  %v11650 = vrot.slane %v11643, %v11649
  %v11651 = vcombine.low %v11557, %v11558
  %v11653 = vunpack.c.l.s4 1983009808
  %v11654 = vunpack.c.0.s8 %v11653
  %v11655 = vlaneseq
  %v11656 = vshrl.u32 %v11655, 7
  %v11657 = vsub.s32 %v11654, %v11656
  %v11658 = vrot.slane %v11651, %v11657
  %v11659 = vcombine.low %v11634, %v11642
  %v11660 = vcombine.high %v11634, %v11642
  %v11662 = vunpack.c.l.s4 1934713408
  %v11663 = vunpack.c.0.s8 %v11662
  %v11664 = vlaneseq
  %v11665 = vshrl.u32 %v11664, 7
  %v11666 = vsub.s32 %v11663, %v11665
  %v11667 = vrot.slane %v11659, %v11666
  %v11669 = vunpack.c.l.s4 1934713408
  %v11670 = vunpack.c.0.s8 %v11669
  %v11671 = vlaneseq
  %v11672 = vshrl.u32 %v11671, 7
  %v11673 = vsub.s32 %v11670, %v11672
  %v11674 = vrot.slane %v11660, %v11673
  %v11675 = vcombine.low %v11650, %v11658
  %v11676 = vcombine.high %v11650, %v11658
  %v11678 = vunpack.c.l.s4 1934713408
  %v11679 = vunpack.c.0.s8 %v11678
  %v11680 = vlaneseq
  %v11681 = vshrl.u32 %v11680, 7
  %v11682 = vsub.s32 %v11679, %v11681
  %v11683 = vrot.slane %v11675, %v11682
  %v11685 = vunpack.c.l.s4 1934713408
  %v11686 = vunpack.c.0.s8 %v11685
  %v11687 = vlaneseq
  %v11688 = vshrl.u32 %v11687, 7
  %v11689 = vsub.s32 %v11686, %v11688
  %v11690 = vrot.slane %v11676, %v11689
  %v11691 = vcombine.low %v11667, %v11683
  %v11692 = vcombine.high %v11667, %v11683
  %v11693 = vcombine.low %v11674, %v11690
  %v11694 = vcombine.high %v11674, %v11690
  %v11695 = vcombine.low %v11599, %v11606
  %v11697 = vunpack.c.l.s4 1983009808
  %v11698 = vunpack.c.0.s8 %v11697
  %v11699 = vlaneseq
  %v11700 = vshrl.u32 %v11699, 7
  %v11701 = vsub.s32 %v11698, %v11700
  %v11702 = vrot.slane %v11695, %v11701
  %v11703 = vcombine.low %v11623, %v11624
  %v11705 = vunpack.c.l.s4 1983009808
  %v11706 = vunpack.c.0.s8 %v11705
  %v11707 = vlaneseq
  %v11708 = vshrl.u32 %v11707, 7
  %v11709 = vsub.s32 %v11706, %v11708
  %v11710 = vrot.slane %v11703, %v11709
  %v11711 = vcombine.low %v11615, %v11622
  %v11713 = vunpack.c.l.s4 1983009808
  %v11714 = vunpack.c.0.s8 %v11713
  %v11715 = vlaneseq
  %v11716 = vshrl.u32 %v11715, 7
  %v11717 = vsub.s32 %v11714, %v11716
  %v11718 = vrot.slane %v11711, %v11717
  %v11719 = vcombine.low %v11625, %v11626
  %v11721 = vunpack.c.l.s4 1983009808
  %v11722 = vunpack.c.0.s8 %v11721
  %v11723 = vlaneseq
  %v11724 = vshrl.u32 %v11723, 7
  %v11725 = vsub.s32 %v11722, %v11724
  %v11726 = vrot.slane %v11719, %v11725
  %v11727 = vcombine.low %v11702, %v11710
  %v11728 = vcombine.high %v11702, %v11710
  %v11730 = vunpack.c.l.s4 1934713408
  %v11731 = vunpack.c.0.s8 %v11730
  %v11732 = vlaneseq
  %v11733 = vshrl.u32 %v11732, 7
  %v11734 = vsub.s32 %v11731, %v11733
  %v11735 = vrot.slane %v11727, %v11734
  %v11737 = vunpack.c.l.s4 1934713408
  %v11738 = vunpack.c.0.s8 %v11737
  %v11739 = vlaneseq
  %v11740 = vshrl.u32 %v11739, 7
  %v11741 = vsub.s32 %v11738, %v11740
  %v11742 = vrot.slane %v11728, %v11741
  %v11743 = vcombine.low %v11718, %v11726
  %v11744 = vcombine.high %v11718, %v11726
  %v11746 = vunpack.c.l.s4 1934713408
  %v11747 = vunpack.c.0.s8 %v11746
  %v11748 = vlaneseq
  %v11749 = vshrl.u32 %v11748, 7
  %v11750 = vsub.s32 %v11747, %v11749
  %v11751 = vrot.slane %v11743, %v11750
  %v11753 = vunpack.c.l.s4 1934713408
  %v11754 = vunpack.c.0.s8 %v11753
  %v11755 = vlaneseq
  %v11756 = vshrl.u32 %v11755, 7
  %v11757 = vsub.s32 %v11754, %v11756
  %v11758 = vrot.slane %v11744, %v11757
  %v11759 = vcombine.low %v11735, %v11751
  %v11760 = vcombine.high %v11735, %v11751
  %v11761 = vcombine.low %v11742, %v11758
  %v11762 = vcombine.high %v11742, %v11758
  %11765 = vrot.lane.b32.xlu0 %v11692, 8
  %v11766 = vpop.permute.xlu0 %11765
  %11767 = vrot.lane.b32.xlu0 %v11760, 8
  %v11768 = vpop.permute.xlu0 %11767
  %11773 = vrot.lane.b32.xlu0 %v11693, 16
  %v11774 = vpop.permute.xlu0 %11773
  %11775 = vrot.lane.b32.xlu0 %v11761, 16
  %v11776 = vpop.permute.xlu0 %11775
  %11781 = vrot.lane.b32.xlu0 %v11694, 24
  %v11782 = vpop.permute.xlu0 %11781
  %11783 = vrot.lane.b32.xlu0 %v11762, 24
  %v11784 = vpop.permute.xlu0 %11783
  %v11787 = vsel %vm1153, %v11691, %v11766
  %v11788 = vsel %vm1153, %v11759, %v11768
  %v11789 = vsel %vm2748, %v11787, %v11774
  %v11790 = vsel %vm2748, %v11788, %v11776
  %v11791 = vsel %vm2751, %v11789, %v11782
  %v11792 = vsel %vm2751, %v11790, %v11784
  %v11793 = vld [vmem:[%s6186 + $0x20] sm:$0xff]
  %v11794 = vld [vmem:[%s6186 + $0x50] sm:$0xff]
  %v11795 = vld [vmem:[%s6186 + $0x80] sm:$0xff]
  %v11796 = vld [vmem:[%s6186 + $0xb0] sm:$0xff]
  %v11797 = vld [vmem:[%s6186 + $0xe0] ss:$0 sm:$0xff]
  %v11799 = vsel %vm140, %v11791, 0
  %v11802 = vsel %vm140, %v11792, 0
  %11804 = vmatprep.subr.mxu0 0.0
  %11805 = vmatpush1.msra.mxu0 %v11793
  %11806 = vmatprep.subr.mxu0 0.0
  %11807 = vmatpush1.msra.mxu0 %v11794
  %11808 = vmatprep.subr.mxu0 0.0
  %11809 = vmatpush1.msra.mxu0 %v11795
  %11810 = vmatprep.subr.mxu0 0.0
  %11811 = vmatpush1.msra.mxu0 %v11796
  %11812 = vmatprep.subr.mxu0 0.0
  %11813 = vmatpush1.msra.mxu0 0.0
  %11814 = vmatprep.subr.mxu0 0.0
  %11815 = vmatpush1.msra.mxu0 0.0
  %11816 = vmatprep.subr.mxu0 0.0
  %11817 = vmatpush1.msra.mxu0 0.0
  %11818 = vmatprep.subr.mxu0 0.0
  %11819 = vmatpush1.msra.mxu0 0.0
  %11820 = vmatprep.subr.mxu0 0.0
  %11821 = vmatpush1.msra.mxu0 0.0
  %11822 = vmatprep.subr.mxu0 0.0
  %11823 = vmatpush1.msra.mxu0 0.0
  %11824 = vmatprep.subr.mxu0 0.0
  %11825 = vmatpush1.msra.mxu0 0.0
  %11826 = vmatprep.subr.mxu0 0.0
  %11827 = vmatpush1.msra.mxu0 0.0
  %11828 = vmatprep.subr.mxu0 0.0
  %11829 = vmatpush1.msra.mxu0 0.0
  %11830 = vmatprep.subr.mxu0 0.0
  %11831 = vmatpush1.msra.mxu0 0.0
  %11832 = vmatprep.subr.mxu0 0.0
  %11833 = vmatpush1.msra.mxu0 0.0
  %11834 = vmatprep.subr.mxu0 0.0
  %11835 = vmatpush1.msra.mxu0 0.0
  %11836 = vmatprep.subr.mxu0 0.0
  %11837 = vmatpush1.msra.mxu0 0.0
  %11838 = vmatprep.subr.mxu0 0.0
  %11839 = vmatpush1.msra.mxu0 0.0
  %11840 = vmatprep.subr.mxu0 0.0
  %11841 = vmatpush1.msra.mxu0 0.0
  %11842 = vmatprep.subr.mxu0 0.0
  %11843 = vmatpush1.msra.mxu0 0.0
  %11844 = vmatprep.subr.mxu0 0.0
  %11845 = vmatpush1.msra.mxu0 0.0
  %11846 = vmatprep.subr.mxu0 0.0
  %11847 = vmatpush1.msra.mxu0 0.0
  %11848 = vmatprep.subr.mxu0 0.0
  %11849 = vmatpush1.msra.mxu0 0.0
  %11850 = vmatprep.subr.mxu0 0.0
  %11851 = vmatpush1.msra.mxu0 0.0
  %11852 = vmatprep.subr.mxu0 0.0
  %11853 = vmatpush1.msra.mxu0 0.0
  %11854 = vmatprep.subr.mxu0 0.0
  %11855 = vmatpush1.msra.mxu0 0.0
  %11856 = vmatprep.subr.mxu0 0.0
  %11857 = vmatpush1.msra.mxu0 0.0
  %11858 = vmatprep.subr.mxu0 0.0
  %11859 = vmatpush1.msra.mxu0 0.0
  %11860 = vmatprep.subr.mxu0 0.0
  %11861 = vmatpush1.msra.mxu0 0.0
  %11862 = vmatprep.subr.mxu0 0.0
  %11863 = vmatpush1.msra.mxu0 0.0
  %11864 = vmatprep.subr.mxu0 0.0
  %11865 = vmatpush1.msra.mxu0 0.0
  %11866 = vmatprep.subr.mxu0 0.0
  %11867 = vmatpush1.msra.mxu0 0.0
  %11868 = vmatprep.mubr.f32.mxu0 0.0
  %11869 = vmatmul.mubr.f32.gmra.mrb[0].mxu0 %v11799
  %v11870 = vpop.f32.mrb[0].mxu0
  %v11871 = vadd.f32 %v11797, %v11870
  %v11872 = vpop.f32.mrb[0].mxu0
  %11873 = vmatprep.mubr.f32.mxu0 0.0
  %11874 = vmatmul.mubr.f32.gmra.mrb[0].mxu0 %v11802
  %v11875 = vpop.f32.mrb[0].mxu0
  %v11876 = vadd.f32 %v11797, %v11875
  %v11877 = vpop.f32.mrb[0].mxu0
  %11878 = vdwg.mxu0
  %v11879 = vadd.f32 %v11871, %v8884
  %v11880 = vadd.f32 %v11876, %v8885
  %v11881 = vld [vmem:[%s8843 + $0x1] sm:$0x1]
  %v11882 = vld [vmem:[%s8843 + $0x4] sm:$0x1]
  %v11883 = vsel %vm140, %v11879, 0.0
  %11884 = vadd.xlane.f32.xlu0 %v11883
  %v11885 = vpop.xlane.xlu0 %11884
  %v11886 = vsel %vm140, %v11880, 0.0
  %11887 = vadd.xlane.f32.xlu0 %v11886
  %v11888 = vpop.xlane.xlu0 %11887
  %v11889 = vmul.f32 %v11885, %v147
  %v11890 = vmul.f32 %v11888, %v147
  %v11891 = vsub.f32 %v11879, %v11889
  %v11892 = vsub.f32 %v11880, %v11890
  %v11893 = vmul.f32 %v11891, %v11891
  %v11894 = vmul.f32 %v11892, %v11892
  %v11895 = vsel %vm140, %v11893, 0.0
  %11896 = vadd.xlane.f32.xlu0 %v11895
  %v11897 = vpop.xlane.xlu0 %11896
  %v11898 = vsel %vm140, %v11894, 0.0
  %11899 = vadd.xlane.f32.xlu0 %v11898
  %v11900 = vpop.xlane.xlu0 %11899
  %v11901 = vmul.f32 %v11897, %v147
  %v11902 = vmul.f32 %v11900, %v147
  %v11903 = vadd.f32 %v11901, 1e-12
  %v11904 = vadd.f32 %v11902, 1e-12
  %v11905 = vrsqrt.pop %v11903
  %v11906 = vrsqrt.pop %v11904
  %v11907 = vmul.f32 %v11891, %v11905
  %v11908 = vmul.f32 %v11892, %v11906
  %v11909 = vlaneseq
  %v11910 = vshrl.u32 %v11909, 7
  %v11911 = vsub.s32 0, %v11910
  %v11912 = vrot.slane %v11881, %v11911
  %v11913 = vmul.f32 %v11907, %v11912
  %v11914 = vmul.f32 %v11908, %v11912
  %v11915 = vlaneseq
  %v11916 = vshrl.u32 %v11915, 7
  %v11917 = vsub.s32 0, %v11916
  %v11918 = vrot.slane %v11882, %v11917
  %v11919 = vadd.f32 %v11913, %v11918
  %v11920 = vadd.f32 %v11914, %v11918
  %v11921 = vmul.f32 %v11919, %v2885
  %v11922 = vmul.f32 %v11920, %v2890
  %v11923 = vld [vmem:[%s6186 + $0x28] sm:$0xff]
  %v11924 = vld [vmem:[%s6186 + $0x58] sm:$0xff]
  %v11925 = vld [vmem:[%s6186 + $0x88] sm:$0xff]
  %v11926 = vld [vmem:[%s6186 + $0xb8] sm:$0xff]
  %v11927 = vld [vmem:[%s6186 + $0xe8] ss:$0 sm:$0xff]
  %v11929 = vsel %vm140, %v11921, 0
  %v11932 = vsel %vm140, %v11922, 0
  %11934 = vmatprep.subr.mxu0 0.0
  %11935 = vmatpush1.msra.mxu0 %v11923
  %11936 = vmatprep.subr.mxu0 0.0
  %11937 = vmatpush1.msra.mxu0 %v11924
  %11938 = vmatprep.subr.mxu0 0.0
  %11939 = vmatpush1.msra.mxu0 %v11925
  %11940 = vmatprep.subr.mxu0 0.0
  %11941 = vmatpush1.msra.mxu0 %v11926
  %11942 = vmatprep.subr.mxu0 0.0
  %11943 = vmatpush1.msra.mxu0 0.0
  %11944 = vmatprep.subr.mxu0 0.0
  %11945 = vmatpush1.msra.mxu0 0.0
  %11946 = vmatprep.subr.mxu0 0.0
  %11947 = vmatpush1.msra.mxu0 0.0
  %11948 = vmatprep.subr.mxu0 0.0
  %11949 = vmatpush1.msra.mxu0 0.0
  %11950 = vmatprep.subr.mxu0 0.0
  %11951 = vmatpush1.msra.mxu0 0.0
  %11952 = vmatprep.subr.mxu0 0.0
  %11953 = vmatpush1.msra.mxu0 0.0
  %11954 = vmatprep.subr.mxu0 0.0
  %11955 = vmatpush1.msra.mxu0 0.0
  %11956 = vmatprep.subr.mxu0 0.0
  %11957 = vmatpush1.msra.mxu0 0.0
  %11958 = vmatprep.subr.mxu0 0.0
  %11959 = vmatpush1.msra.mxu0 0.0
  %11960 = vmatprep.subr.mxu0 0.0
  %11961 = vmatpush1.msra.mxu0 0.0
  %11962 = vmatprep.subr.mxu0 0.0
  %11963 = vmatpush1.msra.mxu0 0.0
  %11964 = vmatprep.subr.mxu0 0.0
  %11965 = vmatpush1.msra.mxu0 0.0
  %11966 = vmatprep.subr.mxu0 0.0
  %11967 = vmatpush1.msra.mxu0 0.0
  %11968 = vmatprep.subr.mxu0 0.0
  %11969 = vmatpush1.msra.mxu0 0.0
  %11970 = vmatprep.subr.mxu0 0.0
  %11971 = vmatpush1.msra.mxu0 0.0
  %11972 = vmatprep.subr.mxu0 0.0
  %11973 = vmatpush1.msra.mxu0 0.0
  %11974 = vmatprep.subr.mxu0 0.0
  %11975 = vmatpush1.msra.mxu0 0.0
  %11976 = vmatprep.subr.mxu0 0.0
  %11977 = vmatpush1.msra.mxu0 0.0
  %11978 = vmatprep.subr.mxu0 0.0
  %11979 = vmatpush1.msra.mxu0 0.0
  %11980 = vmatprep.subr.mxu0 0.0
  %11981 = vmatpush1.msra.mxu0 0.0
  %11982 = vmatprep.subr.mxu0 0.0
  %11983 = vmatpush1.msra.mxu0 0.0
  %11984 = vmatprep.subr.mxu0 0.0
  %11985 = vmatpush1.msra.mxu0 0.0
  %11986 = vmatprep.subr.mxu0 0.0
  %11987 = vmatpush1.msra.mxu0 0.0
  %11988 = vmatprep.subr.mxu0 0.0
  %11989 = vmatpush1.msra.mxu0 0.0
  %11990 = vmatprep.subr.mxu0 0.0
  %11991 = vmatpush1.msra.mxu0 0.0
  %11992 = vmatprep.subr.mxu0 0.0
  %11993 = vmatpush1.msra.mxu0 0.0
  %11994 = vmatprep.subr.mxu0 0.0
  %11995 = vmatpush1.msra.mxu0 0.0
  %11996 = vmatprep.subr.mxu0 0.0
  %11997 = vmatpush1.msra.mxu0 0.0
  %11998 = vmatprep.mubr.f32.mxu0 0.0
  %11999 = vmatmul.mubr.f32.gmra.mrb[0].mxu0 %v11929
  %v12000 = vpop.f32.mrb[0].mxu0
  %v12001 = vadd.f32 %v11927, %v12000
  %v12002 = vpop.f32.mrb[0].mxu0
  %12003 = vmatprep.mubr.f32.mxu0 0.0
  %12004 = vmatmul.mubr.f32.gmra.mrb[0].mxu0 %v11932
  %v12005 = vpop.f32.mrb[0].mxu0
  %v12006 = vadd.f32 %v11927, %v12005
  %v12007 = vpop.f32.mrb[0].mxu0
  %12008 = vdwg.mxu0
  %v12009 = vmul.f32 %v12001, %v12001
  %v12010 = vmul.f32 %v12006, %v12006
  %v12011 = vmul.f32 %v12001, %v12009
  %v12012 = vmul.f32 %v12006, %v12010
  %v12013 = vmul.f32 %v12011, 0.044715
  %v12014 = vmul.f32 %v12012, 0.044715
  %v12015 = vadd.f32 %v12001, %v12013
  %v12016 = vadd.f32 %v12006, %v12014
  %v12017 = vmul.f32 %v12015, 0.7978846
  %v12018 = vmul.f32 %v12016, 0.7978846
  %v12019 = vtanh.pop %v12017
  %v12020 = vtanh.pop %v12018
  %v12021 = vadd.f32 %v12019, 1.0
  %v12022 = vadd.f32 %v12020, 1.0
  %v12023 = vmul.f32 %v12021, 0.5
  %v12024 = vmul.f32 %v12022, 0.5
  %v12025 = vmul.f32 %v12001, %v12023
  %v12026 = vmul.f32 %v12006, %v12024
  %s12027 = scalar_lea.vmem %s5, 64
  %v12028 = vld [vmem:[%s12027] sm:$0xff]
  %v12029 = vld [vmem:[%s12027 + $0x8] sm:$0xff]
  %v12030 = vld [vmem:[%s12027 + $0x10] sm:$0xff]
  %v12031 = vld [vmem:[%s12027 + $0x18] sm:$0xff]
  %v12032 = vld [vmem:[%s12027 + $0x20] sm:$0xff]
  %v12033 = vld [vmem:[%s12027 + $0x28] sm:$0xff]
  %v12034 = vld [vmem:[%s12027 + $0x30] sm:$0xff]
  %v12035 = vld [vmem:[%s12027 + $0x38] sm:$0xff]
  %v12036 = vld [vmem:[%s8843 + $0x6] sm:$0x1]
  %v12037 = vlaneseq
  %v12038 = vshrl.u32 %v12037, 7
  %v12039 = vsub.s32 0, %v12038
  %v12040 = vrot.slane %v12036, %v12039
  %v12042 = vsel %vm6058, %v12025, 0
  %v12045 = vsel %vm6058, %v12026, 0
  %12047 = vmatprep.subr.mxu0 0.0
  %12048 = vmatpush1.msra.mxu0 %v12028
  %12049 = vmatprep.subr.mxu0 0.0
  %12050 = vmatpush1.msra.mxu0 %v12029
  %12051 = vmatprep.subr.mxu0 0.0
  %12052 = vmatpush1.msra.mxu0 %v12030
  %12053 = vmatprep.subr.mxu0 0.0
  %12054 = vmatpush1.msra.mxu0 %v12031
  %12055 = vmatprep.subr.mxu0 0.0
  %12056 = vmatpush1.msra.mxu0 %v12032
  %12057 = vmatprep.subr.mxu0 0.0
  %12058 = vmatpush1.msra.mxu0 %v12033
  %12059 = vmatprep.subr.mxu0 0.0
  %12060 = vmatpush1.msra.mxu0 %v12034
  %12061 = vmatprep.subr.mxu0 0.0
  %12062 = vmatpush1.msra.mxu0 %v12035
  %12063 = vmatprep.subr.mxu0 0.0
  %12064 = vmatpush1.msra.mxu0 0.0
  %12065 = vmatprep.subr.mxu0 0.0
  %12066 = vmatpush1.msra.mxu0 0.0
  %12067 = vmatprep.subr.mxu0 0.0
  %12068 = vmatpush1.msra.mxu0 0.0
  %12069 = vmatprep.subr.mxu0 0.0
  %12070 = vmatpush1.msra.mxu0 0.0
  %12071 = vmatprep.subr.mxu0 0.0
  %12072 = vmatpush1.msra.mxu0 0.0
  %12073 = vmatprep.subr.mxu0 0.0
  %12074 = vmatpush1.msra.mxu0 0.0
  %12075 = vmatprep.subr.mxu0 0.0
  %12076 = vmatpush1.msra.mxu0 0.0
  %12077 = vmatprep.subr.mxu0 0.0
  %12078 = vmatpush1.msra.mxu0 0.0
  %12079 = vmatprep.subr.mxu0 0.0
  %12080 = vmatpush1.msra.mxu0 0.0
  %12081 = vmatprep.subr.mxu0 0.0
  %12082 = vmatpush1.msra.mxu0 0.0
  %12083 = vmatprep.subr.mxu0 0.0
  %12084 = vmatpush1.msra.mxu0 0.0
  %12085 = vmatprep.subr.mxu0 0.0
  %12086 = vmatpush1.msra.mxu0 0.0
  %12087 = vmatprep.subr.mxu0 0.0
  %12088 = vmatpush1.msra.mxu0 0.0
  %12089 = vmatprep.subr.mxu0 0.0
  %12090 = vmatpush1.msra.mxu0 0.0
  %12091 = vmatprep.subr.mxu0 0.0
  %12092 = vmatpush1.msra.mxu0 0.0
  %12093 = vmatprep.subr.mxu0 0.0
  %12094 = vmatpush1.msra.mxu0 0.0
  %12095 = vmatprep.subr.mxu0 0.0
  %12096 = vmatpush1.msra.mxu0 0.0
  %12097 = vmatprep.subr.mxu0 0.0
  %12098 = vmatpush1.msra.mxu0 0.0
  %12099 = vmatprep.subr.mxu0 0.0
  %12100 = vmatpush1.msra.mxu0 0.0
  %12101 = vmatprep.subr.mxu0 0.0
  %12102 = vmatpush1.msra.mxu0 0.0
  %12103 = vmatprep.subr.mxu0 0.0
  %12104 = vmatpush1.msra.mxu0 0.0
  %12105 = vmatprep.subr.mxu0 0.0
  %12106 = vmatpush1.msra.mxu0 0.0
  %12107 = vmatprep.subr.mxu0 0.0
  %12108 = vmatpush1.msra.mxu0 0.0
  %12109 = vmatprep.subr.mxu0 0.0
  %12110 = vmatpush1.msra.mxu0 0.0
  %12111 = vmatprep.mubr.f32.mxu0 0.0
  %12112 = vmatmul.mubr.f32.gmra.mrb[0].mxu0 %v12042
  %v12113 = vpop.f32.mrb[0].mxu0
  %v12114 = vadd.f32 %v12040, %v12113
  %v12115 = vpop.f32.mrb[0].mxu0
  %12116 = vmatprep.mubr.f32.mxu0 0.0
  %12117 = vmatmul.mubr.f32.gmra.mrb[0].mxu0 %v12045
  %v12118 = vpop.f32.mrb[0].mxu0
  %v12119 = vadd.f32 %v12040, %v12118
  %v12120 = vpop.f32.mrb[0].mxu0
  %12121 = vdwg.mxu0
  %v12122 = vadd.f32 %v12114, %v11921
  %v12123 = vadd.f32 %v12119, %v11922
  %v12124 = vld [vmem:[%s8843 + $0x2] sm:$0x1]
  %v12125 = vld [vmem:[%s8843 + $0x5] sm:$0x1]
  %v12126 = vsel %vm140, %v12122, 0.0
  %12127 = vadd.xlane.f32.xlu0 %v12126
  %v12128 = vpop.xlane.xlu0 %12127
  %v12129 = vsel %vm140, %v12123, 0.0
  %12130 = vadd.xlane.f32.xlu0 %v12129
  %v12131 = vpop.xlane.xlu0 %12130
  %v12132 = vmul.f32 %v12128, %v147
  %v12133 = vmul.f32 %v12131, %v147
  %v12134 = vsub.f32 %v12122, %v12132
  %v12135 = vsub.f32 %v12123, %v12133
  %v12136 = vmul.f32 %v12134, %v12134
  %v12137 = vmul.f32 %v12135, %v12135
  %v12138 = vsel %vm140, %v12136, 0.0
  %12139 = vadd.xlane.f32.xlu0 %v12138
  %v12140 = vpop.xlane.xlu0 %12139
  %v12141 = vsel %vm140, %v12137, 0.0
  %12142 = vadd.xlane.f32.xlu0 %v12141
  %v12143 = vpop.xlane.xlu0 %12142
  %v12144 = vmul.f32 %v12140, %v147
  %v12145 = vmul.f32 %v12143, %v147
  %v12146 = vadd.f32 %v12144, 1e-12
  %v12147 = vadd.f32 %v12145, 1e-12
  %v12148 = vrsqrt.pop %v12146
  %v12149 = vrsqrt.pop %v12147
  %v12150 = vmul.f32 %v12134, %v12148
  %v12151 = vmul.f32 %v12135, %v12149
  %v12152 = vlaneseq
  %v12153 = vshrl.u32 %v12152, 7
  %v12154 = vsub.s32 0, %v12153
  %v12155 = vrot.slane %v12124, %v12154
  %v12156 = vmul.f32 %v12150, %v12155
  %v12157 = vmul.f32 %v12151, %v12155
  %v12158 = vlaneseq
  %v12159 = vshrl.u32 %v12158, 7
  %v12160 = vsub.s32 0, %v12159
  %v12161 = vrot.slane %v12125, %v12160
  %v12162 = vadd.f32 %v12156, %v12161
  %v12163 = vadd.f32 %v12157, %v12161
  %v12164 = vmul.f32 %v12162, %v2885
  %v12165 = vmul.f32 %v12163, %v2890
  %s12166 = scalar_lea.vmem %s7, 16
  %12167 = vst.msk [vmem:[%s12166] sm:$0xff] %vm140, %v12164
  %12168 = vst.msk [vmem:[%s12166 + $0x8] sm:$0xff] %vm140, %v12165
  // Predicated region
  $region30: #{bert_decoder_forward.1} parent=0 // pred_check
    _
  $region31: #{bert_decoder_forward.1} parent=0 // pred_check_branch
    %12170 = sbr.rel (0) target = $region33
  $region32: #{bert_decoder_forward.1} parent=0 // pred_region
    _
  $region33: #{bert_decoder_forward.1} parent=0 // pred_fallthru
    _
  // Predicated region
  $region34: #{bert_decoder_forward.1} parent=0 // pred_check
    _
  $region35: #{bert_decoder_forward.1} parent=0 // pred_check_branch
    %12172 = sbr.rel (0) target = $region37
  $region36: #{bert_decoder_forward.1} parent=0 // pred_region
    _
  $region37: #{bert_decoder_forward.1} parent=0 // pred_fallthru
    _

</llo_original>
